<compile_context>
chip_gen: v6e
topology: v6e:2x2x1
jax: 0.10.0
libtpu: 0.0.40
codegen_flags: <defaults>
</compile_context>

<pallas_src>
import functools

import jax
import jax.numpy as jnp
from jax import lax
from jax.experimental import pallas as pl
from jax.experimental.pallas import tpu as pltpu

_VMEM_LIMIT = 48 * 1024 * 1024       # below v7x's 64 MiB physical VMEM
_TILE_BUDGET = 12 * 1024 * 1024      # target double-buffered working set / kernel


def _round_up(x, m):
    return (x + m - 1) // m * m


def _tile_rows(m, bytes_per_row, budget=_TILE_BUDGET):
    """Pick a row-tile (multiple of 8) that fits the VMEM budget, + padded rows."""
    tm = 1024
    while tm > 8 and 2 * tm * bytes_per_row > budget:
        tm //= 2
    tm = min(tm, _round_up(m, 8))
    return tm, _round_up(m, tm)


def _pad_rows(x, m_pad):
    m = x.shape[0]
    if m_pad == m:
        return x
    return jnp.pad(x, ((0, m_pad - m),) + ((0, 0),) * (x.ndim - 1))


def _cparams(sems=None):
    return pltpu.CompilerParams(dimension_semantics=sems,
                                vmem_limit_bytes=_VMEM_LIMIT)


def _lrelu(x, slope):
    return jnp.where(x > 0, x, slope * x)


# -----------------------------------------------------------------------------
# Fused kNN: pairwise negative squared distance + iterative top-k (indices only)
# -----------------------------------------------------------------------------

def _knn_kernel(k, n_valid, rows_ref, all_ref, idx_ref):
    xr = rows_ref[0]                                            # (TN, C) queries
    xa = all_ref[0]                                             # (Np, C) all points
    sq_r = jnp.sum(xr * xr, axis=-1, keepdims=True)             # (TN, 1)
    sq_a = jnp.sum(xa * xa, axis=-1, keepdims=True)             # (Np, 1)
    inner = lax.dot_general(                                    # xr @ xa.T on MXU
        xr, xa, dimension_numbers=(((1,), (1,)), ((), ())),
        preferred_element_type=jnp.float32)                     # (TN, Np)
    d = 2.0 * inner - sq_r - jnp.transpose(sq_a)                # neg. sq. distance
    col = lax.broadcasted_iota(jnp.int32, d.shape, 1)
    neg_inf = jnp.float32(-jnp.inf)
    d = jnp.where(col < n_valid, d, neg_inf)                    # mask padded columns
    picks = []
    for _ in range(k):                                          # static unroll (small k)
        m = jnp.max(d, axis=-1, keepdims=True)
        sel = jnp.min(jnp.where(d == m, col, d.shape[1]),       # first occurrence
                      axis=-1, keepdims=True)
        picks.append(sel)
        d = jnp.where(col == sel, neg_inf, d)                   # drop selected column
    idx_ref[0] = jnp.concatenate(picks, axis=-1)                # (TN, k) int32


def knn_pallas(xt, k):
    """xt: (B, N, C) -> (B, N, k) int32 nearest-neighbor indices (self included)."""
    B, N, C = xt.shape
    tn, n_pad = _tile_rows(N, 4 * (N + 2 * C + k))
    xp = xt if n_pad == N else jnp.pad(xt, ((0, 0), (0, n_pad - N), (0, 0)))
    idx = pl.pallas_call(
        functools.partial(_knn_kernel, k, N),
        out_shape=jax.ShapeDtypeStruct((B, n_pad, k), jnp.int32),
        grid=(B, n_pad // tn),
        in_specs=[
            pl.BlockSpec((1, tn, C), lambda b, i: (b, i, 0)),
            pl.BlockSpec((1, n_pad, C), lambda b, i: (b, 0, 0)),
        ],
        out_specs=pl.BlockSpec((1, tn, k), lambda b, i: (b, i, 0)),
        compiler_params=_cparams(("parallel", "parallel")),
    )(xp, xp)
    return idx if n_pad == N else idx[:, :N]


# -----------------------------------------------------------------------------
# Per-point projection of an edge conv:  x @ [Wd*s | (Wc-Wd)*s] + [0 | shift]
# (BN scale folded into the weights on host; lane-dense 2*Cout = 128 output)
# -----------------------------------------------------------------------------

def _proj_kernel(x_ref, w_ref, b_ref, o_ref):
    o_ref[...] = jnp.dot(x_ref[...], w_ref[...],
                         preferred_element_type=jnp.float32) + b_ref[...]


def point_proj(x, w, b):
    M, C = x.shape
    C2 = w.shape[1]
    tm, m_pad = _tile_rows(M, 4 * (C + 2 * C2))
    out = pl.pallas_call(
        _proj_kernel,
        out_shape=jax.ShapeDtypeStruct((m_pad, C2), jnp.float32),
        grid=(m_pad // tm,),
        in_specs=[
            pl.BlockSpec((tm, C), lambda i: (i, 0)),
            pl.BlockSpec((C, C2), lambda i: (0, 0)),
            pl.BlockSpec((1, C2), lambda i: (0, 0)),
        ],
        out_specs=pl.BlockSpec((tm, C2), lambda i: (i, 0)),
        compiler_params=_cparams(("parallel",)),
    )(_pad_rows(x, m_pad), w, b.reshape(1, C2))
    return out if m_pad == M else out[:M]


# -----------------------------------------------------------------------------
# Edge conv pooling: combine neighbor/center projections, LeakyReLU, max over k
# -----------------------------------------------------------------------------

def _edge_pool_kernel(slope, g_ref, c_ref, o_ref):
    c = c_ref[...]                                              # (TM, Cout)
    kk = g_ref.shape[1]
    acc = _lrelu(g_ref[:, 0, :] + c, slope)
    for j in range(1, kk):                                      # static unroll over k
        acc = jnp.maximum(acc, _lrelu(g_ref[:, j, :] + c, slope))
    o_ref[...] = acc


def edge_pool(g, c, slope=0.2):
    """g: (M, k, Cout) gathered neighbor projections; c: (M, Cout) center term."""
    M, K, Co = g.shape
    lanes = _round_up(Co, 128)
    tm, m_pad = _tile_rows(M, 4 * (_round_up(K, 8) * lanes + 3 * lanes))
    out = pl.pallas_call(
        functools.partial(_edge_pool_kernel, slope),
        out_shape=jax.ShapeDtypeStruct((m_pad, Co), jnp.float32),
        grid=(m_pad // tm,),
        in_specs=[
            pl.BlockSpec((tm, K, Co), lambda i: (i, 0, 0)),
            pl.BlockSpec((tm, Co), lambda i: (i, 0)),
        ],
        out_specs=pl.BlockSpec((tm, Co), lambda i: (i, 0)),
        compiler_params=_cparams(("parallel",)),
    )(_pad_rows(g, m_pad), _pad_rows(c, m_pad))
    return out if m_pad == M else out[:M]


# -----------------------------------------------------------------------------
# conv5: rebuild the per-neighbor activations of conv1-4 from cached projections,
# 256->64 conv + BN + LeakyReLU + max over k, all in one kernel (the (k, B*N, 256)
# concat and the four full activation tensors never reach HBM).
# -----------------------------------------------------------------------------

def _conv5_kernel(slope, g1, g2, g3, g4, c1, c2, c3, c4, w_ref, b_ref, o_ref):
    w = w_ref[...]                                              # (256, 64)
    b = b_ref[...]                                              # (1, 64)
    gs = (g1, g2, g3, g4)
    cc = (c1[...], c2[...], c3[...], c4[...])
    kk = g1.shape[1]
    acc = None
    for j in range(kk):                                         # static unroll over k
        e = jnp.concatenate(
            [_lrelu(g[:, j, :] + c, slope) for g, c in zip(gs, cc)], axis=-1)
        y = _lrelu(jnp.dot(e, w, preferred_element_type=jnp.float32) + b, slope)
        acc = y if acc is None else jnp.maximum(acc, y)
    o_ref[...] = acc


def conv5_fused(gs, cs, w, shift, slope=0.2):
    M, K, Co = gs[0].shape
    tm, m_pad = _tile_rows(M, 4 * (4 * _round_up(K, 8) * 128 + 8 * 128 + 512))
    out = pl.pallas_call(
        functools.partial(_conv5_kernel, slope),
        out_shape=jax.ShapeDtypeStruct((m_pad, Co), jnp.float32),
        grid=(m_pad // tm,),
        in_specs=(
            [pl.BlockSpec((tm, K, Co), lambda i: (i, 0, 0)) for _ in range(4)]
            + [pl.BlockSpec((tm, Co), lambda i: (i, 0)) for _ in range(4)]
            + [pl.BlockSpec((4 * Co, Co), lambda i: (0, 0)),
               pl.BlockSpec((1, Co), lambda i: (0, 0))]),
        out_specs=pl.BlockSpec((tm, Co), lambda i: (i, 0)),
        compiler_params=_cparams(("parallel",)),
    )(*[_pad_rows(g, m_pad) for g in gs],
      *[_pad_rows(c, m_pad) for c in cs],
      w, shift.reshape(1, Co))
    return out if m_pad == M else out[:M]


# -----------------------------------------------------------------------------
# conv6 (1x1 conv + BN + LeakyReLU) fused with global max + avg pooling over N
# -----------------------------------------------------------------------------

def _conv6_pool_kernel(slope, x_ref, w_ref, b_ref, o_ref):
    y = jnp.dot(x_ref[0], w_ref[...], preferred_element_type=jnp.float32)
    y = _lrelu(y + b_ref[...], slope)                           # (N, 256)
    hmax = jnp.max(y, axis=0, keepdims=True)                    # (1, 256)
    havg = jnp.mean(y, axis=0, keepdims=True)                   # (1, 256)
    o_ref[...] = jnp.concatenate([hmax, havg], axis=-1).reshape(o_ref.shape)


def conv6_global_pool(feat, w, shift, slope=0.2):
    B, N, C = feat.shape
    Co = w.shape[1]
    out = pl.pallas_call(
        functools.partial(_conv6_pool_kernel, slope),
        out_shape=jax.ShapeDtypeStruct((B, 1, 2 * Co), jnp.float32),
        grid=(B,),
        in_specs=[
            pl.BlockSpec((1, N, C), lambda b: (b, 0, 0)),
            pl.BlockSpec((C, Co), lambda b: (0, 0)),
            pl.BlockSpec((1, Co), lambda b: (0, 0)),
        ],
        out_specs=pl.BlockSpec((1, 1, 2 * Co), lambda b: (b, 0, 0)),
        compiler_params=_cparams(("parallel",)),
    )(feat, w, shift.reshape(1, Co))
    return out.reshape(B, 2 * Co)


# -----------------------------------------------------------------------------
# Classification head: Linear+BN+LReLU -> Linear+BN+LReLU -> Linear, one kernel
# (Dropout is identity in eval mode.)
# -----------------------------------------------------------------------------

def _mlp_kernel(slope, h_ref, w1, b1, w2, b2, w3, b3, o_ref):
    h = h_ref[...]
    h = _lrelu(jnp.dot(h, w1[...], preferred_element_type=jnp.float32) + b1[...], slope)
    h = _lrelu(jnp.dot(h, w2[...], preferred_element_type=jnp.float32) + b2[...], slope)
    o_ref[...] = jnp.dot(h, w3[...], preferred_element_type=jnp.float32) + b3[...]


def mlp_head(h, p1, p2, p3, slope=0.01):
    B = h.shape[0]
    (w1, b1), (w2, b2), (w3, b3) = p1, p2, p3
    return pl.pallas_call(
        functools.partial(_mlp_kernel, slope),
        out_shape=jax.ShapeDtypeStruct((B, w3.shape[1]), jnp.float32),
        compiler_params=_cparams(),
    )(h, w1, b1.reshape(1, -1), w2, b2.reshape(1, -1), w3, b3.reshape(1, -1))


# -----------------------------------------------------------------------------
# Parameters: deterministic synthetic init, then host-side inference folding
# (BN into weights, edge-conv center decomposition).
# -----------------------------------------------------------------------------

def init_params(key, output_channels=40):
    eps = 1e-5
    keys = iter(jax.random.split(key, 64))

    def conv_w(cin, cout):
        return (jax.random.normal(next(keys), (cin, cout), jnp.float32)
                / jnp.sqrt(jnp.float32(cin)))

    def bn(c):
        gamma = 1.0 + 0.1 * jax.random.normal(next(keys), (c,), jnp.float32)
        beta = 0.1 * jax.random.normal(next(keys), (c,), jnp.float32)
        mean = 0.1 * jax.random.normal(next(keys), (c,), jnp.float32)
        var = 1.0 + 0.1 * jnp.abs(jax.random.normal(next(keys), (c,), jnp.float32))
        scale = gamma / jnp.sqrt(var + eps)
        shift = beta - mean * scale
        return scale, shift

    def linear(cin, cout):
        w = (jax.random.normal(next(keys), (cin, cout), jnp.float32)
             / jnp.sqrt(jnp.float32(cin)))
        b = 0.1 * jax.random.normal(next(keys), (cout,), jnp.float32)
        return w, b

    p = {}
    for name, cin, cout in [("conv1", 6, 64), ("conv2", 128, 64),
                            ("conv3", 128, 64), ("conv4", 128, 64),
                            ("conv5", 256, 64), ("conv6", 64, 256)]:
        w = conv_w(cin, cout)
        s, sh = bn(cout)
        p[name] = (w, s, sh)

    # Linear + BN:  (x @ W + b) * s + sh  ==  x @ (W * s) + (b * s + sh)
    w, b = linear(512, 256)
    s, sh = bn(256)
    p["mlp1"] = (w, s, sh + b * s)
    w, b = linear(256, 64)
    s, sh = bn(64)
    p["mlp2"] = (w, s, sh + b * s)
    w, b = linear(64, output_channels)
    p["mlp3"] = (w, jnp.ones((output_channels,), jnp.float32), b)
    return p


def fold_params(p):
    """Host-side inference-time folding (done once at parameter-load time)."""
    fp = {}
    for name in ("conv1", "conv2", "conv3", "conv4"):
        w, s, sh = p[name]
        c = w.shape[0] // 2
        wd = w[:c] * s[None, :]                  # neighbor ("x_j - x_i") half
        wc = w[c:] * s[None, :]                  # center   ("x_i")       half
        # BN(conv([x_j - x_i, x_i])) == x_j @ wd + x_i @ (wc - wd) + shift
        fp[name] = (jnp.concatenate([wd, wc - wd], axis=1),
                    jnp.concatenate([jnp.zeros_like(sh), sh]))
    for name in ("conv5", "conv6", "mlp1", "mlp2", "mlp3"):
        w, s, sh = p[name]
        fp[name] = (w * s[None, :], sh)
    return fp


# -----------------------------------------------------------------------------
# Forward pass
# -----------------------------------------------------------------------------

def dgcnn_forward(x, fparams, k=4, ext_ft=False):
    """x: (B, C_in, N) in torch layout. Returns (B, output_channels)."""
    B, _, N = x.shape
    M = B * N
    xt = jnp.transpose(x, (0, 2, 1)).astype(jnp.float32)        # (B, N, C)

    def edge_layer(feat_bnc, name):
        C = feat_bnc.shape[-1]
        idx = knn_pallas(feat_bnc, k)                            # (B, N, k)
        w_comb, b_comb = fparams[name]
        cout = w_comb.shape[1] // 2
        proj = point_proj(feat_bnc.reshape(M, C), w_comb, b_comb)   # (M, 2*cout)
        pn = proj[:, :cout].reshape(B, N, cout)                  # neighbor term
        pc = proj[:, cout:]                                      # center term (M, cout)
        # TODO(synk): neighbor gather uses XLA take; an in-kernel (scalar-prefetch /
        # DMA) gather would avoid materializing the gathered projections in HBM.
        g = jax.vmap(lambda p, i: p[i])(pn, idx)                 # (B, N, k, cout)
        return g.reshape(M, k, cout), pc

    g1, c1 = edge_layer(xt, "conv1")
    x1 = edge_pool(g1, c1)                                       # (M, 64)
    g2, c2 = edge_layer(x1.reshape(B, N, 64), "conv2")
    x2 = edge_pool(g2, c2)
    g3, c3 = edge_layer(x2.reshape(B, N, 64), "conv3")
    x3 = edge_pool(g3, c3)
    g4, c4 = edge_layer(x3.reshape(B, N, 64), "conv4")
    # (the reference computes pooled x4 but never uses it)

    w5, sh5 = fparams["conv5"]
    feat = conv5_fused((g1, g2, g3, g4), (c1, c2, c3, c4), w5, sh5)   # (M, 64)

    if ext_ft:
        return jnp.transpose(feat.reshape(B, N, 64), (0, 2, 1))       # (B, 64, N)

    w6, sh6 = fparams["conv6"]
    h = conv6_global_pool(feat.reshape(B, N, 64), w6, sh6)            # (B, 512)
    return mlp_head(h, fparams["mlp1"], fparams["mlp2"], fparams["mlp3"])


if __name__ == "__main__":
    key = jax.random.PRNGKey(0)
    kx, kp = jax.random.split(key)

    B, C, N, K = 2, 3, 16, 4                 # small shapes; args.k = 4
    x = jax.random.normal(kx, (B, C, N), jnp.float32)
    params = init_params(kp, output_channels=40)
    fparams = fold_params(params)

    fwd = jax.jit(dgcnn_forward, static_argnames=("k", "ext_ft"))
    out = fwd(x, fparams, k=K, ext_ft=False)
    jax.block_until_ready(out)
    assert out.shape == (B, 40) and out.dtype == jnp.float32
    print("KERNEL_OK")
</pallas_src>

<mosaic_0001>
module attributes {stable_mosaic.version = 11 : i64} {
  func.func @_proj_kernel(%arg0: i32, %arg1: memref<32x3xf32, #tpu.memory_space<vmem>>, %arg2: memref<3x128xf32, #tpu.memory_space<vmem>>, %arg3: memref<1x128xf32, #tpu.memory_space<vmem>>, %arg4: memref<32x128xf32, #tpu.memory_space<vmem>>) attributes {dimension_semantics = [#tpu.dimension_semantics<parallel>], iteration_bounds = array<i64: 1>, scalar_prefetch = 0 : i64, scratch_operands = 0 : i64, tpu.core_type = #tpu.core_type<tc>, window_params = [{transform_indices = @transform_0, window_bounds = array<i64: 32, 3>}, {pipeline_mode = #tpu.pipeline_mode<synchronous>, transform_indices = @transform_1, window_bounds = array<i64: 3, 128>}, {pipeline_mode = #tpu.pipeline_mode<synchronous>, transform_indices = @transform_2, window_bounds = array<i64: 1, 128>}, {transform_indices = @transform_3, window_bounds = array<i64: 32, 128>}]} {
    %c0 = arith.constant 0 : index
    %c0_0 = arith.constant 0 : index
    %0 = vector.load %arg1[%c0, %c0_0] : memref<32x3xf32, #tpu.memory_space<vmem>>, vector<32x3xf32>
    %c0_1 = arith.constant 0 : index
    %c0_2 = arith.constant 0 : index
    %1 = vector.load %arg2[%c0_1, %c0_2] : memref<3x128xf32, #tpu.memory_space<vmem>>, vector<3x128xf32>
    %cst = arith.constant dense<0.000000e+00> : vector<32x128xf32>
    %2 = tpu.matmul %0, %1, %cst {dimension_numbers = #tpu.dot_dimension_numbers<[1], [0], [0], [1], [0, 0, 1, 1], [], []>} : vector<32x3xf32>, vector<3x128xf32>, vector<32x128xf32> -> vector<32x128xf32>
    %c0_3 = arith.constant 0 : index
    %c0_4 = arith.constant 0 : index
    %3 = vector.load %arg3[%c0_3, %c0_4] : memref<1x128xf32, #tpu.memory_space<vmem>>, vector<1x128xf32>
    %4 = vector.broadcast %3 : vector<1x128xf32> to vector<32x128xf32>
    %5 = arith.addf %2, %4 : vector<32x128xf32>
    %c0_5 = arith.constant 0 : index
    %c0_6 = arith.constant 0 : index
    %6 = vector.load %arg4[%c0_5, %c0_6] : memref<32x128xf32, #tpu.memory_space<vmem>>, vector<32x128xf32>
    tpu.vector_store %arg4[%c0_5, %c0_6], %5 {strides = array<i32>} : memref<32x128xf32, #tpu.memory_space<vmem>>, vector<32x128xf32>,
    return
  }
  func.func @transform_0(%arg0: i32) -> (i32, i32) {
    %c0_i32 = arith.constant 0 : i32
    %c0_i32_0 = arith.constant 0 : i32
    return %arg0, %c0_i32 : i32, i32
  }
  func.func @transform_1(%arg0: i32) -> (i32, i32) {
    %c0_i32 = arith.constant 0 : i32
    %c0_i32_0 = arith.constant 0 : i32
    %c0_i32_1 = arith.constant 0 : i32
    return %c0_i32, %c0_i32_0 : i32, i32
  }
  func.func @transform_2(%arg0: i32) -> (i32, i32) {
    %c0_i32 = arith.constant 0 : i32
    %c0_i32_0 = arith.constant 0 : i32
    %c0_i32_1 = arith.constant 0 : i32
    return %c0_i32, %c0_i32_0 : i32, i32
  }
  func.func @transform_3(%arg0: i32) -> (i32, i32) {
    %c0_i32 = arith.constant 0 : i32
    %c0_i32_0 = arith.constant 0 : i32
    return %arg0, %c0_i32 : i32, i32
  }
}

module attributes {stable_mosaic.version = 11 : i64} {
  func.func @_knn_kernel(%arg0: i32, %arg1: i32, %arg2: memref<1x16x3xf32, #tpu.memory_space<vmem>>, %arg3: memref<1x16x3xf32, #tpu.memory_space<vmem>>, %arg4: memref<1x16x4xi32, #tpu.memory_space<vmem>>) attributes {dimension_semantics = [#tpu.dimension_semantics<parallel>, #tpu.dimension_semantics<parallel>], iteration_bounds = array<i64: 2, 1>, scalar_prefetch = 0 : i64, scratch_operands = 0 : i64, tpu.core_type = #tpu.core_type<tc>, window_params = [{transform_indices = @transform_0, window_bounds = array<i64: 1, 16, 3>}, {transform_indices = @transform_1, window_bounds = array<i64: 1, 16, 3>}, {transform_indices = @transform_2, window_bounds = array<i64: 1, 16, 4>}]} {
    %c0 = arith.constant 0 : index
    %c0_0 = arith.constant 0 : index
    %c0_1 = arith.constant 0 : index
    %0 = vector.load %arg2[%c0, %c0_0, %c0_1] : memref<1x16x3xf32, #tpu.memory_space<vmem>>, vector<1x16x3xf32>
    %1 = vector.shape_cast %0 : vector<1x16x3xf32> to vector<16x3xf32>
    %c0_2 = arith.constant 0 : index
    %c0_3 = arith.constant 0 : index
    %c0_4 = arith.constant 0 : index
    %2 = vector.load %arg3[%c0_2, %c0_3, %c0_4] : memref<1x16x3xf32, #tpu.memory_space<vmem>>, vector<1x16x3xf32>
    %3 = vector.shape_cast %2 : vector<1x16x3xf32> to vector<16x3xf32>
    %4 = arith.mulf %1, %1 : vector<16x3xf32>
    %cst = arith.constant dense<0.000000e+00> : vector<16xf32>
    %5 = vector.multi_reduction <add>, %4, %cst [1] : vector<16x3xf32> to vector<16xf32>
    %6 = vector.shape_cast %5 : vector<16xf32> to vector<16x1xf32>
    %7 = arith.mulf %3, %3 : vector<16x3xf32>
    %cst_5 = arith.constant dense<0.000000e+00> : vector<16xf32>
    %8 = vector.multi_reduction <add>, %7, %cst_5 [1] : vector<16x3xf32> to vector<16xf32>
    %9 = vector.shape_cast %8 : vector<16xf32> to vector<16x1xf32>
    %cst_6 = arith.constant dense<0.000000e+00> : vector<16x16xf32>
    %10 = tpu.matmul %1, %3, %cst_6 {dimension_numbers = #tpu.dot_dimension_numbers<[1], [1], [0], [0], [0, 0, 1, 0], [], []>} : vector<16x3xf32>, vector<16x3xf32>, vector<16x16xf32> -> vector<16x16xf32>
    %cst_7 = arith.constant 2.000000e+00 : f32
    %11 = vector.broadcast %cst_7 : f32 to vector<16x16xf32>
    %12 = arith.mulf %11, %10 : vector<16x16xf32>
    %13 = vector.broadcast %6 : vector<16x1xf32> to vector<16x16xf32>
    %14 = arith.subf %12, %13 : vector<16x16xf32>
    %15 = tpu.transpose %9, [1, 0] : vector<16x1xf32> -> vector<1x16xf32>
    %16 = vector.broadcast %15 : vector<1x16xf32> to vector<16x16xf32>
    %17 = arith.subf %14, %16 : vector<16x16xf32>
    %18 = tpu.iota {dimensions = array<i32: 1>} : vector<16x16xi32>
    %c16_i32 = arith.constant 16 : i32
    %19 = vector.broadcast %c16_i32 : i32 to vector<16x16xi32>
    %20 = arith.cmpi slt, %18, %19 : vector<16x16xi32>
    %cst_8 = arith.constant 0xFF800000 : f32
    %21 = vector.broadcast %cst_8 : f32 to vector<16x16xf32>
    %22 = arith.select %20, %17, %21 : vector<16x16xi1>, vector<16x16xf32>
    %cst_9 = arith.constant dense<0xFF800000> : vector<16xf32>
    %23 = vector.multi_reduction <maximumf>, %22, %cst_9 [1] : vector<16x16xf32> to vector<16xf32>
    %24 = vector.shape_cast %23 : vector<16xf32> to vector<16x1xf32>
    %25 = vector.broadcast %24 : vector<16x1xf32> to vector<16x16xf32>
    %26 = arith.cmpf oeq, %22, %25 : vector<16x16xf32>
    %c16_i32_10 = arith.constant 16 : i32
    %27 = vector.broadcast %c16_i32_10 : i32 to vector<16x16xi32>
    %28 = arith.select %26, %18, %27 : vector<16x16xi1>, vector<16x16xi32>
    %cst_11 = arith.constant dense<2147483647> : vector<16xi32>
    %29 = vector.multi_reduction <minsi>, %28, %cst_11 [1] : vector<16x16xi32> to vector<16xi32>
    %30 = vector.shape_cast %29 : vector<16xi32> to vector<16x1xi32>
    %31 = vector.broadcast %30 : vector<16x1xi32> to vector<16x16xi32>
    %32 = arith.cmpi eq, %18, %31 : vector<16x16xi32>
    %cst_12 = arith.constant 0xFF800000 : f32
    %33 = vector.broadcast %cst_12 : f32 to vector<16x16xf32>
    %34 = arith.select %32, %33, %22 : vector<16x16xi1>, vector<16x16xf32>
    %cst_13 = arith.constant dense<0xFF800000> : vector<16xf32>
    %35 = vector.multi_reduction <maximumf>, %34, %cst_13 [1] : vector<16x16xf32> to vector<16xf32>
    %36 = vector.shape_cast %35 : vector<16xf32> to vector<16x1xf32>
    %37 = vector.broadcast %36 : vector<16x1xf32> to vector<16x16xf32>
    %38 = arith.cmpf oeq, %34, %37 : vector<16x16xf32>
    %c16_i32_14 = arith.constant 16 : i32
    %39 = vector.broadcast %c16_i32_14 : i32 to vector<16x16xi32>
    %40 = arith.select %38, %18, %39 : vector<16x16xi1>, vector<16x16xi32>
    %cst_15 = arith.constant dense<2147483647> : vector<16xi32>
    %41 = vector.multi_reduction <minsi>, %40, %cst_15 [1] : vector<16x16xi32> to vector<16xi32>
    %42 = vector.shape_cast %41 : vector<16xi32> to vector<16x1xi32>
    %43 = vector.broadcast %42 : vector<16x1xi32> to vector<16x16xi32>
    %44 = arith.cmpi eq, %18, %43 : vector<16x16xi32>
    %cst_16 = arith.constant 0xFF800000 : f32
    %45 = vector.broadcast %cst_16 : f32 to vector<16x16xf32>
    %46 = arith.select %44, %45, %34 : vector<16x16xi1>, vector<16x16xf32>
    %cst_17 = arith.constant dense<0xFF800000> : vector<16xf32>
    %47 = vector.multi_reduction <maximumf>, %46, %cst_17 [1] : vector<16x16xf32> to vector<16xf32>
    %48 = vector.shape_cast %47 : vector<16xf32> to vector<16x1xf32>
    %49 = vector.broadcast %48 : vector<16x1xf32> to vector<16x16xf32>
    %50 = arith.cmpf oeq, %46, %49 : vector<16x16xf32>
    %c16_i32_18 = arith.constant 16 : i32
    %51 = vector.broadcast %c16_i32_18 : i32 to vector<16x16xi32>
    %52 = arith.select %50, %18, %51 : vector<16x16xi1>, vector<16x16xi32>
    %cst_19 = arith.constant dense<2147483647> : vector<16xi32>
    %53 = vector.multi_reduction <minsi>, %52, %cst_19 [1] : vector<16x16xi32> to vector<16xi32>
    %54 = vector.shape_cast %53 : vector<16xi32> to vector<16x1xi32>
    %55 = vector.broadcast %54 : vector<16x1xi32> to vector<16x16xi32>
    %56 = arith.cmpi eq, %18, %55 : vector<16x16xi32>
    %cst_20 = arith.constant 0xFF800000 : f32
    %57 = vector.broadcast %cst_20 : f32 to vector<16x16xf32>
    %58 = arith.select %56, %57, %46 : vector<16x16xi1>, vector<16x16xf32>
    %cst_21 = arith.constant dense<0xFF800000> : vector<16xf32>
    %59 = vector.multi_reduction <maximumf>, %58, %cst_21 [1] : vector<16x16xf32> to vector<16xf32>
    %60 = vector.shape_cast %59 : vector<16xf32> to vector<16x1xf32>
    %61 = vector.broadcast %60 : vector<16x1xf32> to vector<16x16xf32>
    %62 = arith.cmpf oeq, %58, %61 : vector<16x16xf32>
    %c16_i32_22 = arith.constant 16 : i32
    %63 = vector.broadcast %c16_i32_22 : i32 to vector<16x16xi32>
    %64 = arith.select %62, %18, %63 : vector<16x16xi1>, vector<16x16xi32>
    %cst_23 = arith.constant dense<2147483647> : vector<16xi32>
    %65 = vector.multi_reduction <minsi>, %64, %cst_23 [1] : vector<16x16xi32> to vector<16xi32>
    %66 = vector.shape_cast %65 : vector<16xi32> to vector<16x1xi32>
    %67 = tpu.concatenate %30, %42, %54, %66 in 1 : vector<16x1xi32>, vector<16x1xi32>, vector<16x1xi32>, vector<16x1xi32> -> vector<16x4xi32>
    %c0_24 = arith.constant 0 : index
    %c0_25 = arith.constant 0 : index
    %c0_26 = arith.constant 0 : index
    %68 = vector.load %arg4[%c0_24, %c0_25, %c0_26] : memref<1x16x4xi32, #tpu.memory_space<vmem>>, vector<1x16x4xi32>
    %69 = vector.shape_cast %68 : vector<1x16x4xi32> to vector<16x4xi32>
    %70 = vector.shape_cast %67 : vector<16x4xi32> to vector<1x16x4xi32>
    tpu.vector_store %arg4[%c0_24, %c0_25, %c0_26], %70 {strides = array<i32>} : memref<1x16x4xi32, #tpu.memory_space<vmem>>, vector<1x16x4xi32>,
    return
  }
  func.func @transform_0(%arg0: i32, %arg1: i32) -> (i32, i32, i32) {
    %c0_i32 = arith.constant 0 : i32
    %c0_i32_0 = arith.constant 0 : i32
    return %arg0, %arg1, %c0_i32 : i32, i32, i32
  }
  func.func @transform_1(%arg0: i32, %arg1: i32) -> (i32, i32, i32) {
    %c0_i32 = arith.constant 0 : i32
    %c0_i32_0 = arith.constant 0 : i32
    %c0_i32_1 = arith.constant 0 : i32
    return %arg0, %c0_i32, %c0_i32_0 : i32, i32, i32
  }
  func.func @transform_2(%arg0: i32, %arg1: i32) -> (i32, i32, i32) {
    %c0_i32 = arith.constant 0 : i32
    %c0_i32_0 = arith.constant 0 : i32
    return %arg0, %arg1, %c0_i32 : i32, i32, i32
  }
}

module attributes {stable_mosaic.version = 11 : i64} {
  func.func @_edge_pool_kernel(%arg0: i32, %arg1: memref<32x4x64xf32, #tpu.memory_space<vmem>>, %arg2: memref<32x64xf32, #tpu.memory_space<vmem>>, %arg3: memref<32x64xf32, #tpu.memory_space<vmem>>) attributes {dimension_semantics = [#tpu.dimension_semantics<parallel>], iteration_bounds = array<i64: 1>, scalar_prefetch = 0 : i64, scratch_operands = 0 : i64, tpu.core_type = #tpu.core_type<tc>, window_params = [{transform_indices = @transform_0, window_bounds = array<i64: 32, 4, 64>}, {transform_indices = @transform_1, window_bounds = array<i64: 32, 64>}, {transform_indices = @transform_2, window_bounds = array<i64: 32, 64>}]} {
    %c0 = arith.constant 0 : index
    %c0_0 = arith.constant 0 : index
    %0 = vector.load %arg2[%c0, %c0_0] : memref<32x64xf32, #tpu.memory_space<vmem>>, vector<32x64xf32>
    %c0_1 = arith.constant 0 : index
    %c0_2 = arith.constant 0 : index
    %c0_3 = arith.constant 0 : index
    %1 = vector.load %arg1[%c0_1, %c0_2, %c0_3] : memref<32x4x64xf32, #tpu.memory_space<vmem>>, vector<32x1x64xf32>
    %2 = vector.shape_cast %1 : vector<32x1x64xf32> to vector<32x64xf32>
    %3 = arith.addf %2, %0 : vector<32x64xf32>
    %cst = arith.constant 0.000000e+00 : f32
    %4 = vector.broadcast %cst : f32 to vector<32x64xf32>
    %5 = arith.cmpf ogt, %3, %4 : vector<32x64xf32>
    %cst_4 = arith.constant 2.000000e-01 : f32
    %6 = vector.broadcast %cst_4 : f32 to vector<32x64xf32>
    %7 = arith.mulf %6, %3 : vector<32x64xf32>
    %8 = arith.select %5, %3, %7 : vector<32x64xi1>, vector<32x64xf32>
    %c0_5 = arith.constant 0 : index
    %c1 = arith.constant 1 : index
    %c0_6 = arith.constant 0 : index
    %9 = vector.load %arg1[%c0_5, %c1, %c0_6] : memref<32x4x64xf32, #tpu.memory_space<vmem>>, vector<32x1x64xf32>
    %10 = vector.shape_cast %9 : vector<32x1x64xf32> to vector<32x64xf32>
    %11 = arith.addf %10, %0 : vector<32x64xf32>
    %cst_7 = arith.constant 0.000000e+00 : f32
    %12 = vector.broadcast %cst_7 : f32 to vector<32x64xf32>
    %13 = arith.cmpf ogt, %11, %12 : vector<32x64xf32>
    %cst_8 = arith.constant 2.000000e-01 : f32
    %14 = vector.broadcast %cst_8 : f32 to vector<32x64xf32>
    %15 = arith.mulf %14, %11 : vector<32x64xf32>
    %16 = arith.select %13, %11, %15 : vector<32x64xi1>, vector<32x64xf32>
    %17 = arith.maximumf %8, %16 : vector<32x64xf32>
    %c0_9 = arith.constant 0 : index
    %c2 = arith.constant 2 : index
    %c0_10 = arith.constant 0 : index
    %18 = vector.load %arg1[%c0_9, %c2, %c0_10] : memref<32x4x64xf32, #tpu.memory_space<vmem>>, vector<32x1x64xf32>
    %19 = vector.shape_cast %18 : vector<32x1x64xf32> to vector<32x64xf32>
    %20 = arith.addf %19, %0 : vector<32x64xf32>
    %cst_11 = arith.constant 0.000000e+00 : f32
    %21 = vector.broadcast %cst_11 : f32 to vector<32x64xf32>
    %22 = arith.cmpf ogt, %20, %21 : vector<32x64xf32>
    %cst_12 = arith.constant 2.000000e-01 : f32
    %23 = vector.broadcast %cst_12 : f32 to vector<32x64xf32>
    %24 = arith.mulf %23, %20 : vector<32x64xf32>
    %25 = arith.select %22, %20, %24 : vector<32x64xi1>, vector<32x64xf32>
    %26 = arith.maximumf %17, %25 : vector<32x64xf32>
    %c0_13 = arith.constant 0 : index
    %c3 = arith.constant 3 : index
    %c0_14 = arith.constant 0 : index
    %27 = vector.load %arg1[%c0_13, %c3, %c0_14] : memref<32x4x64xf32, #tpu.memory_space<vmem>>, vector<32x1x64xf32>
    %28 = vector.shape_cast %27 : vector<32x1x64xf32> to vector<32x64xf32>
    %29 = arith.addf %28, %0 : vector<32x64xf32>
    %cst_15 = arith.constant 0.000000e+00 : f32
    %30 = vector.broadcast %cst_15 : f32 to vector<32x64xf32>
    %31 = arith.cmpf ogt, %29, %30 : vector<32x64xf32>
    %cst_16 = arith.constant 2.000000e-01 : f32
    %32 = vector.broadcast %cst_16 : f32 to vector<32x64xf32>
    %33 = arith.mulf %32, %29 : vector<32x64xf32>
    %34 = arith.select %31, %29, %33 : vector<32x64xi1>, vector<32x64xf32>
    %35 = arith.maximumf %26, %34 : vector<32x64xf32>
    %c0_17 = arith.constant 0 : index
    %c0_18 = arith.constant 0 : index
    %36 = vector.load %arg3[%c0_17, %c0_18] : memref<32x64xf32, #tpu.memory_space<vmem>>, vector<32x64xf32>
    tpu.vector_store %arg3[%c0_17, %c0_18], %35 {strides = array<i32>} : memref<32x64xf32, #tpu.memory_space<vmem>>, vector<32x64xf32>,
    return
  }
  func.func @transform_0(%arg0: i32) -> (i32, i32, i32) {
    %c0_i32 = arith.constant 0 : i32
    %c0_i32_0 = arith.constant 0 : i32
    %c0_i32_1 = arith.constant 0 : i32
    return %arg0, %c0_i32, %c0_i32_0 : i32, i32, i32
  }
  func.func @transform_1(%arg0: i32) -> (i32, i32) {
    %c0_i32 = arith.constant 0 : i32
    %c0_i32_0 = arith.constant 0 : i32
    return %arg0, %c0_i32 : i32, i32
  }
  func.func @transform_2(%arg0: i32) -> (i32, i32) {
    %c0_i32 = arith.constant 0 : i32
    %c0_i32_0 = arith.constant 0 : i32
    return %arg0, %c0_i32 : i32, i32
  }
}

module attributes {stable_mosaic.version = 11 : i64} {
  func.func @_proj_kernel(%arg0: i32, %arg1: memref<32x64xf32, #tpu.memory_space<vmem>>, %arg2: memref<64x128xf32, #tpu.memory_space<vmem>>, %arg3: memref<1x128xf32, #tpu.memory_space<vmem>>, %arg4: memref<32x128xf32, #tpu.memory_space<vmem>>) attributes {dimension_semantics = [#tpu.dimension_semantics<parallel>], iteration_bounds = array<i64: 1>, scalar_prefetch = 0 : i64, scratch_operands = 0 : i64, tpu.core_type = #tpu.core_type<tc>, window_params = [{transform_indices = @transform_0, window_bounds = array<i64: 32, 64>}, {pipeline_mode = #tpu.pipeline_mode<synchronous>, transform_indices = @transform_1, window_bounds = array<i64: 64, 128>}, {pipeline_mode = #tpu.pipeline_mode<synchronous>, transform_indices = @transform_2, window_bounds = array<i64: 1, 128>}, {transform_indices = @transform_3, window_bounds = array<i64: 32, 128>}]} {
    %c0 = arith.constant 0 : index
    %c0_0 = arith.constant 0 : index
    %0 = vector.load %arg1[%c0, %c0_0] : memref<32x64xf32, #tpu.memory_space<vmem>>, vector<32x64xf32>
    %c0_1 = arith.constant 0 : index
    %c0_2 = arith.constant 0 : index
    %1 = vector.load %arg2[%c0_1, %c0_2] : memref<64x128xf32, #tpu.memory_space<vmem>>, vector<64x128xf32>
    %cst = arith.constant dense<0.000000e+00> : vector<32x128xf32>
    %2 = tpu.matmul %0, %1, %cst {dimension_numbers = #tpu.dot_dimension_numbers<[1], [0], [0], [1], [0, 0, 1, 1], [], []>} : vector<32x64xf32>, vector<64x128xf32>, vector<32x128xf32> -> vector<32x128xf32>
    %c0_3 = arith.constant 0 : index
    %c0_4 = arith.constant 0 : index
    %3 = vector.load %arg3[%c0_3, %c0_4] : memref<1x128xf32, #tpu.memory_space<vmem>>, vector<1x128xf32>
    %4 = vector.broadcast %3 : vector<1x128xf32> to vector<32x128xf32>
    %5 = arith.addf %2, %4 : vector<32x128xf32>
    %c0_5 = arith.constant 0 : index
    %c0_6 = arith.constant 0 : index
    %6 = vector.load %arg4[%c0_5, %c0_6] : memref<32x128xf32, #tpu.memory_space<vmem>>, vector<32x128xf32>
    tpu.vector_store %arg4[%c0_5, %c0_6], %5 {strides = array<i32>} : memref<32x128xf32, #tpu.memory_space<vmem>>, vector<32x128xf32>,
    return
  }
  func.func @transform_0(%arg0: i32) -> (i32, i32) {
    %c0_i32 = arith.constant 0 : i32
    %c0_i32_0 = arith.constant 0 : i32
    return %arg0, %c0_i32 : i32, i32
  }
  func.func @transform_1(%arg0: i32) -> (i32, i32) {
    %c0_i32 = arith.constant 0 : i32
    %c0_i32_0 = arith.constant 0 : i32
    %c0_i32_1 = arith.constant 0 : i32
    return %c0_i32, %c0_i32_0 : i32, i32
  }
  func.func @transform_2(%arg0: i32) -> (i32, i32) {
    %c0_i32 = arith.constant 0 : i32
    %c0_i32_0 = arith.constant 0 : i32
    %c0_i32_1 = arith.constant 0 : i32
    return %c0_i32, %c0_i32_0 : i32, i32
  }
  func.func @transform_3(%arg0: i32) -> (i32, i32) {
    %c0_i32 = arith.constant 0 : i32
    %c0_i32_0 = arith.constant 0 : i32
    return %arg0, %c0_i32 : i32, i32
  }
}

module attributes {stable_mosaic.version = 11 : i64} {
  func.func @_knn_kernel(%arg0: i32, %arg1: i32, %arg2: memref<1x16x64xf32, #tpu.memory_space<vmem>>, %arg3: memref<1x16x64xf32, #tpu.memory_space<vmem>>, %arg4: memref<1x16x4xi32, #tpu.memory_space<vmem>>) attributes {dimension_semantics = [#tpu.dimension_semantics<parallel>, #tpu.dimension_semantics<parallel>], iteration_bounds = array<i64: 2, 1>, scalar_prefetch = 0 : i64, scratch_operands = 0 : i64, tpu.core_type = #tpu.core_type<tc>, window_params = [{transform_indices = @transform_0, window_bounds = array<i64: 1, 16, 64>}, {transform_indices = @transform_1, window_bounds = array<i64: 1, 16, 64>}, {transform_indices = @transform_2, window_bounds = array<i64: 1, 16, 4>}]} {
    %c0 = arith.constant 0 : index
    %c0_0 = arith.constant 0 : index
    %c0_1 = arith.constant 0 : index
    %0 = vector.load %arg2[%c0, %c0_0, %c0_1] : memref<1x16x64xf32, #tpu.memory_space<vmem>>, vector<1x16x64xf32>
    %1 = vector.shape_cast %0 : vector<1x16x64xf32> to vector<16x64xf32>
    %c0_2 = arith.constant 0 : index
    %c0_3 = arith.constant 0 : index
    %c0_4 = arith.constant 0 : index
    %2 = vector.load %arg3[%c0_2, %c0_3, %c0_4] : memref<1x16x64xf32, #tpu.memory_space<vmem>>, vector<1x16x64xf32>
    %3 = vector.shape_cast %2 : vector<1x16x64xf32> to vector<16x64xf32>
    %4 = arith.mulf %1, %1 : vector<16x64xf32>
    %cst = arith.constant dense<0.000000e+00> : vector<16xf32>
    %5 = vector.multi_reduction <add>, %4, %cst [1] : vector<16x64xf32> to vector<16xf32>
    %6 = vector.shape_cast %5 : vector<16xf32> to vector<16x1xf32>
    %7 = arith.mulf %3, %3 : vector<16x64xf32>
    %cst_5 = arith.constant dense<0.000000e+00> : vector<16xf32>
    %8 = vector.multi_reduction <add>, %7, %cst_5 [1] : vector<16x64xf32> to vector<16xf32>
    %9 = vector.shape_cast %8 : vector<16xf32> to vector<16x1xf32>
    %cst_6 = arith.constant dense<0.000000e+00> : vector<16x16xf32>
    %10 = tpu.matmul %1, %3, %cst_6 {dimension_numbers = #tpu.dot_dimension_numbers<[1], [1], [0], [0], [0, 0, 1, 0], [], []>} : vector<16x64xf32>, vector<16x64xf32>, vector<16x16xf32> -> vector<16x16xf32>
    %cst_7 = arith.constant 2.000000e+00 : f32
    %11 = vector.broadcast %cst_7 : f32 to vector<16x16xf32>
    %12 = arith.mulf %11, %10 : vector<16x16xf32>
    %13 = vector.broadcast %6 : vector<16x1xf32> to vector<16x16xf32>
    %14 = arith.subf %12, %13 : vector<16x16xf32>
    %15 = tpu.transpose %9, [1, 0] : vector<16x1xf32> -> vector<1x16xf32>
    %16 = vector.broadcast %15 : vector<1x16xf32> to vector<16x16xf32>
    %17 = arith.subf %14, %16 : vector<16x16xf32>
    %18 = tpu.iota {dimensions = array<i32: 1>} : vector<16x16xi32>
    %c16_i32 = arith.constant 16 : i32
    %19 = vector.broadcast %c16_i32 : i32 to vector<16x16xi32>
    %20 = arith.cmpi slt, %18, %19 : vector<16x16xi32>
    %cst_8 = arith.constant 0xFF800000 : f32
    %21 = vector.broadcast %cst_8 : f32 to vector<16x16xf32>
    %22 = arith.select %20, %17, %21 : vector<16x16xi1>, vector<16x16xf32>
    %cst_9 = arith.constant dense<0xFF800000> : vector<16xf32>
    %23 = vector.multi_reduction <maximumf>, %22, %cst_9 [1] : vector<16x16xf32> to vector<16xf32>
    %24 = vector.shape_cast %23 : vector<16xf32> to vector<16x1xf32>
    %25 = vector.broadcast %24 : vector<16x1xf32> to vector<16x16xf32>
    %26 = arith.cmpf oeq, %22, %25 : vector<16x16xf32>
    %c16_i32_10 = arith.constant 16 : i32
    %27 = vector.broadcast %c16_i32_10 : i32 to vector<16x16xi32>
    %28 = arith.select %26, %18, %27 : vector<16x16xi1>, vector<16x16xi32>
    %cst_11 = arith.constant dense<2147483647> : vector<16xi32>
    %29 = vector.multi_reduction <minsi>, %28, %cst_11 [1] : vector<16x16xi32> to vector<16xi32>
    %30 = vector.shape_cast %29 : vector<16xi32> to vector<16x1xi32>
    %31 = vector.broadcast %30 : vector<16x1xi32> to vector<16x16xi32>
    %32 = arith.cmpi eq, %18, %31 : vector<16x16xi32>
    %cst_12 = arith.constant 0xFF800000 : f32
    %33 = vector.broadcast %cst_12 : f32 to vector<16x16xf32>
    %34 = arith.select %32, %33, %22 : vector<16x16xi1>, vector<16x16xf32>
    %cst_13 = arith.constant dense<0xFF800000> : vector<16xf32>
    %35 = vector.multi_reduction <maximumf>, %34, %cst_13 [1] : vector<16x16xf32> to vector<16xf32>
    %36 = vector.shape_cast %35 : vector<16xf32> to vector<16x1xf32>
    %37 = vector.broadcast %36 : vector<16x1xf32> to vector<16x16xf32>
    %38 = arith.cmpf oeq, %34, %37 : vector<16x16xf32>
    %c16_i32_14 = arith.constant 16 : i32
    %39 = vector.broadcast %c16_i32_14 : i32 to vector<16x16xi32>
    %40 = arith.select %38, %18, %39 : vector<16x16xi1>, vector<16x16xi32>
    %cst_15 = arith.constant dense<2147483647> : vector<16xi32>
    %41 = vector.multi_reduction <minsi>, %40, %cst_15 [1] : vector<16x16xi32> to vector<16xi32>
    %42 = vector.shape_cast %41 : vector<16xi32> to vector<16x1xi32>
    %43 = vector.broadcast %42 : vector<16x1xi32> to vector<16x16xi32>
    %44 = arith.cmpi eq, %18, %43 : vector<16x16xi32>
    %cst_16 = arith.constant 0xFF800000 : f32
    %45 = vector.broadcast %cst_16 : f32 to vector<16x16xf32>
    %46 = arith.select %44, %45, %34 : vector<16x16xi1>, vector<16x16xf32>
    %cst_17 = arith.constant dense<0xFF800000> : vector<16xf32>
    %47 = vector.multi_reduction <maximumf>, %46, %cst_17 [1] : vector<16x16xf32> to vector<16xf32>
    %48 = vector.shape_cast %47 : vector<16xf32> to vector<16x1xf32>
    %49 = vector.broadcast %48 : vector<16x1xf32> to vector<16x16xf32>
    %50 = arith.cmpf oeq, %46, %49 : vector<16x16xf32>
    %c16_i32_18 = arith.constant 16 : i32
    %51 = vector.broadcast %c16_i32_18 : i32 to vector<16x16xi32>
    %52 = arith.select %50, %18, %51 : vector<16x16xi1>, vector<16x16xi32>
    %cst_19 = arith.constant dense<2147483647> : vector<16xi32>
    %53 = vector.multi_reduction <minsi>, %52, %cst_19 [1] : vector<16x16xi32> to vector<16xi32>
    %54 = vector.shape_cast %53 : vector<16xi32> to vector<16x1xi32>
    %55 = vector.broadcast %54 : vector<16x1xi32> to vector<16x16xi32>
    %56 = arith.cmpi eq, %18, %55 : vector<16x16xi32>
    %cst_20 = arith.constant 0xFF800000 : f32
    %57 = vector.broadcast %cst_20 : f32 to vector<16x16xf32>
    %58 = arith.select %56, %57, %46 : vector<16x16xi1>, vector<16x16xf32>
    %cst_21 = arith.constant dense<0xFF800000> : vector<16xf32>
    %59 = vector.multi_reduction <maximumf>, %58, %cst_21 [1] : vector<16x16xf32> to vector<16xf32>
    %60 = vector.shape_cast %59 : vector<16xf32> to vector<16x1xf32>
    %61 = vector.broadcast %60 : vector<16x1xf32> to vector<16x16xf32>
    %62 = arith.cmpf oeq, %58, %61 : vector<16x16xf32>
    %c16_i32_22 = arith.constant 16 : i32
    %63 = vector.broadcast %c16_i32_22 : i32 to vector<16x16xi32>
    %64 = arith.select %62, %18, %63 : vector<16x16xi1>, vector<16x16xi32>
    %cst_23 = arith.constant dense<2147483647> : vector<16xi32>
    %65 = vector.multi_reduction <minsi>, %64, %cst_23 [1] : vector<16x16xi32> to vector<16xi32>
    %66 = vector.shape_cast %65 : vector<16xi32> to vector<16x1xi32>
    %67 = tpu.concatenate %30, %42, %54, %66 in 1 : vector<16x1xi32>, vector<16x1xi32>, vector<16x1xi32>, vector<16x1xi32> -> vector<16x4xi32>
    %c0_24 = arith.constant 0 : index
    %c0_25 = arith.constant 0 : index
    %c0_26 = arith.constant 0 : index
    %68 = vector.load %arg4[%c0_24, %c0_25, %c0_26] : memref<1x16x4xi32, #tpu.memory_space<vmem>>, vector<1x16x4xi32>
    %69 = vector.shape_cast %68 : vector<1x16x4xi32> to vector<16x4xi32>
    %70 = vector.shape_cast %67 : vector<16x4xi32> to vector<1x16x4xi32>
    tpu.vector_store %arg4[%c0_24, %c0_25, %c0_26], %70 {strides = array<i32>} : memref<1x16x4xi32, #tpu.memory_space<vmem>>, vector<1x16x4xi32>,
    return
  }
  func.func @transform_0(%arg0: i32, %arg1: i32) -> (i32, i32, i32) {
    %c0_i32 = arith.constant 0 : i32
    %c0_i32_0 = arith.constant 0 : i32
    return %arg0, %arg1, %c0_i32 : i32, i32, i32
  }
  func.func @transform_1(%arg0: i32, %arg1: i32) -> (i32, i32, i32) {
    %c0_i32 = arith.constant 0 : i32
    %c0_i32_0 = arith.constant 0 : i32
    %c0_i32_1 = arith.constant 0 : i32
    return %arg0, %c0_i32, %c0_i32_0 : i32, i32, i32
  }
  func.func @transform_2(%arg0: i32, %arg1: i32) -> (i32, i32, i32) {
    %c0_i32 = arith.constant 0 : i32
    %c0_i32_0 = arith.constant 0 : i32
    return %arg0, %arg1, %c0_i32 : i32, i32, i32
  }
}

module attributes {stable_mosaic.version = 11 : i64} {
  func.func @_conv6_pool_kernel(%arg0: i32, %arg1: memref<1x16x64xf32, #tpu.memory_space<vmem>>, %arg2: memref<64x256xf32, #tpu.memory_space<vmem>>, %arg3: memref<1x256xf32, #tpu.memory_space<vmem>>, %arg4: memref<1x1x512xf32, #tpu.memory_space<vmem>>) attributes {dimension_semantics = [#tpu.dimension_semantics<parallel>], iteration_bounds = array<i64: 2>, scalar_prefetch = 0 : i64, scratch_operands = 0 : i64, tpu.core_type = #tpu.core_type<tc>, window_params = [{transform_indices = @transform_0, window_bounds = array<i64: 1, 16, 64>}, {pipeline_mode = #tpu.pipeline_mode<synchronous>, transform_indices = @transform_1, window_bounds = array<i64: 64, 256>}, {pipeline_mode = #tpu.pipeline_mode<synchronous>, transform_indices = @transform_2, window_bounds = array<i64: 1, 256>}, {transform_indices = @transform_3, window_bounds = array<i64: 1, 1, 512>}]} {
    %c0 = arith.constant 0 : index
    %c0_0 = arith.constant 0 : index
    %c0_1 = arith.constant 0 : index
    %0 = vector.load %arg1[%c0, %c0_0, %c0_1] : memref<1x16x64xf32, #tpu.memory_space<vmem>>, vector<1x16x64xf32>
    %1 = vector.shape_cast %0 : vector<1x16x64xf32> to vector<16x64xf32>
    %c0_2 = arith.constant 0 : index
    %c0_3 = arith.constant 0 : index
    %2 = vector.load %arg2[%c0_2, %c0_3] : memref<64x256xf32, #tpu.memory_space<vmem>>, vector<64x256xf32>
    %cst = arith.constant dense<0.000000e+00> : vector<16x256xf32>
    %3 = tpu.matmul %1, %2, %cst {dimension_numbers = #tpu.dot_dimension_numbers<[1], [0], [0], [1], [0, 0, 1, 1], [], []>} : vector<16x64xf32>, vector<64x256xf32>, vector<16x256xf32> -> vector<16x256xf32>
    %c0_4 = arith.constant 0 : index
    %c0_5 = arith.constant 0 : index
    %4 = vector.load %arg3[%c0_4, %c0_5] : memref<1x256xf32, #tpu.memory_space<vmem>>, vector<1x256xf32>
    %5 = vector.broadcast %4 : vector<1x256xf32> to vector<16x256xf32>
    %6 = arith.addf %3, %5 : vector<16x256xf32>
    %cst_6 = arith.constant 0.000000e+00 : f32
    %7 = vector.broadcast %cst_6 : f32 to vector<16x256xf32>
    %8 = arith.cmpf ogt, %6, %7 : vector<16x256xf32>
    %cst_7 = arith.constant 2.000000e-01 : f32
    %9 = vector.broadcast %cst_7 : f32 to vector<16x256xf32>
    %10 = arith.mulf %9, %6 : vector<16x256xf32>
    %11 = arith.select %8, %6, %10 : vector<16x256xi1>, vector<16x256xf32>
    %cst_8 = arith.constant dense<0xFF800000> : vector<256xf32>
    %12 = vector.multi_reduction <maximumf>, %11, %cst_8 [0] : vector<16x256xf32> to vector<256xf32>
    %13 = vector.shape_cast %12 : vector<256xf32> to vector<1x256xf32>
    %cst_9 = arith.constant dense<0.000000e+00> : vector<256xf32>
    %14 = vector.multi_reduction <add>, %11, %cst_9 [0] : vector<16x256xf32> to vector<256xf32>
    %15 = vector.shape_cast %14 : vector<256xf32> to vector<1x256xf32>
    %cst_10 = arith.constant 1.600000e+01 : f32
    %16 = vector.broadcast %cst_10 : f32 to vector<1x256xf32>
    %17 = arith.divf %15, %16 : vector<1x256xf32>
    %18 = tpu.concatenate %13, %17 in 1 : vector<1x256xf32>, vector<1x256xf32> -> vector<1x512xf32>
    %19 = vector.shape_cast %18 : vector<1x512xf32> to vector<1x1x512xf32>
    %c0_11 = arith.constant 0 : index
    %c0_12 = arith.constant 0 : index
    %c0_13 = arith.constant 0 : index
    %20 = vector.load %arg4[%c0_11, %c0_12, %c0_13] : memref<1x1x512xf32, #tpu.memory_space<vmem>>, vector<1x1x512xf32>
    tpu.vector_store %arg4[%c0_11, %c0_12, %c0_13], %19 {strides = array<i32>} : memref<1x1x512xf32, #tpu.memory_space<vmem>>, vector<1x1x512xf32>,
    return
  }
  func.func @transform_0(%arg0: i32) -> (i32, i32, i32) {
    %c0_i32 = arith.constant 0 : i32
    %c0_i32_0 = arith.constant 0 : i32
    %c0_i32_1 = arith.constant 0 : i32
    return %arg0, %c0_i32, %c0_i32_0 : i32, i32, i32
  }
  func.func @transform_1(%arg0: i32) -> (i32, i32) {
    %c0_i32 = arith.constant 0 : i32
    %c0_i32_0 = arith.constant 0 : i32
    %c0_i32_1 = arith.constant 0 : i32
    return %c0_i32, %c0_i32_0 : i32, i32
  }
  func.func @transform_2(%arg0: i32) -> (i32, i32) {
    %c0_i32 = arith.constant 0 : i32
    %c0_i32_0 = arith.constant 0 : i32
    %c0_i32_1 = arith.constant 0 : i32
    return %c0_i32, %c0_i32_0 : i32, i32
  }
  func.func @transform_3(%arg0: i32) -> (i32, i32, i32) {
    %c0_i32 = arith.constant 0 : i32
    %c0_i32_0 = arith.constant 0 : i32
    %c0_i32_1 = arith.constant 0 : i32
    return %arg0, %c0_i32, %c0_i32_0 : i32, i32, i32
  }
}

module attributes {stable_mosaic.version = 11 : i64} {
  func.func @_conv5_kernel(%arg0: i32, %arg1: memref<32x4x64xf32, #tpu.memory_space<vmem>>, %arg2: memref<32x4x64xf32, #tpu.memory_space<vmem>>, %arg3: memref<32x4x64xf32, #tpu.memory_space<vmem>>, %arg4: memref<32x4x64xf32, #tpu.memory_space<vmem>>, %arg5: memref<32x64xf32, #tpu.memory_space<vmem>>, %arg6: memref<32x64xf32, #tpu.memory_space<vmem>>, %arg7: memref<32x64xf32, #tpu.memory_space<vmem>>, %arg8: memref<32x64xf32, #tpu.memory_space<vmem>>, %arg9: memref<256x64xf32, #tpu.memory_space<vmem>>, %arg10: memref<1x64xf32, #tpu.memory_space<vmem>>, %arg11: memref<32x64xf32, #tpu.memory_space<vmem>>) attributes {dimension_semantics = [#tpu.dimension_semantics<parallel>], iteration_bounds = array<i64: 1>, scalar_prefetch = 0 : i64, scratch_operands = 0 : i64, tpu.core_type = #tpu.core_type<tc>, window_params = [{transform_indices = @transform_0, window_bounds = array<i64: 32, 4, 64>}, {transform_indices = @transform_1, window_bounds = array<i64: 32, 4, 64>}, {transform_indices = @transform_2, window_bounds = array<i64: 32, 4, 64>}, {transform_indices = @transform_3, window_bounds = array<i64: 32, 4, 64>}, {transform_indices = @transform_4, window_bounds = array<i64: 32, 64>}, {transform_indices = @transform_5, window_bounds = array<i64: 32, 64>}, {transform_indices = @transform_6, window_bounds = array<i64: 32, 64>}, {transform_indices = @transform_7, window_bounds = array<i64: 32, 64>}, {pipeline_mode = #tpu.pipeline_mode<synchronous>, transform_indices = @transform_8, window_bounds = array<i64: 256, 64>}, {pipeline_mode = #tpu.pipeline_mode<synchronous>, transform_indices = @transform_9, window_bounds = array<i64: 1, 64>}, {transform_indices = @transform_10, window_bounds = array<i64: 32, 64>}]} {
    %c0 = arith.constant 0 : index
    %c0_0 = arith.constant 0 : index
    %0 = vector.load %arg9[%c0, %c0_0] : memref<256x64xf32, #tpu.memory_space<vmem>>, vector<256x64xf32>
    %c0_1 = arith.constant 0 : index
    %c0_2 = arith.constant 0 : index
    %1 = vector.load %arg10[%c0_1, %c0_2] : memref<1x64xf32, #tpu.memory_space<vmem>>, vector<1x64xf32>
    %c0_3 = arith.constant 0 : index
    %c0_4 = arith.constant 0 : index
    %2 = vector.load %arg5[%c0_3, %c0_4] : memref<32x64xf32, #tpu.memory_space<vmem>>, vector<32x64xf32>
    %c0_5 = arith.constant 0 : index
    %c0_6 = arith.constant 0 : index
    %3 = vector.load %arg6[%c0_5, %c0_6] : memref<32x64xf32, #tpu.memory_space<vmem>>, vector<32x64xf32>
    %c0_7 = arith.constant 0 : index
    %c0_8 = arith.constant 0 : index
    %4 = vector.load %arg7[%c0_7, %c0_8] : memref<32x64xf32, #tpu.memory_space<vmem>>, vector<32x64xf32>
    %c0_9 = arith.constant 0 : index
    %c0_10 = arith.constant 0 : index
    %5 = vector.load %arg8[%c0_9, %c0_10] : memref<32x64xf32, #tpu.memory_space<vmem>>, vector<32x64xf32>
    %c0_11 = arith.constant 0 : index
    %c0_12 = arith.constant 0 : index
    %c0_13 = arith.constant 0 : index
    %6 = vector.load %arg1[%c0_11, %c0_12, %c0_13] : memref<32x4x64xf32, #tpu.memory_space<vmem>>, vector<32x1x64xf32>
    %7 = vector.shape_cast %6 : vector<32x1x64xf32> to vector<32x64xf32>
    %8 = arith.addf %7, %2 : vector<32x64xf32>
    %cst = arith.constant 0.000000e+00 : f32
    %9 = vector.broadcast %cst : f32 to vector<32x64xf32>
    %10 = arith.cmpf ogt, %8, %9 : vector<32x64xf32>
    %cst_14 = arith.constant 2.000000e-01 : f32
    %11 = vector.broadcast %cst_14 : f32 to vector<32x64xf32>
    %12 = arith.mulf %11, %8 : vector<32x64xf32>
    %13 = arith.select %10, %8, %12 : vector<32x64xi1>, vector<32x64xf32>
    %c0_15 = arith.constant 0 : index
    %c0_16 = arith.constant 0 : index
    %c0_17 = arith.constant 0 : index
    %14 = vector.load %arg2[%c0_15, %c0_16, %c0_17] : memref<32x4x64xf32, #tpu.memory_space<vmem>>, vector<32x1x64xf32>
    %15 = vector.shape_cast %14 : vector<32x1x64xf32> to vector<32x64xf32>
    %16 = arith.addf %15, %3 : vector<32x64xf32>
    %cst_18 = arith.constant 0.000000e+00 : f32
    %17 = vector.broadcast %cst_18 : f32 to vector<32x64xf32>
    %18 = arith.cmpf ogt, %16, %17 : vector<32x64xf32>
    %cst_19 = arith.constant 2.000000e-01 : f32
    %19 = vector.broadcast %cst_19 : f32 to vector<32x64xf32>
    %20 = arith.mulf %19, %16 : vector<32x64xf32>
    %21 = arith.select %18, %16, %20 : vector<32x64xi1>, vector<32x64xf32>
    %c0_20 = arith.constant 0 : index
    %c0_21 = arith.constant 0 : index
    %c0_22 = arith.constant 0 : index
    %22 = vector.load %arg3[%c0_20, %c0_21, %c0_22] : memref<32x4x64xf32, #tpu.memory_space<vmem>>, vector<32x1x64xf32>
    %23 = vector.shape_cast %22 : vector<32x1x64xf32> to vector<32x64xf32>
    %24 = arith.addf %23, %4 : vector<32x64xf32>
    %cst_23 = arith.constant 0.000000e+00 : f32
    %25 = vector.broadcast %cst_23 : f32 to vector<32x64xf32>
    %26 = arith.cmpf ogt, %24, %25 : vector<32x64xf32>
    %cst_24 = arith.constant 2.000000e-01 : f32
    %27 = vector.broadcast %cst_24 : f32 to vector<32x64xf32>
    %28 = arith.mulf %27, %24 : vector<32x64xf32>
    %29 = arith.select %26, %24, %28 : vector<32x64xi1>, vector<32x64xf32>
    %c0_25 = arith.constant 0 : index
    %c0_26 = arith.constant 0 : index
    %c0_27 = arith.constant 0 : index
    %30 = vector.load %arg4[%c0_25, %c0_26, %c0_27] : memref<32x4x64xf32, #tpu.memory_space<vmem>>, vector<32x1x64xf32>
    %31 = vector.shape_cast %30 : vector<32x1x64xf32> to vector<32x64xf32>
    %32 = arith.addf %31, %5 : vector<32x64xf32>
    %cst_28 = arith.constant 0.000000e+00 : f32
    %33 = vector.broadcast %cst_28 : f32 to vector<32x64xf32>
    %34 = arith.cmpf ogt, %32, %33 : vector<32x64xf32>
    %cst_29 = arith.constant 2.000000e-01 : f32
    %35 = vector.broadcast %cst_29 : f32 to vector<32x64xf32>
    %36 = arith.mulf %35, %32 : vector<32x64xf32>
    %37 = arith.select %34, %32, %36 : vector<32x64xi1>, vector<32x64xf32>
    %38 = tpu.concatenate %13, %21, %29, %37 in 1 : vector<32x64xf32>, vector<32x64xf32>, vector<32x64xf32>, vector<32x64xf32> -> vector<32x256xf32>
    %cst_30 = arith.constant dense<0.000000e+00> : vector<32x64xf32>
    %39 = tpu.matmul %38, %0, %cst_30 {dimension_numbers = #tpu.dot_dimension_numbers<[1], [0], [0], [1], [0, 0, 1, 1], [], []>} : vector<32x256xf32>, vector<256x64xf32>, vector<32x64xf32> -> vector<32x64xf32>
    %40 = vector.broadcast %1 : vector<1x64xf32> to vector<32x64xf32>
    %41 = arith.addf %39, %40 : vector<32x64xf32>
    %cst_31 = arith.constant 0.000000e+00 : f32
    %42 = vector.broadcast %cst_31 : f32 to vector<32x64xf32>
    %43 = arith.cmpf ogt, %41, %42 : vector<32x64xf32>
    %cst_32 = arith.constant 2.000000e-01 : f32
    %44 = vector.broadcast %cst_32 : f32 to vector<32x64xf32>
    %45 = arith.mulf %44, %41 : vector<32x64xf32>
    %46 = arith.select %43, %41, %45 : vector<32x64xi1>, vector<32x64xf32>
    %c0_33 = arith.constant 0 : index
    %c1 = arith.constant 1 : index
    %c0_34 = arith.constant 0 : index
    %47 = vector.load %arg1[%c0_33, %c1, %c0_34] : memref<32x4x64xf32, #tpu.memory_space<vmem>>, vector<32x1x64xf32>
    %48 = vector.shape_cast %47 : vector<32x1x64xf32> to vector<32x64xf32>
    %49 = arith.addf %48, %2 : vector<32x64xf32>
    %cst_35 = arith.constant 0.000000e+00 : f32
    %50 = vector.broadcast %cst_35 : f32 to vector<32x64xf32>
    %51 = arith.cmpf ogt, %49, %50 : vector<32x64xf32>
    %cst_36 = arith.constant 2.000000e-01 : f32
    %52 = vector.broadcast %cst_36 : f32 to vector<32x64xf32>
    %53 = arith.mulf %52, %49 : vector<32x64xf32>
    %54 = arith.select %51, %49, %53 : vector<32x64xi1>, vector<32x64xf32>
    %c0_37 = arith.constant 0 : index
    %c1_38 = arith.constant 1 : index
    %c0_39 = arith.constant 0 : index
    %55 = vector.load %arg2[%c0_37, %c1_38, %c0_39] : memref<32x4x64xf32, #tpu.memory_space<vmem>>, vector<32x1x64xf32>
    %56 = vector.shape_cast %55 : vector<32x1x64xf32> to vector<32x64xf32>
    %57 = arith.addf %56, %3 : vector<32x64xf32>
    %cst_40 = arith.constant 0.000000e+00 : f32
    %58 = vector.broadcast %cst_40 : f32 to vector<32x64xf32>
    %59 = arith.cmpf ogt, %57, %58 : vector<32x64xf32>
    %cst_41 = arith.constant 2.000000e-01 : f32
    %60 = vector.broadcast %cst_41 : f32 to vector<32x64xf32>
    %61 = arith.mulf %60, %57 : vector<32x64xf32>
    %62 = arith.select %59, %57, %61 : vector<32x64xi1>, vector<32x64xf32>
    %c0_42 = arith.constant 0 : index
    %c1_43 = arith.constant 1 : index
    %c0_44 = arith.constant 0 : index
    %63 = vector.load %arg3[%c0_42, %c1_43, %c0_44] : memref<32x4x64xf32, #tpu.memory_space<vmem>>, vector<32x1x64xf32>
    %64 = vector.shape_cast %63 : vector<32x1x64xf32> to vector<32x64xf32>
    %65 = arith.addf %64, %4 : vector<32x64xf32>
    %cst_45 = arith.constant 0.000000e+00 : f32
    %66 = vector.broadcast %cst_45 : f32 to vector<32x64xf32>
    %67 = arith.cmpf ogt, %65, %66 : vector<32x64xf32>
    %cst_46 = arith.constant 2.000000e-01 : f32
    %68 = vector.broadcast %cst_46 : f32 to vector<32x64xf32>
    %69 = arith.mulf %68, %65 : vector<32x64xf32>
    %70 = arith.select %67, %65, %69 : vector<32x64xi1>, vector<32x64xf32>
    %c0_47 = arith.constant 0 : index
    %c1_48 = arith.constant 1 : index
    %c0_49 = arith.constant 0 : index
    %71 = vector.load %arg4[%c0_47, %c1_48, %c0_49] : memref<32x4x64xf32, #tpu.memory_space<vmem>>, vector<32x1x64xf32>
    %72 = vector.shape_cast %71 : vector<32x1x64xf32> to vector<32x64xf32>
    %73 = arith.addf %72, %5 : vector<32x64xf32>
    %cst_50 = arith.constant 0.000000e+00 : f32
    %74 = vector.broadcast %cst_50 : f32 to vector<32x64xf32>
    %75 = arith.cmpf ogt, %73, %74 : vector<32x64xf32>
    %cst_51 = arith.constant 2.000000e-01 : f32
    %76 = vector.broadcast %cst_51 : f32 to vector<32x64xf32>
    %77 = arith.mulf %76, %73 : vector<32x64xf32>
    %78 = arith.select %75, %73, %77 : vector<32x64xi1>, vector<32x64xf32>
    %79 = tpu.concatenate %54, %62, %70, %78 in 1 : vector<32x64xf32>, vector<32x64xf32>, vector<32x64xf32>, vector<32x64xf32> -> vector<32x256xf32>
    %cst_52 = arith.constant dense<0.000000e+00> : vector<32x64xf32>
    %80 = tpu.matmul %79, %0, %cst_52 {dimension_numbers = #tpu.dot_dimension_numbers<[1], [0], [0], [1], [0, 0, 1, 1], [], []>} : vector<32x256xf32>, vector<256x64xf32>, vector<32x64xf32> -> vector<32x64xf32>
    %81 = vector.broadcast %1 : vector<1x64xf32> to vector<32x64xf32>
    %82 = arith.addf %80, %81 : vector<32x64xf32>
    %cst_53 = arith.constant 0.000000e+00 : f32
    %83 = vector.broadcast %cst_53 : f32 to vector<32x64xf32>
    %84 = arith.cmpf ogt, %82, %83 : vector<32x64xf32>
    %cst_54 = arith.constant 2.000000e-01 : f32
    %85 = vector.broadcast %cst_54 : f32 to vector<32x64xf32>
    %86 = arith.mulf %85, %82 : vector<32x64xf32>
    %87 = arith.select %84, %82, %86 : vector<32x64xi1>, vector<32x64xf32>
    %88 = arith.maximumf %46, %87 : vector<32x64xf32>
    %c0_55 = arith.constant 0 : index
    %c2 = arith.constant 2 : index
    %c0_56 = arith.constant 0 : index
    %89 = vector.load %arg1[%c0_55, %c2, %c0_56] : memref<32x4x64xf32, #tpu.memory_space<vmem>>, vector<32x1x64xf32>
    %90 = vector.shape_cast %89 : vector<32x1x64xf32> to vector<32x64xf32>
    %91 = arith.addf %90, %2 : vector<32x64xf32>
    %cst_57 = arith.constant 0.000000e+00 : f32
    %92 = vector.broadcast %cst_57 : f32 to vector<32x64xf32>
    %93 = arith.cmpf ogt, %91, %92 : vector<32x64xf32>
    %cst_58 = arith.constant 2.000000e-01 : f32
    %94 = vector.broadcast %cst_58 : f32 to vector<32x64xf32>
    %95 = arith.mulf %94, %91 : vector<32x64xf32>
    %96 = arith.select %93, %91, %95 : vector<32x64xi1>, vector<32x64xf32>
    %c0_59 = arith.constant 0 : index
    %c2_60 = arith.constant 2 : index
    %c0_61 = arith.constant 0 : index
    %97 = vector.load %arg2[%c0_59, %c2_60, %c0_61] : memref<32x4x64xf32, #tpu.memory_space<vmem>>, vector<32x1x64xf32>
    %98 = vector.shape_cast %97 : vector<32x1x64xf32> to vector<32x64xf32>
    %99 = arith.addf %98, %3 : vector<32x64xf32>
    %cst_62 = arith.constant 0.000000e+00 : f32
    %100 = vector.broadcast %cst_62 : f32 to vector<32x64xf32>
    %101 = arith.cmpf ogt, %99, %100 : vector<32x64xf32>
    %cst_63 = arith.constant 2.000000e-01 : f32
    %102 = vector.broadcast %cst_63 : f32 to vector<32x64xf32>
    %103 = arith.mulf %102, %99 : vector<32x64xf32>
    %104 = arith.select %101, %99, %103 : vector<32x64xi1>, vector<32x64xf32>
    %c0_64 = arith.constant 0 : index
    %c2_65 = arith.constant 2 : index
    %c0_66 = arith.constant 0 : index
    %105 = vector.load %arg3[%c0_64, %c2_65, %c0_66] : memref<32x4x64xf32, #tpu.memory_space<vmem>>, vector<32x1x64xf32>
    %106 = vector.shape_cast %105 : vector<32x1x64xf32> to vector<32x64xf32>
    %107 = arith.addf %106, %4 : vector<32x64xf32>
    %cst_67 = arith.constant 0.000000e+00 : f32
    %108 = vector.broadcast %cst_67 : f32 to vector<32x64xf32>
    %109 = arith.cmpf ogt, %107, %108 : vector<32x64xf32>
    %cst_68 = arith.constant 2.000000e-01 : f32
    %110 = vector.broadcast %cst_68 : f32 to vector<32x64xf32>
    %111 = arith.mulf %110, %107 : vector<32x64xf32>
    %112 = arith.select %109, %107, %111 : vector<32x64xi1>, vector<32x64xf32>
    %c0_69 = arith.constant 0 : index
    %c2_70 = arith.constant 2 : index
    %c0_71 = arith.constant 0 : index
    %113 = vector.load %arg4[%c0_69, %c2_70, %c0_71] : memref<32x4x64xf32, #tpu.memory_space<vmem>>, vector<32x1x64xf32>
    %114 = vector.shape_cast %113 : vector<32x1x64xf32> to vector<32x64xf32>
    %115 = arith.addf %114, %5 : vector<32x64xf32>
    %cst_72 = arith.constant 0.000000e+00 : f32
    %116 = vector.broadcast %cst_72 : f32 to vector<32x64xf32>
    %117 = arith.cmpf ogt, %115, %116 : vector<32x64xf32>
    %cst_73 = arith.constant 2.000000e-01 : f32
    %118 = vector.broadcast %cst_73 : f32 to vector<32x64xf32>
    %119 = arith.mulf %118, %115 : vector<32x64xf32>
    %120 = arith.select %117, %115, %119 : vector<32x64xi1>, vector<32x64xf32>
    %121 = tpu.concatenate %96, %104, %112, %120 in 1 : vector<32x64xf32>, vector<32x64xf32>, vector<32x64xf32>, vector<32x64xf32> -> vector<32x256xf32>
    %cst_74 = arith.constant dense<0.000000e+00> : vector<32x64xf32>
    %122 = tpu.matmul %121, %0, %cst_74 {dimension_numbers = #tpu.dot_dimension_numbers<[1], [0], [0], [1], [0, 0, 1, 1], [], []>} : vector<32x256xf32>, vector<256x64xf32>, vector<32x64xf32> -> vector<32x64xf32>
    %123 = vector.broadcast %1 : vector<1x64xf32> to vector<32x64xf32>
    %124 = arith.addf %122, %123 : vector<32x64xf32>
    %cst_75 = arith.constant 0.000000e+00 : f32
    %125 = vector.broadcast %cst_75 : f32 to vector<32x64xf32>
    %126 = arith.cmpf ogt, %124, %125 : vector<32x64xf32>
    %cst_76 = arith.constant 2.000000e-01 : f32
    %127 = vector.broadcast %cst_76 : f32 to vector<32x64xf32>
    %128 = arith.mulf %127, %124 : vector<32x64xf32>
    %129 = arith.select %126, %124, %128 : vector<32x64xi1>, vector<32x64xf32>
    %130 = arith.maximumf %88, %129 : vector<32x64xf32>
    %c0_77 = arith.constant 0 : index
    %c3 = arith.constant 3 : index
    %c0_78 = arith.constant 0 : index
    %131 = vector.load %arg1[%c0_77, %c3, %c0_78] : memref<32x4x64xf32, #tpu.memory_space<vmem>>, vector<32x1x64xf32>
    %132 = vector.shape_cast %131 : vector<32x1x64xf32> to vector<32x64xf32>
    %133 = arith.addf %132, %2 : vector<32x64xf32>
    %cst_79 = arith.constant 0.000000e+00 : f32
    %134 = vector.broadcast %cst_79 : f32 to vector<32x64xf32>
    %135 = arith.cmpf ogt, %133, %134 : vector<32x64xf32>
    %cst_80 = arith.constant 2.000000e-01 : f32
    %136 = vector.broadcast %cst_80 : f32 to vector<32x64xf32>
    %137 = arith.mulf %136, %133 : vector<32x64xf32>
    %138 = arith.select %135, %133, %137 : vector<32x64xi1>, vector<32x64xf32>
    %c0_81 = arith.constant 0 : index
    %c3_82 = arith.constant 3 : index
    %c0_83 = arith.constant 0 : index
    %139 = vector.load %arg2[%c0_81, %c3_82, %c0_83] : memref<32x4x64xf32, #tpu.memory_space<vmem>>, vector<32x1x64xf32>
    %140 = vector.shape_cast %139 : vector<32x1x64xf32> to vector<32x64xf32>
    %141 = arith.addf %140, %3 : vector<32x64xf32>
    %cst_84 = arith.constant 0.000000e+00 : f32
    %142 = vector.broadcast %cst_84 : f32 to vector<32x64xf32>
    %143 = arith.cmpf ogt, %141, %142 : vector<32x64xf32>
    %cst_85 = arith.constant 2.000000e-01 : f32
    %144 = vector.broadcast %cst_85 : f32 to vector<32x64xf32>
    %145 = arith.mulf %144, %141 : vector<32x64xf32>
    %146 = arith.select %143, %141, %145 : vector<32x64xi1>, vector<32x64xf32>
    %c0_86 = arith.constant 0 : index
    %c3_87 = arith.constant 3 : index
    %c0_88 = arith.constant 0 : index
    %147 = vector.load %arg3[%c0_86, %c3_87, %c0_88] : memref<32x4x64xf32, #tpu.memory_space<vmem>>, vector<32x1x64xf32>
    %148 = vector.shape_cast %147 : vector<32x1x64xf32> to vector<32x64xf32>
    %149 = arith.addf %148, %4 : vector<32x64xf32>
    %cst_89 = arith.constant 0.000000e+00 : f32
    %150 = vector.broadcast %cst_89 : f32 to vector<32x64xf32>
    %151 = arith.cmpf ogt, %149, %150 : vector<32x64xf32>
    %cst_90 = arith.constant 2.000000e-01 : f32
    %152 = vector.broadcast %cst_90 : f32 to vector<32x64xf32>
    %153 = arith.mulf %152, %149 : vector<32x64xf32>
    %154 = arith.select %151, %149, %153 : vector<32x64xi1>, vector<32x64xf32>
    %c0_91 = arith.constant 0 : index
    %c3_92 = arith.constant 3 : index
    %c0_93 = arith.constant 0 : index
    %155 = vector.load %arg4[%c0_91, %c3_92, %c0_93] : memref<32x4x64xf32, #tpu.memory_space<vmem>>, vector<32x1x64xf32>
    %156 = vector.shape_cast %155 : vector<32x1x64xf32> to vector<32x64xf32>
    %157 = arith.addf %156, %5 : vector<32x64xf32>
    %cst_94 = arith.constant 0.000000e+00 : f32
    %158 = vector.broadcast %cst_94 : f32 to vector<32x64xf32>
    %159 = arith.cmpf ogt, %157, %158 : vector<32x64xf32>
    %cst_95 = arith.constant 2.000000e-01 : f32
    %160 = vector.broadcast %cst_95 : f32 to vector<32x64xf32>
    %161 = arith.mulf %160, %157 : vector<32x64xf32>
    %162 = arith.select %159, %157, %161 : vector<32x64xi1>, vector<32x64xf32>
    %163 = tpu.concatenate %138, %146, %154, %162 in 1 : vector<32x64xf32>, vector<32x64xf32>, vector<32x64xf32>, vector<32x64xf32> -> vector<32x256xf32>
    %cst_96 = arith.constant dense<0.000000e+00> : vector<32x64xf32>
    %164 = tpu.matmul %163, %0, %cst_96 {dimension_numbers = #tpu.dot_dimension_numbers<[1], [0], [0], [1], [0, 0, 1, 1], [], []>} : vector<32x256xf32>, vector<256x64xf32>, vector<32x64xf32> -> vector<32x64xf32>
    %165 = vector.broadcast %1 : vector<1x64xf32> to vector<32x64xf32>
    %166 = arith.addf %164, %165 : vector<32x64xf32>
    %cst_97 = arith.constant 0.000000e+00 : f32
    %167 = vector.broadcast %cst_97 : f32 to vector<32x64xf32>
    %168 = arith.cmpf ogt, %166, %167 : vector<32x64xf32>
    %cst_98 = arith.constant 2.000000e-01 : f32
    %169 = vector.broadcast %cst_98 : f32 to vector<32x64xf32>
    %170 = arith.mulf %169, %166 : vector<32x64xf32>
    %171 = arith.select %168, %166, %170 : vector<32x64xi1>, vector<32x64xf32>
    %172 = arith.maximumf %130, %171 : vector<32x64xf32>
    %c0_99 = arith.constant 0 : index
    %c0_100 = arith.constant 0 : index
    %173 = vector.load %arg11[%c0_99, %c0_100] : memref<32x64xf32, #tpu.memory_space<vmem>>, vector<32x64xf32>
    tpu.vector_store %arg11[%c0_99, %c0_100], %172 {strides = array<i32>} : memref<32x64xf32, #tpu.memory_space<vmem>>, vector<32x64xf32>,
    return
  }
  func.func @transform_0(%arg0: i32) -> (i32, i32, i32) {
    %c0_i32 = arith.constant 0 : i32
    %c0_i32_0 = arith.constant 0 : i32
    %c0_i32_1 = arith.constant 0 : i32
    return %arg0, %c0_i32, %c0_i32_0 : i32, i32, i32
  }
  func.func @transform_1(%arg0: i32) -> (i32, i32, i32) {
    %c0_i32 = arith.constant 0 : i32
    %c0_i32_0 = arith.constant 0 : i32
    %c0_i32_1 = arith.constant 0 : i32
    return %arg0, %c0_i32, %c0_i32_0 : i32, i32, i32
  }
  func.func @transform_2(%arg0: i32) -> (i32, i32, i32) {
    %c0_i32 = arith.constant 0 : i32
    %c0_i32_0 = arith.constant 0 : i32
    %c0_i32_1 = arith.constant 0 : i32
    return %arg0, %c0_i32, %c0_i32_0 : i32, i32, i32
  }
  func.func @transform_3(%arg0: i32) -> (i32, i32, i32) {
    %c0_i32 = arith.constant 0 : i32
    %c0_i32_0 = arith.constant 0 : i32
    %c0_i32_1 = arith.constant 0 : i32
    return %arg0, %c0_i32, %c0_i32_0 : i32, i32, i32
  }
  func.func @transform_4(%arg0: i32) -> (i32, i32) {
    %c0_i32 = arith.constant 0 : i32
    %c0_i32_0 = arith.constant 0 : i32
    return %arg0, %c0_i32 : i32, i32
  }
  func.func @transform_5(%arg0: i32) -> (i32, i32) {
    %c0_i32 = arith.constant 0 : i32
    %c0_i32_0 = arith.constant 0 : i32
    return %arg0, %c0_i32 : i32, i32
  }
  func.func @transform_6(%arg0: i32) -> (i32, i32) {
    %c0_i32 = arith.constant 0 : i32
    %c0_i32_0 = arith.constant 0 : i32
    return %arg0, %c0_i32 : i32, i32
  }
  func.func @transform_7(%arg0: i32) -> (i32, i32) {
    %c0_i32 = arith.constant 0 : i32
    %c0_i32_0 = arith.constant 0 : i32
    return %arg0, %c0_i32 : i32, i32
  }
  func.func @transform_8(%arg0: i32) -> (i32, i32) {
    %c0_i32 = arith.constant 0 : i32
    %c0_i32_0 = arith.constant 0 : i32
    %c0_i32_1 = arith.constant 0 : i32
    return %c0_i32, %c0_i32_0 : i32, i32
  }
  func.func @transform_9(%arg0: i32) -> (i32, i32) {
    %c0_i32 = arith.constant 0 : i32
    %c0_i32_0 = arith.constant 0 : i32
    %c0_i32_1 = arith.constant 0 : i32
    return %c0_i32, %c0_i32_0 : i32, i32
  }
  func.func @transform_10(%arg0: i32) -> (i32, i32) {
    %c0_i32 = arith.constant 0 : i32
    %c0_i32_0 = arith.constant 0 : i32
    return %arg0, %c0_i32 : i32, i32
  }
}

module attributes {stable_mosaic.version = 11 : i64} {
  func.func @_mlp_kernel(%arg0: memref<2x512xf32, #tpu.memory_space<vmem>>, %arg1: memref<512x256xf32, #tpu.memory_space<vmem>>, %arg2: memref<1x256xf32, #tpu.memory_space<vmem>>, %arg3: memref<256x64xf32, #tpu.memory_space<vmem>>, %arg4: memref<1x64xf32, #tpu.memory_space<vmem>>, %arg5: memref<64x40xf32, #tpu.memory_space<vmem>>, %arg6: memref<1x40xf32, #tpu.memory_space<vmem>>, %arg7: memref<2x40xf32, #tpu.memory_space<vmem>>) attributes {dimension_semantics = [], scalar_prefetch = 0 : i64, scratch_operands = 0 : i64, tpu.core_type = #tpu.core_type<tc>} {
    %c0 = arith.constant 0 : index
    %c0_0 = arith.constant 0 : index
    %0 = vector.load %arg0[%c0, %c0_0] : memref<2x512xf32, #tpu.memory_space<vmem>>, vector<2x512xf32>
    %c0_1 = arith.constant 0 : index
    %c0_2 = arith.constant 0 : index
    %1 = vector.load %arg1[%c0_1, %c0_2] : memref<512x256xf32, #tpu.memory_space<vmem>>, vector<512x256xf32>
    %cst = arith.constant dense<0.000000e+00> : vector<2x256xf32>
    %2 = tpu.matmul %0, %1, %cst {dimension_numbers = #tpu.dot_dimension_numbers<[1], [0], [0], [1], [0, 0, 1, 1], [], []>} : vector<2x512xf32>, vector<512x256xf32>, vector<2x256xf32> -> vector<2x256xf32>
    %c0_3 = arith.constant 0 : index
    %c0_4 = arith.constant 0 : index
    %3 = vector.load %arg2[%c0_3, %c0_4] : memref<1x256xf32, #tpu.memory_space<vmem>>, vector<1x256xf32>
    %4 = vector.broadcast %3 : vector<1x256xf32> to vector<2x256xf32>
    %5 = arith.addf %2, %4 : vector<2x256xf32>
    %cst_5 = arith.constant 0.000000e+00 : f32
    %6 = vector.broadcast %cst_5 : f32 to vector<2x256xf32>
    %7 = arith.cmpf ogt, %5, %6 : vector<2x256xf32>
    %cst_6 = arith.constant 0.00999999977 : f32
    %8 = vector.broadcast %cst_6 : f32 to vector<2x256xf32>
    %9 = arith.mulf %8, %5 : vector<2x256xf32>
    %10 = arith.select %7, %5, %9 : vector<2x256xi1>, vector<2x256xf32>
    %c0_7 = arith.constant 0 : index
    %c0_8 = arith.constant 0 : index
    %11 = vector.load %arg3[%c0_7, %c0_8] : memref<256x64xf32, #tpu.memory_space<vmem>>, vector<256x64xf32>
    %cst_9 = arith.constant dense<0.000000e+00> : vector<2x64xf32>
    %12 = tpu.matmul %10, %11, %cst_9 {dimension_numbers = #tpu.dot_dimension_numbers<[1], [0], [0], [1], [0, 0, 1, 1], [], []>} : vector<2x256xf32>, vector<256x64xf32>, vector<2x64xf32> -> vector<2x64xf32>
    %c0_10 = arith.constant 0 : index
    %c0_11 = arith.constant 0 : index
    %13 = vector.load %arg4[%c0_10, %c0_11] : memref<1x64xf32, #tpu.memory_space<vmem>>, vector<1x64xf32>
    %14 = vector.broadcast %13 : vector<1x64xf32> to vector<2x64xf32>
    %15 = arith.addf %12, %14 : vector<2x64xf32>
    %cst_12 = arith.constant 0.000000e+00 : f32
    %16 = vector.broadcast %cst_12 : f32 to vector<2x64xf32>
    %17 = arith.cmpf ogt, %15, %16 : vector<2x64xf32>
    %cst_13 = arith.constant 0.00999999977 : f32
    %18 = vector.broadcast %cst_13 : f32 to vector<2x64xf32>
    %19 = arith.mulf %18, %15 : vector<2x64xf32>
    %20 = arith.select %17, %15, %19 : vector<2x64xi1>, vector<2x64xf32>
    %c0_14 = arith.constant 0 : index
    %c0_15 = arith.constant 0 : index
    %21 = vector.load %arg5[%c0_14, %c0_15] : memref<64x40xf32, #tpu.memory_space<vmem>>, vector<64x40xf32>
    %cst_16 = arith.constant dense<0.000000e+00> : vector<2x40xf32>
    %22 = tpu.matmul %20, %21, %cst_16 {dimension_numbers = #tpu.dot_dimension_numbers<[1], [0], [0], [1], [0, 0, 1, 1], [], []>} : vector<2x64xf32>, vector<64x40xf32>, vector<2x40xf32> -> vector<2x40xf32>
    %c0_17 = arith.constant 0 : index
    %c0_18 = arith.constant 0 : index
    %23 = vector.load %arg6[%c0_17, %c0_18] : memref<1x40xf32, #tpu.memory_space<vmem>>, vector<1x40xf32>
    %24 = vector.broadcast %23 : vector<1x40xf32> to vector<2x40xf32>
    %25 = arith.addf %22, %24 : vector<2x40xf32>
    %c0_19 = arith.constant 0 : index
    %c0_20 = arith.constant 0 : index
    %26 = vector.load %arg7[%c0_19, %c0_20] : memref<2x40xf32, #tpu.memory_space<vmem>>, vector<2x40xf32>
    tpu.vector_store %arg7[%c0_19, %c0_20], %25 {strides = array<i32>} : memref<2x40xf32, #tpu.memory_space<vmem>>, vector<2x40xf32>,
    return
  }
}

</mosaic_0001>

<llo_original>
// kernel: dgcnn_forward.15
$region0: #{dgcnn_forward.15}
  #allocation0 [shape = 'u32[]', space=smem, size = 0x4, offset = 0x4, fixed_abs, tag = 'smem constant byte address 0x4 - core index']
  #allocation1 [shape = 'u32[144,128]{1,0:T(1,128)}', space=vmem, size = 0x12000, scoped, tag = 'internal scratch']
  %s0 = inlined_call_operand.vmem [shape: f32[32,3], index: 0, kind: input, shape index: {}]
  %s1 = inlined_call_operand.vmem [shape: f32[3,128], index: 1, kind: input, shape index: {}]
  %s2 = inlined_call_operand.vmem [shape: f32[1,128], index: 2, kind: input, shape index: {}]
  %s3 = inlined_call_operand.vmem [shape: f32[32,128], index: 3, kind: output, shape index: {}]
  %s4 = sld [smem:[#allocation0]]
  $region22: #{dgcnn_forward.15} parent=0
    _
  %s6 = ssub.s32 1, %s4
  %s7 = scalar_select 0, %s6, %s4
  // Predicated region
  $region2: #{dgcnn_forward.15} parent=0 // pred_check
    _
  $region3: #{dgcnn_forward.15} parent=0 // pred_check_branch
    %9 = sbr.rel (0) target = $region5
  $region4: #{dgcnn_forward.15} parent=0 // pred_region
    _
  $region5: #{dgcnn_forward.15} parent=0 // pred_fallthru
    _
  // Predicated region
  $region6: #{dgcnn_forward.15} parent=0 // pred_check
    _
  $region7: #{dgcnn_forward.15} parent=0 // pred_check_branch
    %11 = sbr.rel (0) target = $region9
  $region8: #{dgcnn_forward.15} parent=0 // pred_region
    _
  $region9: #{dgcnn_forward.15} parent=0 // pred_fallthru
    _
  // Predicated region
  $region10: #{dgcnn_forward.15} parent=0 // pred_check
    _
  $region11: #{dgcnn_forward.15} parent=0 // pred_check_branch
    %13 = sbr.rel (0) target = $region13
  $region12: #{dgcnn_forward.15} parent=0 // pred_region
    _
  $region13: #{dgcnn_forward.15} parent=0 // pred_fallthru
    _
  %v14 = vld [vmem:[%s0] sm:$0xff]
  %v15 = vld [vmem:[%s0 + $0x8] sm:$0xff]
  %v16 = vld [vmem:[%s0 + $0x10] sm:$0xff]
  %v17 = vld [vmem:[%s0 + $0x18] sm:$0xff]
  %v18 = vld [vmem:[%s1] sm:$0x7]
  %v19 = vld [vmem:[%s2] sm:$0x1]
  %v21 = vlaneseq
  %v22 = vshrl.u32 %v21, 7
  %v23 = vsub.s32 0, %v22
  %v24 = vrot.slane %v19, %v23
  %vm26 = vcmask 23552
  %v28 = vsel %vm26, %v14, 0
  %v31 = vsel %vm26, %v15, 0
  %v34 = vsel %vm26, %v16, 0
  %v37 = vsel %vm26, %v17, 0
  %vm39 = vcmask 1042432
  %v41 = vsel %vm39, %v18, 0
  %43 = vmatprep.subr.mxu0 0.0
  %44 = vmatpush1.msra.mxu0 0.0
  %45 = vmatprep.subr.mxu0 0.0
  %46 = vmatpush1.msra.mxu0 0.0
  %47 = vmatprep.subr.mxu0 0.0
  %48 = vmatpush1.msra.mxu0 0.0
  %49 = vmatprep.subr.mxu0 0.0
  %50 = vmatpush1.msra.mxu0 0.0
  %51 = vmatprep.subr.mxu0 0.0
  %52 = vmatpush1.msra.mxu0 0.0
  %53 = vmatprep.subr.mxu0 0.0
  %54 = vmatpush1.msra.mxu0 0.0
  %55 = vmatprep.subr.mxu0 0.0
  %56 = vmatpush1.msra.mxu0 0.0
  %57 = vmatprep.subr.mxu0 0.0
  %58 = vmatpush1.msra.mxu0 0.0
  %59 = vmatprep.subr.mxu0 0.0
  %60 = vmatpush1.msra.mxu0 0.0
  %61 = vmatprep.subr.mxu0 0.0
  %62 = vmatpush1.msra.mxu0 0.0
  %63 = vmatprep.subr.mxu0 0.0
  %64 = vmatpush1.msra.mxu0 0.0
  %65 = vmatprep.subr.mxu0 0.0
  %66 = vmatpush1.msra.mxu0 0.0
  %67 = vmatprep.subr.mxu0 0.0
  %68 = vmatpush1.msra.mxu0 0.0
  %69 = vmatprep.subr.mxu0 0.0
  %70 = vmatpush1.msra.mxu0 0.0
  %71 = vmatprep.subr.mxu0 0.0
  %72 = vmatpush1.msra.mxu0 0.0
  %73 = vmatprep.subr.mxu0 0.0
  %74 = vmatpush1.msra.mxu0 %v41
  %75 = vmatprep.subr.mxu0 0.0
  %76 = vmatpush2.msra.mxu0 0.0
  %77 = vmatprep.subr.mxu0 0.0
  %78 = vmatpush2.msra.mxu0 0.0
  %79 = vmatprep.subr.mxu0 0.0
  %80 = vmatpush2.msra.mxu0 0.0
  %81 = vmatprep.subr.mxu0 0.0
  %82 = vmatpush2.msra.mxu0 0.0
  %83 = vmatprep.subr.mxu0 0.0
  %84 = vmatpush2.msra.mxu0 0.0
  %85 = vmatprep.subr.mxu0 0.0
  %86 = vmatpush2.msra.mxu0 0.0
  %87 = vmatprep.subr.mxu0 0.0
  %88 = vmatpush2.msra.mxu0 0.0
  %89 = vmatprep.subr.mxu0 0.0
  %90 = vmatpush2.msra.mxu0 0.0
  %91 = vmatprep.subr.mxu0 0.0
  %92 = vmatpush2.msra.mxu0 0.0
  %93 = vmatprep.subr.mxu0 0.0
  %94 = vmatpush2.msra.mxu0 0.0
  %95 = vmatprep.subr.mxu0 0.0
  %96 = vmatpush2.msra.mxu0 0.0
  %97 = vmatprep.subr.mxu0 0.0
  %98 = vmatpush2.msra.mxu0 0.0
  %99 = vmatprep.subr.mxu0 0.0
  %100 = vmatpush2.msra.mxu0 0.0
  %101 = vmatprep.subr.mxu0 0.0
  %102 = vmatpush2.msra.mxu0 0.0
  %103 = vmatprep.subr.mxu0 0.0
  %104 = vmatpush2.msra.mxu0 0.0
  %105 = vmatprep.subr.mxu0 0.0
  %106 = vmatpush2.msra.mxu0 0.0
  %107 = vmatprep.mubr.f32.mxu0 0.0
  %108 = vmatmul.mubr.f32.gmra.mxu0 %v28
  %v109 = vpop.f32.mrf.mxu0
  %v110 = vadd.f32 %v24, %v109
  %v111 = vpop.f32.mrf.mxu0
  %112 = vmatprep.mubr.f32.mxu0 0.0
  %113 = vmatmul.mubr.f32.gmra.mxu0 %v31
  %v114 = vpop.f32.mrf.mxu0
  %v115 = vadd.f32 %v24, %v114
  %v116 = vpop.f32.mrf.mxu0
  %117 = vmatprep.mubr.f32.mxu0 0.0
  %118 = vmatmul.mubr.f32.gmra.mxu0 %v34
  %v119 = vpop.f32.mrf.mxu0
  %v120 = vadd.f32 %v24, %v119
  %v121 = vpop.f32.mrf.mxu0
  %122 = vmatprep.mubr.f32.mxu0 0.0
  %123 = vmatmul.mubr.f32.gmra.mxu0 %v37
  %v124 = vpop.f32.mrf.mxu0
  %v125 = vadd.f32 %v24, %v124
  %v126 = vpop.f32.mrf.mxu0
  %127 = vdwg.mxu0
  %128 = vst [vmem:[%s3] sm:$0xff] %v110
  %129 = vst [vmem:[%s3 + $0x8] sm:$0xff] %v115
  %130 = vst [vmem:[%s3 + $0x10] sm:$0xff] %v120
  %131 = vst [vmem:[%s3 + $0x18] sm:$0xff] %v125
  // Predicated region
  $region14: #{dgcnn_forward.15} parent=0 // pred_check
    _
  $region15: #{dgcnn_forward.15} parent=0 // pred_check_branch
    %133 = sbr.rel (0) target = $region17
  $region16: #{dgcnn_forward.15} parent=0 // pred_region
    _
  $region17: #{dgcnn_forward.15} parent=0 // pred_fallthru
    _
  // Predicated region
  $region18: #{dgcnn_forward.15} parent=0 // pred_check
    _
  $region19: #{dgcnn_forward.15} parent=0 // pred_check_branch
    %135 = sbr.rel (0) target = $region21
  $region20: #{dgcnn_forward.15} parent=0 // pred_region
    _
  $region21: #{dgcnn_forward.15} parent=0 // pred_fallthru
    _

// kernel: dgcnn_forward.14
$region0: #{dgcnn_forward.14}
  #allocation0 [shape = 'u32[]', space=smem, size = 0x4, offset = 0x4, fixed_abs, tag = 'smem constant byte address 0x4 - core index']
  #allocation1 [shape = 'u32[144,128]{1,0:T(1,128)}', space=vmem, size = 0x12000, scoped, tag = 'internal scratch']
  %s0 = inlined_call_operand.vmem [shape: f32[2,16,3], index: 0, kind: input, shape index: {}, may-alias: {0,1}]
  %s1 = inlined_call_operand.vmem [shape: f32[2,16,3], index: 1, kind: input, shape index: {}, may-alias: {0,1}]
  %s2 = inlined_call_operand.vmem [shape: s32[2,16,4], index: 2, kind: output, shape index: {}]
  %s3 = sld [smem:[#allocation0]]
  $region41: #{dgcnn_forward.14} parent=0
    _
  %s5 = ssub.s32 1, %s3
  %s6 = scalar_select 0, %s5, %s3
  loop: start=0, step=1, limit=4
  $region2: #{dgcnn_forward.14} parent=0 // loop_pre_header
    _
  $region3: #{dgcnn_forward.14} parent=0 // loop_header
    %s8 = sphi 0, %s12
    %p9 = scmp.ge.s32.totalorder %s8, 4
    %s15 = sphi 0, %s27
    %s16 = sphi 0, %s23
    %s17 = sphi 0, %s15
    %s18 = sphi 0, %s16
    %s19 = sphi 0, %s17
    %s20 = sphi 0, %s18
    %s32 = sphi 0, %s34
    %s35 = sphi 0, %s32
    %s36 = sphi 0, %s35
    %s52 = sphi 0, %s36
    %s58 = sphi 0, %s60
    %s61 = sphi 0, %s58
    %s62 = sphi 0, %s61
    %s78 = sphi 0, %s62
    %s86 = sphi 0, %s88
    %s89 = sphi 0, %s86
    %s90 = sphi 0, %s89
    %s106 = sphi 0, %s90
  $region4: #{dgcnn_forward.14} parent=0 // loop_header_branch
    %11 = sbr.rel (%p9) target = $region8
  $region5: #{dgcnn_forward.14} parent=0 // loop_body
    %s13 = ssub.s32 %s8, 1
    %s14 = ssub.s32 %s8, 2
    %s21 = sadd.s32 1, %s16
    %p22 = scmp.ge.s32.totalorder %s21, 1
    %s23 = scalar_select %p22, 0, %s21
    %s24 = sadd.s32 1, %s15
    %s25 = scalar_select %p22, %s24, %s15
    %p26 = scmp.ge.s32.totalorder %s25, 2
    %s27 = scalar_select %p26, 0, %s25
    %s28 = ssub.s32 %s15, %s27
    %s29 = ssub.s32 %s16, %s23
    %s30 = sor.u32 %s28, %s29
    %p31 = scmp.eq.s32.totalorder %s30, 0
    %s33 = sadd.s32 %s32, 1
    %s34 = scalar_select %p31, %s32, %s33
    %p37 = pneg %p31
    %p38 = scmp.eq.s32.totalorder %s8, 1
    %p39 = por %p37, %p38
    %p40 = scmp.ne.s32.totalorder %s32, %s35
    %p41 = scmp.eq.s32.totalorder %s8, 0
    %p42 = por %p40, %p41
    %p43 = scmp.ne.s32.totalorder %s32, %s35
    %p44 = scmp.eq.s32.totalorder %s13, 1
    %p45 = por %p43, %p44
    %p46 = scmp.ne.s32.totalorder %s35, %s36
    %p47 = scmp.eq.s32.totalorder %s13, 0
    %p48 = por %p46, %p47
    %p49 = scmp.ne.s32.totalorder %s35, %s36
    %p50 = scmp.eq.s32.totalorder %s14, 1
    %p51 = por %p49, %p50
    %p53 = scmp.ne.s32.totalorder %s36, %s52
    %p54 = scmp.eq.s32.totalorder %s14, 0
    %p55 = por %p53, %p54
    %s56 = ssub.s32 %s15, %s27
    %p57 = scmp.eq.s32.totalorder %s56, 0
    %s59 = sadd.s32 %s58, 1
    %s60 = scalar_select %p57, %s58, %s59
    %p63 = pneg %p57
    %p64 = scmp.eq.s32.totalorder %s8, 1
    %p65 = por %p63, %p64
    %p66 = scmp.ne.s32.totalorder %s58, %s61
    %p67 = scmp.eq.s32.totalorder %s8, 0
    %p68 = por %p66, %p67
    %p69 = scmp.ne.s32.totalorder %s58, %s61
    %p70 = scmp.eq.s32.totalorder %s13, 1
    %p71 = por %p69, %p70
    %p72 = scmp.ne.s32.totalorder %s61, %s62
    %p73 = scmp.eq.s32.totalorder %s13, 0
    %p74 = por %p72, %p73
    %p75 = scmp.ne.s32.totalorder %s61, %s62
    %p76 = scmp.eq.s32.totalorder %s14, 1
    %p77 = por %p75, %p76
    %p79 = scmp.ne.s32.totalorder %s62, %s78
    %p80 = scmp.eq.s32.totalorder %s14, 0
    %p81 = por %p79, %p80
    %s82 = ssub.s32 %s15, %s27
    %s83 = ssub.s32 %s16, %s23
    %s84 = sor.u32 %s82, %s83
    %p85 = scmp.eq.s32.totalorder %s84, 0
    %s87 = sadd.s32 %s86, 1
    %s88 = scalar_select %p85, %s86, %s87
    %p91 = pneg %p85
    %p92 = scmp.eq.s32.totalorder %s8, 1
    %p93 = por %p91, %p92
    %p94 = scmp.ne.s32.totalorder %s86, %s89
    %p95 = scmp.eq.s32.totalorder %s8, 0
    %p96 = por %p94, %p95
    %p97 = scmp.ne.s32.totalorder %s86, %s89
    %p98 = scmp.eq.s32.totalorder %s13, 1
    %p99 = por %p97, %p98
    %p100 = scmp.ne.s32.totalorder %s89, %s90
    %p101 = scmp.eq.s32.totalorder %s13, 0
    %p102 = por %p100, %p101
    %p103 = scmp.ne.s32.totalorder %s89, %s90
    %p104 = scmp.eq.s32.totalorder %s14, 1
    %p105 = por %p103, %p104
    %p107 = scmp.ne.s32.totalorder %s90, %s106
    %p108 = scmp.eq.s32.totalorder %s14, 0
    %p109 = por %p107, %p108
    %p110 = scmp.le.s32.totalorder 1, %s8
    %p111 = scmp.lt.s32.totalorder %s8, 3
    %p112 = pnand %p110, %p111
    %p113 = pneg %p112
    // Predicated region
    $region9: #{dgcnn_forward.14} parent=5 // pred_check
      _
    $region10: #{dgcnn_forward.14} parent=5 // pred_check_branch
      %115 = sbr.rel (%p112) target = $region12
    $region11: #{dgcnn_forward.14} parent=5 // pred_region
      %s116 = ssub.s32 %s8, 1
    $region12: #{dgcnn_forward.14} parent=5 // pred_fallthru
      _
    %p117 = scmp.lt.s32.totalorder %s8, 2
    // Predicated region
    $region13: #{dgcnn_forward.14} parent=5 // pred_check
      %p118 = pneg %p117
    $region14: #{dgcnn_forward.14} parent=5 // pred_check_branch
      %120 = sbr.rel (%p118) target = $region16
    $region15: #{dgcnn_forward.14} parent=5 // pred_region
      // Predicated region
      $region17: #{dgcnn_forward.14} parent=15 // pred_check
        %p121 = pneg %p42
      $region18: #{dgcnn_forward.14} parent=15 // pred_check_branch
        %123 = sbr.rel (%p121) target = $region20
      $region19: #{dgcnn_forward.14} parent=15 // pred_region
        %s124 = smul.u32 2, %s16
        %p125 = scmp.lt.s32.totalorder %s15, 1
        %s126 = scalar_select %p125, %s15, 1
        %p127 = scmp.lt.s32.totalorder %s124, 1
        %s128 = scalar_select %p127, %s124, 1
        %s129 = smul.addr %s126, 2
        %s130 = sadd.s32 %s128, %s129
        %s131 = smul.addr %s130, 8
        %s132 = scalar_lea.vmem %s0, %s131
        %s133 = smul.u32 2, %s16
      $region20: #{dgcnn_forward.14} parent=15 // pred_fallthru
        _
      // Predicated region
      $region21: #{dgcnn_forward.14} parent=15 // pred_check
        %p134 = pneg %p68
      $region22: #{dgcnn_forward.14} parent=15 // pred_check_branch
        %136 = sbr.rel (%p134) target = $region24
      $region23: #{dgcnn_forward.14} parent=15 // pred_region
        %p137 = scmp.lt.s32.totalorder %s15, 1
        %s138 = scalar_select %p137, %s15, 1
        %s139 = smul.addr %s138, 2
        %s140 = smul.addr %s139, 8
        %s141 = scalar_lea.vmem %s1, %s140
      $region24: #{dgcnn_forward.14} parent=15 // pred_fallthru
        _
    $region16: #{dgcnn_forward.14} parent=5 // pred_fallthru
      _
    %p142 = scmp.le.s32.totalorder 1, %s8
    %p143 = scmp.lt.s32.totalorder %s8, 3
    %p144 = pnand %p142, %p143
    %p145 = pneg %p144
    // Predicated region
    $region25: #{dgcnn_forward.14} parent=5 // pred_check
      _
    $region26: #{dgcnn_forward.14} parent=5 // pred_check_branch
      %147 = sbr.rel (%p144) target = $region28
    $region27: #{dgcnn_forward.14} parent=5 // pred_region
      %s148 = ssub.s32 %s8, 1
      %s149 = smul.u32 2, %s18
      %p150 = scmp.lt.s32.totalorder %s17, 1
      %s151 = scalar_select %p150, %s17, 1
      %p152 = scmp.lt.s32.totalorder %s149, 1
      %s153 = scalar_select %p152, %s149, 1
      %s154 = smul.addr %s151, 2
      %s155 = sadd.s32 %s153, %s154
      %s156 = smul.addr %s155, 8
      %s157 = scalar_lea.vmem %s0, %s156
      %p158 = pneg %p48
      %p159 = pneg %p45
      %p160 = scmp.lt.s32.totalorder %s17, 1
      %s161 = scalar_select %p160, %s17, 1
      %s162 = smul.addr %s161, 2
      %s163 = smul.addr %s162, 8
      %s164 = scalar_lea.vmem %s1, %s163
      %p165 = pneg %p74
      %p166 = pneg %p71
      %p167 = pneg %p102
      %p168 = pneg %p99
      %s169 = smul.u32 2, %s18
      %p170 = scmp.lt.s32.totalorder %s17, 1
      %s171 = scalar_select %p170, %s17, 1
      %p172 = scmp.lt.s32.totalorder %s169, 1
      %s173 = scalar_select %p172, %s169, 1
      %s174 = smul.addr %s171, 2
      %s175 = sadd.s32 %s173, %s174
      %s176 = smul.addr %s175, 8
      %s177 = scalar_lea.vmem %s2, %s176
      %s178 = smul.u32 2, %s18
      %p179 = scmp.lt.s32.totalorder %s17, 1
      %s180 = scalar_select %p179, %s17, 1
      %p181 = scmp.lt.s32.totalorder %s178, 1
      %s182 = scalar_select %p181, %s178, 1
      %s183 = smul.addr %s180, 2
      %s184 = sadd.s32 %s182, %s183
      %s185 = smul.addr %s184, 8
      %s186 = scalar_lea.vmem %s0, %s185
      %s187 = smul.u32 2, %s18
      %p188 = scmp.lt.s32.totalorder %s17, 1
      %s189 = scalar_select %p188, %s17, 1
      %s190 = smul.addr %s189, 2
      %s191 = smul.addr %s190, 8
      %s192 = scalar_lea.vmem %s1, %s191
      %s193 = smul.u32 2, %s18
      %p194 = scmp.lt.s32.totalorder %s17, 1
      %s195 = scalar_select %p194, %s17, 1
      %p196 = scmp.lt.s32.totalorder %s193, 1
      %s197 = scalar_select %p196, %s193, 1
      %s198 = smul.addr %s195, 2
      %s199 = sadd.s32 %s197, %s198
      %s200 = smul.addr %s199, 8
      %s201 = scalar_lea.vmem %s2, %s200
      %s202 = smul.u32 2, %s18
      %v203 = vld [vmem:[%s186] sm:$0xff]
      %v204 = vld [vmem:[%s186 + $0x8] sm:$0xff]
      %v205 = vld [vmem:[%s192] sm:$0xff]
      %v206 = vld [vmem:[%s192 + $0x8] sm:$0xff]
      %v207 = vmul.f32 %v203, %v203
      %v208 = vmul.f32 %v204, %v204
      %vm209 = vcmask 23552
      %v210 = vsel %vm209, %v207, 0.0
      %211 = vadd.xlane.f32.xlu0 %v210
      %v212 = vpop.xlane.xlu0 %211
      %v213 = vsel %vm209, %v208, 0.0
      %214 = vadd.xlane.f32.xlu0 %v213
      %v215 = vpop.xlane.xlu0 %214
      %v216 = vmul.f32 %v205, %v205
      %v217 = vmul.f32 %v206, %v206
      %v218 = vsel %vm209, %v216, 0.0
      %219 = vadd.xlane.f32.xlu0 %v218
      %v220 = vpop.xlane.xlu0 %219
      %v221 = vsel %vm209, %v217, 0.0
      %222 = vadd.xlane.f32.xlu0 %v221
      %v223 = vpop.xlane.xlu0 %222
      %v225 = vsel %vm209, %v203, 0
      %v228 = vsel %vm209, %v204, 0
      %v231 = vsel %vm209, %v205, 0
      %v234 = vsel %vm209, %v206, 0
      %236 = vmatprep.subr.mxu0 0.0
      %237 = vmatpush1.xpose.msra.mxu0 0.0
      %238 = vmatprep.subr.mxu0 0.0
      %239 = vmatpush1.xpose.msra.mxu0 0.0
      %240 = vmatprep.subr.mxu0 0.0
      %241 = vmatpush1.xpose.msra.mxu0 0.0
      %242 = vmatprep.subr.mxu0 0.0
      %243 = vmatpush1.xpose.msra.mxu0 0.0
      %244 = vmatprep.subr.mxu0 0.0
      %245 = vmatpush1.xpose.msra.mxu0 0.0
      %246 = vmatprep.subr.mxu0 0.0
      %247 = vmatpush1.xpose.msra.mxu0 0.0
      %248 = vmatprep.subr.mxu0 0.0
      %249 = vmatpush1.xpose.msra.mxu0 0.0
      %250 = vmatprep.subr.mxu0 0.0
      %251 = vmatpush1.xpose.msra.mxu0 0.0
      %252 = vmatprep.subr.mxu0 0.0
      %253 = vmatpush1.xpose.msra.mxu0 0.0
      %254 = vmatprep.subr.mxu0 0.0
      %255 = vmatpush1.xpose.msra.mxu0 0.0
      %256 = vmatprep.subr.mxu0 0.0
      %257 = vmatpush1.xpose.msra.mxu0 0.0
      %258 = vmatprep.subr.mxu0 0.0
      %259 = vmatpush1.xpose.msra.mxu0 0.0
      %260 = vmatprep.subr.mxu0 0.0
      %261 = vmatpush1.xpose.msra.mxu0 0.0
      %262 = vmatprep.subr.mxu0 0.0
      %263 = vmatpush1.xpose.msra.mxu0 0.0
      %264 = vmatprep.subr.mxu0 0.0
      %265 = vmatpush1.xpose.msra.mxu0 %v234
      %266 = vmatprep.subr.mxu0 0.0
      %267 = vmatpush1.xpose.msra.mxu0 %v231
      %268 = vmatprep.subr.mxu0 0.0
      %269 = vmatpush2.xpose.msra.mxu0 0.0
      %270 = vmatprep.subr.mxu0 0.0
      %271 = vmatpush2.xpose.msra.mxu0 0.0
      %272 = vmatprep.subr.mxu0 0.0
      %273 = vmatpush2.xpose.msra.mxu0 0.0
      %274 = vmatprep.subr.mxu0 0.0
      %275 = vmatpush2.xpose.msra.mxu0 0.0
      %276 = vmatprep.subr.mxu0 0.0
      %277 = vmatpush2.xpose.msra.mxu0 0.0
      %278 = vmatprep.subr.mxu0 0.0
      %279 = vmatpush2.xpose.msra.mxu0 0.0
      %280 = vmatprep.subr.mxu0 0.0
      %281 = vmatpush2.xpose.msra.mxu0 0.0
      %282 = vmatprep.subr.mxu0 0.0
      %283 = vmatpush2.xpose.msra.mxu0 0.0
      %284 = vmatprep.subr.mxu0 0.0
      %285 = vmatpush2.xpose.msra.mxu0 0.0
      %286 = vmatprep.subr.mxu0 0.0
      %287 = vmatpush2.xpose.msra.mxu0 0.0
      %288 = vmatprep.subr.mxu0 0.0
      %289 = vmatpush2.xpose.msra.mxu0 0.0
      %290 = vmatprep.subr.mxu0 0.0
      %291 = vmatpush2.xpose.msra.mxu0 0.0
      %292 = vmatprep.subr.mxu0 0.0
      %293 = vmatpush2.xpose.msra.mxu0 0.0
      %294 = vmatprep.subr.mxu0 0.0
      %295 = vmatpush2.xpose.msra.mxu0 0.0
      %296 = vmatprep.subr.mxu0 0.0
      %297 = vmatpush2.xpose.msra.mxu0 0.0
      %298 = vmatprep.subr.mxu0 0.0
      %299 = vmatpush2.xpose.msra.mxu0 0.0
      %300 = vmatprep.mubr.f32.mxu0 0.0
      %301 = vmatmul.mubr.f32.gmra.mxu0 %v225
      %v302 = vpop.f32.mrf.mxu0
      %v303 = vadd.f32 0.0, %v302
      %v304 = vpop.f32.mrf.mxu0
      %305 = vmatprep.mubr.f32.mxu0 0.0
      %306 = vmatmul.mubr.f32.gmra.mxu0 %v228
      %v307 = vpop.f32.mrf.mxu0
      %v308 = vadd.f32 0.0, %v307
      %v309 = vpop.f32.mrf.mxu0
      %310 = vdwg.mxu0
      %v311 = vmul.f32 %v303, 2.0
      %v312 = vmul.f32 %v308, 2.0
      %v313 = vsub.f32 %v311, %v212
      %v314 = vsub.f32 %v312, %v215
      %315 = vxpose.xlu0.b32.start [1/16] %v220, 128
      %316 = vxpose.xlu0.b32.cont [2/16] %v223, 128
      %317 = vxpose.xlu0.b32.cont [3/16] 0.0, 128
      %318 = vxpose.xlu0.b32.cont [4/16] 0.0, 128
      %319 = vxpose.xlu0.b32.cont [5/16] 0.0, 128
      %320 = vxpose.xlu0.b32.cont [6/16] 0.0, 128
      %321 = vxpose.xlu0.b32.cont [7/16] 0.0, 128
      %322 = vxpose.xlu0.b32.cont [8/16] 0.0, 128
      %323 = vxpose.xlu0.b32.cont [9/16] 0.0, 128
      %324 = vxpose.xlu0.b32.cont [10/16] 0.0, 128
      %325 = vxpose.xlu0.b32.cont [11/16] 0.0, 128
      %326 = vxpose.xlu0.b32.cont [12/16] 0.0, 128
      %327 = vxpose.xlu0.b32.cont [13/16] 0.0, 128
      %328 = vxpose.xlu0.b32.cont [14/16] 0.0, 128
      %329 = vxpose.xlu0.b32.cont [15/16] 0.0, 128
      %330 = vxpose.xlu0.b32.end [16/16] 0.0, 128
      %v331 = vpop.trf.xlu0
      %v332 = vpop.trf.xlu0
      %v333 = vpop.trf.xlu0
      %v334 = vpop.trf.xlu0
      %v335 = vpop.trf.xlu0
      %v336 = vpop.trf.xlu0
      %v337 = vpop.trf.xlu0
      %v338 = vpop.trf.xlu0
      %v339 = vpop.trf.xlu0
      %v340 = vpop.trf.xlu0
      %v341 = vpop.trf.xlu0
      %v342 = vpop.trf.xlu0
      %v343 = vpop.trf.xlu0
      %v344 = vpop.trf.xlu0
      %v345 = vpop.trf.xlu0
      %v346 = vpop.trf.xlu0
      %v347 = vlaneseq
      %v348 = vshrl.u32 %v347, 7
      %v349 = vsub.s32 0, %v348
      %v350 = vrot.slane %v331, %v349
      %v351 = vsub.f32 %v313, %v350
      %v352 = vsub.f32 %v314, %v350
      %v353 = vlaneseq
      %v354 = vand.u32 %v353, 127
      %vm355 = vcmp.lt.s32.totalorder %v354, 16
      %v356 = vsel %vm355, %v351, -inf
      %v357 = vsel %vm355, %v352, -inf
      %vm358 = vcmask 130048
      %v359 = vsel %vm358, %v356, -inf
      %360 = vmax.xlane.f32.xlu0 %v359
      %v361 = vpop.xlane.xlu0 %360
      %v362 = vsel %vm358, %v357, -inf
      %363 = vmax.xlane.f32.xlu0 %v362
      %v364 = vpop.xlane.xlu0 %363
      %vm365 = vcmp.eq.f32.partialorder %v356, %v361
      %vm366 = vcmp.eq.f32.partialorder %v357, %v364
      %v367 = vsel %vm365, %v354, 16
      %v368 = vsel %vm366, %v354, 16
      %v369 = vsel %vm358, %v367, 2147483647
      %v370 = vand.u32 %v369, 65535
      %v371 = vshra.s32 %v369, 16
      %v372 = vcvt.s32.f32 %v370
      %v373 = vcvt.s32.f32 %v371
      %374 = vmin.xlane.f32.xlu0 %v373
      %v375 = vpop.xlane.xlu0 %374
      %vm376 = vcmp.eq.f32.partialorder %v373, %v375
      %v377 = vsel %vm376, %v372, inf
      %378 = vmin.xlane.f32.xlu0 %v377
      %v379 = vpop.xlane.xlu0 %378
      %v380 = vcvt.f32.s32 %v379
      %v381 = vcvt.f32.s32 %v375
      %v382 = vshll.u32 %v381, 16
      %v383 = vadd.s32 %v382, %v380
      %v384 = vsel %vm358, %v368, 2147483647
      %v385 = vand.u32 %v384, 65535
      %v386 = vshra.s32 %v384, 16
      %v387 = vcvt.s32.f32 %v385
      %v388 = vcvt.s32.f32 %v386
      %389 = vmin.xlane.f32.xlu0 %v388
      %v390 = vpop.xlane.xlu0 %389
      %vm391 = vcmp.eq.f32.partialorder %v388, %v390
      %v392 = vsel %vm391, %v387, inf
      %393 = vmin.xlane.f32.xlu0 %v392
      %v394 = vpop.xlane.xlu0 %393
      %v395 = vcvt.f32.s32 %v394
      %v396 = vcvt.f32.s32 %v390
      %v397 = vshll.u32 %v396, 16
      %v398 = vadd.s32 %v397, %v395
      %vm399 = vcmp.eq.s32.totalorder %v354, %v383
      %vm400 = vcmp.eq.s32.totalorder %v354, %v398
      %v401 = vsel %vm399, -inf, %v356
      %v402 = vsel %vm400, -inf, %v357
      %v403 = vsel %vm358, %v401, -inf
      %404 = vmax.xlane.f32.xlu0 %v403
      %v405 = vpop.xlane.xlu0 %404
      %v406 = vsel %vm358, %v402, -inf
      %407 = vmax.xlane.f32.xlu0 %v406
      %v408 = vpop.xlane.xlu0 %407
      %vm409 = vcmp.eq.f32.partialorder %v401, %v405
      %vm410 = vcmp.eq.f32.partialorder %v402, %v408
      %v411 = vsel %vm409, %v354, 16
      %v412 = vsel %vm410, %v354, 16
      %v413 = vsel %vm358, %v411, 2147483647
      %v414 = vand.u32 %v413, 65535
      %v415 = vshra.s32 %v413, 16
      %v416 = vcvt.s32.f32 %v414
      %v417 = vcvt.s32.f32 %v415
      %418 = vmin.xlane.f32.xlu0 %v417
      %v419 = vpop.xlane.xlu0 %418
      %vm420 = vcmp.eq.f32.partialorder %v417, %v419
      %v421 = vsel %vm420, %v416, inf
      %422 = vmin.xlane.f32.xlu0 %v421
      %v423 = vpop.xlane.xlu0 %422
      %v424 = vcvt.f32.s32 %v423
      %v425 = vcvt.f32.s32 %v419
      %v426 = vshll.u32 %v425, 16
      %v427 = vadd.s32 %v426, %v424
      %v428 = vsel %vm358, %v412, 2147483647
      %v429 = vand.u32 %v428, 65535
      %v430 = vshra.s32 %v428, 16
      %v431 = vcvt.s32.f32 %v429
      %v432 = vcvt.s32.f32 %v430
      %433 = vmin.xlane.f32.xlu0 %v432
      %v434 = vpop.xlane.xlu0 %433
      %vm435 = vcmp.eq.f32.partialorder %v432, %v434
      %v436 = vsel %vm435, %v431, inf
      %437 = vmin.xlane.f32.xlu0 %v436
      %v438 = vpop.xlane.xlu0 %437
      %v439 = vcvt.f32.s32 %v438
      %v440 = vcvt.f32.s32 %v434
      %v441 = vshll.u32 %v440, 16
      %v442 = vadd.s32 %v441, %v439
      %vm443 = vcmp.eq.s32.totalorder %v354, %v427
      %vm444 = vcmp.eq.s32.totalorder %v354, %v442
      %v445 = vsel %vm443, -inf, %v401
      %v446 = vsel %vm444, -inf, %v402
      %v447 = vsel %vm358, %v445, -inf
      %448 = vmax.xlane.f32.xlu0 %v447
      %v449 = vpop.xlane.xlu0 %448
      %v450 = vsel %vm358, %v446, -inf
      %451 = vmax.xlane.f32.xlu0 %v450
      %v452 = vpop.xlane.xlu0 %451
      %vm453 = vcmp.eq.f32.partialorder %v445, %v449
      %vm454 = vcmp.eq.f32.partialorder %v446, %v452
      %v455 = vsel %vm453, %v354, 16
      %v456 = vsel %vm454, %v354, 16
      %v457 = vsel %vm358, %v455, 2147483647
      %v458 = vand.u32 %v457, 65535
      %v459 = vshra.s32 %v457, 16
      %v460 = vcvt.s32.f32 %v458
      %v461 = vcvt.s32.f32 %v459
      %462 = vmin.xlane.f32.xlu0 %v461
      %v463 = vpop.xlane.xlu0 %462
      %vm464 = vcmp.eq.f32.partialorder %v461, %v463
      %v465 = vsel %vm464, %v460, inf
      %466 = vmin.xlane.f32.xlu0 %v465
      %v467 = vpop.xlane.xlu0 %466
      %v468 = vcvt.f32.s32 %v467
      %v469 = vcvt.f32.s32 %v463
      %v470 = vshll.u32 %v469, 16
      %v471 = vadd.s32 %v470, %v468
      %v472 = vsel %vm358, %v456, 2147483647
      %v473 = vand.u32 %v472, 65535
      %v474 = vshra.s32 %v472, 16
      %v475 = vcvt.s32.f32 %v473
      %v476 = vcvt.s32.f32 %v474
      %477 = vmin.xlane.f32.xlu0 %v476
      %v478 = vpop.xlane.xlu0 %477
      %vm479 = vcmp.eq.f32.partialorder %v476, %v478
      %v480 = vsel %vm479, %v475, inf
      %481 = vmin.xlane.f32.xlu0 %v480
      %v482 = vpop.xlane.xlu0 %481
      %v483 = vcvt.f32.s32 %v482
      %v484 = vcvt.f32.s32 %v478
      %v485 = vshll.u32 %v484, 16
      %v486 = vadd.s32 %v485, %v483
      %vm487 = vcmp.eq.s32.totalorder %v354, %v471
      %vm488 = vcmp.eq.s32.totalorder %v354, %v486
      %v489 = vsel %vm487, -inf, %v445
      %v490 = vsel %vm488, -inf, %v446
      %v491 = vsel %vm358, %v489, -inf
      %492 = vmax.xlane.f32.xlu0 %v491
      %v493 = vpop.xlane.xlu0 %492
      %v494 = vsel %vm358, %v490, -inf
      %495 = vmax.xlane.f32.xlu0 %v494
      %v496 = vpop.xlane.xlu0 %495
      %vm497 = vcmp.eq.f32.partialorder %v489, %v493
      %vm498 = vcmp.eq.f32.partialorder %v490, %v496
      %v499 = vsel %vm497, %v354, 16
      %v500 = vsel %vm498, %v354, 16
      %v501 = vsel %vm358, %v499, 2147483647
      %v502 = vand.u32 %v501, 65535
      %v503 = vshra.s32 %v501, 16
      %v504 = vcvt.s32.f32 %v502
      %v505 = vcvt.s32.f32 %v503
      %506 = vmin.xlane.f32.xlu0 %v505
      %v507 = vpop.xlane.xlu0 %506
      %vm508 = vcmp.eq.f32.partialorder %v505, %v507
      %v509 = vsel %vm508, %v504, inf
      %510 = vmin.xlane.f32.xlu0 %v509
      %v511 = vpop.xlane.xlu0 %510
      %v512 = vcvt.f32.s32 %v511
      %v513 = vcvt.f32.s32 %v507
      %v514 = vshll.u32 %v513, 16
      %v515 = vadd.s32 %v514, %v512
      %v516 = vsel %vm358, %v500, 2147483647
      %v517 = vand.u32 %v516, 65535
      %v518 = vshra.s32 %v516, 16
      %v519 = vcvt.s32.f32 %v517
      %v520 = vcvt.s32.f32 %v518
      %521 = vmin.xlane.f32.xlu0 %v520
      %v522 = vpop.xlane.xlu0 %521
      %vm523 = vcmp.eq.f32.partialorder %v520, %v522
      %v524 = vsel %vm523, %v519, inf
      %525 = vmin.xlane.f32.xlu0 %v524
      %v526 = vpop.xlane.xlu0 %525
      %v527 = vcvt.f32.s32 %v526
      %v528 = vcvt.f32.s32 %v522
      %v529 = vshll.u32 %v528, 16
      %v530 = vadd.s32 %v529, %v527
      %vm531 = vcmask 7168
      %v532 = vsel %vm531, %v383, %v427
      %v533 = vsel %vm531, %v398, %v442
      %vm534 = vcmask 15360
      %v535 = vsel %vm534, %v532, %v471
      %v536 = vsel %vm534, %v533, %v486
      %v537 = vsel %vm209, %v535, %v515
      %v538 = vsel %vm209, %v536, %v530
      %vm539 = vcmask 31744
      %540 = vst.msk [vmem:[%s201] sm:$0xff] %vm539, %v537
      %541 = vst.msk [vmem:[%s201 + $0x8] sm:$0xff] %vm539, %v538
      %s542 = smul.u32 2, %s18
      %p543 = scmp.lt.s32.totalorder %s17, 1
      %s544 = scalar_select %p543, %s17, 1
      %p545 = scmp.lt.s32.totalorder %s542, 1
      %s546 = scalar_select %p545, %s542, 1
      %s547 = smul.addr %s544, 2
      %s548 = sadd.s32 %s546, %s547
      %s549 = smul.addr %s548, 8
      %s550 = scalar_lea.vmem %s2, %s549
      // Predicated region
      $region29: #{dgcnn_forward.14} parent=27 // pred_check
        %p551 = pneg %p99
      $region30: #{dgcnn_forward.14} parent=27 // pred_check_branch
        %553 = sbr.rel (%p551) target = $region32
      $region31: #{dgcnn_forward.14} parent=27 // pred_region
        %s554 = smul.u32 2, %s18
      $region32: #{dgcnn_forward.14} parent=27 // pred_fallthru
        _
    $region28: #{dgcnn_forward.14} parent=5 // pred_fallthru
      _
    %p555 = scmp.le.s32.totalorder 2, %s8
    // Predicated region
    $region33: #{dgcnn_forward.14} parent=5 // pred_check
      %p556 = pneg %p555
    $region34: #{dgcnn_forward.14} parent=5 // pred_check_branch
      %558 = sbr.rel (%p556) target = $region36
    $region35: #{dgcnn_forward.14} parent=5 // pred_region
      %s559 = ssub.s32 %s8, 2
      // Predicated region
      $region37: #{dgcnn_forward.14} parent=35 // pred_check
        %p560 = pneg %p105
      $region38: #{dgcnn_forward.14} parent=35 // pred_check_branch
        %562 = sbr.rel (%p560) target = $region40
      $region39: #{dgcnn_forward.14} parent=35 // pred_region
        %s563 = smul.u32 2, %s20
        %p564 = scmp.lt.s32.totalorder %s19, 1
        %s565 = scalar_select %p564, %s19, 1
        %p566 = scmp.lt.s32.totalorder %s563, 1
        %s567 = scalar_select %p566, %s563, 1
        %s568 = smul.addr %s565, 2
        %s569 = sadd.s32 %s567, %s568
        %s570 = smul.addr %s569, 8
        %s571 = scalar_lea.vmem %s2, %s570
      $region40: #{dgcnn_forward.14} parent=35 // pred_fallthru
        _
    $region36: #{dgcnn_forward.14} parent=5 // pred_fallthru
      _
  $region6: #{dgcnn_forward.14} parent=0 // loop_footer
    %s12 = sadd.s32 1, %s8
  $region7: #{dgcnn_forward.14} parent=0 // loop_footer_branch
    %7 = sbr.rel target = $region3
  $region8: #{dgcnn_forward.14} parent=0 // loop_exit
    _

// kernel: dgcnn_forward.18
$region0: #{dgcnn_forward.18}
  #allocation0 [shape = 'u32[]', space=smem, size = 0x4, offset = 0x4, fixed_abs, tag = 'smem constant byte address 0x4 - core index']
  #allocation1 [shape = 'u32[144,128]{1,0:T(1,128)}', space=vmem, size = 0x12000, scoped, tag = 'internal scratch']
  %s0 = inlined_call_operand.vmem [shape: f32[32,64], index: 0, kind: input, shape index: {}]
  %s1 = inlined_call_operand.vmem [shape: f32[64,128], index: 1, kind: input, shape index: {}]
  %s2 = inlined_call_operand.vmem [shape: f32[1,128], index: 2, kind: input, shape index: {}]
  %s3 = inlined_call_operand.vmem [shape: f32[32,128], index: 3, kind: output, shape index: {}]
  %s4 = sld [smem:[#allocation0]]
  $region22: #{dgcnn_forward.18} parent=0
    _
  %s6 = ssub.s32 1, %s4
  %s7 = scalar_select 0, %s6, %s4
  // Predicated region
  $region2: #{dgcnn_forward.18} parent=0 // pred_check
    _
  $region3: #{dgcnn_forward.18} parent=0 // pred_check_branch
    %9 = sbr.rel (0) target = $region5
  $region4: #{dgcnn_forward.18} parent=0 // pred_region
    _
  $region5: #{dgcnn_forward.18} parent=0 // pred_fallthru
    _
  // Predicated region
  $region6: #{dgcnn_forward.18} parent=0 // pred_check
    _
  $region7: #{dgcnn_forward.18} parent=0 // pred_check_branch
    %11 = sbr.rel (0) target = $region9
  $region8: #{dgcnn_forward.18} parent=0 // pred_region
    _
  $region9: #{dgcnn_forward.18} parent=0 // pred_fallthru
    _
  // Predicated region
  $region10: #{dgcnn_forward.18} parent=0 // pred_check
    _
  $region11: #{dgcnn_forward.18} parent=0 // pred_check_branch
    %13 = sbr.rel (0) target = $region13
  $region12: #{dgcnn_forward.18} parent=0 // pred_region
    _
  $region13: #{dgcnn_forward.18} parent=0 // pred_fallthru
    _
  %v14 = vld [vmem:[%s0] sm:$0xff]
  %v15 = vld [vmem:[%s0 + $0x8] sm:$0xff]
  %v16 = vld [vmem:[%s0 + $0x10] sm:$0xff]
  %v17 = vld [vmem:[%s0 + $0x18] sm:$0xff]
  %v18 = vld [vmem:[%s1] sm:$0xff]
  %v19 = vld [vmem:[%s1 + $0x8] sm:$0xff]
  %v20 = vld [vmem:[%s1 + $0x10] sm:$0xff]
  %v21 = vld [vmem:[%s1 + $0x18] sm:$0xff]
  %v22 = vld [vmem:[%s1 + $0x20] sm:$0xff]
  %v23 = vld [vmem:[%s1 + $0x28] sm:$0xff]
  %v24 = vld [vmem:[%s1 + $0x30] sm:$0xff]
  %v25 = vld [vmem:[%s1 + $0x38] sm:$0xff]
  %v26 = vld [vmem:[%s2] sm:$0x1]
  %v28 = vlaneseq
  %v29 = vshrl.u32 %v28, 7
  %v30 = vsub.s32 0, %v29
  %v31 = vrot.slane %v26, %v30
  %vm33 = vcmask 523264
  %v35 = vsel %vm33, %v14, 0
  %v38 = vsel %vm33, %v15, 0
  %v41 = vsel %vm33, %v16, 0
  %v44 = vsel %vm33, %v17, 0
  %46 = vmatprep.subr.mxu0 0.0
  %47 = vmatpush1.msra.mxu0 0.0
  %48 = vmatprep.subr.mxu0 0.0
  %49 = vmatpush1.msra.mxu0 0.0
  %50 = vmatprep.subr.mxu0 0.0
  %51 = vmatpush1.msra.mxu0 0.0
  %52 = vmatprep.subr.mxu0 0.0
  %53 = vmatpush1.msra.mxu0 0.0
  %54 = vmatprep.subr.mxu0 0.0
  %55 = vmatpush1.msra.mxu0 0.0
  %56 = vmatprep.subr.mxu0 0.0
  %57 = vmatpush1.msra.mxu0 0.0
  %58 = vmatprep.subr.mxu0 0.0
  %59 = vmatpush1.msra.mxu0 0.0
  %60 = vmatprep.subr.mxu0 0.0
  %61 = vmatpush1.msra.mxu0 0.0
  %62 = vmatprep.subr.mxu0 0.0
  %63 = vmatpush1.msra.mxu0 %v25
  %64 = vmatprep.subr.mxu0 0.0
  %65 = vmatpush1.msra.mxu0 %v24
  %66 = vmatprep.subr.mxu0 0.0
  %67 = vmatpush1.msra.mxu0 %v23
  %68 = vmatprep.subr.mxu0 0.0
  %69 = vmatpush1.msra.mxu0 %v22
  %70 = vmatprep.subr.mxu0 0.0
  %71 = vmatpush1.msra.mxu0 %v21
  %72 = vmatprep.subr.mxu0 0.0
  %73 = vmatpush1.msra.mxu0 %v20
  %74 = vmatprep.subr.mxu0 0.0
  %75 = vmatpush1.msra.mxu0 %v19
  %76 = vmatprep.subr.mxu0 0.0
  %77 = vmatpush1.msra.mxu0 %v18
  %78 = vmatprep.subr.mxu0 0.0
  %79 = vmatpush2.msra.mxu0 0.0
  %80 = vmatprep.subr.mxu0 0.0
  %81 = vmatpush2.msra.mxu0 0.0
  %82 = vmatprep.subr.mxu0 0.0
  %83 = vmatpush2.msra.mxu0 0.0
  %84 = vmatprep.subr.mxu0 0.0
  %85 = vmatpush2.msra.mxu0 0.0
  %86 = vmatprep.subr.mxu0 0.0
  %87 = vmatpush2.msra.mxu0 0.0
  %88 = vmatprep.subr.mxu0 0.0
  %89 = vmatpush2.msra.mxu0 0.0
  %90 = vmatprep.subr.mxu0 0.0
  %91 = vmatpush2.msra.mxu0 0.0
  %92 = vmatprep.subr.mxu0 0.0
  %93 = vmatpush2.msra.mxu0 0.0
  %94 = vmatprep.subr.mxu0 0.0
  %95 = vmatpush2.msra.mxu0 0.0
  %96 = vmatprep.subr.mxu0 0.0
  %97 = vmatpush2.msra.mxu0 0.0
  %98 = vmatprep.subr.mxu0 0.0
  %99 = vmatpush2.msra.mxu0 0.0
  %100 = vmatprep.subr.mxu0 0.0
  %101 = vmatpush2.msra.mxu0 0.0
  %102 = vmatprep.subr.mxu0 0.0
  %103 = vmatpush2.msra.mxu0 0.0
  %104 = vmatprep.subr.mxu0 0.0
  %105 = vmatpush2.msra.mxu0 0.0
  %106 = vmatprep.subr.mxu0 0.0
  %107 = vmatpush2.msra.mxu0 0.0
  %108 = vmatprep.subr.mxu0 0.0
  %109 = vmatpush2.msra.mxu0 0.0
  %110 = vmatprep.mubr.f32.mxu0 0.0
  %111 = vmatmul.mubr.f32.gmra.mxu0 %v35
  %v112 = vpop.f32.mrf.mxu0
  %v113 = vadd.f32 %v31, %v112
  %v114 = vpop.f32.mrf.mxu0
  %115 = vmatprep.mubr.f32.mxu0 0.0
  %116 = vmatmul.mubr.f32.gmra.mxu0 %v38
  %v117 = vpop.f32.mrf.mxu0
  %v118 = vadd.f32 %v31, %v117
  %v119 = vpop.f32.mrf.mxu0
  %120 = vmatprep.mubr.f32.mxu0 0.0
  %121 = vmatmul.mubr.f32.gmra.mxu0 %v41
  %v122 = vpop.f32.mrf.mxu0
  %v123 = vadd.f32 %v31, %v122
  %v124 = vpop.f32.mrf.mxu0
  %125 = vmatprep.mubr.f32.mxu0 0.0
  %126 = vmatmul.mubr.f32.gmra.mxu0 %v44
  %v127 = vpop.f32.mrf.mxu0
  %v128 = vadd.f32 %v31, %v127
  %v129 = vpop.f32.mrf.mxu0
  %130 = vdwg.mxu0
  %131 = vst [vmem:[%s3] sm:$0xff] %v113
  %132 = vst [vmem:[%s3 + $0x8] sm:$0xff] %v118
  %133 = vst [vmem:[%s3 + $0x10] sm:$0xff] %v123
  %134 = vst [vmem:[%s3 + $0x18] sm:$0xff] %v128
  // Predicated region
  $region14: #{dgcnn_forward.18} parent=0 // pred_check
    _
  $region15: #{dgcnn_forward.18} parent=0 // pred_check_branch
    %136 = sbr.rel (0) target = $region17
  $region16: #{dgcnn_forward.18} parent=0 // pred_region
    _
  $region17: #{dgcnn_forward.18} parent=0 // pred_fallthru
    _
  // Predicated region
  $region18: #{dgcnn_forward.18} parent=0 // pred_check
    _
  $region19: #{dgcnn_forward.18} parent=0 // pred_check_branch
    %138 = sbr.rel (0) target = $region21
  $region20: #{dgcnn_forward.18} parent=0 // pred_region
    _
  $region21: #{dgcnn_forward.18} parent=0 // pred_fallthru
    _

// kernel: dgcnn_forward.17
$region0: #{dgcnn_forward.17}
  #allocation0 [shape = 'u32[]', space=smem, size = 0x4, offset = 0x4, fixed_abs, tag = 'smem constant byte address 0x4 - core index']
  #allocation1 [shape = 'u32[144,128]{1,0:T(1,128)}', space=vmem, size = 0x12000, scoped, tag = 'internal scratch']
  %s0 = inlined_call_operand.vmem [shape: f32[2,16,64], index: 0, kind: input, shape index: {}, may-alias: {0,1}]
  %s1 = inlined_call_operand.vmem [shape: f32[2,16,64], index: 1, kind: input, shape index: {}, may-alias: {0,1}]
  %s2 = inlined_call_operand.vmem [shape: s32[2,16,4], index: 2, kind: output, shape index: {}]
  %s3 = sld [smem:[#allocation0]]
  $region41: #{dgcnn_forward.17} parent=0
    _
  %s5 = ssub.s32 1, %s3
  %s6 = scalar_select 0, %s5, %s3
  loop: start=0, step=1, limit=4
  $region2: #{dgcnn_forward.17} parent=0 // loop_pre_header
    _
  $region3: #{dgcnn_forward.17} parent=0 // loop_header
    %s8 = sphi 0, %s12
    %p9 = scmp.ge.s32.totalorder %s8, 4
    %s15 = sphi 0, %s27
    %s16 = sphi 0, %s23
    %s17 = sphi 0, %s15
    %s18 = sphi 0, %s16
    %s19 = sphi 0, %s17
    %s20 = sphi 0, %s18
    %s32 = sphi 0, %s34
    %s35 = sphi 0, %s32
    %s36 = sphi 0, %s35
    %s52 = sphi 0, %s36
    %s58 = sphi 0, %s60
    %s61 = sphi 0, %s58
    %s62 = sphi 0, %s61
    %s78 = sphi 0, %s62
    %s86 = sphi 0, %s88
    %s89 = sphi 0, %s86
    %s90 = sphi 0, %s89
    %s106 = sphi 0, %s90
  $region4: #{dgcnn_forward.17} parent=0 // loop_header_branch
    %11 = sbr.rel (%p9) target = $region8
  $region5: #{dgcnn_forward.17} parent=0 // loop_body
    %s13 = ssub.s32 %s8, 1
    %s14 = ssub.s32 %s8, 2
    %s21 = sadd.s32 1, %s16
    %p22 = scmp.ge.s32.totalorder %s21, 1
    %s23 = scalar_select %p22, 0, %s21
    %s24 = sadd.s32 1, %s15
    %s25 = scalar_select %p22, %s24, %s15
    %p26 = scmp.ge.s32.totalorder %s25, 2
    %s27 = scalar_select %p26, 0, %s25
    %s28 = ssub.s32 %s15, %s27
    %s29 = ssub.s32 %s16, %s23
    %s30 = sor.u32 %s28, %s29
    %p31 = scmp.eq.s32.totalorder %s30, 0
    %s33 = sadd.s32 %s32, 1
    %s34 = scalar_select %p31, %s32, %s33
    %p37 = pneg %p31
    %p38 = scmp.eq.s32.totalorder %s8, 1
    %p39 = por %p37, %p38
    %p40 = scmp.ne.s32.totalorder %s32, %s35
    %p41 = scmp.eq.s32.totalorder %s8, 0
    %p42 = por %p40, %p41
    %p43 = scmp.ne.s32.totalorder %s32, %s35
    %p44 = scmp.eq.s32.totalorder %s13, 1
    %p45 = por %p43, %p44
    %p46 = scmp.ne.s32.totalorder %s35, %s36
    %p47 = scmp.eq.s32.totalorder %s13, 0
    %p48 = por %p46, %p47
    %p49 = scmp.ne.s32.totalorder %s35, %s36
    %p50 = scmp.eq.s32.totalorder %s14, 1
    %p51 = por %p49, %p50
    %p53 = scmp.ne.s32.totalorder %s36, %s52
    %p54 = scmp.eq.s32.totalorder %s14, 0
    %p55 = por %p53, %p54
    %s56 = ssub.s32 %s15, %s27
    %p57 = scmp.eq.s32.totalorder %s56, 0
    %s59 = sadd.s32 %s58, 1
    %s60 = scalar_select %p57, %s58, %s59
    %p63 = pneg %p57
    %p64 = scmp.eq.s32.totalorder %s8, 1
    %p65 = por %p63, %p64
    %p66 = scmp.ne.s32.totalorder %s58, %s61
    %p67 = scmp.eq.s32.totalorder %s8, 0
    %p68 = por %p66, %p67
    %p69 = scmp.ne.s32.totalorder %s58, %s61
    %p70 = scmp.eq.s32.totalorder %s13, 1
    %p71 = por %p69, %p70
    %p72 = scmp.ne.s32.totalorder %s61, %s62
    %p73 = scmp.eq.s32.totalorder %s13, 0
    %p74 = por %p72, %p73
    %p75 = scmp.ne.s32.totalorder %s61, %s62
    %p76 = scmp.eq.s32.totalorder %s14, 1
    %p77 = por %p75, %p76
    %p79 = scmp.ne.s32.totalorder %s62, %s78
    %p80 = scmp.eq.s32.totalorder %s14, 0
    %p81 = por %p79, %p80
    %s82 = ssub.s32 %s15, %s27
    %s83 = ssub.s32 %s16, %s23
    %s84 = sor.u32 %s82, %s83
    %p85 = scmp.eq.s32.totalorder %s84, 0
    %s87 = sadd.s32 %s86, 1
    %s88 = scalar_select %p85, %s86, %s87
    %p91 = pneg %p85
    %p92 = scmp.eq.s32.totalorder %s8, 1
    %p93 = por %p91, %p92
    %p94 = scmp.ne.s32.totalorder %s86, %s89
    %p95 = scmp.eq.s32.totalorder %s8, 0
    %p96 = por %p94, %p95
    %p97 = scmp.ne.s32.totalorder %s86, %s89
    %p98 = scmp.eq.s32.totalorder %s13, 1
    %p99 = por %p97, %p98
    %p100 = scmp.ne.s32.totalorder %s89, %s90
    %p101 = scmp.eq.s32.totalorder %s13, 0
    %p102 = por %p100, %p101
    %p103 = scmp.ne.s32.totalorder %s89, %s90
    %p104 = scmp.eq.s32.totalorder %s14, 1
    %p105 = por %p103, %p104
    %p107 = scmp.ne.s32.totalorder %s90, %s106
    %p108 = scmp.eq.s32.totalorder %s14, 0
    %p109 = por %p107, %p108
    %p110 = scmp.le.s32.totalorder 1, %s8
    %p111 = scmp.lt.s32.totalorder %s8, 3
    %p112 = pnand %p110, %p111
    %p113 = pneg %p112
    // Predicated region
    $region9: #{dgcnn_forward.17} parent=5 // pred_check
      _
    $region10: #{dgcnn_forward.17} parent=5 // pred_check_branch
      %115 = sbr.rel (%p112) target = $region12
    $region11: #{dgcnn_forward.17} parent=5 // pred_region
      %s116 = ssub.s32 %s8, 1
    $region12: #{dgcnn_forward.17} parent=5 // pred_fallthru
      _
    %p117 = scmp.lt.s32.totalorder %s8, 2
    // Predicated region
    $region13: #{dgcnn_forward.17} parent=5 // pred_check
      %p118 = pneg %p117
    $region14: #{dgcnn_forward.17} parent=5 // pred_check_branch
      %120 = sbr.rel (%p118) target = $region16
    $region15: #{dgcnn_forward.17} parent=5 // pred_region
      // Predicated region
      $region17: #{dgcnn_forward.17} parent=15 // pred_check
        %p121 = pneg %p42
      $region18: #{dgcnn_forward.17} parent=15 // pred_check_branch
        %123 = sbr.rel (%p121) target = $region20
      $region19: #{dgcnn_forward.17} parent=15 // pred_region
        %s124 = smul.u32 2, %s16
        %p125 = scmp.lt.s32.totalorder %s15, 1
        %s126 = scalar_select %p125, %s15, 1
        %p127 = scmp.lt.s32.totalorder %s124, 1
        %s128 = scalar_select %p127, %s124, 1
        %s129 = smul.addr %s126, 2
        %s130 = sadd.s32 %s128, %s129
        %s131 = smul.addr %s130, 8
        %s132 = scalar_lea.vmem %s0, %s131
        %s133 = smul.u32 2, %s16
      $region20: #{dgcnn_forward.17} parent=15 // pred_fallthru
        _
      // Predicated region
      $region21: #{dgcnn_forward.17} parent=15 // pred_check
        %p134 = pneg %p68
      $region22: #{dgcnn_forward.17} parent=15 // pred_check_branch
        %136 = sbr.rel (%p134) target = $region24
      $region23: #{dgcnn_forward.17} parent=15 // pred_region
        %p137 = scmp.lt.s32.totalorder %s15, 1
        %s138 = scalar_select %p137, %s15, 1
        %s139 = smul.addr %s138, 2
        %s140 = smul.addr %s139, 8
        %s141 = scalar_lea.vmem %s1, %s140
      $region24: #{dgcnn_forward.17} parent=15 // pred_fallthru
        _
    $region16: #{dgcnn_forward.17} parent=5 // pred_fallthru
      _
    %p142 = scmp.le.s32.totalorder 1, %s8
    %p143 = scmp.lt.s32.totalorder %s8, 3
    %p144 = pnand %p142, %p143
    %p145 = pneg %p144
    // Predicated region
    $region25: #{dgcnn_forward.17} parent=5 // pred_check
      _
    $region26: #{dgcnn_forward.17} parent=5 // pred_check_branch
      %147 = sbr.rel (%p144) target = $region28
    $region27: #{dgcnn_forward.17} parent=5 // pred_region
      %s148 = ssub.s32 %s8, 1
      %s149 = smul.u32 2, %s18
      %p150 = scmp.lt.s32.totalorder %s17, 1
      %s151 = scalar_select %p150, %s17, 1
      %p152 = scmp.lt.s32.totalorder %s149, 1
      %s153 = scalar_select %p152, %s149, 1
      %s154 = smul.addr %s151, 2
      %s155 = sadd.s32 %s153, %s154
      %s156 = smul.addr %s155, 8
      %s157 = scalar_lea.vmem %s0, %s156
      %p158 = pneg %p48
      %p159 = pneg %p45
      %p160 = scmp.lt.s32.totalorder %s17, 1
      %s161 = scalar_select %p160, %s17, 1
      %s162 = smul.addr %s161, 2
      %s163 = smul.addr %s162, 8
      %s164 = scalar_lea.vmem %s1, %s163
      %p165 = pneg %p74
      %p166 = pneg %p71
      %p167 = pneg %p102
      %p168 = pneg %p99
      %s169 = smul.u32 2, %s18
      %p170 = scmp.lt.s32.totalorder %s17, 1
      %s171 = scalar_select %p170, %s17, 1
      %p172 = scmp.lt.s32.totalorder %s169, 1
      %s173 = scalar_select %p172, %s169, 1
      %s174 = smul.addr %s171, 2
      %s175 = sadd.s32 %s173, %s174
      %s176 = smul.addr %s175, 8
      %s177 = scalar_lea.vmem %s2, %s176
      %s178 = smul.u32 2, %s18
      %p179 = scmp.lt.s32.totalorder %s17, 1
      %s180 = scalar_select %p179, %s17, 1
      %p181 = scmp.lt.s32.totalorder %s178, 1
      %s182 = scalar_select %p181, %s178, 1
      %s183 = smul.addr %s180, 2
      %s184 = sadd.s32 %s182, %s183
      %s185 = smul.addr %s184, 8
      %s186 = scalar_lea.vmem %s0, %s185
      %s187 = smul.u32 2, %s18
      %p188 = scmp.lt.s32.totalorder %s17, 1
      %s189 = scalar_select %p188, %s17, 1
      %s190 = smul.addr %s189, 2
      %s191 = smul.addr %s190, 8
      %s192 = scalar_lea.vmem %s1, %s191
      %s193 = smul.u32 2, %s18
      %p194 = scmp.lt.s32.totalorder %s17, 1
      %s195 = scalar_select %p194, %s17, 1
      %p196 = scmp.lt.s32.totalorder %s193, 1
      %s197 = scalar_select %p196, %s193, 1
      %s198 = smul.addr %s195, 2
      %s199 = sadd.s32 %s197, %s198
      %s200 = smul.addr %s199, 8
      %s201 = scalar_lea.vmem %s2, %s200
      %s202 = smul.u32 2, %s18
      %v203 = vld [vmem:[%s186] sm:$0xff]
      %v204 = vld [vmem:[%s186 + $0x8] sm:$0xff]
      %v205 = vld [vmem:[%s192] sm:$0xff]
      %v206 = vld [vmem:[%s192 + $0x8] sm:$0xff]
      %v207 = vmul.f32 %v203, %v203
      %v208 = vmul.f32 %v204, %v204
      %vm209 = vcmask 523264
      %v210 = vsel %vm209, %v207, 0.0
      %211 = vadd.xlane.f32.xlu0 %v210
      %v212 = vpop.xlane.xlu0 %211
      %v213 = vsel %vm209, %v208, 0.0
      %214 = vadd.xlane.f32.xlu0 %v213
      %v215 = vpop.xlane.xlu0 %214
      %v216 = vmul.f32 %v205, %v205
      %v217 = vmul.f32 %v206, %v206
      %v218 = vsel %vm209, %v216, 0.0
      %219 = vadd.xlane.f32.xlu0 %v218
      %v220 = vpop.xlane.xlu0 %219
      %v221 = vsel %vm209, %v217, 0.0
      %222 = vadd.xlane.f32.xlu0 %v221
      %v223 = vpop.xlane.xlu0 %222
      %v225 = vsel %vm209, %v203, 0
      %v228 = vsel %vm209, %v204, 0
      %v231 = vsel %vm209, %v205, 0
      %v234 = vsel %vm209, %v206, 0
      %236 = vmatprep.subr.mxu0 0.0
      %237 = vmatpush1.xpose.msra.mxu0 0.0
      %238 = vmatprep.subr.mxu0 0.0
      %239 = vmatpush1.xpose.msra.mxu0 0.0
      %240 = vmatprep.subr.mxu0 0.0
      %241 = vmatpush1.xpose.msra.mxu0 0.0
      %242 = vmatprep.subr.mxu0 0.0
      %243 = vmatpush1.xpose.msra.mxu0 0.0
      %244 = vmatprep.subr.mxu0 0.0
      %245 = vmatpush1.xpose.msra.mxu0 0.0
      %246 = vmatprep.subr.mxu0 0.0
      %247 = vmatpush1.xpose.msra.mxu0 0.0
      %248 = vmatprep.subr.mxu0 0.0
      %249 = vmatpush1.xpose.msra.mxu0 0.0
      %250 = vmatprep.subr.mxu0 0.0
      %251 = vmatpush1.xpose.msra.mxu0 0.0
      %252 = vmatprep.subr.mxu0 0.0
      %253 = vmatpush1.xpose.msra.mxu0 0.0
      %254 = vmatprep.subr.mxu0 0.0
      %255 = vmatpush1.xpose.msra.mxu0 0.0
      %256 = vmatprep.subr.mxu0 0.0
      %257 = vmatpush1.xpose.msra.mxu0 0.0
      %258 = vmatprep.subr.mxu0 0.0
      %259 = vmatpush1.xpose.msra.mxu0 0.0
      %260 = vmatprep.subr.mxu0 0.0
      %261 = vmatpush1.xpose.msra.mxu0 0.0
      %262 = vmatprep.subr.mxu0 0.0
      %263 = vmatpush1.xpose.msra.mxu0 0.0
      %264 = vmatprep.subr.mxu0 0.0
      %265 = vmatpush1.xpose.msra.mxu0 %v234
      %266 = vmatprep.subr.mxu0 0.0
      %267 = vmatpush1.xpose.msra.mxu0 %v231
      %268 = vmatprep.subr.mxu0 0.0
      %269 = vmatpush2.xpose.msra.mxu0 0.0
      %270 = vmatprep.subr.mxu0 0.0
      %271 = vmatpush2.xpose.msra.mxu0 0.0
      %272 = vmatprep.subr.mxu0 0.0
      %273 = vmatpush2.xpose.msra.mxu0 0.0
      %274 = vmatprep.subr.mxu0 0.0
      %275 = vmatpush2.xpose.msra.mxu0 0.0
      %276 = vmatprep.subr.mxu0 0.0
      %277 = vmatpush2.xpose.msra.mxu0 0.0
      %278 = vmatprep.subr.mxu0 0.0
      %279 = vmatpush2.xpose.msra.mxu0 0.0
      %280 = vmatprep.subr.mxu0 0.0
      %281 = vmatpush2.xpose.msra.mxu0 0.0
      %282 = vmatprep.subr.mxu0 0.0
      %283 = vmatpush2.xpose.msra.mxu0 0.0
      %284 = vmatprep.subr.mxu0 0.0
      %285 = vmatpush2.xpose.msra.mxu0 0.0
      %286 = vmatprep.subr.mxu0 0.0
      %287 = vmatpush2.xpose.msra.mxu0 0.0
      %288 = vmatprep.subr.mxu0 0.0
      %289 = vmatpush2.xpose.msra.mxu0 0.0
      %290 = vmatprep.subr.mxu0 0.0
      %291 = vmatpush2.xpose.msra.mxu0 0.0
      %292 = vmatprep.subr.mxu0 0.0
      %293 = vmatpush2.xpose.msra.mxu0 0.0
      %294 = vmatprep.subr.mxu0 0.0
      %295 = vmatpush2.xpose.msra.mxu0 0.0
      %296 = vmatprep.subr.mxu0 0.0
      %297 = vmatpush2.xpose.msra.mxu0 0.0
      %298 = vmatprep.subr.mxu0 0.0
      %299 = vmatpush2.xpose.msra.mxu0 0.0
      %300 = vmatprep.mubr.f32.mxu0 0.0
      %301 = vmatmul.mubr.f32.gmra.mxu0 %v225
      %v302 = vpop.f32.mrf.mxu0
      %v303 = vadd.f32 0.0, %v302
      %v304 = vpop.f32.mrf.mxu0
      %305 = vmatprep.mubr.f32.mxu0 0.0
      %306 = vmatmul.mubr.f32.gmra.mxu0 %v228
      %v307 = vpop.f32.mrf.mxu0
      %v308 = vadd.f32 0.0, %v307
      %v309 = vpop.f32.mrf.mxu0
      %310 = vdwg.mxu0
      %v311 = vmul.f32 %v303, 2.0
      %v312 = vmul.f32 %v308, 2.0
      %v313 = vsub.f32 %v311, %v212
      %v314 = vsub.f32 %v312, %v215
      %315 = vxpose.xlu0.b32.start [1/16] %v220, 128
      %316 = vxpose.xlu0.b32.cont [2/16] %v223, 128
      %317 = vxpose.xlu0.b32.cont [3/16] 0.0, 128
      %318 = vxpose.xlu0.b32.cont [4/16] 0.0, 128
      %319 = vxpose.xlu0.b32.cont [5/16] 0.0, 128
      %320 = vxpose.xlu0.b32.cont [6/16] 0.0, 128
      %321 = vxpose.xlu0.b32.cont [7/16] 0.0, 128
      %322 = vxpose.xlu0.b32.cont [8/16] 0.0, 128
      %323 = vxpose.xlu0.b32.cont [9/16] 0.0, 128
      %324 = vxpose.xlu0.b32.cont [10/16] 0.0, 128
      %325 = vxpose.xlu0.b32.cont [11/16] 0.0, 128
      %326 = vxpose.xlu0.b32.cont [12/16] 0.0, 128
      %327 = vxpose.xlu0.b32.cont [13/16] 0.0, 128
      %328 = vxpose.xlu0.b32.cont [14/16] 0.0, 128
      %329 = vxpose.xlu0.b32.cont [15/16] 0.0, 128
      %330 = vxpose.xlu0.b32.end [16/16] 0.0, 128
      %v331 = vpop.trf.xlu0
      %v332 = vpop.trf.xlu0
      %v333 = vpop.trf.xlu0
      %v334 = vpop.trf.xlu0
      %v335 = vpop.trf.xlu0
      %v336 = vpop.trf.xlu0
      %v337 = vpop.trf.xlu0
      %v338 = vpop.trf.xlu0
      %v339 = vpop.trf.xlu0
      %v340 = vpop.trf.xlu0
      %v341 = vpop.trf.xlu0
      %v342 = vpop.trf.xlu0
      %v343 = vpop.trf.xlu0
      %v344 = vpop.trf.xlu0
      %v345 = vpop.trf.xlu0
      %v346 = vpop.trf.xlu0
      %v347 = vlaneseq
      %v348 = vshrl.u32 %v347, 7
      %v349 = vsub.s32 0, %v348
      %v350 = vrot.slane %v331, %v349
      %v351 = vsub.f32 %v313, %v350
      %v352 = vsub.f32 %v314, %v350
      %v353 = vlaneseq
      %v354 = vand.u32 %v353, 127
      %vm355 = vcmp.lt.s32.totalorder %v354, 16
      %v356 = vsel %vm355, %v351, -inf
      %v357 = vsel %vm355, %v352, -inf
      %vm358 = vcmask 130048
      %v359 = vsel %vm358, %v356, -inf
      %360 = vmax.xlane.f32.xlu0 %v359
      %v361 = vpop.xlane.xlu0 %360
      %v362 = vsel %vm358, %v357, -inf
      %363 = vmax.xlane.f32.xlu0 %v362
      %v364 = vpop.xlane.xlu0 %363
      %vm365 = vcmp.eq.f32.partialorder %v356, %v361
      %vm366 = vcmp.eq.f32.partialorder %v357, %v364
      %v367 = vsel %vm365, %v354, 16
      %v368 = vsel %vm366, %v354, 16
      %v369 = vsel %vm358, %v367, 2147483647
      %v370 = vand.u32 %v369, 65535
      %v371 = vshra.s32 %v369, 16
      %v372 = vcvt.s32.f32 %v370
      %v373 = vcvt.s32.f32 %v371
      %374 = vmin.xlane.f32.xlu0 %v373
      %v375 = vpop.xlane.xlu0 %374
      %vm376 = vcmp.eq.f32.partialorder %v373, %v375
      %v377 = vsel %vm376, %v372, inf
      %378 = vmin.xlane.f32.xlu0 %v377
      %v379 = vpop.xlane.xlu0 %378
      %v380 = vcvt.f32.s32 %v379
      %v381 = vcvt.f32.s32 %v375
      %v382 = vshll.u32 %v381, 16
      %v383 = vadd.s32 %v382, %v380
      %v384 = vsel %vm358, %v368, 2147483647
      %v385 = vand.u32 %v384, 65535
      %v386 = vshra.s32 %v384, 16
      %v387 = vcvt.s32.f32 %v385
      %v388 = vcvt.s32.f32 %v386
      %389 = vmin.xlane.f32.xlu0 %v388
      %v390 = vpop.xlane.xlu0 %389
      %vm391 = vcmp.eq.f32.partialorder %v388, %v390
      %v392 = vsel %vm391, %v387, inf
      %393 = vmin.xlane.f32.xlu0 %v392
      %v394 = vpop.xlane.xlu0 %393
      %v395 = vcvt.f32.s32 %v394
      %v396 = vcvt.f32.s32 %v390
      %v397 = vshll.u32 %v396, 16
      %v398 = vadd.s32 %v397, %v395
      %vm399 = vcmp.eq.s32.totalorder %v354, %v383
      %vm400 = vcmp.eq.s32.totalorder %v354, %v398
      %v401 = vsel %vm399, -inf, %v356
      %v402 = vsel %vm400, -inf, %v357
      %v403 = vsel %vm358, %v401, -inf
      %404 = vmax.xlane.f32.xlu0 %v403
      %v405 = vpop.xlane.xlu0 %404
      %v406 = vsel %vm358, %v402, -inf
      %407 = vmax.xlane.f32.xlu0 %v406
      %v408 = vpop.xlane.xlu0 %407
      %vm409 = vcmp.eq.f32.partialorder %v401, %v405
      %vm410 = vcmp.eq.f32.partialorder %v402, %v408
      %v411 = vsel %vm409, %v354, 16
      %v412 = vsel %vm410, %v354, 16
      %v413 = vsel %vm358, %v411, 2147483647
      %v414 = vand.u32 %v413, 65535
      %v415 = vshra.s32 %v413, 16
      %v416 = vcvt.s32.f32 %v414
      %v417 = vcvt.s32.f32 %v415
      %418 = vmin.xlane.f32.xlu0 %v417
      %v419 = vpop.xlane.xlu0 %418
      %vm420 = vcmp.eq.f32.partialorder %v417, %v419
      %v421 = vsel %vm420, %v416, inf
      %422 = vmin.xlane.f32.xlu0 %v421
      %v423 = vpop.xlane.xlu0 %422
      %v424 = vcvt.f32.s32 %v423
      %v425 = vcvt.f32.s32 %v419
      %v426 = vshll.u32 %v425, 16
      %v427 = vadd.s32 %v426, %v424
      %v428 = vsel %vm358, %v412, 2147483647
      %v429 = vand.u32 %v428, 65535
      %v430 = vshra.s32 %v428, 16
      %v431 = vcvt.s32.f32 %v429
      %v432 = vcvt.s32.f32 %v430
      %433 = vmin.xlane.f32.xlu0 %v432
      %v434 = vpop.xlane.xlu0 %433
      %vm435 = vcmp.eq.f32.partialorder %v432, %v434
      %v436 = vsel %vm435, %v431, inf
      %437 = vmin.xlane.f32.xlu0 %v436
      %v438 = vpop.xlane.xlu0 %437
      %v439 = vcvt.f32.s32 %v438
      %v440 = vcvt.f32.s32 %v434
      %v441 = vshll.u32 %v440, 16
      %v442 = vadd.s32 %v441, %v439
      %vm443 = vcmp.eq.s32.totalorder %v354, %v427
      %vm444 = vcmp.eq.s32.totalorder %v354, %v442
      %v445 = vsel %vm443, -inf, %v401
      %v446 = vsel %vm444, -inf, %v402
      %v447 = vsel %vm358, %v445, -inf
      %448 = vmax.xlane.f32.xlu0 %v447
      %v449 = vpop.xlane.xlu0 %448
      %v450 = vsel %vm358, %v446, -inf
      %451 = vmax.xlane.f32.xlu0 %v450
      %v452 = vpop.xlane.xlu0 %451
      %vm453 = vcmp.eq.f32.partialorder %v445, %v449
      %vm454 = vcmp.eq.f32.partialorder %v446, %v452
      %v455 = vsel %vm453, %v354, 16
      %v456 = vsel %vm454, %v354, 16
      %v457 = vsel %vm358, %v455, 2147483647
      %v458 = vand.u32 %v457, 65535
      %v459 = vshra.s32 %v457, 16
      %v460 = vcvt.s32.f32 %v458
      %v461 = vcvt.s32.f32 %v459
      %462 = vmin.xlane.f32.xlu0 %v461
      %v463 = vpop.xlane.xlu0 %462
      %vm464 = vcmp.eq.f32.partialorder %v461, %v463
      %v465 = vsel %vm464, %v460, inf
      %466 = vmin.xlane.f32.xlu0 %v465
      %v467 = vpop.xlane.xlu0 %466
      %v468 = vcvt.f32.s32 %v467
      %v469 = vcvt.f32.s32 %v463
      %v470 = vshll.u32 %v469, 16
      %v471 = vadd.s32 %v470, %v468
      %v472 = vsel %vm358, %v456, 2147483647
      %v473 = vand.u32 %v472, 65535
      %v474 = vshra.s32 %v472, 16
      %v475 = vcvt.s32.f32 %v473
      %v476 = vcvt.s32.f32 %v474
      %477 = vmin.xlane.f32.xlu0 %v476
      %v478 = vpop.xlane.xlu0 %477
      %vm479 = vcmp.eq.f32.partialorder %v476, %v478
      %v480 = vsel %vm479, %v475, inf
      %481 = vmin.xlane.f32.xlu0 %v480
      %v482 = vpop.xlane.xlu0 %481
      %v483 = vcvt.f32.s32 %v482
      %v484 = vcvt.f32.s32 %v478
      %v485 = vshll.u32 %v484, 16
      %v486 = vadd.s32 %v485, %v483
      %vm487 = vcmp.eq.s32.totalorder %v354, %v471
      %vm488 = vcmp.eq.s32.totalorder %v354, %v486
      %v489 = vsel %vm487, -inf, %v445
      %v490 = vsel %vm488, -inf, %v446
      %v491 = vsel %vm358, %v489, -inf
      %492 = vmax.xlane.f32.xlu0 %v491
      %v493 = vpop.xlane.xlu0 %492
      %v494 = vsel %vm358, %v490, -inf
      %495 = vmax.xlane.f32.xlu0 %v494
      %v496 = vpop.xlane.xlu0 %495
      %vm497 = vcmp.eq.f32.partialorder %v489, %v493
      %vm498 = vcmp.eq.f32.partialorder %v490, %v496
      %v499 = vsel %vm497, %v354, 16
      %v500 = vsel %vm498, %v354, 16
      %v501 = vsel %vm358, %v499, 2147483647
      %v502 = vand.u32 %v501, 65535
      %v503 = vshra.s32 %v501, 16
      %v504 = vcvt.s32.f32 %v502
      %v505 = vcvt.s32.f32 %v503
      %506 = vmin.xlane.f32.xlu0 %v505
      %v507 = vpop.xlane.xlu0 %506
      %vm508 = vcmp.eq.f32.partialorder %v505, %v507
      %v509 = vsel %vm508, %v504, inf
      %510 = vmin.xlane.f32.xlu0 %v509
      %v511 = vpop.xlane.xlu0 %510
      %v512 = vcvt.f32.s32 %v511
      %v513 = vcvt.f32.s32 %v507
      %v514 = vshll.u32 %v513, 16
      %v515 = vadd.s32 %v514, %v512
      %v516 = vsel %vm358, %v500, 2147483647
      %v517 = vand.u32 %v516, 65535
      %v518 = vshra.s32 %v516, 16
      %v519 = vcvt.s32.f32 %v517
      %v520 = vcvt.s32.f32 %v518
      %521 = vmin.xlane.f32.xlu0 %v520
      %v522 = vpop.xlane.xlu0 %521
      %vm523 = vcmp.eq.f32.partialorder %v520, %v522
      %v524 = vsel %vm523, %v519, inf
      %525 = vmin.xlane.f32.xlu0 %v524
      %v526 = vpop.xlane.xlu0 %525
      %v527 = vcvt.f32.s32 %v526
      %v528 = vcvt.f32.s32 %v522
      %v529 = vshll.u32 %v528, 16
      %v530 = vadd.s32 %v529, %v527
      %vm531 = vcmask 7168
      %v532 = vsel %vm531, %v383, %v427
      %v533 = vsel %vm531, %v398, %v442
      %vm534 = vcmask 15360
      %v535 = vsel %vm534, %v532, %v471
      %v536 = vsel %vm534, %v533, %v486
      %vm537 = vcmask 23552
      %v538 = vsel %vm537, %v535, %v515
      %v539 = vsel %vm537, %v536, %v530
      %vm540 = vcmask 31744
      %541 = vst.msk [vmem:[%s201] sm:$0xff] %vm540, %v538
      %542 = vst.msk [vmem:[%s201 + $0x8] sm:$0xff] %vm540, %v539
      %s543 = smul.u32 2, %s18
      %p544 = scmp.lt.s32.totalorder %s17, 1
      %s545 = scalar_select %p544, %s17, 1
      %p546 = scmp.lt.s32.totalorder %s543, 1
      %s547 = scalar_select %p546, %s543, 1
      %s548 = smul.addr %s545, 2
      %s549 = sadd.s32 %s547, %s548
      %s550 = smul.addr %s549, 8
      %s551 = scalar_lea.vmem %s2, %s550
      // Predicated region
      $region29: #{dgcnn_forward.17} parent=27 // pred_check
        %p552 = pneg %p99
      $region30: #{dgcnn_forward.17} parent=27 // pred_check_branch
        %554 = sbr.rel (%p552) target = $region32
      $region31: #{dgcnn_forward.17} parent=27 // pred_region
        %s555 = smul.u32 2, %s18
      $region32: #{dgcnn_forward.17} parent=27 // pred_fallthru
        _
    $region28: #{dgcnn_forward.17} parent=5 // pred_fallthru
      _
    %p556 = scmp.le.s32.totalorder 2, %s8
    // Predicated region
    $region33: #{dgcnn_forward.17} parent=5 // pred_check
      %p557 = pneg %p556
    $region34: #{dgcnn_forward.17} parent=5 // pred_check_branch
      %559 = sbr.rel (%p557) target = $region36
    $region35: #{dgcnn_forward.17} parent=5 // pred_region
      %s560 = ssub.s32 %s8, 2
      // Predicated region
      $region37: #{dgcnn_forward.17} parent=35 // pred_check
        %p561 = pneg %p105
      $region38: #{dgcnn_forward.17} parent=35 // pred_check_branch
        %563 = sbr.rel (%p561) target = $region40
      $region39: #{dgcnn_forward.17} parent=35 // pred_region
        %s564 = smul.u32 2, %s20
        %p565 = scmp.lt.s32.totalorder %s19, 1
        %s566 = scalar_select %p565, %s19, 1
        %p567 = scmp.lt.s32.totalorder %s564, 1
        %s568 = scalar_select %p567, %s564, 1
        %s569 = smul.addr %s566, 2
        %s570 = sadd.s32 %s568, %s569
        %s571 = smul.addr %s570, 8
        %s572 = scalar_lea.vmem %s2, %s571
      $region40: #{dgcnn_forward.17} parent=35 // pred_fallthru
        _
    $region36: #{dgcnn_forward.17} parent=5 // pred_fallthru
      _
  $region6: #{dgcnn_forward.17} parent=0 // loop_footer
    %s12 = sadd.s32 1, %s8
  $region7: #{dgcnn_forward.17} parent=0 // loop_footer_branch
    %7 = sbr.rel target = $region3
  $region8: #{dgcnn_forward.17} parent=0 // loop_exit
    _

// kernel: dgcnn_forward.16
$region0: #{dgcnn_forward.16}
  #allocation0 [shape = 'u32[]', space=smem, size = 0x4, offset = 0x4, fixed_abs, tag = 'smem constant byte address 0x4 - core index']
  #allocation1 [shape = 'u32[144,128]{1,0:T(1,128)}', space=vmem, size = 0x12000, scoped, tag = 'internal scratch']
  %s0 = inlined_call_operand.vmem [shape: f32[32,4,64], index: 0, kind: input, shape index: {}]
  %s1 = inlined_call_operand.vmem [shape: f32[32,64], index: 1, kind: input, shape index: {}]
  %s2 = inlined_call_operand.vmem [shape: f32[32,64], index: 2, kind: output, shape index: {}]
  %s3 = sld [smem:[#allocation0]]
  $region18: #{dgcnn_forward.16} parent=0
    _
  %s5 = ssub.s32 1, %s3
  %s6 = scalar_select 0, %s5, %s3
  // Predicated region
  $region2: #{dgcnn_forward.16} parent=0 // pred_check
    _
  $region3: #{dgcnn_forward.16} parent=0 // pred_check_branch
    %8 = sbr.rel (0) target = $region5
  $region4: #{dgcnn_forward.16} parent=0 // pred_region
    _
  $region5: #{dgcnn_forward.16} parent=0 // pred_fallthru
    _
  // Predicated region
  $region6: #{dgcnn_forward.16} parent=0 // pred_check
    _
  $region7: #{dgcnn_forward.16} parent=0 // pred_check_branch
    %10 = sbr.rel (0) target = $region9
  $region8: #{dgcnn_forward.16} parent=0 // pred_region
    _
  $region9: #{dgcnn_forward.16} parent=0 // pred_fallthru
    _
  %v11 = vld [vmem:[%s1] sm:$0xff]
  %v12 = vld [vmem:[%s1 + $0x8] sm:$0xff]
  %v13 = vld [vmem:[%s1 + $0x10] sm:$0xff]
  %v14 = vld [vmem:[%s1 + $0x18] sm:$0xff]
  %v15 = vld [vmem:[%s0] sm:$0x1]
  %v16 = vld [vmem:[%s0 + $0x4] sm:$0x1]
  %v17 = vld [vmem:[%s0 + $0x8] sm:$0x1]
  %v18 = vld [vmem:[%s0 + $0xc] sm:$0x1]
  %v19 = vld [vmem:[%s0 + $0x10] sm:$0x1]
  %v20 = vld [vmem:[%s0 + $0x14] sm:$0x1]
  %v21 = vld [vmem:[%s0 + $0x18] sm:$0x1]
  %v22 = vld [vmem:[%s0 + $0x1c] sm:$0x1]
  %v23 = vld [vmem:[%s0 + $0x20] sm:$0x1]
  %v24 = vld [vmem:[%s0 + $0x24] sm:$0x1]
  %v25 = vld [vmem:[%s0 + $0x28] sm:$0x1]
  %v26 = vld [vmem:[%s0 + $0x2c] sm:$0x1]
  %v27 = vld [vmem:[%s0 + $0x30] sm:$0x1]
  %v28 = vld [vmem:[%s0 + $0x34] sm:$0x1]
  %v29 = vld [vmem:[%s0 + $0x38] sm:$0x1]
  %v30 = vld [vmem:[%s0 + $0x3c] sm:$0x1]
  %v31 = vld [vmem:[%s0 + $0x40] sm:$0x1]
  %v32 = vld [vmem:[%s0 + $0x44] sm:$0x1]
  %v33 = vld [vmem:[%s0 + $0x48] sm:$0x1]
  %v34 = vld [vmem:[%s0 + $0x4c] sm:$0x1]
  %v35 = vld [vmem:[%s0 + $0x50] sm:$0x1]
  %v36 = vld [vmem:[%s0 + $0x54] sm:$0x1]
  %v37 = vld [vmem:[%s0 + $0x58] sm:$0x1]
  %v38 = vld [vmem:[%s0 + $0x5c] sm:$0x1]
  %v39 = vld [vmem:[%s0 + $0x60] sm:$0x1]
  %v40 = vld [vmem:[%s0 + $0x64] sm:$0x1]
  %v41 = vld [vmem:[%s0 + $0x68] sm:$0x1]
  %v42 = vld [vmem:[%s0 + $0x6c] sm:$0x1]
  %v43 = vld [vmem:[%s0 + $0x70] sm:$0x1]
  %v44 = vld [vmem:[%s0 + $0x74] sm:$0x1]
  %v45 = vld [vmem:[%s0 + $0x78] sm:$0x1]
  %v46 = vld [vmem:[%s0 + $0x7c] sm:$0x1]
  %v51 = vrot.slane %v11, 1
  %v52 = vrot.slane %v11, 2
  %v53 = vrot.slane %v11, 3
  %v54 = vrot.slane %v11, 4
  %v55 = vrot.slane %v11, 5
  %v56 = vrot.slane %v11, 6
  %v57 = vrot.slane %v11, 7
  %v58 = vrot.slane %v12, 1
  %v59 = vrot.slane %v12, 2
  %v60 = vrot.slane %v12, 3
  %v61 = vrot.slane %v12, 4
  %v62 = vrot.slane %v12, 5
  %v63 = vrot.slane %v12, 6
  %v64 = vrot.slane %v12, 7
  %v65 = vrot.slane %v13, 1
  %v66 = vrot.slane %v13, 2
  %v67 = vrot.slane %v13, 3
  %v68 = vrot.slane %v13, 4
  %v69 = vrot.slane %v13, 5
  %v70 = vrot.slane %v13, 6
  %v71 = vrot.slane %v13, 7
  %v72 = vrot.slane %v14, 1
  %v73 = vrot.slane %v14, 2
  %v74 = vrot.slane %v14, 3
  %v75 = vrot.slane %v14, 4
  %v76 = vrot.slane %v14, 5
  %v77 = vrot.slane %v14, 6
  %v78 = vrot.slane %v14, 7
  %v111 = vadd.f32 %v15, %v11
  %v112 = vadd.f32 %v16, %v51
  %v113 = vadd.f32 %v17, %v52
  %v114 = vadd.f32 %v18, %v53
  %v115 = vadd.f32 %v19, %v54
  %v116 = vadd.f32 %v20, %v55
  %v117 = vadd.f32 %v21, %v56
  %v118 = vadd.f32 %v22, %v57
  %v119 = vadd.f32 %v23, %v12
  %v120 = vadd.f32 %v24, %v58
  %v121 = vadd.f32 %v25, %v59
  %v122 = vadd.f32 %v26, %v60
  %v123 = vadd.f32 %v27, %v61
  %v124 = vadd.f32 %v28, %v62
  %v125 = vadd.f32 %v29, %v63
  %v126 = vadd.f32 %v30, %v64
  %v127 = vadd.f32 %v31, %v13
  %v128 = vadd.f32 %v32, %v65
  %v129 = vadd.f32 %v33, %v66
  %v130 = vadd.f32 %v34, %v67
  %v131 = vadd.f32 %v35, %v68
  %v132 = vadd.f32 %v36, %v69
  %v133 = vadd.f32 %v37, %v70
  %v134 = vadd.f32 %v38, %v71
  %v135 = vadd.f32 %v39, %v14
  %v136 = vadd.f32 %v40, %v72
  %v137 = vadd.f32 %v41, %v73
  %v138 = vadd.f32 %v42, %v74
  %v139 = vadd.f32 %v43, %v75
  %v140 = vadd.f32 %v44, %v76
  %v141 = vadd.f32 %v45, %v77
  %v142 = vadd.f32 %v46, %v78
  %vm143 = vcmp.gt.f32.partialorder %v111, 0.0
  %vm144 = vcmp.gt.f32.partialorder %v112, 0.0
  %vm145 = vcmp.gt.f32.partialorder %v113, 0.0
  %vm146 = vcmp.gt.f32.partialorder %v114, 0.0
  %vm147 = vcmp.gt.f32.partialorder %v115, 0.0
  %vm148 = vcmp.gt.f32.partialorder %v116, 0.0
  %vm149 = vcmp.gt.f32.partialorder %v117, 0.0
  %vm150 = vcmp.gt.f32.partialorder %v118, 0.0
  %vm151 = vcmp.gt.f32.partialorder %v119, 0.0
  %vm152 = vcmp.gt.f32.partialorder %v120, 0.0
  %vm153 = vcmp.gt.f32.partialorder %v121, 0.0
  %vm154 = vcmp.gt.f32.partialorder %v122, 0.0
  %vm155 = vcmp.gt.f32.partialorder %v123, 0.0
  %vm156 = vcmp.gt.f32.partialorder %v124, 0.0
  %vm157 = vcmp.gt.f32.partialorder %v125, 0.0
  %vm158 = vcmp.gt.f32.partialorder %v126, 0.0
  %vm159 = vcmp.gt.f32.partialorder %v127, 0.0
  %vm160 = vcmp.gt.f32.partialorder %v128, 0.0
  %vm161 = vcmp.gt.f32.partialorder %v129, 0.0
  %vm162 = vcmp.gt.f32.partialorder %v130, 0.0
  %vm163 = vcmp.gt.f32.partialorder %v131, 0.0
  %vm164 = vcmp.gt.f32.partialorder %v132, 0.0
  %vm165 = vcmp.gt.f32.partialorder %v133, 0.0
  %vm166 = vcmp.gt.f32.partialorder %v134, 0.0
  %vm167 = vcmp.gt.f32.partialorder %v135, 0.0
  %vm168 = vcmp.gt.f32.partialorder %v136, 0.0
  %vm169 = vcmp.gt.f32.partialorder %v137, 0.0
  %vm170 = vcmp.gt.f32.partialorder %v138, 0.0
  %vm171 = vcmp.gt.f32.partialorder %v139, 0.0
  %vm172 = vcmp.gt.f32.partialorder %v140, 0.0
  %vm173 = vcmp.gt.f32.partialorder %v141, 0.0
  %vm174 = vcmp.gt.f32.partialorder %v142, 0.0
  %v175 = vmul.f32 %v111, 0.2
  %v176 = vmul.f32 %v112, 0.2
  %v177 = vmul.f32 %v113, 0.2
  %v178 = vmul.f32 %v114, 0.2
  %v179 = vmul.f32 %v115, 0.2
  %v180 = vmul.f32 %v116, 0.2
  %v181 = vmul.f32 %v117, 0.2
  %v182 = vmul.f32 %v118, 0.2
  %v183 = vmul.f32 %v119, 0.2
  %v184 = vmul.f32 %v120, 0.2
  %v185 = vmul.f32 %v121, 0.2
  %v186 = vmul.f32 %v122, 0.2
  %v187 = vmul.f32 %v123, 0.2
  %v188 = vmul.f32 %v124, 0.2
  %v189 = vmul.f32 %v125, 0.2
  %v190 = vmul.f32 %v126, 0.2
  %v191 = vmul.f32 %v127, 0.2
  %v192 = vmul.f32 %v128, 0.2
  %v193 = vmul.f32 %v129, 0.2
  %v194 = vmul.f32 %v130, 0.2
  %v195 = vmul.f32 %v131, 0.2
  %v196 = vmul.f32 %v132, 0.2
  %v197 = vmul.f32 %v133, 0.2
  %v198 = vmul.f32 %v134, 0.2
  %v199 = vmul.f32 %v135, 0.2
  %v200 = vmul.f32 %v136, 0.2
  %v201 = vmul.f32 %v137, 0.2
  %v202 = vmul.f32 %v138, 0.2
  %v203 = vmul.f32 %v139, 0.2
  %v204 = vmul.f32 %v140, 0.2
  %v205 = vmul.f32 %v141, 0.2
  %v206 = vmul.f32 %v142, 0.2
  %v207 = vsel %vm143, %v111, %v175
  %v208 = vsel %vm144, %v112, %v176
  %v209 = vsel %vm145, %v113, %v177
  %v210 = vsel %vm146, %v114, %v178
  %v211 = vsel %vm147, %v115, %v179
  %v212 = vsel %vm148, %v116, %v180
  %v213 = vsel %vm149, %v117, %v181
  %v214 = vsel %vm150, %v118, %v182
  %v215 = vsel %vm151, %v119, %v183
  %v216 = vsel %vm152, %v120, %v184
  %v217 = vsel %vm153, %v121, %v185
  %v218 = vsel %vm154, %v122, %v186
  %v219 = vsel %vm155, %v123, %v187
  %v220 = vsel %vm156, %v124, %v188
  %v221 = vsel %vm157, %v125, %v189
  %v222 = vsel %vm158, %v126, %v190
  %v223 = vsel %vm159, %v127, %v191
  %v224 = vsel %vm160, %v128, %v192
  %v225 = vsel %vm161, %v129, %v193
  %v226 = vsel %vm162, %v130, %v194
  %v227 = vsel %vm163, %v131, %v195
  %v228 = vsel %vm164, %v132, %v196
  %v229 = vsel %vm165, %v133, %v197
  %v230 = vsel %vm166, %v134, %v198
  %v231 = vsel %vm167, %v135, %v199
  %v232 = vsel %vm168, %v136, %v200
  %v233 = vsel %vm169, %v137, %v201
  %v234 = vsel %vm170, %v138, %v202
  %v235 = vsel %vm171, %v139, %v203
  %v236 = vsel %vm172, %v140, %v204
  %v237 = vsel %vm173, %v141, %v205
  %v238 = vsel %vm174, %v142, %v206
  %v239 = vld [vmem:[%s0 + $0x1] sm:$0x1]
  %v240 = vld [vmem:[%s0 + $0x5] sm:$0x1]
  %v241 = vld [vmem:[%s0 + $0x9] sm:$0x1]
  %v242 = vld [vmem:[%s0 + $0xd] sm:$0x1]
  %v243 = vld [vmem:[%s0 + $0x11] sm:$0x1]
  %v244 = vld [vmem:[%s0 + $0x15] sm:$0x1]
  %v245 = vld [vmem:[%s0 + $0x19] sm:$0x1]
  %v246 = vld [vmem:[%s0 + $0x1d] sm:$0x1]
  %v247 = vld [vmem:[%s0 + $0x21] sm:$0x1]
  %v248 = vld [vmem:[%s0 + $0x25] sm:$0x1]
  %v249 = vld [vmem:[%s0 + $0x29] sm:$0x1]
  %v250 = vld [vmem:[%s0 + $0x2d] sm:$0x1]
  %v251 = vld [vmem:[%s0 + $0x31] sm:$0x1]
  %v252 = vld [vmem:[%s0 + $0x35] sm:$0x1]
  %v253 = vld [vmem:[%s0 + $0x39] sm:$0x1]
  %v254 = vld [vmem:[%s0 + $0x3d] sm:$0x1]
  %v255 = vld [vmem:[%s0 + $0x41] sm:$0x1]
  %v256 = vld [vmem:[%s0 + $0x45] sm:$0x1]
  %v257 = vld [vmem:[%s0 + $0x49] sm:$0x1]
  %v258 = vld [vmem:[%s0 + $0x4d] sm:$0x1]
  %v259 = vld [vmem:[%s0 + $0x51] sm:$0x1]
  %v260 = vld [vmem:[%s0 + $0x55] sm:$0x1]
  %v261 = vld [vmem:[%s0 + $0x59] sm:$0x1]
  %v262 = vld [vmem:[%s0 + $0x5d] sm:$0x1]
  %v263 = vld [vmem:[%s0 + $0x61] sm:$0x1]
  %v264 = vld [vmem:[%s0 + $0x65] sm:$0x1]
  %v265 = vld [vmem:[%s0 + $0x69] sm:$0x1]
  %v266 = vld [vmem:[%s0 + $0x6d] sm:$0x1]
  %v267 = vld [vmem:[%s0 + $0x71] sm:$0x1]
  %v268 = vld [vmem:[%s0 + $0x75] sm:$0x1]
  %v269 = vld [vmem:[%s0 + $0x79] sm:$0x1]
  %v270 = vld [vmem:[%s0 + $0x7d] sm:$0x1]
  %v271 = vadd.f32 %v239, %v11
  %v272 = vadd.f32 %v240, %v51
  %v273 = vadd.f32 %v241, %v52
  %v274 = vadd.f32 %v242, %v53
  %v275 = vadd.f32 %v243, %v54
  %v276 = vadd.f32 %v244, %v55
  %v277 = vadd.f32 %v245, %v56
  %v278 = vadd.f32 %v246, %v57
  %v279 = vadd.f32 %v247, %v12
  %v280 = vadd.f32 %v248, %v58
  %v281 = vadd.f32 %v249, %v59
  %v282 = vadd.f32 %v250, %v60
  %v283 = vadd.f32 %v251, %v61
  %v284 = vadd.f32 %v252, %v62
  %v285 = vadd.f32 %v253, %v63
  %v286 = vadd.f32 %v254, %v64
  %v287 = vadd.f32 %v255, %v13
  %v288 = vadd.f32 %v256, %v65
  %v289 = vadd.f32 %v257, %v66
  %v290 = vadd.f32 %v258, %v67
  %v291 = vadd.f32 %v259, %v68
  %v292 = vadd.f32 %v260, %v69
  %v293 = vadd.f32 %v261, %v70
  %v294 = vadd.f32 %v262, %v71
  %v295 = vadd.f32 %v263, %v14
  %v296 = vadd.f32 %v264, %v72
  %v297 = vadd.f32 %v265, %v73
  %v298 = vadd.f32 %v266, %v74
  %v299 = vadd.f32 %v267, %v75
  %v300 = vadd.f32 %v268, %v76
  %v301 = vadd.f32 %v269, %v77
  %v302 = vadd.f32 %v270, %v78
  %vm303 = vcmp.gt.f32.partialorder %v271, 0.0
  %vm304 = vcmp.gt.f32.partialorder %v272, 0.0
  %vm305 = vcmp.gt.f32.partialorder %v273, 0.0
  %vm306 = vcmp.gt.f32.partialorder %v274, 0.0
  %vm307 = vcmp.gt.f32.partialorder %v275, 0.0
  %vm308 = vcmp.gt.f32.partialorder %v276, 0.0
  %vm309 = vcmp.gt.f32.partialorder %v277, 0.0
  %vm310 = vcmp.gt.f32.partialorder %v278, 0.0
  %vm311 = vcmp.gt.f32.partialorder %v279, 0.0
  %vm312 = vcmp.gt.f32.partialorder %v280, 0.0
  %vm313 = vcmp.gt.f32.partialorder %v281, 0.0
  %vm314 = vcmp.gt.f32.partialorder %v282, 0.0
  %vm315 = vcmp.gt.f32.partialorder %v283, 0.0
  %vm316 = vcmp.gt.f32.partialorder %v284, 0.0
  %vm317 = vcmp.gt.f32.partialorder %v285, 0.0
  %vm318 = vcmp.gt.f32.partialorder %v286, 0.0
  %vm319 = vcmp.gt.f32.partialorder %v287, 0.0
  %vm320 = vcmp.gt.f32.partialorder %v288, 0.0
  %vm321 = vcmp.gt.f32.partialorder %v289, 0.0
  %vm322 = vcmp.gt.f32.partialorder %v290, 0.0
  %vm323 = vcmp.gt.f32.partialorder %v291, 0.0
  %vm324 = vcmp.gt.f32.partialorder %v292, 0.0
  %vm325 = vcmp.gt.f32.partialorder %v293, 0.0
  %vm326 = vcmp.gt.f32.partialorder %v294, 0.0
  %vm327 = vcmp.gt.f32.partialorder %v295, 0.0
  %vm328 = vcmp.gt.f32.partialorder %v296, 0.0
  %vm329 = vcmp.gt.f32.partialorder %v297, 0.0
  %vm330 = vcmp.gt.f32.partialorder %v298, 0.0
  %vm331 = vcmp.gt.f32.partialorder %v299, 0.0
  %vm332 = vcmp.gt.f32.partialorder %v300, 0.0
  %vm333 = vcmp.gt.f32.partialorder %v301, 0.0
  %vm334 = vcmp.gt.f32.partialorder %v302, 0.0
  %v335 = vmul.f32 %v271, 0.2
  %v336 = vmul.f32 %v272, 0.2
  %v337 = vmul.f32 %v273, 0.2
  %v338 = vmul.f32 %v274, 0.2
  %v339 = vmul.f32 %v275, 0.2
  %v340 = vmul.f32 %v276, 0.2
  %v341 = vmul.f32 %v277, 0.2
  %v342 = vmul.f32 %v278, 0.2
  %v343 = vmul.f32 %v279, 0.2
  %v344 = vmul.f32 %v280, 0.2
  %v345 = vmul.f32 %v281, 0.2
  %v346 = vmul.f32 %v282, 0.2
  %v347 = vmul.f32 %v283, 0.2
  %v348 = vmul.f32 %v284, 0.2
  %v349 = vmul.f32 %v285, 0.2
  %v350 = vmul.f32 %v286, 0.2
  %v351 = vmul.f32 %v287, 0.2
  %v352 = vmul.f32 %v288, 0.2
  %v353 = vmul.f32 %v289, 0.2
  %v354 = vmul.f32 %v290, 0.2
  %v355 = vmul.f32 %v291, 0.2
  %v356 = vmul.f32 %v292, 0.2
  %v357 = vmul.f32 %v293, 0.2
  %v358 = vmul.f32 %v294, 0.2
  %v359 = vmul.f32 %v295, 0.2
  %v360 = vmul.f32 %v296, 0.2
  %v361 = vmul.f32 %v297, 0.2
  %v362 = vmul.f32 %v298, 0.2
  %v363 = vmul.f32 %v299, 0.2
  %v364 = vmul.f32 %v300, 0.2
  %v365 = vmul.f32 %v301, 0.2
  %v366 = vmul.f32 %v302, 0.2
  %v367 = vsel %vm303, %v271, %v335
  %v368 = vsel %vm304, %v272, %v336
  %v369 = vsel %vm305, %v273, %v337
  %v370 = vsel %vm306, %v274, %v338
  %v371 = vsel %vm307, %v275, %v339
  %v372 = vsel %vm308, %v276, %v340
  %v373 = vsel %vm309, %v277, %v341
  %v374 = vsel %vm310, %v278, %v342
  %v375 = vsel %vm311, %v279, %v343
  %v376 = vsel %vm312, %v280, %v344
  %v377 = vsel %vm313, %v281, %v345
  %v378 = vsel %vm314, %v282, %v346
  %v379 = vsel %vm315, %v283, %v347
  %v380 = vsel %vm316, %v284, %v348
  %v381 = vsel %vm317, %v285, %v349
  %v382 = vsel %vm318, %v286, %v350
  %v383 = vsel %vm319, %v287, %v351
  %v384 = vsel %vm320, %v288, %v352
  %v385 = vsel %vm321, %v289, %v353
  %v386 = vsel %vm322, %v290, %v354
  %v387 = vsel %vm323, %v291, %v355
  %v388 = vsel %vm324, %v292, %v356
  %v389 = vsel %vm325, %v293, %v357
  %v390 = vsel %vm326, %v294, %v358
  %v391 = vsel %vm327, %v295, %v359
  %v392 = vsel %vm328, %v296, %v360
  %v393 = vsel %vm329, %v297, %v361
  %v394 = vsel %vm330, %v298, %v362
  %v395 = vsel %vm331, %v299, %v363
  %v396 = vsel %vm332, %v300, %v364
  %v397 = vsel %vm333, %v301, %v365
  %v398 = vsel %vm334, %v302, %v366
  %v399 = vmax.f32 %v207, %v367
  %v400 = vmax.f32 %v208, %v368
  %v401 = vmax.f32 %v209, %v369
  %v402 = vmax.f32 %v210, %v370
  %v403 = vmax.f32 %v211, %v371
  %v404 = vmax.f32 %v212, %v372
  %v405 = vmax.f32 %v213, %v373
  %v406 = vmax.f32 %v214, %v374
  %v407 = vmax.f32 %v215, %v375
  %v408 = vmax.f32 %v216, %v376
  %v409 = vmax.f32 %v217, %v377
  %v410 = vmax.f32 %v218, %v378
  %v411 = vmax.f32 %v219, %v379
  %v412 = vmax.f32 %v220, %v380
  %v413 = vmax.f32 %v221, %v381
  %v414 = vmax.f32 %v222, %v382
  %v415 = vmax.f32 %v223, %v383
  %v416 = vmax.f32 %v224, %v384
  %v417 = vmax.f32 %v225, %v385
  %v418 = vmax.f32 %v226, %v386
  %v419 = vmax.f32 %v227, %v387
  %v420 = vmax.f32 %v228, %v388
  %v421 = vmax.f32 %v229, %v389
  %v422 = vmax.f32 %v230, %v390
  %v423 = vmax.f32 %v231, %v391
  %v424 = vmax.f32 %v232, %v392
  %v425 = vmax.f32 %v233, %v393
  %v426 = vmax.f32 %v234, %v394
  %v427 = vmax.f32 %v235, %v395
  %v428 = vmax.f32 %v236, %v396
  %v429 = vmax.f32 %v237, %v397
  %v430 = vmax.f32 %v238, %v398
  %v431 = vld [vmem:[%s0 + $0x2] sm:$0x1]
  %v432 = vld [vmem:[%s0 + $0x6] sm:$0x1]
  %v433 = vld [vmem:[%s0 + $0xa] sm:$0x1]
  %v434 = vld [vmem:[%s0 + $0xe] sm:$0x1]
  %v435 = vld [vmem:[%s0 + $0x12] sm:$0x1]
  %v436 = vld [vmem:[%s0 + $0x16] sm:$0x1]
  %v437 = vld [vmem:[%s0 + $0x1a] sm:$0x1]
  %v438 = vld [vmem:[%s0 + $0x1e] sm:$0x1]
  %v439 = vld [vmem:[%s0 + $0x22] sm:$0x1]
  %v440 = vld [vmem:[%s0 + $0x26] sm:$0x1]
  %v441 = vld [vmem:[%s0 + $0x2a] sm:$0x1]
  %v442 = vld [vmem:[%s0 + $0x2e] sm:$0x1]
  %v443 = vld [vmem:[%s0 + $0x32] sm:$0x1]
  %v444 = vld [vmem:[%s0 + $0x36] sm:$0x1]
  %v445 = vld [vmem:[%s0 + $0x3a] sm:$0x1]
  %v446 = vld [vmem:[%s0 + $0x3e] sm:$0x1]
  %v447 = vld [vmem:[%s0 + $0x42] sm:$0x1]
  %v448 = vld [vmem:[%s0 + $0x46] sm:$0x1]
  %v449 = vld [vmem:[%s0 + $0x4a] sm:$0x1]
  %v450 = vld [vmem:[%s0 + $0x4e] sm:$0x1]
  %v451 = vld [vmem:[%s0 + $0x52] sm:$0x1]
  %v452 = vld [vmem:[%s0 + $0x56] sm:$0x1]
  %v453 = vld [vmem:[%s0 + $0x5a] sm:$0x1]
  %v454 = vld [vmem:[%s0 + $0x5e] sm:$0x1]
  %v455 = vld [vmem:[%s0 + $0x62] sm:$0x1]
  %v456 = vld [vmem:[%s0 + $0x66] sm:$0x1]
  %v457 = vld [vmem:[%s0 + $0x6a] sm:$0x1]
  %v458 = vld [vmem:[%s0 + $0x6e] sm:$0x1]
  %v459 = vld [vmem:[%s0 + $0x72] sm:$0x1]
  %v460 = vld [vmem:[%s0 + $0x76] sm:$0x1]
  %v461 = vld [vmem:[%s0 + $0x7a] sm:$0x1]
  %v462 = vld [vmem:[%s0 + $0x7e] sm:$0x1]
  %v463 = vadd.f32 %v431, %v11
  %v464 = vadd.f32 %v432, %v51
  %v465 = vadd.f32 %v433, %v52
  %v466 = vadd.f32 %v434, %v53
  %v467 = vadd.f32 %v435, %v54
  %v468 = vadd.f32 %v436, %v55
  %v469 = vadd.f32 %v437, %v56
  %v470 = vadd.f32 %v438, %v57
  %v471 = vadd.f32 %v439, %v12
  %v472 = vadd.f32 %v440, %v58
  %v473 = vadd.f32 %v441, %v59
  %v474 = vadd.f32 %v442, %v60
  %v475 = vadd.f32 %v443, %v61
  %v476 = vadd.f32 %v444, %v62
  %v477 = vadd.f32 %v445, %v63
  %v478 = vadd.f32 %v446, %v64
  %v479 = vadd.f32 %v447, %v13
  %v480 = vadd.f32 %v448, %v65
  %v481 = vadd.f32 %v449, %v66
  %v482 = vadd.f32 %v450, %v67
  %v483 = vadd.f32 %v451, %v68
  %v484 = vadd.f32 %v452, %v69
  %v485 = vadd.f32 %v453, %v70
  %v486 = vadd.f32 %v454, %v71
  %v487 = vadd.f32 %v455, %v14
  %v488 = vadd.f32 %v456, %v72
  %v489 = vadd.f32 %v457, %v73
  %v490 = vadd.f32 %v458, %v74
  %v491 = vadd.f32 %v459, %v75
  %v492 = vadd.f32 %v460, %v76
  %v493 = vadd.f32 %v461, %v77
  %v494 = vadd.f32 %v462, %v78
  %vm495 = vcmp.gt.f32.partialorder %v463, 0.0
  %vm496 = vcmp.gt.f32.partialorder %v464, 0.0
  %vm497 = vcmp.gt.f32.partialorder %v465, 0.0
  %vm498 = vcmp.gt.f32.partialorder %v466, 0.0
  %vm499 = vcmp.gt.f32.partialorder %v467, 0.0
  %vm500 = vcmp.gt.f32.partialorder %v468, 0.0
  %vm501 = vcmp.gt.f32.partialorder %v469, 0.0
  %vm502 = vcmp.gt.f32.partialorder %v470, 0.0
  %vm503 = vcmp.gt.f32.partialorder %v471, 0.0
  %vm504 = vcmp.gt.f32.partialorder %v472, 0.0
  %vm505 = vcmp.gt.f32.partialorder %v473, 0.0
  %vm506 = vcmp.gt.f32.partialorder %v474, 0.0
  %vm507 = vcmp.gt.f32.partialorder %v475, 0.0
  %vm508 = vcmp.gt.f32.partialorder %v476, 0.0
  %vm509 = vcmp.gt.f32.partialorder %v477, 0.0
  %vm510 = vcmp.gt.f32.partialorder %v478, 0.0
  %vm511 = vcmp.gt.f32.partialorder %v479, 0.0
  %vm512 = vcmp.gt.f32.partialorder %v480, 0.0
  %vm513 = vcmp.gt.f32.partialorder %v481, 0.0
  %vm514 = vcmp.gt.f32.partialorder %v482, 0.0
  %vm515 = vcmp.gt.f32.partialorder %v483, 0.0
  %vm516 = vcmp.gt.f32.partialorder %v484, 0.0
  %vm517 = vcmp.gt.f32.partialorder %v485, 0.0
  %vm518 = vcmp.gt.f32.partialorder %v486, 0.0
  %vm519 = vcmp.gt.f32.partialorder %v487, 0.0
  %vm520 = vcmp.gt.f32.partialorder %v488, 0.0
  %vm521 = vcmp.gt.f32.partialorder %v489, 0.0
  %vm522 = vcmp.gt.f32.partialorder %v490, 0.0
  %vm523 = vcmp.gt.f32.partialorder %v491, 0.0
  %vm524 = vcmp.gt.f32.partialorder %v492, 0.0
  %vm525 = vcmp.gt.f32.partialorder %v493, 0.0
  %vm526 = vcmp.gt.f32.partialorder %v494, 0.0
  %v527 = vmul.f32 %v463, 0.2
  %v528 = vmul.f32 %v464, 0.2
  %v529 = vmul.f32 %v465, 0.2
  %v530 = vmul.f32 %v466, 0.2
  %v531 = vmul.f32 %v467, 0.2
  %v532 = vmul.f32 %v468, 0.2
  %v533 = vmul.f32 %v469, 0.2
  %v534 = vmul.f32 %v470, 0.2
  %v535 = vmul.f32 %v471, 0.2
  %v536 = vmul.f32 %v472, 0.2
  %v537 = vmul.f32 %v473, 0.2
  %v538 = vmul.f32 %v474, 0.2
  %v539 = vmul.f32 %v475, 0.2
  %v540 = vmul.f32 %v476, 0.2
  %v541 = vmul.f32 %v477, 0.2
  %v542 = vmul.f32 %v478, 0.2
  %v543 = vmul.f32 %v479, 0.2
  %v544 = vmul.f32 %v480, 0.2
  %v545 = vmul.f32 %v481, 0.2
  %v546 = vmul.f32 %v482, 0.2
  %v547 = vmul.f32 %v483, 0.2
  %v548 = vmul.f32 %v484, 0.2
  %v549 = vmul.f32 %v485, 0.2
  %v550 = vmul.f32 %v486, 0.2
  %v551 = vmul.f32 %v487, 0.2
  %v552 = vmul.f32 %v488, 0.2
  %v553 = vmul.f32 %v489, 0.2
  %v554 = vmul.f32 %v490, 0.2
  %v555 = vmul.f32 %v491, 0.2
  %v556 = vmul.f32 %v492, 0.2
  %v557 = vmul.f32 %v493, 0.2
  %v558 = vmul.f32 %v494, 0.2
  %v559 = vsel %vm495, %v463, %v527
  %v560 = vsel %vm496, %v464, %v528
  %v561 = vsel %vm497, %v465, %v529
  %v562 = vsel %vm498, %v466, %v530
  %v563 = vsel %vm499, %v467, %v531
  %v564 = vsel %vm500, %v468, %v532
  %v565 = vsel %vm501, %v469, %v533
  %v566 = vsel %vm502, %v470, %v534
  %v567 = vsel %vm503, %v471, %v535
  %v568 = vsel %vm504, %v472, %v536
  %v569 = vsel %vm505, %v473, %v537
  %v570 = vsel %vm506, %v474, %v538
  %v571 = vsel %vm507, %v475, %v539
  %v572 = vsel %vm508, %v476, %v540
  %v573 = vsel %vm509, %v477, %v541
  %v574 = vsel %vm510, %v478, %v542
  %v575 = vsel %vm511, %v479, %v543
  %v576 = vsel %vm512, %v480, %v544
  %v577 = vsel %vm513, %v481, %v545
  %v578 = vsel %vm514, %v482, %v546
  %v579 = vsel %vm515, %v483, %v547
  %v580 = vsel %vm516, %v484, %v548
  %v581 = vsel %vm517, %v485, %v549
  %v582 = vsel %vm518, %v486, %v550
  %v583 = vsel %vm519, %v487, %v551
  %v584 = vsel %vm520, %v488, %v552
  %v585 = vsel %vm521, %v489, %v553
  %v586 = vsel %vm522, %v490, %v554
  %v587 = vsel %vm523, %v491, %v555
  %v588 = vsel %vm524, %v492, %v556
  %v589 = vsel %vm525, %v493, %v557
  %v590 = vsel %vm526, %v494, %v558
  %v591 = vmax.f32 %v399, %v559
  %v592 = vmax.f32 %v400, %v560
  %v593 = vmax.f32 %v401, %v561
  %v594 = vmax.f32 %v402, %v562
  %v595 = vmax.f32 %v403, %v563
  %v596 = vmax.f32 %v404, %v564
  %v597 = vmax.f32 %v405, %v565
  %v598 = vmax.f32 %v406, %v566
  %v599 = vmax.f32 %v407, %v567
  %v600 = vmax.f32 %v408, %v568
  %v601 = vmax.f32 %v409, %v569
  %v602 = vmax.f32 %v410, %v570
  %v603 = vmax.f32 %v411, %v571
  %v604 = vmax.f32 %v412, %v572
  %v605 = vmax.f32 %v413, %v573
  %v606 = vmax.f32 %v414, %v574
  %v607 = vmax.f32 %v415, %v575
  %v608 = vmax.f32 %v416, %v576
  %v609 = vmax.f32 %v417, %v577
  %v610 = vmax.f32 %v418, %v578
  %v611 = vmax.f32 %v419, %v579
  %v612 = vmax.f32 %v420, %v580
  %v613 = vmax.f32 %v421, %v581
  %v614 = vmax.f32 %v422, %v582
  %v615 = vmax.f32 %v423, %v583
  %v616 = vmax.f32 %v424, %v584
  %v617 = vmax.f32 %v425, %v585
  %v618 = vmax.f32 %v426, %v586
  %v619 = vmax.f32 %v427, %v587
  %v620 = vmax.f32 %v428, %v588
  %v621 = vmax.f32 %v429, %v589
  %v622 = vmax.f32 %v430, %v590
  %v623 = vld [vmem:[%s0 + $0x3] sm:$0x1]
  %v624 = vld [vmem:[%s0 + $0x7] sm:$0x1]
  %v625 = vld [vmem:[%s0 + $0xb] sm:$0x1]
  %v626 = vld [vmem:[%s0 + $0xf] sm:$0x1]
  %v627 = vld [vmem:[%s0 + $0x13] sm:$0x1]
  %v628 = vld [vmem:[%s0 + $0x17] sm:$0x1]
  %v629 = vld [vmem:[%s0 + $0x1b] sm:$0x1]
  %v630 = vld [vmem:[%s0 + $0x1f] sm:$0x1]
  %v631 = vld [vmem:[%s0 + $0x23] sm:$0x1]
  %v632 = vld [vmem:[%s0 + $0x27] sm:$0x1]
  %v633 = vld [vmem:[%s0 + $0x2b] sm:$0x1]
  %v634 = vld [vmem:[%s0 + $0x2f] sm:$0x1]
  %v635 = vld [vmem:[%s0 + $0x33] sm:$0x1]
  %v636 = vld [vmem:[%s0 + $0x37] sm:$0x1]
  %v637 = vld [vmem:[%s0 + $0x3b] sm:$0x1]
  %v638 = vld [vmem:[%s0 + $0x3f] sm:$0x1]
  %v639 = vld [vmem:[%s0 + $0x43] sm:$0x1]
  %v640 = vld [vmem:[%s0 + $0x47] sm:$0x1]
  %v641 = vld [vmem:[%s0 + $0x4b] sm:$0x1]
  %v642 = vld [vmem:[%s0 + $0x4f] sm:$0x1]
  %v643 = vld [vmem:[%s0 + $0x53] sm:$0x1]
  %v644 = vld [vmem:[%s0 + $0x57] sm:$0x1]
  %v645 = vld [vmem:[%s0 + $0x5b] sm:$0x1]
  %v646 = vld [vmem:[%s0 + $0x5f] sm:$0x1]
  %v647 = vld [vmem:[%s0 + $0x63] sm:$0x1]
  %v648 = vld [vmem:[%s0 + $0x67] sm:$0x1]
  %v649 = vld [vmem:[%s0 + $0x6b] sm:$0x1]
  %v650 = vld [vmem:[%s0 + $0x6f] sm:$0x1]
  %v651 = vld [vmem:[%s0 + $0x73] sm:$0x1]
  %v652 = vld [vmem:[%s0 + $0x77] sm:$0x1]
  %v653 = vld [vmem:[%s0 + $0x7b] sm:$0x1]
  %v654 = vld [vmem:[%s0 + $0x7f] sm:$0x1]
  %v655 = vadd.f32 %v623, %v11
  %v656 = vadd.f32 %v624, %v51
  %v657 = vadd.f32 %v625, %v52
  %v658 = vadd.f32 %v626, %v53
  %v659 = vadd.f32 %v627, %v54
  %v660 = vadd.f32 %v628, %v55
  %v661 = vadd.f32 %v629, %v56
  %v662 = vadd.f32 %v630, %v57
  %v663 = vadd.f32 %v631, %v12
  %v664 = vadd.f32 %v632, %v58
  %v665 = vadd.f32 %v633, %v59
  %v666 = vadd.f32 %v634, %v60
  %v667 = vadd.f32 %v635, %v61
  %v668 = vadd.f32 %v636, %v62
  %v669 = vadd.f32 %v637, %v63
  %v670 = vadd.f32 %v638, %v64
  %v671 = vadd.f32 %v639, %v13
  %v672 = vadd.f32 %v640, %v65
  %v673 = vadd.f32 %v641, %v66
  %v674 = vadd.f32 %v642, %v67
  %v675 = vadd.f32 %v643, %v68
  %v676 = vadd.f32 %v644, %v69
  %v677 = vadd.f32 %v645, %v70
  %v678 = vadd.f32 %v646, %v71
  %v679 = vadd.f32 %v647, %v14
  %v680 = vadd.f32 %v648, %v72
  %v681 = vadd.f32 %v649, %v73
  %v682 = vadd.f32 %v650, %v74
  %v683 = vadd.f32 %v651, %v75
  %v684 = vadd.f32 %v652, %v76
  %v685 = vadd.f32 %v653, %v77
  %v686 = vadd.f32 %v654, %v78
  %vm687 = vcmp.gt.f32.partialorder %v655, 0.0
  %vm688 = vcmp.gt.f32.partialorder %v656, 0.0
  %vm689 = vcmp.gt.f32.partialorder %v657, 0.0
  %vm690 = vcmp.gt.f32.partialorder %v658, 0.0
  %vm691 = vcmp.gt.f32.partialorder %v659, 0.0
  %vm692 = vcmp.gt.f32.partialorder %v660, 0.0
  %vm693 = vcmp.gt.f32.partialorder %v661, 0.0
  %vm694 = vcmp.gt.f32.partialorder %v662, 0.0
  %vm695 = vcmp.gt.f32.partialorder %v663, 0.0
  %vm696 = vcmp.gt.f32.partialorder %v664, 0.0
  %vm697 = vcmp.gt.f32.partialorder %v665, 0.0
  %vm698 = vcmp.gt.f32.partialorder %v666, 0.0
  %vm699 = vcmp.gt.f32.partialorder %v667, 0.0
  %vm700 = vcmp.gt.f32.partialorder %v668, 0.0
  %vm701 = vcmp.gt.f32.partialorder %v669, 0.0
  %vm702 = vcmp.gt.f32.partialorder %v670, 0.0
  %vm703 = vcmp.gt.f32.partialorder %v671, 0.0
  %vm704 = vcmp.gt.f32.partialorder %v672, 0.0
  %vm705 = vcmp.gt.f32.partialorder %v673, 0.0
  %vm706 = vcmp.gt.f32.partialorder %v674, 0.0
  %vm707 = vcmp.gt.f32.partialorder %v675, 0.0
  %vm708 = vcmp.gt.f32.partialorder %v676, 0.0
  %vm709 = vcmp.gt.f32.partialorder %v677, 0.0
  %vm710 = vcmp.gt.f32.partialorder %v678, 0.0
  %vm711 = vcmp.gt.f32.partialorder %v679, 0.0
  %vm712 = vcmp.gt.f32.partialorder %v680, 0.0
  %vm713 = vcmp.gt.f32.partialorder %v681, 0.0
  %vm714 = vcmp.gt.f32.partialorder %v682, 0.0
  %vm715 = vcmp.gt.f32.partialorder %v683, 0.0
  %vm716 = vcmp.gt.f32.partialorder %v684, 0.0
  %vm717 = vcmp.gt.f32.partialorder %v685, 0.0
  %vm718 = vcmp.gt.f32.partialorder %v686, 0.0
  %v719 = vmul.f32 %v655, 0.2
  %v720 = vmul.f32 %v656, 0.2
  %v721 = vmul.f32 %v657, 0.2
  %v722 = vmul.f32 %v658, 0.2
  %v723 = vmul.f32 %v659, 0.2
  %v724 = vmul.f32 %v660, 0.2
  %v725 = vmul.f32 %v661, 0.2
  %v726 = vmul.f32 %v662, 0.2
  %v727 = vmul.f32 %v663, 0.2
  %v728 = vmul.f32 %v664, 0.2
  %v729 = vmul.f32 %v665, 0.2
  %v730 = vmul.f32 %v666, 0.2
  %v731 = vmul.f32 %v667, 0.2
  %v732 = vmul.f32 %v668, 0.2
  %v733 = vmul.f32 %v669, 0.2
  %v734 = vmul.f32 %v670, 0.2
  %v735 = vmul.f32 %v671, 0.2
  %v736 = vmul.f32 %v672, 0.2
  %v737 = vmul.f32 %v673, 0.2
  %v738 = vmul.f32 %v674, 0.2
  %v739 = vmul.f32 %v675, 0.2
  %v740 = vmul.f32 %v676, 0.2
  %v741 = vmul.f32 %v677, 0.2
  %v742 = vmul.f32 %v678, 0.2
  %v743 = vmul.f32 %v679, 0.2
  %v744 = vmul.f32 %v680, 0.2
  %v745 = vmul.f32 %v681, 0.2
  %v746 = vmul.f32 %v682, 0.2
  %v747 = vmul.f32 %v683, 0.2
  %v748 = vmul.f32 %v684, 0.2
  %v749 = vmul.f32 %v685, 0.2
  %v750 = vmul.f32 %v686, 0.2
  %v751 = vsel %vm687, %v655, %v719
  %v752 = vsel %vm688, %v656, %v720
  %v753 = vsel %vm689, %v657, %v721
  %v754 = vsel %vm690, %v658, %v722
  %v755 = vsel %vm691, %v659, %v723
  %v756 = vsel %vm692, %v660, %v724
  %v757 = vsel %vm693, %v661, %v725
  %v758 = vsel %vm694, %v662, %v726
  %v759 = vsel %vm695, %v663, %v727
  %v760 = vsel %vm696, %v664, %v728
  %v761 = vsel %vm697, %v665, %v729
  %v762 = vsel %vm698, %v666, %v730
  %v763 = vsel %vm699, %v667, %v731
  %v764 = vsel %vm700, %v668, %v732
  %v765 = vsel %vm701, %v669, %v733
  %v766 = vsel %vm702, %v670, %v734
  %v767 = vsel %vm703, %v671, %v735
  %v768 = vsel %vm704, %v672, %v736
  %v769 = vsel %vm705, %v673, %v737
  %v770 = vsel %vm706, %v674, %v738
  %v771 = vsel %vm707, %v675, %v739
  %v772 = vsel %vm708, %v676, %v740
  %v773 = vsel %vm709, %v677, %v741
  %v774 = vsel %vm710, %v678, %v742
  %v775 = vsel %vm711, %v679, %v743
  %v776 = vsel %vm712, %v680, %v744
  %v777 = vsel %vm713, %v681, %v745
  %v778 = vsel %vm714, %v682, %v746
  %v779 = vsel %vm715, %v683, %v747
  %v780 = vsel %vm716, %v684, %v748
  %v781 = vsel %vm717, %v685, %v749
  %v782 = vsel %vm718, %v686, %v750
  %v783 = vmax.f32 %v591, %v751
  %v784 = vmax.f32 %v592, %v752
  %v785 = vmax.f32 %v593, %v753
  %v786 = vmax.f32 %v594, %v754
  %v787 = vmax.f32 %v595, %v755
  %v788 = vmax.f32 %v596, %v756
  %v789 = vmax.f32 %v597, %v757
  %v790 = vmax.f32 %v598, %v758
  %v791 = vmax.f32 %v599, %v759
  %v792 = vmax.f32 %v600, %v760
  %v793 = vmax.f32 %v601, %v761
  %v794 = vmax.f32 %v602, %v762
  %v795 = vmax.f32 %v603, %v763
  %v796 = vmax.f32 %v604, %v764
  %v797 = vmax.f32 %v605, %v765
  %v798 = vmax.f32 %v606, %v766
  %v799 = vmax.f32 %v607, %v767
  %v800 = vmax.f32 %v608, %v768
  %v801 = vmax.f32 %v609, %v769
  %v802 = vmax.f32 %v610, %v770
  %v803 = vmax.f32 %v611, %v771
  %v804 = vmax.f32 %v612, %v772
  %v805 = vmax.f32 %v613, %v773
  %v806 = vmax.f32 %v614, %v774
  %v807 = vmax.f32 %v615, %v775
  %v808 = vmax.f32 %v616, %v776
  %v809 = vmax.f32 %v617, %v777
  %v810 = vmax.f32 %v618, %v778
  %v811 = vmax.f32 %v619, %v779
  %v812 = vmax.f32 %v620, %v780
  %v813 = vmax.f32 %v621, %v781
  %v814 = vmax.f32 %v622, %v782
  %v847 = vrot.slane %v784, 7
  %vm848 = vcmask 1041409
  %v849 = vsel %vm848, %v847, %v783
  %v850 = vrot.slane %v785, 6
  %vm851 = vcmask 1042434
  %v852 = vsel %vm851, %v850, %v849
  %v853 = vrot.slane %v786, 5
  %vm854 = vcmask 1043459
  %v855 = vsel %vm854, %v853, %v852
  %v856 = vrot.slane %v787, 4
  %vm857 = vcmask 1044484
  %v858 = vsel %vm857, %v856, %v855
  %v859 = vrot.slane %v788, 3
  %vm860 = vcmask 1045509
  %v861 = vsel %vm860, %v859, %v858
  %v862 = vrot.slane %v789, 2
  %vm863 = vcmask 1046534
  %v864 = vsel %vm863, %v862, %v861
  %v865 = vrot.slane %v790, 1
  %vm866 = vcmask 1047559
  %v867 = vsel %vm866, %v865, %v864
  %v868 = vrot.slane %v792, 7
  %v869 = vsel %vm848, %v868, %v791
  %v870 = vrot.slane %v793, 6
  %v871 = vsel %vm851, %v870, %v869
  %v872 = vrot.slane %v794, 5
  %v873 = vsel %vm854, %v872, %v871
  %v874 = vrot.slane %v795, 4
  %v875 = vsel %vm857, %v874, %v873
  %v876 = vrot.slane %v796, 3
  %v877 = vsel %vm860, %v876, %v875
  %v878 = vrot.slane %v797, 2
  %v879 = vsel %vm863, %v878, %v877
  %v880 = vrot.slane %v798, 1
  %v881 = vsel %vm866, %v880, %v879
  %v882 = vrot.slane %v800, 7
  %v883 = vsel %vm848, %v882, %v799
  %v884 = vrot.slane %v801, 6
  %v885 = vsel %vm851, %v884, %v883
  %v886 = vrot.slane %v802, 5
  %v887 = vsel %vm854, %v886, %v885
  %v888 = vrot.slane %v803, 4
  %v889 = vsel %vm857, %v888, %v887
  %v890 = vrot.slane %v804, 3
  %v891 = vsel %vm860, %v890, %v889
  %v892 = vrot.slane %v805, 2
  %v893 = vsel %vm863, %v892, %v891
  %v894 = vrot.slane %v806, 1
  %v895 = vsel %vm866, %v894, %v893
  %v896 = vrot.slane %v808, 7
  %v897 = vsel %vm848, %v896, %v807
  %v898 = vrot.slane %v809, 6
  %v899 = vsel %vm851, %v898, %v897
  %v900 = vrot.slane %v810, 5
  %v901 = vsel %vm854, %v900, %v899
  %v902 = vrot.slane %v811, 4
  %v903 = vsel %vm857, %v902, %v901
  %v904 = vrot.slane %v812, 3
  %v905 = vsel %vm860, %v904, %v903
  %v906 = vrot.slane %v813, 2
  %v907 = vsel %vm863, %v906, %v905
  %v908 = vrot.slane %v814, 1
  %v909 = vsel %vm866, %v908, %v907
  %vm914 = vcmask 523264
  %915 = vst.msk [vmem:[%s2] sm:$0xff] %vm914, %v867
  %916 = vst.msk [vmem:[%s2 + $0x8] sm:$0xff] %vm914, %v881
  %917 = vst.msk [vmem:[%s2 + $0x10] sm:$0xff] %vm914, %v895
  %918 = vst.msk [vmem:[%s2 + $0x18] sm:$0xff] %vm914, %v909
  // Predicated region
  $region10: #{dgcnn_forward.16} parent=0 // pred_check
    _
  $region11: #{dgcnn_forward.16} parent=0 // pred_check_branch
    %920 = sbr.rel (0) target = $region13
  $region12: #{dgcnn_forward.16} parent=0 // pred_region
    _
  $region13: #{dgcnn_forward.16} parent=0 // pred_fallthru
    _
  // Predicated region
  $region14: #{dgcnn_forward.16} parent=0 // pred_check
    _
  $region15: #{dgcnn_forward.16} parent=0 // pred_check_branch
    %922 = sbr.rel (0) target = $region17
  $region16: #{dgcnn_forward.16} parent=0 // pred_region
    _
  $region17: #{dgcnn_forward.16} parent=0 // pred_fallthru
    _

// kernel: dgcnn_forward.26
$region0: #{dgcnn_forward.26}
  #allocation0 [shape = 'u32[]', space=smem, size = 0x4, offset = 0x4, fixed_abs, tag = 'smem constant byte address 0x4 - core index']
  #allocation1 [shape = 'u32[144,128]{1,0:T(1,128)}', space=vmem, size = 0x12000, scoped, tag = 'internal scratch']
  %s0 = inlined_call_operand.vmem [shape: f32[2,16,64], index: 0, kind: input, shape index: {}]
  %s1 = inlined_call_operand.vmem [shape: f32[64,256], index: 1, kind: input, shape index: {}]
  %s2 = inlined_call_operand.vmem [shape: f32[1,256], index: 2, kind: input, shape index: {}]
  %s3 = inlined_call_operand.vmem [shape: f32[2,1,512], index: 3, kind: output, shape index: {}]
  %s4 = sld [smem:[#allocation0]]
  $region45: #{dgcnn_forward.26} parent=0
    _
  %s6 = ssub.s32 1, %s4
  %s7 = scalar_select 0, %s6, %s4
  loop: start=0, step=1, limit=4
  $region2: #{dgcnn_forward.26} parent=0 // loop_pre_header
    _
  $region3: #{dgcnn_forward.26} parent=0 // loop_header
    %s9 = sphi 0, %s13
    %p10 = scmp.ge.s32.totalorder %s9, 4
    %s19 = sphi 0, %s21
    %s22 = sphi 0, %s19
    %s23 = sphi 0, %s22
    %s39 = sphi 0, %s23
    %s43 = sphi 0, %s43
    %s45 = sphi 0, %s43
    %s46 = sphi 0, %s45
    %s60 = sphi 0, %s46
    %s64 = sphi 0, %s64
    %s66 = sphi 0, %s64
    %s67 = sphi 0, %s66
    %s81 = sphi 0, %s67
    %s87 = sphi 0, %s89
    %s90 = sphi 0, %s87
    %s91 = sphi 0, %s90
    %s107 = sphi 0, %s91
  $region4: #{dgcnn_forward.26} parent=0 // loop_header_branch
    %12 = sbr.rel (%p10) target = $region8
  $region5: #{dgcnn_forward.26} parent=0 // loop_body
    %s14 = ssub.s32 %s9, 1
    %s15 = ssub.s32 %s9, 2
    %s16 = sadd.s32 %s9, 1
    %s17 = ssub.s32 %s9, %s16
    %p18 = scmp.eq.s32.totalorder %s17, 0
    %s20 = sadd.s32 %s19, 1
    %s21 = scalar_select %p18, %s19, %s20
    %p24 = pneg %p18
    %p25 = scmp.eq.s32.totalorder %s9, 1
    %p26 = por %p24, %p25
    %p27 = scmp.ne.s32.totalorder %s19, %s22
    %p28 = scmp.eq.s32.totalorder %s9, 0
    %p29 = por %p27, %p28
    %p30 = scmp.ne.s32.totalorder %s19, %s22
    %p31 = scmp.eq.s32.totalorder %s14, 1
    %p32 = por %p30, %p31
    %p33 = scmp.ne.s32.totalorder %s22, %s23
    %p34 = scmp.eq.s32.totalorder %s14, 0
    %p35 = por %p33, %p34
    %p36 = scmp.ne.s32.totalorder %s22, %s23
    %p37 = scmp.eq.s32.totalorder %s15, 1
    %p38 = por %p36, %p37
    %p40 = scmp.ne.s32.totalorder %s23, %s39
    %p41 = scmp.eq.s32.totalorder %s15, 0
    %p42 = por %p40, %p41
    %s44 = sadd.s32 %s43, 1
    %p47 = scmp.eq.s32.totalorder %s9, 1
    %p48 = scmp.ne.s32.totalorder %s43, %s45
    %p49 = scmp.eq.s32.totalorder %s9, 0
    %p50 = por %p48, %p49
    %p51 = scmp.ne.s32.totalorder %s43, %s45
    %p52 = scmp.eq.s32.totalorder %s14, 1
    %p53 = por %p51, %p52
    %p54 = scmp.ne.s32.totalorder %s45, %s46
    %p55 = scmp.eq.s32.totalorder %s14, 0
    %p56 = por %p54, %p55
    %p57 = scmp.ne.s32.totalorder %s45, %s46
    %p58 = scmp.eq.s32.totalorder %s15, 1
    %p59 = por %p57, %p58
    %p61 = scmp.ne.s32.totalorder %s46, %s60
    %p62 = scmp.eq.s32.totalorder %s15, 0
    %p63 = por %p61, %p62
    %s65 = sadd.s32 %s64, 1
    %p68 = scmp.eq.s32.totalorder %s9, 1
    %p69 = scmp.ne.s32.totalorder %s64, %s66
    %p70 = scmp.eq.s32.totalorder %s9, 0
    %p71 = por %p69, %p70
    %p72 = scmp.ne.s32.totalorder %s64, %s66
    %p73 = scmp.eq.s32.totalorder %s14, 1
    %p74 = por %p72, %p73
    %p75 = scmp.ne.s32.totalorder %s66, %s67
    %p76 = scmp.eq.s32.totalorder %s14, 0
    %p77 = por %p75, %p76
    %p78 = scmp.ne.s32.totalorder %s66, %s67
    %p79 = scmp.eq.s32.totalorder %s15, 1
    %p80 = por %p78, %p79
    %p82 = scmp.ne.s32.totalorder %s67, %s81
    %p83 = scmp.eq.s32.totalorder %s15, 0
    %p84 = por %p82, %p83
    %s85 = ssub.s32 %s9, %s16
    %p86 = scmp.eq.s32.totalorder %s85, 0
    %s88 = sadd.s32 %s87, 1
    %s89 = scalar_select %p86, %s87, %s88
    %p92 = pneg %p86
    %p93 = scmp.eq.s32.totalorder %s9, 1
    %p94 = por %p92, %p93
    %p95 = scmp.ne.s32.totalorder %s87, %s90
    %p96 = scmp.eq.s32.totalorder %s9, 0
    %p97 = por %p95, %p96
    %p98 = scmp.ne.s32.totalorder %s87, %s90
    %p99 = scmp.eq.s32.totalorder %s14, 1
    %p100 = por %p98, %p99
    %p101 = scmp.ne.s32.totalorder %s90, %s91
    %p102 = scmp.eq.s32.totalorder %s14, 0
    %p103 = por %p101, %p102
    %p104 = scmp.ne.s32.totalorder %s90, %s91
    %p105 = scmp.eq.s32.totalorder %s15, 1
    %p106 = por %p104, %p105
    %p108 = scmp.ne.s32.totalorder %s91, %s107
    %p109 = scmp.eq.s32.totalorder %s15, 0
    %p110 = por %p108, %p109
    %p111 = scmp.le.s32.totalorder 1, %s9
    %p112 = scmp.lt.s32.totalorder %s9, 3
    %p113 = pnand %p111, %p112
    %p114 = pneg %p113
    // Predicated region
    $region9: #{dgcnn_forward.26} parent=5 // pred_check
      _
    $region10: #{dgcnn_forward.26} parent=5 // pred_check_branch
      %116 = sbr.rel (%p113) target = $region12
    $region11: #{dgcnn_forward.26} parent=5 // pred_region
      %s117 = ssub.s32 %s9, 1
      // Predicated region
      $region13: #{dgcnn_forward.26} parent=11 // pred_check
        %p118 = pneg %p56
      $region14: #{dgcnn_forward.26} parent=11 // pred_check_branch
        %120 = sbr.rel (%p118) target = $region16
      $region15: #{dgcnn_forward.26} parent=11 // pred_region
        _
      $region16: #{dgcnn_forward.26} parent=11 // pred_fallthru
        _
      // Predicated region
      $region17: #{dgcnn_forward.26} parent=11 // pred_check
        %p121 = pneg %p77
      $region18: #{dgcnn_forward.26} parent=11 // pred_check_branch
        %123 = sbr.rel (%p121) target = $region20
      $region19: #{dgcnn_forward.26} parent=11 // pred_region
        _
      $region20: #{dgcnn_forward.26} parent=11 // pred_fallthru
        _
    $region12: #{dgcnn_forward.26} parent=5 // pred_fallthru
      _
    %p124 = scmp.lt.s32.totalorder %s9, 2
    // Predicated region
    $region21: #{dgcnn_forward.26} parent=5 // pred_check
      %p125 = pneg %p124
    $region22: #{dgcnn_forward.26} parent=5 // pred_check_branch
      %127 = sbr.rel (%p125) target = $region24
    $region23: #{dgcnn_forward.26} parent=5 // pred_region
      // Predicated region
      $region25: #{dgcnn_forward.26} parent=23 // pred_check
        %p128 = pneg %p29
      $region26: #{dgcnn_forward.26} parent=23 // pred_check_branch
        %130 = sbr.rel (%p128) target = $region28
      $region27: #{dgcnn_forward.26} parent=23 // pred_region
        %p131 = scmp.lt.s32.totalorder %s9, 1
        %s132 = scalar_select %p131, %s9, 1
        %s133 = smul.addr %s132, 2
        %s134 = smul.addr %s133, 8
        %s135 = scalar_lea.vmem %s0, %s134
      $region28: #{dgcnn_forward.26} parent=23 // pred_fallthru
        _
    $region24: #{dgcnn_forward.26} parent=5 // pred_fallthru
      _
    %p136 = scmp.le.s32.totalorder 1, %s9
    %p137 = scmp.lt.s32.totalorder %s9, 3
    %p138 = pnand %p136, %p137
    %p139 = pneg %p138
    // Predicated region
    $region29: #{dgcnn_forward.26} parent=5 // pred_check
      _
    $region30: #{dgcnn_forward.26} parent=5 // pred_check_branch
      %141 = sbr.rel (%p138) target = $region32
    $region31: #{dgcnn_forward.26} parent=5 // pred_region
      %s142 = ssub.s32 %s9, 1
      %p143 = scmp.lt.s32.totalorder %s14, 1
      %s144 = scalar_select %p143, %s14, 1
      %s145 = smul.addr %s144, 2
      %s146 = smul.addr %s145, 8
      %s147 = scalar_lea.vmem %s0, %s146
      %p148 = pneg %p35
      %p149 = pneg %p32
      %p150 = pneg %p56
      %p151 = pneg %p53
      %p152 = pneg %p77
      %p153 = pneg %p74
      %p154 = pneg %p103
      %p155 = pneg %p100
      %p156 = scmp.lt.s32.totalorder %s14, 1
      %s157 = scalar_select %p156, %s14, 1
      %s158 = smul.addr %s157, 4
      %s159 = scalar_lea.vmem %s3, %s158
      %p160 = scmp.lt.s32.totalorder %s14, 1
      %s161 = scalar_select %p160, %s14, 1
      %s162 = smul.addr %s161, 2
      %s163 = smul.addr %s162, 8
      %s164 = scalar_lea.vmem %s0, %s163
      %p165 = scmp.lt.s32.totalorder %s14, 1
      %s166 = scalar_select %p165, %s14, 1
      %s167 = smul.addr %s166, 4
      %s168 = scalar_lea.vmem %s3, %s167
      %v169 = vld [vmem:[%s164] sm:$0xff]
      %v170 = vld [vmem:[%s164 + $0x8] sm:$0xff]
      %v171 = vld [vmem:[%s1] sm:$0xff]
      %v172 = vld [vmem:[%s1 + $0x8] sm:$0xff]
      %v173 = vld [vmem:[%s1 + $0x10] sm:$0xff]
      %v174 = vld [vmem:[%s1 + $0x18] sm:$0xff]
      %v175 = vld [vmem:[%s1 + $0x20] sm:$0xff]
      %v176 = vld [vmem:[%s1 + $0x28] sm:$0xff]
      %v177 = vld [vmem:[%s1 + $0x30] sm:$0xff]
      %v178 = vld [vmem:[%s1 + $0x38] sm:$0xff]
      %v179 = vld [vmem:[%s1 + $0x40] sm:$0xff]
      %v180 = vld [vmem:[%s1 + $0x48] sm:$0xff]
      %v181 = vld [vmem:[%s1 + $0x50] sm:$0xff]
      %v182 = vld [vmem:[%s1 + $0x58] sm:$0xff]
      %v183 = vld [vmem:[%s1 + $0x60] sm:$0xff]
      %v184 = vld [vmem:[%s1 + $0x68] sm:$0xff]
      %v185 = vld [vmem:[%s1 + $0x70] sm:$0xff]
      %v186 = vld [vmem:[%s1 + $0x78] sm:$0xff]
      %v187 = vld [vmem:[%s2] sm:$0x3]
      %v189 = vlaneseq
      %v190 = vshrl.u32 %v189, 7
      %v191 = vsub.s32 0, %v190
      %v192 = vrot.slane %v187, %v191
      %v193 = vlaneseq
      %v194 = vshrl.u32 %v193, 7
      %v195 = vsub.s32 1, %v194
      %v196 = vrot.slane %v187, %v195
      %vm199 = vcmask 523264
      %v201 = vsel %vm199, %v169, 0
      %v204 = vsel %vm199, %v170, 0
      %206 = vmatprep.subr.mxu0 0.0
      %207 = vmatpush1.msra.mxu0 0.0
      %208 = vmatprep.subr.mxu0 0.0
      %209 = vmatpush1.msra.mxu0 0.0
      %210 = vmatprep.subr.mxu0 0.0
      %211 = vmatpush1.msra.mxu0 0.0
      %212 = vmatprep.subr.mxu0 0.0
      %213 = vmatpush1.msra.mxu0 0.0
      %214 = vmatprep.subr.mxu0 0.0
      %215 = vmatpush1.msra.mxu0 0.0
      %216 = vmatprep.subr.mxu0 0.0
      %217 = vmatpush1.msra.mxu0 0.0
      %218 = vmatprep.subr.mxu0 0.0
      %219 = vmatpush1.msra.mxu0 0.0
      %220 = vmatprep.subr.mxu0 0.0
      %221 = vmatpush1.msra.mxu0 0.0
      %222 = vmatprep.subr.mxu0 %v186
      %223 = vmatpush1.msra.mxu0 %v185
      %224 = vmatprep.subr.mxu0 %v184
      %225 = vmatpush1.msra.mxu0 %v183
      %226 = vmatprep.subr.mxu0 %v182
      %227 = vmatpush1.msra.mxu0 %v181
      %228 = vmatprep.subr.mxu0 %v180
      %229 = vmatpush1.msra.mxu0 %v179
      %230 = vmatprep.subr.mxu0 %v178
      %231 = vmatpush1.msra.mxu0 %v177
      %232 = vmatprep.subr.mxu0 %v176
      %233 = vmatpush1.msra.mxu0 %v175
      %234 = vmatprep.subr.mxu0 %v174
      %235 = vmatpush1.msra.mxu0 %v173
      %236 = vmatprep.subr.mxu0 %v172
      %237 = vmatpush1.msra.mxu0 %v171
      %238 = vmatprep.subr.mxu0 0.0
      %239 = vmatpush2.msra.mxu0 0.0
      %240 = vmatprep.subr.mxu0 0.0
      %241 = vmatpush2.msra.mxu0 0.0
      %242 = vmatprep.subr.mxu0 0.0
      %243 = vmatpush2.msra.mxu0 0.0
      %244 = vmatprep.subr.mxu0 0.0
      %245 = vmatpush2.msra.mxu0 0.0
      %246 = vmatprep.subr.mxu0 0.0
      %247 = vmatpush2.msra.mxu0 0.0
      %248 = vmatprep.subr.mxu0 0.0
      %249 = vmatpush2.msra.mxu0 0.0
      %250 = vmatprep.subr.mxu0 0.0
      %251 = vmatpush2.msra.mxu0 0.0
      %252 = vmatprep.subr.mxu0 0.0
      %253 = vmatpush2.msra.mxu0 0.0
      %254 = vmatprep.subr.mxu0 0.0
      %255 = vmatpush2.msra.mxu0 0.0
      %256 = vmatprep.subr.mxu0 0.0
      %257 = vmatpush2.msra.mxu0 0.0
      %258 = vmatprep.subr.mxu0 0.0
      %259 = vmatpush2.msra.mxu0 0.0
      %260 = vmatprep.subr.mxu0 0.0
      %261 = vmatpush2.msra.mxu0 0.0
      %262 = vmatprep.subr.mxu0 0.0
      %263 = vmatpush2.msra.mxu0 0.0
      %264 = vmatprep.subr.mxu0 0.0
      %265 = vmatpush2.msra.mxu0 0.0
      %266 = vmatprep.subr.mxu0 0.0
      %267 = vmatpush2.msra.mxu0 0.0
      %268 = vmatprep.subr.mxu0 0.0
      %269 = vmatpush2.msra.mxu0 0.0
      %270 = vmatprep.mubr.f32.mxu0 0.0
      %271 = vmatmul.mubr.f32.gmra.mxu0 %v201
      %v272 = vpop.f32.mrf.mxu0
      %v273 = vadd.f32 %v192, %v272
      %v274 = vpop.f32.mrf.mxu0
      %v275 = vadd.f32 %v196, %v274
      %276 = vmatprep.mubr.f32.mxu0 0.0
      %277 = vmatmul.mubr.f32.gmra.mxu0 %v204
      %v278 = vpop.f32.mrf.mxu0
      %v279 = vadd.f32 %v192, %v278
      %v280 = vpop.f32.mrf.mxu0
      %v281 = vadd.f32 %v196, %v280
      %282 = vdwg.mxu0
      %vm283 = vcmp.gt.f32.partialorder %v273, 0.0
      %vm284 = vcmp.gt.f32.partialorder %v275, 0.0
      %vm285 = vcmp.gt.f32.partialorder %v279, 0.0
      %vm286 = vcmp.gt.f32.partialorder %v281, 0.0
      %v287 = vmul.f32 %v273, 0.2
      %v288 = vmul.f32 %v275, 0.2
      %v289 = vmul.f32 %v279, 0.2
      %v290 = vmul.f32 %v281, 0.2
      %v291 = vsel %vm283, %v273, %v287
      %v292 = vsel %vm284, %v275, %v288
      %v293 = vsel %vm285, %v279, %v289
      %v294 = vsel %vm286, %v281, %v290
      %v295 = vmax.f32 %v291, %v293
      %v296 = vrot.slane %v295, 4
      %v297 = vmax.f32 %v295, %v296
      %v298 = vrot.slane %v297, 2
      %v299 = vmax.f32 %v297, %v298
      %v300 = vrot.slane %v299, 1
      %v301 = vmax.f32 %v299, %v300
      %v302 = vmax.f32 %v292, %v294
      %v303 = vrot.slane %v302, 4
      %v304 = vmax.f32 %v302, %v303
      %v305 = vrot.slane %v304, 2
      %v306 = vmax.f32 %v304, %v305
      %v307 = vrot.slane %v306, 1
      %v308 = vmax.f32 %v306, %v307
      %v309 = vadd.f32 %v291, %v293
      %v310 = vrot.slane %v309, 4
      %v311 = vadd.f32 %v309, %v310
      %v312 = vrot.slane %v311, 2
      %v313 = vadd.f32 %v311, %v312
      %v314 = vrot.slane %v313, 1
      %v315 = vadd.f32 %v313, %v314
      %v316 = vadd.f32 %v292, %v294
      %v317 = vrot.slane %v316, 4
      %v318 = vadd.f32 %v316, %v317
      %v319 = vrot.slane %v318, 2
      %v320 = vadd.f32 %v318, %v319
      %v321 = vrot.slane %v320, 1
      %v322 = vadd.f32 %v320, %v321
      %v323 = vrcp.pop 16.0
      %v324 = vmul.f32 %v315, %v323
      %v325 = vmul.f32 %v322, %v323
      %v330 = vcombine.low %v301, %v308
      %v331 = vcombine.low %v324, %v325
      %v333 = vunpack.c.l.s4 1966171168
      %v334 = vunpack.c.0.s8 %v333
      %v335 = vlaneseq
      %v336 = vshrl.u32 %v335, 7
      %v337 = vsub.s32 %v334, %v336
      %v338 = vrot.slane %v330, %v337
      %v340 = vunpack.c.l.s4 1966171168
      %v341 = vunpack.c.0.s8 %v340
      %v342 = vlaneseq
      %v343 = vshrl.u32 %v342, 7
      %v344 = vsub.s32 %v341, %v343
      %v345 = vrot.slane %v331, %v344
      %v346 = vcombine.low %v338, %v345
      %v348 = vunpack.c.l.s4 1966171168
      %v349 = vunpack.c.0.s8 %v348
      %v350 = vlaneseq
      %v351 = vshrl.u32 %v350, 7
      %v352 = vsub.s32 %v349, %v351
      %v353 = vrot.slane %v346, %v352
      %v355 = vlaneseq
      %vm356 = vcmp.ge.s32.totalorder %v355, 0
      %vm357 = vcmp.lt.s32.totalorder %v355, 512
      %vm358 = vmand %vm356, %vm357
      %359 = vst.msk [vmem:[%s168] sm:$0xf] %vm358, %v353
      %p360 = scmp.lt.s32.totalorder %s14, 1
      %s361 = scalar_select %p360, %s14, 1
      %s362 = smul.addr %s361, 4
      %s363 = scalar_lea.vmem %s3, %s362
      // Predicated region
      $region33: #{dgcnn_forward.26} parent=31 // pred_check
        %p364 = pneg %p100
      $region34: #{dgcnn_forward.26} parent=31 // pred_check_branch
        %366 = sbr.rel (%p364) target = $region36
      $region35: #{dgcnn_forward.26} parent=31 // pred_region
        _
      $region36: #{dgcnn_forward.26} parent=31 // pred_fallthru
        _
    $region32: #{dgcnn_forward.26} parent=5 // pred_fallthru
      _
    %p367 = scmp.le.s32.totalorder 2, %s9
    // Predicated region
    $region37: #{dgcnn_forward.26} parent=5 // pred_check
      %p368 = pneg %p367
    $region38: #{dgcnn_forward.26} parent=5 // pred_check_branch
      %370 = sbr.rel (%p368) target = $region40
    $region39: #{dgcnn_forward.26} parent=5 // pred_region
      %s371 = ssub.s32 %s9, 2
      // Predicated region
      $region41: #{dgcnn_forward.26} parent=39 // pred_check
        %p372 = pneg %p106
      $region42: #{dgcnn_forward.26} parent=39 // pred_check_branch
        %374 = sbr.rel (%p372) target = $region44
      $region43: #{dgcnn_forward.26} parent=39 // pred_region
        %p375 = scmp.lt.s32.totalorder %s15, 1
        %s376 = scalar_select %p375, %s15, 1
        %s377 = smul.addr %s376, 4
        %s378 = scalar_lea.vmem %s3, %s377
      $region44: #{dgcnn_forward.26} parent=39 // pred_fallthru
        _
    $region40: #{dgcnn_forward.26} parent=5 // pred_fallthru
      _
  $region6: #{dgcnn_forward.26} parent=0 // loop_footer
    %s13 = sadd.s32 1, %s9
  $region7: #{dgcnn_forward.26} parent=0 // loop_footer_branch
    %8 = sbr.rel target = $region3
  $region8: #{dgcnn_forward.26} parent=0 // loop_exit
    _

// kernel: dgcnn_forward.27
$region0: #{dgcnn_forward.27}
  #allocation0 [shape = 'u32[]', space=smem, size = 0x4, offset = 0x4, fixed_abs, tag = 'smem constant byte address 0x4 - core index']
  #allocation1 [shape = 'u32[144,128]{1,0:T(1,128)}', space=vmem, size = 0x12000, scoped, tag = 'internal scratch']
  %s0 = inlined_call_operand.vmem [shape: f32[2,512], index: 0, kind: input, shape index: {}]
  %s1 = inlined_call_operand.vmem [shape: f32[512,256], index: 1, kind: input, shape index: {}]
  %s2 = inlined_call_operand.vmem [shape: f32[1,256], index: 2, kind: input, shape index: {}]
  %s3 = inlined_call_operand.vmem [shape: f32[256,64], index: 3, kind: input, shape index: {}]
  %s4 = inlined_call_operand.vmem [shape: f32[1,64], index: 4, kind: input, shape index: {}]
  %s5 = inlined_call_operand.vmem [shape: f32[64,40], index: 5, kind: input, shape index: {}]
  %s6 = inlined_call_operand.vmem [shape: f32[1,40], index: 6, kind: input, shape index: {}]
  %s7 = inlined_call_operand.hbm [shape: f32[2,40], index: 7, kind: output, shape index: {}]
  %s8 = sld [smem:[#allocation0]]
  $region38: #{dgcnn_forward.27} parent=0
    _
  %s10 = ssub.s32 1, %s8
  %s11 = scalar_select 0, %s10, %s8
  $region1: #{dgcnn_forward.27} parent=0
    #allocation2 [shape = 'u8[1024]{0}', space=vmem, size = 0x400, scoped, tag = 'output window, operand 0, single buffered']
    #allocation3 [shape = 's32[1]{0}', space=sflag, size = 0x4, scoped, tag = 'scoped memory for dgcnn_forward.27']
    %12 = vsyncpa [#allocation3], 0
    // Predicated region
    $region2: #{dgcnn_forward.27} parent=1 // pred_check
      _
    $region3: #{dgcnn_forward.27} parent=1 // pred_check_branch
      %14 = sbr.rel (0) target = $region5
    $region4: #{dgcnn_forward.27} parent=1 // pred_region
      _
    $region5: #{dgcnn_forward.27} parent=1 // pred_fallthru
      _
    // Predicated region
    $region6: #{dgcnn_forward.27} parent=1 // pred_check
      _
    $region7: #{dgcnn_forward.27} parent=1 // pred_check_branch
      %16 = sbr.rel (0) target = $region9
    $region8: #{dgcnn_forward.27} parent=1 // pred_region
      _
    $region9: #{dgcnn_forward.27} parent=1 // pred_fallthru
      _
    // Predicated region
    $region10: #{dgcnn_forward.27} parent=1 // pred_check
      _
    $region11: #{dgcnn_forward.27} parent=1 // pred_check_branch
      %18 = sbr.rel (0) target = $region13
    $region12: #{dgcnn_forward.27} parent=1 // pred_region
      _
    $region13: #{dgcnn_forward.27} parent=1 // pred_fallthru
      _
    // Predicated region
    $region14: #{dgcnn_forward.27} parent=1 // pred_check
      _
    $region15: #{dgcnn_forward.27} parent=1 // pred_check_branch
      %20 = sbr.rel (0) target = $region17
    $region16: #{dgcnn_forward.27} parent=1 // pred_region
      _
    $region17: #{dgcnn_forward.27} parent=1 // pred_fallthru
      _
    // Predicated region
    $region18: #{dgcnn_forward.27} parent=1 // pred_check
      _
    $region19: #{dgcnn_forward.27} parent=1 // pred_check_branch
      %22 = sbr.rel (0) target = $region21
    $region20: #{dgcnn_forward.27} parent=1 // pred_region
      _
    $region21: #{dgcnn_forward.27} parent=1 // pred_fallthru
      _
    // Predicated region
    $region22: #{dgcnn_forward.27} parent=1 // pred_check
      _
    $region23: #{dgcnn_forward.27} parent=1 // pred_check_branch
      %24 = sbr.rel (0) target = $region25
    $region24: #{dgcnn_forward.27} parent=1 // pred_region
      _
    $region25: #{dgcnn_forward.27} parent=1 // pred_fallthru
      _
    // Predicated region
    $region26: #{dgcnn_forward.27} parent=1 // pred_check
      _
    $region27: #{dgcnn_forward.27} parent=1 // pred_check_branch
      %26 = sbr.rel (0) target = $region29
    $region28: #{dgcnn_forward.27} parent=1 // pred_region
      _
    $region29: #{dgcnn_forward.27} parent=1 // pred_fallthru
      _
    %v27 = vld [vmem:[%s0] sm:$0xff]
    %v28 = vld [vmem:[%s1] sm:$0xff]
    %v29 = vld [vmem:[%s1 + $0x8] sm:$0xff]
    %v30 = vld [vmem:[%s1 + $0x10] sm:$0xff]
    %v31 = vld [vmem:[%s1 + $0x18] sm:$0xff]
    %v32 = vld [vmem:[%s1 + $0x20] sm:$0xff]
    %v33 = vld [vmem:[%s1 + $0x28] sm:$0xff]
    %v34 = vld [vmem:[%s1 + $0x30] sm:$0xff]
    %v35 = vld [vmem:[%s1 + $0x38] sm:$0xff]
    %v36 = vld [vmem:[%s1 + $0x40] sm:$0xff]
    %v37 = vld [vmem:[%s1 + $0x48] sm:$0xff]
    %v38 = vld [vmem:[%s1 + $0x50] sm:$0xff]
    %v39 = vld [vmem:[%s1 + $0x58] sm:$0xff]
    %v40 = vld [vmem:[%s1 + $0x60] sm:$0xff]
    %v41 = vld [vmem:[%s1 + $0x68] sm:$0xff]
    %v42 = vld [vmem:[%s1 + $0x70] sm:$0xff]
    %v43 = vld [vmem:[%s1 + $0x78] sm:$0xff]
    %v44 = vld [vmem:[%s1 + $0x80] sm:$0xff]
    %v45 = vld [vmem:[%s1 + $0x88] sm:$0xff]
    %v46 = vld [vmem:[%s1 + $0x90] sm:$0xff]
    %v47 = vld [vmem:[%s1 + $0x98] sm:$0xff]
    %v48 = vld [vmem:[%s1 + $0xa0] sm:$0xff]
    %v49 = vld [vmem:[%s1 + $0xa8] sm:$0xff]
    %v50 = vld [vmem:[%s1 + $0xb0] sm:$0xff]
    %v51 = vld [vmem:[%s1 + $0xb8] sm:$0xff]
    %v52 = vld [vmem:[%s1 + $0xc0] sm:$0xff]
    %v53 = vld [vmem:[%s1 + $0xc8] sm:$0xff]
    %v54 = vld [vmem:[%s1 + $0xd0] sm:$0xff]
    %v55 = vld [vmem:[%s1 + $0xd8] sm:$0xff]
    %v56 = vld [vmem:[%s1 + $0xe0] sm:$0xff]
    %v57 = vld [vmem:[%s1 + $0xe8] sm:$0xff]
    %v58 = vld [vmem:[%s1 + $0xf0] sm:$0xff]
    %v59 = vld [vmem:[%s1 + $0xf8] sm:$0xff]
    %v60 = vld [vmem:[%s1 + $0x100] sm:$0xff]
    %v61 = vld [vmem:[%s1 + $0x108] sm:$0xff]
    %v62 = vld [vmem:[%s1 + $0x110] sm:$0xff]
    %v63 = vld [vmem:[%s1 + $0x118] sm:$0xff]
    %v64 = vld [vmem:[%s1 + $0x120] sm:$0xff]
    %v65 = vld [vmem:[%s1 + $0x128] sm:$0xff]
    %v66 = vld [vmem:[%s1 + $0x130] sm:$0xff]
    %v67 = vld [vmem:[%s1 + $0x138] sm:$0xff]
    %v68 = vld [vmem:[%s1 + $0x140] sm:$0xff]
    %v69 = vld [vmem:[%s1 + $0x148] sm:$0xff]
    %v70 = vld [vmem:[%s1 + $0x150] sm:$0xff]
    %v71 = vld [vmem:[%s1 + $0x158] sm:$0xff]
    %v72 = vld [vmem:[%s1 + $0x160] sm:$0xff]
    %v73 = vld [vmem:[%s1 + $0x168] sm:$0xff]
    %v74 = vld [vmem:[%s1 + $0x170] sm:$0xff]
    %v75 = vld [vmem:[%s1 + $0x178] sm:$0xff]
    %v76 = vld [vmem:[%s1 + $0x180] sm:$0xff]
    %v77 = vld [vmem:[%s1 + $0x188] sm:$0xff]
    %v78 = vld [vmem:[%s1 + $0x190] sm:$0xff]
    %v79 = vld [vmem:[%s1 + $0x198] sm:$0xff]
    %v80 = vld [vmem:[%s1 + $0x1a0] sm:$0xff]
    %v81 = vld [vmem:[%s1 + $0x1a8] sm:$0xff]
    %v82 = vld [vmem:[%s1 + $0x1b0] sm:$0xff]
    %v83 = vld [vmem:[%s1 + $0x1b8] sm:$0xff]
    %v84 = vld [vmem:[%s1 + $0x1c0] sm:$0xff]
    %v85 = vld [vmem:[%s1 + $0x1c8] sm:$0xff]
    %v86 = vld [vmem:[%s1 + $0x1d0] sm:$0xff]
    %v87 = vld [vmem:[%s1 + $0x1d8] sm:$0xff]
    %v88 = vld [vmem:[%s1 + $0x1e0] sm:$0xff]
    %v89 = vld [vmem:[%s1 + $0x1e8] sm:$0xff]
    %v90 = vld [vmem:[%s1 + $0x1f0] sm:$0xff]
    %v91 = vld [vmem:[%s1 + $0x1f8] sm:$0xff]
    %v92 = vld [vmem:[%s1 + $0x200] sm:$0xff]
    %v93 = vld [vmem:[%s1 + $0x208] sm:$0xff]
    %v94 = vld [vmem:[%s1 + $0x210] sm:$0xff]
    %v95 = vld [vmem:[%s1 + $0x218] sm:$0xff]
    %v96 = vld [vmem:[%s1 + $0x220] sm:$0xff]
    %v97 = vld [vmem:[%s1 + $0x228] sm:$0xff]
    %v98 = vld [vmem:[%s1 + $0x230] sm:$0xff]
    %v99 = vld [vmem:[%s1 + $0x238] sm:$0xff]
    %v100 = vld [vmem:[%s1 + $0x240] sm:$0xff]
    %v101 = vld [vmem:[%s1 + $0x248] sm:$0xff]
    %v102 = vld [vmem:[%s1 + $0x250] sm:$0xff]
    %v103 = vld [vmem:[%s1 + $0x258] sm:$0xff]
    %v104 = vld [vmem:[%s1 + $0x260] sm:$0xff]
    %v105 = vld [vmem:[%s1 + $0x268] sm:$0xff]
    %v106 = vld [vmem:[%s1 + $0x270] sm:$0xff]
    %v107 = vld [vmem:[%s1 + $0x278] sm:$0xff]
    %v108 = vld [vmem:[%s1 + $0x280] sm:$0xff]
    %v109 = vld [vmem:[%s1 + $0x288] sm:$0xff]
    %v110 = vld [vmem:[%s1 + $0x290] sm:$0xff]
    %v111 = vld [vmem:[%s1 + $0x298] sm:$0xff]
    %v112 = vld [vmem:[%s1 + $0x2a0] sm:$0xff]
    %v113 = vld [vmem:[%s1 + $0x2a8] sm:$0xff]
    %v114 = vld [vmem:[%s1 + $0x2b0] sm:$0xff]
    %v115 = vld [vmem:[%s1 + $0x2b8] sm:$0xff]
    %v116 = vld [vmem:[%s1 + $0x2c0] sm:$0xff]
    %v117 = vld [vmem:[%s1 + $0x2c8] sm:$0xff]
    %v118 = vld [vmem:[%s1 + $0x2d0] sm:$0xff]
    %v119 = vld [vmem:[%s1 + $0x2d8] sm:$0xff]
    %v120 = vld [vmem:[%s1 + $0x2e0] sm:$0xff]
    %v121 = vld [vmem:[%s1 + $0x2e8] sm:$0xff]
    %v122 = vld [vmem:[%s1 + $0x2f0] sm:$0xff]
    %v123 = vld [vmem:[%s1 + $0x2f8] sm:$0xff]
    %v124 = vld [vmem:[%s1 + $0x300] sm:$0xff]
    %v125 = vld [vmem:[%s1 + $0x308] sm:$0xff]
    %v126 = vld [vmem:[%s1 + $0x310] sm:$0xff]
    %v127 = vld [vmem:[%s1 + $0x318] sm:$0xff]
    %v128 = vld [vmem:[%s1 + $0x320] sm:$0xff]
    %v129 = vld [vmem:[%s1 + $0x328] sm:$0xff]
    %v130 = vld [vmem:[%s1 + $0x330] sm:$0xff]
    %v131 = vld [vmem:[%s1 + $0x338] sm:$0xff]
    %v132 = vld [vmem:[%s1 + $0x340] sm:$0xff]
    %v133 = vld [vmem:[%s1 + $0x348] sm:$0xff]
    %v134 = vld [vmem:[%s1 + $0x350] sm:$0xff]
    %v135 = vld [vmem:[%s1 + $0x358] sm:$0xff]
    %v136 = vld [vmem:[%s1 + $0x360] sm:$0xff]
    %v137 = vld [vmem:[%s1 + $0x368] sm:$0xff]
    %v138 = vld [vmem:[%s1 + $0x370] sm:$0xff]
    %v139 = vld [vmem:[%s1 + $0x378] sm:$0xff]
    %v140 = vld [vmem:[%s1 + $0x380] sm:$0xff]
    %v141 = vld [vmem:[%s1 + $0x388] sm:$0xff]
    %v142 = vld [vmem:[%s1 + $0x390] sm:$0xff]
    %v143 = vld [vmem:[%s1 + $0x398] sm:$0xff]
    %v144 = vld [vmem:[%s1 + $0x3a0] sm:$0xff]
    %v145 = vld [vmem:[%s1 + $0x3a8] sm:$0xff]
    %v146 = vld [vmem:[%s1 + $0x3b0] sm:$0xff]
    %v147 = vld [vmem:[%s1 + $0x3b8] sm:$0xff]
    %v148 = vld [vmem:[%s1 + $0x3c0] sm:$0xff]
    %v149 = vld [vmem:[%s1 + $0x3c8] sm:$0xff]
    %v150 = vld [vmem:[%s1 + $0x3d0] sm:$0xff]
    %v151 = vld [vmem:[%s1 + $0x3d8] sm:$0xff]
    %v152 = vld [vmem:[%s1 + $0x3e0] sm:$0xff]
    %v153 = vld [vmem:[%s1 + $0x3e8] sm:$0xff]
    %v154 = vld [vmem:[%s1 + $0x3f0] sm:$0xff]
    %v155 = vld [vmem:[%s1 + $0x3f8] sm:$0xff]
    %v156 = vld [vmem:[%s2] sm:$0x3]
    %v158 = vlaneseq
    %v159 = vshrl.u32 %v158, 7
    %v160 = vsub.s32 0, %v159
    %v161 = vrot.slane %v156, %v160
    %v162 = vlaneseq
    %v163 = vshrl.u32 %v162, 7
    %v164 = vsub.s32 1, %v163
    %v165 = vrot.slane %v156, %v164
    %v169 = vcombine.high %v27, %v27
    %v171 = vunpack.c.l.s4 1983009808
    %v172 = vunpack.c.0.s8 %v171
    %v173 = vlaneseq
    %v174 = vshrl.u32 %v173, 7
    %v175 = vsub.s32 %v172, %v174
    %v176 = vrot.slane %v27, %v175
    %v178 = vunpack.c.l.s4 1983009808
    %v179 = vunpack.c.0.s8 %v178
    %v180 = vlaneseq
    %v181 = vshrl.u32 %v180, 7
    %v182 = vsub.s32 %v179, %v181
    %v183 = vrot.slane %v169, %v182
    %v184 = vcombine.high %v176, %v176
    %v185 = vcombine.high %v183, %v183
    %190 = vmatprep.subr.mxu0 %v59
    %191 = vmatpush1.msra.mxu0 %v58
    %192 = vmatprep.subr.mxu0 %v57
    %193 = vmatpush1.msra.mxu0 %v56
    %194 = vmatprep.subr.mxu0 %v55
    %195 = vmatpush1.msra.mxu0 %v54
    %196 = vmatprep.subr.mxu0 %v53
    %197 = vmatpush1.msra.mxu0 %v52
    %198 = vmatprep.subr.mxu0 %v51
    %199 = vmatpush1.msra.mxu0 %v50
    %200 = vmatprep.subr.mxu0 %v49
    %201 = vmatpush1.msra.mxu0 %v48
    %202 = vmatprep.subr.mxu0 %v47
    %203 = vmatpush1.msra.mxu0 %v46
    %204 = vmatprep.subr.mxu0 %v45
    %205 = vmatpush1.msra.mxu0 %v44
    %206 = vmatprep.subr.mxu0 %v43
    %207 = vmatpush1.msra.mxu0 %v42
    %208 = vmatprep.subr.mxu0 %v41
    %209 = vmatpush1.msra.mxu0 %v40
    %210 = vmatprep.subr.mxu0 %v39
    %211 = vmatpush1.msra.mxu0 %v38
    %212 = vmatprep.subr.mxu0 %v37
    %213 = vmatpush1.msra.mxu0 %v36
    %214 = vmatprep.subr.mxu0 %v35
    %215 = vmatpush1.msra.mxu0 %v34
    %216 = vmatprep.subr.mxu0 %v33
    %217 = vmatpush1.msra.mxu0 %v32
    %218 = vmatprep.subr.mxu0 %v31
    %219 = vmatpush1.msra.mxu0 %v30
    %220 = vmatprep.subr.mxu0 %v29
    %221 = vmatpush1.msra.mxu0 %v28
    %222 = vmatprep.subr.mxu0 %v91
    %223 = vmatpush2.msra.mxu0 %v90
    %224 = vmatprep.subr.mxu0 %v89
    %225 = vmatpush2.msra.mxu0 %v88
    %226 = vmatprep.subr.mxu0 %v87
    %227 = vmatpush2.msra.mxu0 %v86
    %228 = vmatprep.subr.mxu0 %v85
    %229 = vmatpush2.msra.mxu0 %v84
    %230 = vmatprep.subr.mxu0 %v83
    %231 = vmatpush2.msra.mxu0 %v82
    %232 = vmatprep.subr.mxu0 %v81
    %233 = vmatpush2.msra.mxu0 %v80
    %234 = vmatprep.subr.mxu0 %v79
    %235 = vmatpush2.msra.mxu0 %v78
    %236 = vmatprep.subr.mxu0 %v77
    %237 = vmatpush2.msra.mxu0 %v76
    %238 = vmatprep.subr.mxu0 %v75
    %239 = vmatpush2.msra.mxu0 %v74
    %240 = vmatprep.subr.mxu0 %v73
    %241 = vmatpush2.msra.mxu0 %v72
    %242 = vmatprep.subr.mxu0 %v71
    %243 = vmatpush2.msra.mxu0 %v70
    %244 = vmatprep.subr.mxu0 %v69
    %245 = vmatpush2.msra.mxu0 %v68
    %246 = vmatprep.subr.mxu0 %v67
    %247 = vmatpush2.msra.mxu0 %v66
    %248 = vmatprep.subr.mxu0 %v65
    %249 = vmatpush2.msra.mxu0 %v64
    %250 = vmatprep.subr.mxu0 %v63
    %251 = vmatpush2.msra.mxu0 %v62
    %252 = vmatprep.subr.mxu0 %v61
    %253 = vmatpush2.msra.mxu0 %v60
    %254 = vmatprep.mubr.f32.mxu0 %v184
    %255 = vmatmul.mubr.f32.gmra.mxu0 %v176
    %v256 = vpop.f32.mrf.mxu0
    %v257 = vadd.f32 %v161, %v256
    %v258 = vpop.f32.mrf.mxu0
    %v259 = vadd.f32 %v165, %v258
    %260 = vdwg.mxu0
    %261 = vmatprep.subr.mxu0 %v123
    %262 = vmatpush1.msra.mxu0 %v122
    %263 = vmatprep.subr.mxu0 %v121
    %264 = vmatpush1.msra.mxu0 %v120
    %265 = vmatprep.subr.mxu0 %v119
    %266 = vmatpush1.msra.mxu0 %v118
    %267 = vmatprep.subr.mxu0 %v117
    %268 = vmatpush1.msra.mxu0 %v116
    %269 = vmatprep.subr.mxu0 %v115
    %270 = vmatpush1.msra.mxu0 %v114
    %271 = vmatprep.subr.mxu0 %v113
    %272 = vmatpush1.msra.mxu0 %v112
    %273 = vmatprep.subr.mxu0 %v111
    %274 = vmatpush1.msra.mxu0 %v110
    %275 = vmatprep.subr.mxu0 %v109
    %276 = vmatpush1.msra.mxu0 %v108
    %277 = vmatprep.subr.mxu0 %v107
    %278 = vmatpush1.msra.mxu0 %v106
    %279 = vmatprep.subr.mxu0 %v105
    %280 = vmatpush1.msra.mxu0 %v104
    %281 = vmatprep.subr.mxu0 %v103
    %282 = vmatpush1.msra.mxu0 %v102
    %283 = vmatprep.subr.mxu0 %v101
    %284 = vmatpush1.msra.mxu0 %v100
    %285 = vmatprep.subr.mxu0 %v99
    %286 = vmatpush1.msra.mxu0 %v98
    %287 = vmatprep.subr.mxu0 %v97
    %288 = vmatpush1.msra.mxu0 %v96
    %289 = vmatprep.subr.mxu0 %v95
    %290 = vmatpush1.msra.mxu0 %v94
    %291 = vmatprep.subr.mxu0 %v93
    %292 = vmatpush1.msra.mxu0 %v92
    %293 = vmatprep.subr.mxu0 %v155
    %294 = vmatpush2.msra.mxu0 %v154
    %295 = vmatprep.subr.mxu0 %v153
    %296 = vmatpush2.msra.mxu0 %v152
    %297 = vmatprep.subr.mxu0 %v151
    %298 = vmatpush2.msra.mxu0 %v150
    %299 = vmatprep.subr.mxu0 %v149
    %300 = vmatpush2.msra.mxu0 %v148
    %301 = vmatprep.subr.mxu0 %v147
    %302 = vmatpush2.msra.mxu0 %v146
    %303 = vmatprep.subr.mxu0 %v145
    %304 = vmatpush2.msra.mxu0 %v144
    %305 = vmatprep.subr.mxu0 %v143
    %306 = vmatpush2.msra.mxu0 %v142
    %307 = vmatprep.subr.mxu0 %v141
    %308 = vmatpush2.msra.mxu0 %v140
    %309 = vmatprep.subr.mxu0 %v139
    %310 = vmatpush2.msra.mxu0 %v138
    %311 = vmatprep.subr.mxu0 %v137
    %312 = vmatpush2.msra.mxu0 %v136
    %313 = vmatprep.subr.mxu0 %v135
    %314 = vmatpush2.msra.mxu0 %v134
    %315 = vmatprep.subr.mxu0 %v133
    %316 = vmatpush2.msra.mxu0 %v132
    %317 = vmatprep.subr.mxu0 %v131
    %318 = vmatpush2.msra.mxu0 %v130
    %319 = vmatprep.subr.mxu0 %v129
    %320 = vmatpush2.msra.mxu0 %v128
    %321 = vmatprep.subr.mxu0 %v127
    %322 = vmatpush2.msra.mxu0 %v126
    %323 = vmatprep.subr.mxu0 %v125
    %324 = vmatpush2.msra.mxu0 %v124
    %325 = vmatprep.mubr.f32.mxu0 %v185
    %326 = vmatmul.mubr.f32.gmra.mxu0 %v183
    %v327 = vpop.f32.mrf.mxu0
    %v328 = vadd.f32 %v257, %v327
    %v329 = vpop.f32.mrf.mxu0
    %v330 = vadd.f32 %v259, %v329
    %331 = vdwg.mxu0
    %vm332 = vcmp.gt.f32.partialorder %v328, 0.0
    %vm333 = vcmp.gt.f32.partialorder %v330, 0.0
    %v334 = vmul.f32 %v328, 0.01
    %v335 = vmul.f32 %v330, 0.01
    %v336 = vsel %vm332, %v328, %v334
    %v337 = vsel %vm333, %v330, %v335
    %v338 = vld [vmem:[%s3] sm:$0xff]
    %v339 = vld [vmem:[%s3 + $0x8] sm:$0xff]
    %v340 = vld [vmem:[%s3 + $0x10] sm:$0xff]
    %v341 = vld [vmem:[%s3 + $0x18] sm:$0xff]
    %v342 = vld [vmem:[%s3 + $0x20] sm:$0xff]
    %v343 = vld [vmem:[%s3 + $0x28] sm:$0xff]
    %v344 = vld [vmem:[%s3 + $0x30] sm:$0xff]
    %v345 = vld [vmem:[%s3 + $0x38] sm:$0xff]
    %v346 = vld [vmem:[%s3 + $0x40] sm:$0xff]
    %v347 = vld [vmem:[%s3 + $0x48] sm:$0xff]
    %v348 = vld [vmem:[%s3 + $0x50] sm:$0xff]
    %v349 = vld [vmem:[%s3 + $0x58] sm:$0xff]
    %v350 = vld [vmem:[%s3 + $0x60] sm:$0xff]
    %v351 = vld [vmem:[%s3 + $0x68] sm:$0xff]
    %v352 = vld [vmem:[%s3 + $0x70] sm:$0xff]
    %v353 = vld [vmem:[%s3 + $0x78] sm:$0xff]
    %v354 = vld [vmem:[%s3 + $0x80] sm:$0xff]
    %v355 = vld [vmem:[%s3 + $0x88] sm:$0xff]
    %v356 = vld [vmem:[%s3 + $0x90] sm:$0xff]
    %v357 = vld [vmem:[%s3 + $0x98] sm:$0xff]
    %v358 = vld [vmem:[%s3 + $0xa0] sm:$0xff]
    %v359 = vld [vmem:[%s3 + $0xa8] sm:$0xff]
    %v360 = vld [vmem:[%s3 + $0xb0] sm:$0xff]
    %v361 = vld [vmem:[%s3 + $0xb8] sm:$0xff]
    %v362 = vld [vmem:[%s3 + $0xc0] sm:$0xff]
    %v363 = vld [vmem:[%s3 + $0xc8] sm:$0xff]
    %v364 = vld [vmem:[%s3 + $0xd0] sm:$0xff]
    %v365 = vld [vmem:[%s3 + $0xd8] sm:$0xff]
    %v366 = vld [vmem:[%s3 + $0xe0] sm:$0xff]
    %v367 = vld [vmem:[%s3 + $0xe8] sm:$0xff]
    %v368 = vld [vmem:[%s3 + $0xf0] sm:$0xff]
    %v369 = vld [vmem:[%s3 + $0xf8] sm:$0xff]
    %v370 = vld [vmem:[%s4] sm:$0x1]
    %v372 = vlaneseq
    %v373 = vshrl.u32 %v372, 7
    %v374 = vsub.s32 0, %v373
    %v375 = vrot.slane %v370, %v374
    %377 = vmatprep.subr.mxu0 0.0
    %378 = vmatpush1.msra.mxu0 %v353
    %379 = vmatprep.subr.mxu0 0.0
    %380 = vmatpush1.msra.mxu0 %v352
    %381 = vmatprep.subr.mxu0 0.0
    %382 = vmatpush1.msra.mxu0 %v351
    %383 = vmatprep.subr.mxu0 0.0
    %384 = vmatpush1.msra.mxu0 %v350
    %385 = vmatprep.subr.mxu0 0.0
    %386 = vmatpush1.msra.mxu0 %v349
    %387 = vmatprep.subr.mxu0 0.0
    %388 = vmatpush1.msra.mxu0 %v348
    %389 = vmatprep.subr.mxu0 0.0
    %390 = vmatpush1.msra.mxu0 %v347
    %391 = vmatprep.subr.mxu0 0.0
    %392 = vmatpush1.msra.mxu0 %v346
    %393 = vmatprep.subr.mxu0 0.0
    %394 = vmatpush1.msra.mxu0 %v345
    %395 = vmatprep.subr.mxu0 0.0
    %396 = vmatpush1.msra.mxu0 %v344
    %397 = vmatprep.subr.mxu0 0.0
    %398 = vmatpush1.msra.mxu0 %v343
    %399 = vmatprep.subr.mxu0 0.0
    %400 = vmatpush1.msra.mxu0 %v342
    %401 = vmatprep.subr.mxu0 0.0
    %402 = vmatpush1.msra.mxu0 %v341
    %403 = vmatprep.subr.mxu0 0.0
    %404 = vmatpush1.msra.mxu0 %v340
    %405 = vmatprep.subr.mxu0 0.0
    %406 = vmatpush1.msra.mxu0 %v339
    %407 = vmatprep.subr.mxu0 0.0
    %408 = vmatpush1.msra.mxu0 %v338
    %409 = vmatprep.subr.mxu0 0.0
    %410 = vmatpush2.msra.mxu0 %v369
    %411 = vmatprep.subr.mxu0 0.0
    %412 = vmatpush2.msra.mxu0 %v368
    %413 = vmatprep.subr.mxu0 0.0
    %414 = vmatpush2.msra.mxu0 %v367
    %415 = vmatprep.subr.mxu0 0.0
    %416 = vmatpush2.msra.mxu0 %v366
    %417 = vmatprep.subr.mxu0 0.0
    %418 = vmatpush2.msra.mxu0 %v365
    %419 = vmatprep.subr.mxu0 0.0
    %420 = vmatpush2.msra.mxu0 %v364
    %421 = vmatprep.subr.mxu0 0.0
    %422 = vmatpush2.msra.mxu0 %v363
    %423 = vmatprep.subr.mxu0 0.0
    %424 = vmatpush2.msra.mxu0 %v362
    %425 = vmatprep.subr.mxu0 0.0
    %426 = vmatpush2.msra.mxu0 %v361
    %427 = vmatprep.subr.mxu0 0.0
    %428 = vmatpush2.msra.mxu0 %v360
    %429 = vmatprep.subr.mxu0 0.0
    %430 = vmatpush2.msra.mxu0 %v359
    %431 = vmatprep.subr.mxu0 0.0
    %432 = vmatpush2.msra.mxu0 %v358
    %433 = vmatprep.subr.mxu0 0.0
    %434 = vmatpush2.msra.mxu0 %v357
    %435 = vmatprep.subr.mxu0 0.0
    %436 = vmatpush2.msra.mxu0 %v356
    %437 = vmatprep.subr.mxu0 0.0
    %438 = vmatpush2.msra.mxu0 %v355
    %439 = vmatprep.subr.mxu0 0.0
    %440 = vmatpush2.msra.mxu0 %v354
    %441 = vmatprep.mubr.f32.mxu0 %v337
    %442 = vmatmul.mubr.f32.gmra.mxu0 %v336
    %v443 = vpop.f32.mrf.mxu0
    %v444 = vadd.f32 %v375, %v443
    %v445 = vpop.f32.mrf.mxu0
    %446 = vdwg.mxu0
    %vm447 = vcmp.gt.f32.partialorder %v444, 0.0
    %v448 = vmul.f32 %v444, 0.01
    %v449 = vsel %vm447, %v444, %v448
    %v450 = vld [vmem:[%s5] sm:$0xff]
    %v451 = vld [vmem:[%s5 + $0x8] sm:$0xff]
    %v452 = vld [vmem:[%s5 + $0x10] sm:$0xff]
    %v453 = vld [vmem:[%s5 + $0x18] sm:$0xff]
    %v454 = vld [vmem:[%s5 + $0x20] sm:$0xff]
    %v455 = vld [vmem:[%s5 + $0x28] sm:$0xff]
    %v456 = vld [vmem:[%s5 + $0x30] sm:$0xff]
    %v457 = vld [vmem:[%s5 + $0x38] sm:$0xff]
    %v458 = vld [vmem:[%s6] sm:$0x1]
    %v460 = vlaneseq
    %v461 = vshrl.u32 %v460, 7
    %v462 = vsub.s32 0, %v461
    %v463 = vrot.slane %v458, %v462
    %vm465 = vcmask 523264
    %v467 = vsel %vm465, %v449, 0
    %469 = vmatprep.subr.mxu0 0.0
    %470 = vmatpush1.msra.mxu0 0.0
    %471 = vmatprep.subr.mxu0 0.0
    %472 = vmatpush1.msra.mxu0 0.0
    %473 = vmatprep.subr.mxu0 0.0
    %474 = vmatpush1.msra.mxu0 0.0
    %475 = vmatprep.subr.mxu0 0.0
    %476 = vmatpush1.msra.mxu0 0.0
    %477 = vmatprep.subr.mxu0 0.0
    %478 = vmatpush1.msra.mxu0 0.0
    %479 = vmatprep.subr.mxu0 0.0
    %480 = vmatpush1.msra.mxu0 0.0
    %481 = vmatprep.subr.mxu0 0.0
    %482 = vmatpush1.msra.mxu0 0.0
    %483 = vmatprep.subr.mxu0 0.0
    %484 = vmatpush1.msra.mxu0 0.0
    %485 = vmatprep.subr.mxu0 0.0
    %486 = vmatpush1.msra.mxu0 %v457
    %487 = vmatprep.subr.mxu0 0.0
    %488 = vmatpush1.msra.mxu0 %v456
    %489 = vmatprep.subr.mxu0 0.0
    %490 = vmatpush1.msra.mxu0 %v455
    %491 = vmatprep.subr.mxu0 0.0
    %492 = vmatpush1.msra.mxu0 %v454
    %493 = vmatprep.subr.mxu0 0.0
    %494 = vmatpush1.msra.mxu0 %v453
    %495 = vmatprep.subr.mxu0 0.0
    %496 = vmatpush1.msra.mxu0 %v452
    %497 = vmatprep.subr.mxu0 0.0
    %498 = vmatpush1.msra.mxu0 %v451
    %499 = vmatprep.subr.mxu0 0.0
    %500 = vmatpush1.msra.mxu0 %v450
    %501 = vmatprep.subr.mxu0 0.0
    %502 = vmatpush2.msra.mxu0 0.0
    %503 = vmatprep.subr.mxu0 0.0
    %504 = vmatpush2.msra.mxu0 0.0
    %505 = vmatprep.subr.mxu0 0.0
    %506 = vmatpush2.msra.mxu0 0.0
    %507 = vmatprep.subr.mxu0 0.0
    %508 = vmatpush2.msra.mxu0 0.0
    %509 = vmatprep.subr.mxu0 0.0
    %510 = vmatpush2.msra.mxu0 0.0
    %511 = vmatprep.subr.mxu0 0.0
    %512 = vmatpush2.msra.mxu0 0.0
    %513 = vmatprep.subr.mxu0 0.0
    %514 = vmatpush2.msra.mxu0 0.0
    %515 = vmatprep.subr.mxu0 0.0
    %516 = vmatpush2.msra.mxu0 0.0
    %517 = vmatprep.subr.mxu0 0.0
    %518 = vmatpush2.msra.mxu0 0.0
    %519 = vmatprep.subr.mxu0 0.0
    %520 = vmatpush2.msra.mxu0 0.0
    %521 = vmatprep.subr.mxu0 0.0
    %522 = vmatpush2.msra.mxu0 0.0
    %523 = vmatprep.subr.mxu0 0.0
    %524 = vmatpush2.msra.mxu0 0.0
    %525 = vmatprep.subr.mxu0 0.0
    %526 = vmatpush2.msra.mxu0 0.0
    %527 = vmatprep.subr.mxu0 0.0
    %528 = vmatpush2.msra.mxu0 0.0
    %529 = vmatprep.subr.mxu0 0.0
    %530 = vmatpush2.msra.mxu0 0.0
    %531 = vmatprep.subr.mxu0 0.0
    %532 = vmatpush2.msra.mxu0 0.0
    %533 = vmatprep.mubr.f32.mxu0 0.0
    %534 = vmatmul.mubr.f32.gmra.mxu0 %v467
    %v535 = vpop.f32.mrf.mxu0
    %v536 = vadd.f32 %v463, %v535
    %v537 = vpop.f32.mrf.mxu0
    %538 = vdwg.mxu0
    %vm539 = vcmask 320512
    %540 = vst.msk [vmem:[#allocation2] sm:$0x3] %vm539, %v536
    // Predicated region
    $region30: #{dgcnn_forward.27} parent=1 // pred_check
      _
    $region31: #{dgcnn_forward.27} parent=1 // pred_check_branch
      %542 = sbr.rel (0) target = $region33
    $region32: #{dgcnn_forward.27} parent=1 // pred_region
      %s544 = ssub.s32 32, 32
      %545 = vsyncadd [#allocation3], %s544
      %s547 = sshll.u32 [#allocation2], 4
      %s548 = int_to_ptr.vmem [resolvable:$true] %s547
      %550 = dma.vmem_to_hbm [thread:$0]  %s548, 32, %s7, [#allocation3]
    $region33: #{dgcnn_forward.27} parent=1 // pred_fallthru
      _
    // Predicated region
    $region34: #{dgcnn_forward.27} parent=1 // pred_check
      _
    $region35: #{dgcnn_forward.27} parent=1 // pred_check_branch
      %552 = sbr.rel (0) target = $region37
    $region36: #{dgcnn_forward.27} parent=1 // pred_region
      %553 = dma.done [#allocation3], 32
    $region37: #{dgcnn_forward.27} parent=1 // pred_fallthru
      _
    %554 = vsyncpa [#allocation3], 1

// kernel: dgcnn_forward.25
$region0: #{dgcnn_forward.25}
  #allocation0 [shape = 'u32[]', space=smem, size = 0x4, offset = 0x4, fixed_abs, tag = 'smem constant byte address 0x4 - core index']
  #allocation1 [shape = 'u32[144,128]{1,0:T(1,128)}', space=vmem, size = 0x12000, scoped, tag = 'internal scratch']
  %s0 = inlined_call_operand.vmem [shape: f32[32,4,64], index: 0, kind: input, shape index: {}]
  %s1 = inlined_call_operand.vmem [shape: f32[32,4,64], index: 1, kind: input, shape index: {}]
  %s2 = inlined_call_operand.vmem [shape: f32[32,4,64], index: 2, kind: input, shape index: {}]
  %s3 = inlined_call_operand.vmem [shape: f32[32,4,64], index: 3, kind: input, shape index: {}]
  %s4 = inlined_call_operand.vmem [shape: f32[32,64], index: 4, kind: input, shape index: {}]
  %s5 = inlined_call_operand.vmem [shape: f32[32,64], index: 5, kind: input, shape index: {}]
  %s6 = inlined_call_operand.vmem [shape: f32[32,64], index: 6, kind: input, shape index: {}]
  %s7 = inlined_call_operand.vmem [shape: f32[32,64], index: 7, kind: input, shape index: {}]
  %s8 = inlined_call_operand.vmem [shape: f32[256,64], index: 8, kind: input, shape index: {}]
  %s9 = inlined_call_operand.vmem [shape: f32[1,64], index: 9, kind: input, shape index: {}]
  %s10 = inlined_call_operand.vmem [shape: f32[32,64], index: 10, kind: output, shape index: {}]
  %s11 = sld [smem:[#allocation0]]
  $region50: #{dgcnn_forward.25} parent=0
    _
  %s13 = ssub.s32 1, %s11
  %s14 = scalar_select 0, %s13, %s11
  // Predicated region
  $region2: #{dgcnn_forward.25} parent=0 // pred_check
    _
  $region3: #{dgcnn_forward.25} parent=0 // pred_check_branch
    %16 = sbr.rel (0) target = $region5
  $region4: #{dgcnn_forward.25} parent=0 // pred_region
    _
  $region5: #{dgcnn_forward.25} parent=0 // pred_fallthru
    _
  // Predicated region
  $region6: #{dgcnn_forward.25} parent=0 // pred_check
    _
  $region7: #{dgcnn_forward.25} parent=0 // pred_check_branch
    %18 = sbr.rel (0) target = $region9
  $region8: #{dgcnn_forward.25} parent=0 // pred_region
    _
  $region9: #{dgcnn_forward.25} parent=0 // pred_fallthru
    _
  // Predicated region
  $region10: #{dgcnn_forward.25} parent=0 // pred_check
    _
  $region11: #{dgcnn_forward.25} parent=0 // pred_check_branch
    %20 = sbr.rel (0) target = $region13
  $region12: #{dgcnn_forward.25} parent=0 // pred_region
    _
  $region13: #{dgcnn_forward.25} parent=0 // pred_fallthru
    _
  // Predicated region
  $region14: #{dgcnn_forward.25} parent=0 // pred_check
    _
  $region15: #{dgcnn_forward.25} parent=0 // pred_check_branch
    %22 = sbr.rel (0) target = $region17
  $region16: #{dgcnn_forward.25} parent=0 // pred_region
    _
  $region17: #{dgcnn_forward.25} parent=0 // pred_fallthru
    _
  // Predicated region
  $region18: #{dgcnn_forward.25} parent=0 // pred_check
    _
  $region19: #{dgcnn_forward.25} parent=0 // pred_check_branch
    %24 = sbr.rel (0) target = $region21
  $region20: #{dgcnn_forward.25} parent=0 // pred_region
    _
  $region21: #{dgcnn_forward.25} parent=0 // pred_fallthru
    _
  // Predicated region
  $region22: #{dgcnn_forward.25} parent=0 // pred_check
    _
  $region23: #{dgcnn_forward.25} parent=0 // pred_check_branch
    %26 = sbr.rel (0) target = $region25
  $region24: #{dgcnn_forward.25} parent=0 // pred_region
    _
  $region25: #{dgcnn_forward.25} parent=0 // pred_fallthru
    _
  // Predicated region
  $region26: #{dgcnn_forward.25} parent=0 // pred_check
    _
  $region27: #{dgcnn_forward.25} parent=0 // pred_check_branch
    %28 = sbr.rel (0) target = $region29
  $region28: #{dgcnn_forward.25} parent=0 // pred_region
    _
  $region29: #{dgcnn_forward.25} parent=0 // pred_fallthru
    _
  // Predicated region
  $region30: #{dgcnn_forward.25} parent=0 // pred_check
    _
  $region31: #{dgcnn_forward.25} parent=0 // pred_check_branch
    %30 = sbr.rel (0) target = $region33
  $region32: #{dgcnn_forward.25} parent=0 // pred_region
    _
  $region33: #{dgcnn_forward.25} parent=0 // pred_fallthru
    _
  // Predicated region
  $region34: #{dgcnn_forward.25} parent=0 // pred_check
    _
  $region35: #{dgcnn_forward.25} parent=0 // pred_check_branch
    %32 = sbr.rel (0) target = $region37
  $region36: #{dgcnn_forward.25} parent=0 // pred_region
    _
  $region37: #{dgcnn_forward.25} parent=0 // pred_fallthru
    _
  // Predicated region
  $region38: #{dgcnn_forward.25} parent=0 // pred_check
    _
  $region39: #{dgcnn_forward.25} parent=0 // pred_check_branch
    %34 = sbr.rel (0) target = $region41
  $region40: #{dgcnn_forward.25} parent=0 // pred_region
    _
  $region41: #{dgcnn_forward.25} parent=0 // pred_fallthru
    _
  %v35 = vld [vmem:[%s8] sm:$0xff]
  %v36 = vld [vmem:[%s8 + $0x8] sm:$0xff]
  %v37 = vld [vmem:[%s8 + $0x10] sm:$0xff]
  %v38 = vld [vmem:[%s8 + $0x18] sm:$0xff]
  %v39 = vld [vmem:[%s8 + $0x20] sm:$0xff]
  %v40 = vld [vmem:[%s8 + $0x28] sm:$0xff]
  %v41 = vld [vmem:[%s8 + $0x30] sm:$0xff]
  %v42 = vld [vmem:[%s8 + $0x38] sm:$0xff]
  %v43 = vld [vmem:[%s8 + $0x40] sm:$0xff]
  %v44 = vld [vmem:[%s8 + $0x48] sm:$0xff]
  %v45 = vld [vmem:[%s8 + $0x50] sm:$0xff]
  %v46 = vld [vmem:[%s8 + $0x58] sm:$0xff]
  %v47 = vld [vmem:[%s8 + $0x60] sm:$0xff]
  %v48 = vld [vmem:[%s8 + $0x68] sm:$0xff]
  %v49 = vld [vmem:[%s8 + $0x70] sm:$0xff]
  %v50 = vld [vmem:[%s8 + $0x78] sm:$0xff]
  %v51 = vld [vmem:[%s8 + $0x80] sm:$0xff]
  %v52 = vld [vmem:[%s8 + $0x88] sm:$0xff]
  %v53 = vld [vmem:[%s8 + $0x90] sm:$0xff]
  %v54 = vld [vmem:[%s8 + $0x98] sm:$0xff]
  %v55 = vld [vmem:[%s8 + $0xa0] sm:$0xff]
  %v56 = vld [vmem:[%s8 + $0xa8] sm:$0xff]
  %v57 = vld [vmem:[%s8 + $0xb0] sm:$0xff]
  %v58 = vld [vmem:[%s8 + $0xb8] sm:$0xff]
  %v59 = vld [vmem:[%s8 + $0xc0] sm:$0xff]
  %v60 = vld [vmem:[%s8 + $0xc8] sm:$0xff]
  %v61 = vld [vmem:[%s8 + $0xd0] sm:$0xff]
  %v62 = vld [vmem:[%s8 + $0xd8] sm:$0xff]
  %v63 = vld [vmem:[%s8 + $0xe0] sm:$0xff]
  %v64 = vld [vmem:[%s8 + $0xe8] sm:$0xff]
  %v65 = vld [vmem:[%s8 + $0xf0] sm:$0xff]
  %v66 = vld [vmem:[%s8 + $0xf8] sm:$0xff]
  %v67 = vld [vmem:[%s9] sm:$0x1]
  %v68 = vld [vmem:[%s4] sm:$0xff]
  %v69 = vld [vmem:[%s4 + $0x8] sm:$0xff]
  %v70 = vld [vmem:[%s4 + $0x10] sm:$0xff]
  %v71 = vld [vmem:[%s4 + $0x18] sm:$0xff]
  %v72 = vld [vmem:[%s5] sm:$0xff]
  %v73 = vld [vmem:[%s5 + $0x8] sm:$0xff]
  %v74 = vld [vmem:[%s5 + $0x10] sm:$0xff]
  %v75 = vld [vmem:[%s5 + $0x18] sm:$0xff]
  %v76 = vld [vmem:[%s6] sm:$0xff]
  %v77 = vld [vmem:[%s6 + $0x8] sm:$0xff]
  %v78 = vld [vmem:[%s6 + $0x10] sm:$0xff]
  %v79 = vld [vmem:[%s6 + $0x18] sm:$0xff]
  %v80 = vld [vmem:[%s7] sm:$0xff]
  %v81 = vld [vmem:[%s7 + $0x8] sm:$0xff]
  %v82 = vld [vmem:[%s7 + $0x10] sm:$0xff]
  %v83 = vld [vmem:[%s7 + $0x18] sm:$0xff]
  %v84 = vld [vmem:[%s0] sm:$0x1]
  %v85 = vld [vmem:[%s0 + $0x4] sm:$0x1]
  %v86 = vld [vmem:[%s0 + $0x8] sm:$0x1]
  %v87 = vld [vmem:[%s0 + $0xc] sm:$0x1]
  %v88 = vld [vmem:[%s0 + $0x10] sm:$0x1]
  %v89 = vld [vmem:[%s0 + $0x14] sm:$0x1]
  %v90 = vld [vmem:[%s0 + $0x18] sm:$0x1]
  %v91 = vld [vmem:[%s0 + $0x1c] sm:$0x1]
  %v92 = vld [vmem:[%s0 + $0x20] sm:$0x1]
  %v93 = vld [vmem:[%s0 + $0x24] sm:$0x1]
  %v94 = vld [vmem:[%s0 + $0x28] sm:$0x1]
  %v95 = vld [vmem:[%s0 + $0x2c] sm:$0x1]
  %v96 = vld [vmem:[%s0 + $0x30] sm:$0x1]
  %v97 = vld [vmem:[%s0 + $0x34] sm:$0x1]
  %v98 = vld [vmem:[%s0 + $0x38] sm:$0x1]
  %v99 = vld [vmem:[%s0 + $0x3c] sm:$0x1]
  %v100 = vld [vmem:[%s0 + $0x40] sm:$0x1]
  %v101 = vld [vmem:[%s0 + $0x44] sm:$0x1]
  %v102 = vld [vmem:[%s0 + $0x48] sm:$0x1]
  %v103 = vld [vmem:[%s0 + $0x4c] sm:$0x1]
  %v104 = vld [vmem:[%s0 + $0x50] sm:$0x1]
  %v105 = vld [vmem:[%s0 + $0x54] sm:$0x1]
  %v106 = vld [vmem:[%s0 + $0x58] sm:$0x1]
  %v107 = vld [vmem:[%s0 + $0x5c] sm:$0x1]
  %v108 = vld [vmem:[%s0 + $0x60] sm:$0x1]
  %v109 = vld [vmem:[%s0 + $0x64] sm:$0x1]
  %v110 = vld [vmem:[%s0 + $0x68] sm:$0x1]
  %v111 = vld [vmem:[%s0 + $0x6c] sm:$0x1]
  %v112 = vld [vmem:[%s0 + $0x70] sm:$0x1]
  %v113 = vld [vmem:[%s0 + $0x74] sm:$0x1]
  %v114 = vld [vmem:[%s0 + $0x78] sm:$0x1]
  %v115 = vld [vmem:[%s0 + $0x7c] sm:$0x1]
  %v120 = vrot.slane %v68, 1
  %v121 = vrot.slane %v68, 2
  %v122 = vrot.slane %v68, 3
  %v123 = vrot.slane %v68, 4
  %v124 = vrot.slane %v68, 5
  %v125 = vrot.slane %v68, 6
  %v126 = vrot.slane %v68, 7
  %v127 = vrot.slane %v69, 1
  %v128 = vrot.slane %v69, 2
  %v129 = vrot.slane %v69, 3
  %v130 = vrot.slane %v69, 4
  %v131 = vrot.slane %v69, 5
  %v132 = vrot.slane %v69, 6
  %v133 = vrot.slane %v69, 7
  %v134 = vrot.slane %v70, 1
  %v135 = vrot.slane %v70, 2
  %v136 = vrot.slane %v70, 3
  %v137 = vrot.slane %v70, 4
  %v138 = vrot.slane %v70, 5
  %v139 = vrot.slane %v70, 6
  %v140 = vrot.slane %v70, 7
  %v141 = vrot.slane %v71, 1
  %v142 = vrot.slane %v71, 2
  %v143 = vrot.slane %v71, 3
  %v144 = vrot.slane %v71, 4
  %v145 = vrot.slane %v71, 5
  %v146 = vrot.slane %v71, 6
  %v147 = vrot.slane %v71, 7
  %v180 = vadd.f32 %v84, %v68
  %v181 = vadd.f32 %v85, %v120
  %v182 = vadd.f32 %v86, %v121
  %v183 = vadd.f32 %v87, %v122
  %v184 = vadd.f32 %v88, %v123
  %v185 = vadd.f32 %v89, %v124
  %v186 = vadd.f32 %v90, %v125
  %v187 = vadd.f32 %v91, %v126
  %v188 = vadd.f32 %v92, %v69
  %v189 = vadd.f32 %v93, %v127
  %v190 = vadd.f32 %v94, %v128
  %v191 = vadd.f32 %v95, %v129
  %v192 = vadd.f32 %v96, %v130
  %v193 = vadd.f32 %v97, %v131
  %v194 = vadd.f32 %v98, %v132
  %v195 = vadd.f32 %v99, %v133
  %v196 = vadd.f32 %v100, %v70
  %v197 = vadd.f32 %v101, %v134
  %v198 = vadd.f32 %v102, %v135
  %v199 = vadd.f32 %v103, %v136
  %v200 = vadd.f32 %v104, %v137
  %v201 = vadd.f32 %v105, %v138
  %v202 = vadd.f32 %v106, %v139
  %v203 = vadd.f32 %v107, %v140
  %v204 = vadd.f32 %v108, %v71
  %v205 = vadd.f32 %v109, %v141
  %v206 = vadd.f32 %v110, %v142
  %v207 = vadd.f32 %v111, %v143
  %v208 = vadd.f32 %v112, %v144
  %v209 = vadd.f32 %v113, %v145
  %v210 = vadd.f32 %v114, %v146
  %v211 = vadd.f32 %v115, %v147
  %vm212 = vcmp.gt.f32.partialorder %v180, 0.0
  %vm213 = vcmp.gt.f32.partialorder %v181, 0.0
  %vm214 = vcmp.gt.f32.partialorder %v182, 0.0
  %vm215 = vcmp.gt.f32.partialorder %v183, 0.0
  %vm216 = vcmp.gt.f32.partialorder %v184, 0.0
  %vm217 = vcmp.gt.f32.partialorder %v185, 0.0
  %vm218 = vcmp.gt.f32.partialorder %v186, 0.0
  %vm219 = vcmp.gt.f32.partialorder %v187, 0.0
  %vm220 = vcmp.gt.f32.partialorder %v188, 0.0
  %vm221 = vcmp.gt.f32.partialorder %v189, 0.0
  %vm222 = vcmp.gt.f32.partialorder %v190, 0.0
  %vm223 = vcmp.gt.f32.partialorder %v191, 0.0
  %vm224 = vcmp.gt.f32.partialorder %v192, 0.0
  %vm225 = vcmp.gt.f32.partialorder %v193, 0.0
  %vm226 = vcmp.gt.f32.partialorder %v194, 0.0
  %vm227 = vcmp.gt.f32.partialorder %v195, 0.0
  %vm228 = vcmp.gt.f32.partialorder %v196, 0.0
  %vm229 = vcmp.gt.f32.partialorder %v197, 0.0
  %vm230 = vcmp.gt.f32.partialorder %v198, 0.0
  %vm231 = vcmp.gt.f32.partialorder %v199, 0.0
  %vm232 = vcmp.gt.f32.partialorder %v200, 0.0
  %vm233 = vcmp.gt.f32.partialorder %v201, 0.0
  %vm234 = vcmp.gt.f32.partialorder %v202, 0.0
  %vm235 = vcmp.gt.f32.partialorder %v203, 0.0
  %vm236 = vcmp.gt.f32.partialorder %v204, 0.0
  %vm237 = vcmp.gt.f32.partialorder %v205, 0.0
  %vm238 = vcmp.gt.f32.partialorder %v206, 0.0
  %vm239 = vcmp.gt.f32.partialorder %v207, 0.0
  %vm240 = vcmp.gt.f32.partialorder %v208, 0.0
  %vm241 = vcmp.gt.f32.partialorder %v209, 0.0
  %vm242 = vcmp.gt.f32.partialorder %v210, 0.0
  %vm243 = vcmp.gt.f32.partialorder %v211, 0.0
  %v244 = vmul.f32 %v180, 0.2
  %v245 = vmul.f32 %v181, 0.2
  %v246 = vmul.f32 %v182, 0.2
  %v247 = vmul.f32 %v183, 0.2
  %v248 = vmul.f32 %v184, 0.2
  %v249 = vmul.f32 %v185, 0.2
  %v250 = vmul.f32 %v186, 0.2
  %v251 = vmul.f32 %v187, 0.2
  %v252 = vmul.f32 %v188, 0.2
  %v253 = vmul.f32 %v189, 0.2
  %v254 = vmul.f32 %v190, 0.2
  %v255 = vmul.f32 %v191, 0.2
  %v256 = vmul.f32 %v192, 0.2
  %v257 = vmul.f32 %v193, 0.2
  %v258 = vmul.f32 %v194, 0.2
  %v259 = vmul.f32 %v195, 0.2
  %v260 = vmul.f32 %v196, 0.2
  %v261 = vmul.f32 %v197, 0.2
  %v262 = vmul.f32 %v198, 0.2
  %v263 = vmul.f32 %v199, 0.2
  %v264 = vmul.f32 %v200, 0.2
  %v265 = vmul.f32 %v201, 0.2
  %v266 = vmul.f32 %v202, 0.2
  %v267 = vmul.f32 %v203, 0.2
  %v268 = vmul.f32 %v204, 0.2
  %v269 = vmul.f32 %v205, 0.2
  %v270 = vmul.f32 %v206, 0.2
  %v271 = vmul.f32 %v207, 0.2
  %v272 = vmul.f32 %v208, 0.2
  %v273 = vmul.f32 %v209, 0.2
  %v274 = vmul.f32 %v210, 0.2
  %v275 = vmul.f32 %v211, 0.2
  %v276 = vsel %vm212, %v180, %v244
  %v277 = vsel %vm213, %v181, %v245
  %v278 = vsel %vm214, %v182, %v246
  %v279 = vsel %vm215, %v183, %v247
  %v280 = vsel %vm216, %v184, %v248
  %v281 = vsel %vm217, %v185, %v249
  %v282 = vsel %vm218, %v186, %v250
  %v283 = vsel %vm219, %v187, %v251
  %v284 = vsel %vm220, %v188, %v252
  %v285 = vsel %vm221, %v189, %v253
  %v286 = vsel %vm222, %v190, %v254
  %v287 = vsel %vm223, %v191, %v255
  %v288 = vsel %vm224, %v192, %v256
  %v289 = vsel %vm225, %v193, %v257
  %v290 = vsel %vm226, %v194, %v258
  %v291 = vsel %vm227, %v195, %v259
  %v292 = vsel %vm228, %v196, %v260
  %v293 = vsel %vm229, %v197, %v261
  %v294 = vsel %vm230, %v198, %v262
  %v295 = vsel %vm231, %v199, %v263
  %v296 = vsel %vm232, %v200, %v264
  %v297 = vsel %vm233, %v201, %v265
  %v298 = vsel %vm234, %v202, %v266
  %v299 = vsel %vm235, %v203, %v267
  %v300 = vsel %vm236, %v204, %v268
  %v301 = vsel %vm237, %v205, %v269
  %v302 = vsel %vm238, %v206, %v270
  %v303 = vsel %vm239, %v207, %v271
  %v304 = vsel %vm240, %v208, %v272
  %v305 = vsel %vm241, %v209, %v273
  %v306 = vsel %vm242, %v210, %v274
  %v307 = vsel %vm243, %v211, %v275
  %v308 = vld [vmem:[%s1] sm:$0x1]
  %v309 = vld [vmem:[%s1 + $0x4] sm:$0x1]
  %v310 = vld [vmem:[%s1 + $0x8] sm:$0x1]
  %v311 = vld [vmem:[%s1 + $0xc] sm:$0x1]
  %v312 = vld [vmem:[%s1 + $0x10] sm:$0x1]
  %v313 = vld [vmem:[%s1 + $0x14] sm:$0x1]
  %v314 = vld [vmem:[%s1 + $0x18] sm:$0x1]
  %v315 = vld [vmem:[%s1 + $0x1c] sm:$0x1]
  %v316 = vld [vmem:[%s1 + $0x20] sm:$0x1]
  %v317 = vld [vmem:[%s1 + $0x24] sm:$0x1]
  %v318 = vld [vmem:[%s1 + $0x28] sm:$0x1]
  %v319 = vld [vmem:[%s1 + $0x2c] sm:$0x1]
  %v320 = vld [vmem:[%s1 + $0x30] sm:$0x1]
  %v321 = vld [vmem:[%s1 + $0x34] sm:$0x1]
  %v322 = vld [vmem:[%s1 + $0x38] sm:$0x1]
  %v323 = vld [vmem:[%s1 + $0x3c] sm:$0x1]
  %v324 = vld [vmem:[%s1 + $0x40] sm:$0x1]
  %v325 = vld [vmem:[%s1 + $0x44] sm:$0x1]
  %v326 = vld [vmem:[%s1 + $0x48] sm:$0x1]
  %v327 = vld [vmem:[%s1 + $0x4c] sm:$0x1]
  %v328 = vld [vmem:[%s1 + $0x50] sm:$0x1]
  %v329 = vld [vmem:[%s1 + $0x54] sm:$0x1]
  %v330 = vld [vmem:[%s1 + $0x58] sm:$0x1]
  %v331 = vld [vmem:[%s1 + $0x5c] sm:$0x1]
  %v332 = vld [vmem:[%s1 + $0x60] sm:$0x1]
  %v333 = vld [vmem:[%s1 + $0x64] sm:$0x1]
  %v334 = vld [vmem:[%s1 + $0x68] sm:$0x1]
  %v335 = vld [vmem:[%s1 + $0x6c] sm:$0x1]
  %v336 = vld [vmem:[%s1 + $0x70] sm:$0x1]
  %v337 = vld [vmem:[%s1 + $0x74] sm:$0x1]
  %v338 = vld [vmem:[%s1 + $0x78] sm:$0x1]
  %v339 = vld [vmem:[%s1 + $0x7c] sm:$0x1]
  %v344 = vrot.slane %v72, 1
  %v345 = vrot.slane %v72, 2
  %v346 = vrot.slane %v72, 3
  %v347 = vrot.slane %v72, 4
  %v348 = vrot.slane %v72, 5
  %v349 = vrot.slane %v72, 6
  %v350 = vrot.slane %v72, 7
  %v351 = vrot.slane %v73, 1
  %v352 = vrot.slane %v73, 2
  %v353 = vrot.slane %v73, 3
  %v354 = vrot.slane %v73, 4
  %v355 = vrot.slane %v73, 5
  %v356 = vrot.slane %v73, 6
  %v357 = vrot.slane %v73, 7
  %v358 = vrot.slane %v74, 1
  %v359 = vrot.slane %v74, 2
  %v360 = vrot.slane %v74, 3
  %v361 = vrot.slane %v74, 4
  %v362 = vrot.slane %v74, 5
  %v363 = vrot.slane %v74, 6
  %v364 = vrot.slane %v74, 7
  %v365 = vrot.slane %v75, 1
  %v366 = vrot.slane %v75, 2
  %v367 = vrot.slane %v75, 3
  %v368 = vrot.slane %v75, 4
  %v369 = vrot.slane %v75, 5
  %v370 = vrot.slane %v75, 6
  %v371 = vrot.slane %v75, 7
  %v404 = vadd.f32 %v308, %v72
  %v405 = vadd.f32 %v309, %v344
  %v406 = vadd.f32 %v310, %v345
  %v407 = vadd.f32 %v311, %v346
  %v408 = vadd.f32 %v312, %v347
  %v409 = vadd.f32 %v313, %v348
  %v410 = vadd.f32 %v314, %v349
  %v411 = vadd.f32 %v315, %v350
  %v412 = vadd.f32 %v316, %v73
  %v413 = vadd.f32 %v317, %v351
  %v414 = vadd.f32 %v318, %v352
  %v415 = vadd.f32 %v319, %v353
  %v416 = vadd.f32 %v320, %v354
  %v417 = vadd.f32 %v321, %v355
  %v418 = vadd.f32 %v322, %v356
  %v419 = vadd.f32 %v323, %v357
  %v420 = vadd.f32 %v324, %v74
  %v421 = vadd.f32 %v325, %v358
  %v422 = vadd.f32 %v326, %v359
  %v423 = vadd.f32 %v327, %v360
  %v424 = vadd.f32 %v328, %v361
  %v425 = vadd.f32 %v329, %v362
  %v426 = vadd.f32 %v330, %v363
  %v427 = vadd.f32 %v331, %v364
  %v428 = vadd.f32 %v332, %v75
  %v429 = vadd.f32 %v333, %v365
  %v430 = vadd.f32 %v334, %v366
  %v431 = vadd.f32 %v335, %v367
  %v432 = vadd.f32 %v336, %v368
  %v433 = vadd.f32 %v337, %v369
  %v434 = vadd.f32 %v338, %v370
  %v435 = vadd.f32 %v339, %v371
  %vm436 = vcmp.gt.f32.partialorder %v404, 0.0
  %vm437 = vcmp.gt.f32.partialorder %v405, 0.0
  %vm438 = vcmp.gt.f32.partialorder %v406, 0.0
  %vm439 = vcmp.gt.f32.partialorder %v407, 0.0
  %vm440 = vcmp.gt.f32.partialorder %v408, 0.0
  %vm441 = vcmp.gt.f32.partialorder %v409, 0.0
  %vm442 = vcmp.gt.f32.partialorder %v410, 0.0
  %vm443 = vcmp.gt.f32.partialorder %v411, 0.0
  %vm444 = vcmp.gt.f32.partialorder %v412, 0.0
  %vm445 = vcmp.gt.f32.partialorder %v413, 0.0
  %vm446 = vcmp.gt.f32.partialorder %v414, 0.0
  %vm447 = vcmp.gt.f32.partialorder %v415, 0.0
  %vm448 = vcmp.gt.f32.partialorder %v416, 0.0
  %vm449 = vcmp.gt.f32.partialorder %v417, 0.0
  %vm450 = vcmp.gt.f32.partialorder %v418, 0.0
  %vm451 = vcmp.gt.f32.partialorder %v419, 0.0
  %vm452 = vcmp.gt.f32.partialorder %v420, 0.0
  %vm453 = vcmp.gt.f32.partialorder %v421, 0.0
  %vm454 = vcmp.gt.f32.partialorder %v422, 0.0
  %vm455 = vcmp.gt.f32.partialorder %v423, 0.0
  %vm456 = vcmp.gt.f32.partialorder %v424, 0.0
  %vm457 = vcmp.gt.f32.partialorder %v425, 0.0
  %vm458 = vcmp.gt.f32.partialorder %v426, 0.0
  %vm459 = vcmp.gt.f32.partialorder %v427, 0.0
  %vm460 = vcmp.gt.f32.partialorder %v428, 0.0
  %vm461 = vcmp.gt.f32.partialorder %v429, 0.0
  %vm462 = vcmp.gt.f32.partialorder %v430, 0.0
  %vm463 = vcmp.gt.f32.partialorder %v431, 0.0
  %vm464 = vcmp.gt.f32.partialorder %v432, 0.0
  %vm465 = vcmp.gt.f32.partialorder %v433, 0.0
  %vm466 = vcmp.gt.f32.partialorder %v434, 0.0
  %vm467 = vcmp.gt.f32.partialorder %v435, 0.0
  %v468 = vmul.f32 %v404, 0.2
  %v469 = vmul.f32 %v405, 0.2
  %v470 = vmul.f32 %v406, 0.2
  %v471 = vmul.f32 %v407, 0.2
  %v472 = vmul.f32 %v408, 0.2
  %v473 = vmul.f32 %v409, 0.2
  %v474 = vmul.f32 %v410, 0.2
  %v475 = vmul.f32 %v411, 0.2
  %v476 = vmul.f32 %v412, 0.2
  %v477 = vmul.f32 %v413, 0.2
  %v478 = vmul.f32 %v414, 0.2
  %v479 = vmul.f32 %v415, 0.2
  %v480 = vmul.f32 %v416, 0.2
  %v481 = vmul.f32 %v417, 0.2
  %v482 = vmul.f32 %v418, 0.2
  %v483 = vmul.f32 %v419, 0.2
  %v484 = vmul.f32 %v420, 0.2
  %v485 = vmul.f32 %v421, 0.2
  %v486 = vmul.f32 %v422, 0.2
  %v487 = vmul.f32 %v423, 0.2
  %v488 = vmul.f32 %v424, 0.2
  %v489 = vmul.f32 %v425, 0.2
  %v490 = vmul.f32 %v426, 0.2
  %v491 = vmul.f32 %v427, 0.2
  %v492 = vmul.f32 %v428, 0.2
  %v493 = vmul.f32 %v429, 0.2
  %v494 = vmul.f32 %v430, 0.2
  %v495 = vmul.f32 %v431, 0.2
  %v496 = vmul.f32 %v432, 0.2
  %v497 = vmul.f32 %v433, 0.2
  %v498 = vmul.f32 %v434, 0.2
  %v499 = vmul.f32 %v435, 0.2
  %v500 = vsel %vm436, %v404, %v468
  %v501 = vsel %vm437, %v405, %v469
  %v502 = vsel %vm438, %v406, %v470
  %v503 = vsel %vm439, %v407, %v471
  %v504 = vsel %vm440, %v408, %v472
  %v505 = vsel %vm441, %v409, %v473
  %v506 = vsel %vm442, %v410, %v474
  %v507 = vsel %vm443, %v411, %v475
  %v508 = vsel %vm444, %v412, %v476
  %v509 = vsel %vm445, %v413, %v477
  %v510 = vsel %vm446, %v414, %v478
  %v511 = vsel %vm447, %v415, %v479
  %v512 = vsel %vm448, %v416, %v480
  %v513 = vsel %vm449, %v417, %v481
  %v514 = vsel %vm450, %v418, %v482
  %v515 = vsel %vm451, %v419, %v483
  %v516 = vsel %vm452, %v420, %v484
  %v517 = vsel %vm453, %v421, %v485
  %v518 = vsel %vm454, %v422, %v486
  %v519 = vsel %vm455, %v423, %v487
  %v520 = vsel %vm456, %v424, %v488
  %v521 = vsel %vm457, %v425, %v489
  %v522 = vsel %vm458, %v426, %v490
  %v523 = vsel %vm459, %v427, %v491
  %v524 = vsel %vm460, %v428, %v492
  %v525 = vsel %vm461, %v429, %v493
  %v526 = vsel %vm462, %v430, %v494
  %v527 = vsel %vm463, %v431, %v495
  %v528 = vsel %vm464, %v432, %v496
  %v529 = vsel %vm465, %v433, %v497
  %v530 = vsel %vm466, %v434, %v498
  %v531 = vsel %vm467, %v435, %v499
  %v532 = vld [vmem:[%s2] sm:$0x1]
  %v533 = vld [vmem:[%s2 + $0x4] sm:$0x1]
  %v534 = vld [vmem:[%s2 + $0x8] sm:$0x1]
  %v535 = vld [vmem:[%s2 + $0xc] sm:$0x1]
  %v536 = vld [vmem:[%s2 + $0x10] sm:$0x1]
  %v537 = vld [vmem:[%s2 + $0x14] sm:$0x1]
  %v538 = vld [vmem:[%s2 + $0x18] sm:$0x1]
  %v539 = vld [vmem:[%s2 + $0x1c] sm:$0x1]
  %v540 = vld [vmem:[%s2 + $0x20] sm:$0x1]
  %v541 = vld [vmem:[%s2 + $0x24] sm:$0x1]
  %v542 = vld [vmem:[%s2 + $0x28] sm:$0x1]
  %v543 = vld [vmem:[%s2 + $0x2c] sm:$0x1]
  %v544 = vld [vmem:[%s2 + $0x30] sm:$0x1]
  %v545 = vld [vmem:[%s2 + $0x34] sm:$0x1]
  %v546 = vld [vmem:[%s2 + $0x38] sm:$0x1]
  %v547 = vld [vmem:[%s2 + $0x3c] sm:$0x1]
  %v548 = vld [vmem:[%s2 + $0x40] sm:$0x1]
  %v549 = vld [vmem:[%s2 + $0x44] sm:$0x1]
  %v550 = vld [vmem:[%s2 + $0x48] sm:$0x1]
  %v551 = vld [vmem:[%s2 + $0x4c] sm:$0x1]
  %v552 = vld [vmem:[%s2 + $0x50] sm:$0x1]
  %v553 = vld [vmem:[%s2 + $0x54] sm:$0x1]
  %v554 = vld [vmem:[%s2 + $0x58] sm:$0x1]
  %v555 = vld [vmem:[%s2 + $0x5c] sm:$0x1]
  %v556 = vld [vmem:[%s2 + $0x60] sm:$0x1]
  %v557 = vld [vmem:[%s2 + $0x64] sm:$0x1]
  %v558 = vld [vmem:[%s2 + $0x68] sm:$0x1]
  %v559 = vld [vmem:[%s2 + $0x6c] sm:$0x1]
  %v560 = vld [vmem:[%s2 + $0x70] sm:$0x1]
  %v561 = vld [vmem:[%s2 + $0x74] sm:$0x1]
  %v562 = vld [vmem:[%s2 + $0x78] sm:$0x1]
  %v563 = vld [vmem:[%s2 + $0x7c] sm:$0x1]
  %v568 = vrot.slane %v76, 1
  %v569 = vrot.slane %v76, 2
  %v570 = vrot.slane %v76, 3
  %v571 = vrot.slane %v76, 4
  %v572 = vrot.slane %v76, 5
  %v573 = vrot.slane %v76, 6
  %v574 = vrot.slane %v76, 7
  %v575 = vrot.slane %v77, 1
  %v576 = vrot.slane %v77, 2
  %v577 = vrot.slane %v77, 3
  %v578 = vrot.slane %v77, 4
  %v579 = vrot.slane %v77, 5
  %v580 = vrot.slane %v77, 6
  %v581 = vrot.slane %v77, 7
  %v582 = vrot.slane %v78, 1
  %v583 = vrot.slane %v78, 2
  %v584 = vrot.slane %v78, 3
  %v585 = vrot.slane %v78, 4
  %v586 = vrot.slane %v78, 5
  %v587 = vrot.slane %v78, 6
  %v588 = vrot.slane %v78, 7
  %v589 = vrot.slane %v79, 1
  %v590 = vrot.slane %v79, 2
  %v591 = vrot.slane %v79, 3
  %v592 = vrot.slane %v79, 4
  %v593 = vrot.slane %v79, 5
  %v594 = vrot.slane %v79, 6
  %v595 = vrot.slane %v79, 7
  %v628 = vadd.f32 %v532, %v76
  %v629 = vadd.f32 %v533, %v568
  %v630 = vadd.f32 %v534, %v569
  %v631 = vadd.f32 %v535, %v570
  %v632 = vadd.f32 %v536, %v571
  %v633 = vadd.f32 %v537, %v572
  %v634 = vadd.f32 %v538, %v573
  %v635 = vadd.f32 %v539, %v574
  %v636 = vadd.f32 %v540, %v77
  %v637 = vadd.f32 %v541, %v575
  %v638 = vadd.f32 %v542, %v576
  %v639 = vadd.f32 %v543, %v577
  %v640 = vadd.f32 %v544, %v578
  %v641 = vadd.f32 %v545, %v579
  %v642 = vadd.f32 %v546, %v580
  %v643 = vadd.f32 %v547, %v581
  %v644 = vadd.f32 %v548, %v78
  %v645 = vadd.f32 %v549, %v582
  %v646 = vadd.f32 %v550, %v583
  %v647 = vadd.f32 %v551, %v584
  %v648 = vadd.f32 %v552, %v585
  %v649 = vadd.f32 %v553, %v586
  %v650 = vadd.f32 %v554, %v587
  %v651 = vadd.f32 %v555, %v588
  %v652 = vadd.f32 %v556, %v79
  %v653 = vadd.f32 %v557, %v589
  %v654 = vadd.f32 %v558, %v590
  %v655 = vadd.f32 %v559, %v591
  %v656 = vadd.f32 %v560, %v592
  %v657 = vadd.f32 %v561, %v593
  %v658 = vadd.f32 %v562, %v594
  %v659 = vadd.f32 %v563, %v595
  %vm660 = vcmp.gt.f32.partialorder %v628, 0.0
  %vm661 = vcmp.gt.f32.partialorder %v629, 0.0
  %vm662 = vcmp.gt.f32.partialorder %v630, 0.0
  %vm663 = vcmp.gt.f32.partialorder %v631, 0.0
  %vm664 = vcmp.gt.f32.partialorder %v632, 0.0
  %vm665 = vcmp.gt.f32.partialorder %v633, 0.0
  %vm666 = vcmp.gt.f32.partialorder %v634, 0.0
  %vm667 = vcmp.gt.f32.partialorder %v635, 0.0
  %vm668 = vcmp.gt.f32.partialorder %v636, 0.0
  %vm669 = vcmp.gt.f32.partialorder %v637, 0.0
  %vm670 = vcmp.gt.f32.partialorder %v638, 0.0
  %vm671 = vcmp.gt.f32.partialorder %v639, 0.0
  %vm672 = vcmp.gt.f32.partialorder %v640, 0.0
  %vm673 = vcmp.gt.f32.partialorder %v641, 0.0
  %vm674 = vcmp.gt.f32.partialorder %v642, 0.0
  %vm675 = vcmp.gt.f32.partialorder %v643, 0.0
  %vm676 = vcmp.gt.f32.partialorder %v644, 0.0
  %vm677 = vcmp.gt.f32.partialorder %v645, 0.0
  %vm678 = vcmp.gt.f32.partialorder %v646, 0.0
  %vm679 = vcmp.gt.f32.partialorder %v647, 0.0
  %vm680 = vcmp.gt.f32.partialorder %v648, 0.0
  %vm681 = vcmp.gt.f32.partialorder %v649, 0.0
  %vm682 = vcmp.gt.f32.partialorder %v650, 0.0
  %vm683 = vcmp.gt.f32.partialorder %v651, 0.0
  %vm684 = vcmp.gt.f32.partialorder %v652, 0.0
  %vm685 = vcmp.gt.f32.partialorder %v653, 0.0
  %vm686 = vcmp.gt.f32.partialorder %v654, 0.0
  %vm687 = vcmp.gt.f32.partialorder %v655, 0.0
  %vm688 = vcmp.gt.f32.partialorder %v656, 0.0
  %vm689 = vcmp.gt.f32.partialorder %v657, 0.0
  %vm690 = vcmp.gt.f32.partialorder %v658, 0.0
  %vm691 = vcmp.gt.f32.partialorder %v659, 0.0
  %v692 = vmul.f32 %v628, 0.2
  %v693 = vmul.f32 %v629, 0.2
  %v694 = vmul.f32 %v630, 0.2
  %v695 = vmul.f32 %v631, 0.2
  %v696 = vmul.f32 %v632, 0.2
  %v697 = vmul.f32 %v633, 0.2
  %v698 = vmul.f32 %v634, 0.2
  %v699 = vmul.f32 %v635, 0.2
  %v700 = vmul.f32 %v636, 0.2
  %v701 = vmul.f32 %v637, 0.2
  %v702 = vmul.f32 %v638, 0.2
  %v703 = vmul.f32 %v639, 0.2
  %v704 = vmul.f32 %v640, 0.2
  %v705 = vmul.f32 %v641, 0.2
  %v706 = vmul.f32 %v642, 0.2
  %v707 = vmul.f32 %v643, 0.2
  %v708 = vmul.f32 %v644, 0.2
  %v709 = vmul.f32 %v645, 0.2
  %v710 = vmul.f32 %v646, 0.2
  %v711 = vmul.f32 %v647, 0.2
  %v712 = vmul.f32 %v648, 0.2
  %v713 = vmul.f32 %v649, 0.2
  %v714 = vmul.f32 %v650, 0.2
  %v715 = vmul.f32 %v651, 0.2
  %v716 = vmul.f32 %v652, 0.2
  %v717 = vmul.f32 %v653, 0.2
  %v718 = vmul.f32 %v654, 0.2
  %v719 = vmul.f32 %v655, 0.2
  %v720 = vmul.f32 %v656, 0.2
  %v721 = vmul.f32 %v657, 0.2
  %v722 = vmul.f32 %v658, 0.2
  %v723 = vmul.f32 %v659, 0.2
  %v724 = vsel %vm660, %v628, %v692
  %v725 = vsel %vm661, %v629, %v693
  %v726 = vsel %vm662, %v630, %v694
  %v727 = vsel %vm663, %v631, %v695
  %v728 = vsel %vm664, %v632, %v696
  %v729 = vsel %vm665, %v633, %v697
  %v730 = vsel %vm666, %v634, %v698
  %v731 = vsel %vm667, %v635, %v699
  %v732 = vsel %vm668, %v636, %v700
  %v733 = vsel %vm669, %v637, %v701
  %v734 = vsel %vm670, %v638, %v702
  %v735 = vsel %vm671, %v639, %v703
  %v736 = vsel %vm672, %v640, %v704
  %v737 = vsel %vm673, %v641, %v705
  %v738 = vsel %vm674, %v642, %v706
  %v739 = vsel %vm675, %v643, %v707
  %v740 = vsel %vm676, %v644, %v708
  %v741 = vsel %vm677, %v645, %v709
  %v742 = vsel %vm678, %v646, %v710
  %v743 = vsel %vm679, %v647, %v711
  %v744 = vsel %vm680, %v648, %v712
  %v745 = vsel %vm681, %v649, %v713
  %v746 = vsel %vm682, %v650, %v714
  %v747 = vsel %vm683, %v651, %v715
  %v748 = vsel %vm684, %v652, %v716
  %v749 = vsel %vm685, %v653, %v717
  %v750 = vsel %vm686, %v654, %v718
  %v751 = vsel %vm687, %v655, %v719
  %v752 = vsel %vm688, %v656, %v720
  %v753 = vsel %vm689, %v657, %v721
  %v754 = vsel %vm690, %v658, %v722
  %v755 = vsel %vm691, %v659, %v723
  %v756 = vld [vmem:[%s3] sm:$0x1]
  %v757 = vld [vmem:[%s3 + $0x4] sm:$0x1]
  %v758 = vld [vmem:[%s3 + $0x8] sm:$0x1]
  %v759 = vld [vmem:[%s3 + $0xc] sm:$0x1]
  %v760 = vld [vmem:[%s3 + $0x10] sm:$0x1]
  %v761 = vld [vmem:[%s3 + $0x14] sm:$0x1]
  %v762 = vld [vmem:[%s3 + $0x18] sm:$0x1]
  %v763 = vld [vmem:[%s3 + $0x1c] sm:$0x1]
  %v764 = vld [vmem:[%s3 + $0x20] sm:$0x1]
  %v765 = vld [vmem:[%s3 + $0x24] sm:$0x1]
  %v766 = vld [vmem:[%s3 + $0x28] sm:$0x1]
  %v767 = vld [vmem:[%s3 + $0x2c] sm:$0x1]
  %v768 = vld [vmem:[%s3 + $0x30] sm:$0x1]
  %v769 = vld [vmem:[%s3 + $0x34] sm:$0x1]
  %v770 = vld [vmem:[%s3 + $0x38] sm:$0x1]
  %v771 = vld [vmem:[%s3 + $0x3c] sm:$0x1]
  %v772 = vld [vmem:[%s3 + $0x40] sm:$0x1]
  %v773 = vld [vmem:[%s3 + $0x44] sm:$0x1]
  %v774 = vld [vmem:[%s3 + $0x48] sm:$0x1]
  %v775 = vld [vmem:[%s3 + $0x4c] sm:$0x1]
  %v776 = vld [vmem:[%s3 + $0x50] sm:$0x1]
  %v777 = vld [vmem:[%s3 + $0x54] sm:$0x1]
  %v778 = vld [vmem:[%s3 + $0x58] sm:$0x1]
  %v779 = vld [vmem:[%s3 + $0x5c] sm:$0x1]
  %v780 = vld [vmem:[%s3 + $0x60] sm:$0x1]
  %v781 = vld [vmem:[%s3 + $0x64] sm:$0x1]
  %v782 = vld [vmem:[%s3 + $0x68] sm:$0x1]
  %v783 = vld [vmem:[%s3 + $0x6c] sm:$0x1]
  %v784 = vld [vmem:[%s3 + $0x70] sm:$0x1]
  %v785 = vld [vmem:[%s3 + $0x74] sm:$0x1]
  %v786 = vld [vmem:[%s3 + $0x78] sm:$0x1]
  %v787 = vld [vmem:[%s3 + $0x7c] sm:$0x1]
  %v792 = vrot.slane %v80, 1
  %v793 = vrot.slane %v80, 2
  %v794 = vrot.slane %v80, 3
  %v795 = vrot.slane %v80, 4
  %v796 = vrot.slane %v80, 5
  %v797 = vrot.slane %v80, 6
  %v798 = vrot.slane %v80, 7
  %v799 = vrot.slane %v81, 1
  %v800 = vrot.slane %v81, 2
  %v801 = vrot.slane %v81, 3
  %v802 = vrot.slane %v81, 4
  %v803 = vrot.slane %v81, 5
  %v804 = vrot.slane %v81, 6
  %v805 = vrot.slane %v81, 7
  %v806 = vrot.slane %v82, 1
  %v807 = vrot.slane %v82, 2
  %v808 = vrot.slane %v82, 3
  %v809 = vrot.slane %v82, 4
  %v810 = vrot.slane %v82, 5
  %v811 = vrot.slane %v82, 6
  %v812 = vrot.slane %v82, 7
  %v813 = vrot.slane %v83, 1
  %v814 = vrot.slane %v83, 2
  %v815 = vrot.slane %v83, 3
  %v816 = vrot.slane %v83, 4
  %v817 = vrot.slane %v83, 5
  %v818 = vrot.slane %v83, 6
  %v819 = vrot.slane %v83, 7
  %v852 = vadd.f32 %v756, %v80
  %v853 = vadd.f32 %v757, %v792
  %v854 = vadd.f32 %v758, %v793
  %v855 = vadd.f32 %v759, %v794
  %v856 = vadd.f32 %v760, %v795
  %v857 = vadd.f32 %v761, %v796
  %v858 = vadd.f32 %v762, %v797
  %v859 = vadd.f32 %v763, %v798
  %v860 = vadd.f32 %v764, %v81
  %v861 = vadd.f32 %v765, %v799
  %v862 = vadd.f32 %v766, %v800
  %v863 = vadd.f32 %v767, %v801
  %v864 = vadd.f32 %v768, %v802
  %v865 = vadd.f32 %v769, %v803
  %v866 = vadd.f32 %v770, %v804
  %v867 = vadd.f32 %v771, %v805
  %v868 = vadd.f32 %v772, %v82
  %v869 = vadd.f32 %v773, %v806
  %v870 = vadd.f32 %v774, %v807
  %v871 = vadd.f32 %v775, %v808
  %v872 = vadd.f32 %v776, %v809
  %v873 = vadd.f32 %v777, %v810
  %v874 = vadd.f32 %v778, %v811
  %v875 = vadd.f32 %v779, %v812
  %v876 = vadd.f32 %v780, %v83
  %v877 = vadd.f32 %v781, %v813
  %v878 = vadd.f32 %v782, %v814
  %v879 = vadd.f32 %v783, %v815
  %v880 = vadd.f32 %v784, %v816
  %v881 = vadd.f32 %v785, %v817
  %v882 = vadd.f32 %v786, %v818
  %v883 = vadd.f32 %v787, %v819
  %vm884 = vcmp.gt.f32.partialorder %v852, 0.0
  %vm885 = vcmp.gt.f32.partialorder %v853, 0.0
  %vm886 = vcmp.gt.f32.partialorder %v854, 0.0
  %vm887 = vcmp.gt.f32.partialorder %v855, 0.0
  %vm888 = vcmp.gt.f32.partialorder %v856, 0.0
  %vm889 = vcmp.gt.f32.partialorder %v857, 0.0
  %vm890 = vcmp.gt.f32.partialorder %v858, 0.0
  %vm891 = vcmp.gt.f32.partialorder %v859, 0.0
  %vm892 = vcmp.gt.f32.partialorder %v860, 0.0
  %vm893 = vcmp.gt.f32.partialorder %v861, 0.0
  %vm894 = vcmp.gt.f32.partialorder %v862, 0.0
  %vm895 = vcmp.gt.f32.partialorder %v863, 0.0
  %vm896 = vcmp.gt.f32.partialorder %v864, 0.0
  %vm897 = vcmp.gt.f32.partialorder %v865, 0.0
  %vm898 = vcmp.gt.f32.partialorder %v866, 0.0
  %vm899 = vcmp.gt.f32.partialorder %v867, 0.0
  %vm900 = vcmp.gt.f32.partialorder %v868, 0.0
  %vm901 = vcmp.gt.f32.partialorder %v869, 0.0
  %vm902 = vcmp.gt.f32.partialorder %v870, 0.0
  %vm903 = vcmp.gt.f32.partialorder %v871, 0.0
  %vm904 = vcmp.gt.f32.partialorder %v872, 0.0
  %vm905 = vcmp.gt.f32.partialorder %v873, 0.0
  %vm906 = vcmp.gt.f32.partialorder %v874, 0.0
  %vm907 = vcmp.gt.f32.partialorder %v875, 0.0
  %vm908 = vcmp.gt.f32.partialorder %v876, 0.0
  %vm909 = vcmp.gt.f32.partialorder %v877, 0.0
  %vm910 = vcmp.gt.f32.partialorder %v878, 0.0
  %vm911 = vcmp.gt.f32.partialorder %v879, 0.0
  %vm912 = vcmp.gt.f32.partialorder %v880, 0.0
  %vm913 = vcmp.gt.f32.partialorder %v881, 0.0
  %vm914 = vcmp.gt.f32.partialorder %v882, 0.0
  %vm915 = vcmp.gt.f32.partialorder %v883, 0.0
  %v916 = vmul.f32 %v852, 0.2
  %v917 = vmul.f32 %v853, 0.2
  %v918 = vmul.f32 %v854, 0.2
  %v919 = vmul.f32 %v855, 0.2
  %v920 = vmul.f32 %v856, 0.2
  %v921 = vmul.f32 %v857, 0.2
  %v922 = vmul.f32 %v858, 0.2
  %v923 = vmul.f32 %v859, 0.2
  %v924 = vmul.f32 %v860, 0.2
  %v925 = vmul.f32 %v861, 0.2
  %v926 = vmul.f32 %v862, 0.2
  %v927 = vmul.f32 %v863, 0.2
  %v928 = vmul.f32 %v864, 0.2
  %v929 = vmul.f32 %v865, 0.2
  %v930 = vmul.f32 %v866, 0.2
  %v931 = vmul.f32 %v867, 0.2
  %v932 = vmul.f32 %v868, 0.2
  %v933 = vmul.f32 %v869, 0.2
  %v934 = vmul.f32 %v870, 0.2
  %v935 = vmul.f32 %v871, 0.2
  %v936 = vmul.f32 %v872, 0.2
  %v937 = vmul.f32 %v873, 0.2
  %v938 = vmul.f32 %v874, 0.2
  %v939 = vmul.f32 %v875, 0.2
  %v940 = vmul.f32 %v876, 0.2
  %v941 = vmul.f32 %v877, 0.2
  %v942 = vmul.f32 %v878, 0.2
  %v943 = vmul.f32 %v879, 0.2
  %v944 = vmul.f32 %v880, 0.2
  %v945 = vmul.f32 %v881, 0.2
  %v946 = vmul.f32 %v882, 0.2
  %v947 = vmul.f32 %v883, 0.2
  %v948 = vsel %vm884, %v852, %v916
  %v949 = vsel %vm885, %v853, %v917
  %v950 = vsel %vm886, %v854, %v918
  %v951 = vsel %vm887, %v855, %v919
  %v952 = vsel %vm888, %v856, %v920
  %v953 = vsel %vm889, %v857, %v921
  %v954 = vsel %vm890, %v858, %v922
  %v955 = vsel %vm891, %v859, %v923
  %v956 = vsel %vm892, %v860, %v924
  %v957 = vsel %vm893, %v861, %v925
  %v958 = vsel %vm894, %v862, %v926
  %v959 = vsel %vm895, %v863, %v927
  %v960 = vsel %vm896, %v864, %v928
  %v961 = vsel %vm897, %v865, %v929
  %v962 = vsel %vm898, %v866, %v930
  %v963 = vsel %vm899, %v867, %v931
  %v964 = vsel %vm900, %v868, %v932
  %v965 = vsel %vm901, %v869, %v933
  %v966 = vsel %vm902, %v870, %v934
  %v967 = vsel %vm903, %v871, %v935
  %v968 = vsel %vm904, %v872, %v936
  %v969 = vsel %vm905, %v873, %v937
  %v970 = vsel %vm906, %v874, %v938
  %v971 = vsel %vm907, %v875, %v939
  %v972 = vsel %vm908, %v876, %v940
  %v973 = vsel %vm909, %v877, %v941
  %v974 = vsel %vm910, %v878, %v942
  %v975 = vsel %vm911, %v879, %v943
  %v976 = vsel %vm912, %v880, %v944
  %v977 = vsel %vm913, %v881, %v945
  %v978 = vsel %vm914, %v882, %v946
  %v979 = vsel %vm915, %v883, %v947
  %v1012 = vrot.slane %v277, 7
  %vm1013 = vcmask 1041409
  %v1014 = vsel %vm1013, %v1012, %v276
  %v1015 = vrot.slane %v278, 6
  %vm1016 = vcmask 1042434
  %v1017 = vsel %vm1016, %v1015, %v1014
  %v1018 = vrot.slane %v279, 5
  %vm1019 = vcmask 1043459
  %v1020 = vsel %vm1019, %v1018, %v1017
  %v1021 = vrot.slane %v280, 4
  %vm1022 = vcmask 1044484
  %v1023 = vsel %vm1022, %v1021, %v1020
  %v1024 = vrot.slane %v281, 3
  %vm1025 = vcmask 1045509
  %v1026 = vsel %vm1025, %v1024, %v1023
  %v1027 = vrot.slane %v282, 2
  %vm1028 = vcmask 1046534
  %v1029 = vsel %vm1028, %v1027, %v1026
  %v1030 = vrot.slane %v283, 1
  %vm1031 = vcmask 1047559
  %v1032 = vsel %vm1031, %v1030, %v1029
  %v1033 = vrot.slane %v285, 7
  %v1034 = vsel %vm1013, %v1033, %v284
  %v1035 = vrot.slane %v286, 6
  %v1036 = vsel %vm1016, %v1035, %v1034
  %v1037 = vrot.slane %v287, 5
  %v1038 = vsel %vm1019, %v1037, %v1036
  %v1039 = vrot.slane %v288, 4
  %v1040 = vsel %vm1022, %v1039, %v1038
  %v1041 = vrot.slane %v289, 3
  %v1042 = vsel %vm1025, %v1041, %v1040
  %v1043 = vrot.slane %v290, 2
  %v1044 = vsel %vm1028, %v1043, %v1042
  %v1045 = vrot.slane %v291, 1
  %v1046 = vsel %vm1031, %v1045, %v1044
  %v1047 = vrot.slane %v293, 7
  %v1048 = vsel %vm1013, %v1047, %v292
  %v1049 = vrot.slane %v294, 6
  %v1050 = vsel %vm1016, %v1049, %v1048
  %v1051 = vrot.slane %v295, 5
  %v1052 = vsel %vm1019, %v1051, %v1050
  %v1053 = vrot.slane %v296, 4
  %v1054 = vsel %vm1022, %v1053, %v1052
  %v1055 = vrot.slane %v297, 3
  %v1056 = vsel %vm1025, %v1055, %v1054
  %v1057 = vrot.slane %v298, 2
  %v1058 = vsel %vm1028, %v1057, %v1056
  %v1059 = vrot.slane %v299, 1
  %v1060 = vsel %vm1031, %v1059, %v1058
  %v1061 = vrot.slane %v301, 7
  %v1062 = vsel %vm1013, %v1061, %v300
  %v1063 = vrot.slane %v302, 6
  %v1064 = vsel %vm1016, %v1063, %v1062
  %v1065 = vrot.slane %v303, 5
  %v1066 = vsel %vm1019, %v1065, %v1064
  %v1067 = vrot.slane %v304, 4
  %v1068 = vsel %vm1022, %v1067, %v1066
  %v1069 = vrot.slane %v305, 3
  %v1070 = vsel %vm1025, %v1069, %v1068
  %v1071 = vrot.slane %v306, 2
  %v1072 = vsel %vm1028, %v1071, %v1070
  %v1073 = vrot.slane %v307, 1
  %v1074 = vsel %vm1031, %v1073, %v1072
  %v1111 = vrot.slane %v501, 7
  %v1112 = vsel %vm1013, %v1111, %v500
  %v1113 = vrot.slane %v502, 6
  %v1114 = vsel %vm1016, %v1113, %v1112
  %v1115 = vrot.slane %v503, 5
  %v1116 = vsel %vm1019, %v1115, %v1114
  %v1117 = vrot.slane %v504, 4
  %v1118 = vsel %vm1022, %v1117, %v1116
  %v1119 = vrot.slane %v505, 3
  %v1120 = vsel %vm1025, %v1119, %v1118
  %v1121 = vrot.slane %v506, 2
  %v1122 = vsel %vm1028, %v1121, %v1120
  %v1123 = vrot.slane %v507, 1
  %v1124 = vsel %vm1031, %v1123, %v1122
  %v1125 = vrot.slane %v509, 7
  %v1126 = vsel %vm1013, %v1125, %v508
  %v1127 = vrot.slane %v510, 6
  %v1128 = vsel %vm1016, %v1127, %v1126
  %v1129 = vrot.slane %v511, 5
  %v1130 = vsel %vm1019, %v1129, %v1128
  %v1131 = vrot.slane %v512, 4
  %v1132 = vsel %vm1022, %v1131, %v1130
  %v1133 = vrot.slane %v513, 3
  %v1134 = vsel %vm1025, %v1133, %v1132
  %v1135 = vrot.slane %v514, 2
  %v1136 = vsel %vm1028, %v1135, %v1134
  %v1137 = vrot.slane %v515, 1
  %v1138 = vsel %vm1031, %v1137, %v1136
  %v1139 = vrot.slane %v517, 7
  %v1140 = vsel %vm1013, %v1139, %v516
  %v1141 = vrot.slane %v518, 6
  %v1142 = vsel %vm1016, %v1141, %v1140
  %v1143 = vrot.slane %v519, 5
  %v1144 = vsel %vm1019, %v1143, %v1142
  %v1145 = vrot.slane %v520, 4
  %v1146 = vsel %vm1022, %v1145, %v1144
  %v1147 = vrot.slane %v521, 3
  %v1148 = vsel %vm1025, %v1147, %v1146
  %v1149 = vrot.slane %v522, 2
  %v1150 = vsel %vm1028, %v1149, %v1148
  %v1151 = vrot.slane %v523, 1
  %v1152 = vsel %vm1031, %v1151, %v1150
  %v1153 = vrot.slane %v525, 7
  %v1154 = vsel %vm1013, %v1153, %v524
  %v1155 = vrot.slane %v526, 6
  %v1156 = vsel %vm1016, %v1155, %v1154
  %v1157 = vrot.slane %v527, 5
  %v1158 = vsel %vm1019, %v1157, %v1156
  %v1159 = vrot.slane %v528, 4
  %v1160 = vsel %vm1022, %v1159, %v1158
  %v1161 = vrot.slane %v529, 3
  %v1162 = vsel %vm1025, %v1161, %v1160
  %v1163 = vrot.slane %v530, 2
  %v1164 = vsel %vm1028, %v1163, %v1162
  %v1165 = vrot.slane %v531, 1
  %v1166 = vsel %vm1031, %v1165, %v1164
  %1167 = vrot.lane.b32.xlu0 %v1124, 64
  %v1168 = vpop.permute.xlu0 %1167
  %1169 = vrot.lane.b32.xlu0 %v1138, 64
  %v1170 = vpop.permute.xlu0 %1169
  %1171 = vrot.lane.b32.xlu0 %v1152, 64
  %v1172 = vpop.permute.xlu0 %1171
  %1173 = vrot.lane.b32.xlu0 %v1166, 64
  %v1174 = vpop.permute.xlu0 %1173
  %v1211 = vrot.slane %v725, 7
  %v1212 = vsel %vm1013, %v1211, %v724
  %v1213 = vrot.slane %v726, 6
  %v1214 = vsel %vm1016, %v1213, %v1212
  %v1215 = vrot.slane %v727, 5
  %v1216 = vsel %vm1019, %v1215, %v1214
  %v1217 = vrot.slane %v728, 4
  %v1218 = vsel %vm1022, %v1217, %v1216
  %v1219 = vrot.slane %v729, 3
  %v1220 = vsel %vm1025, %v1219, %v1218
  %v1221 = vrot.slane %v730, 2
  %v1222 = vsel %vm1028, %v1221, %v1220
  %v1223 = vrot.slane %v731, 1
  %v1224 = vsel %vm1031, %v1223, %v1222
  %v1225 = vrot.slane %v733, 7
  %v1226 = vsel %vm1013, %v1225, %v732
  %v1227 = vrot.slane %v734, 6
  %v1228 = vsel %vm1016, %v1227, %v1226
  %v1229 = vrot.slane %v735, 5
  %v1230 = vsel %vm1019, %v1229, %v1228
  %v1231 = vrot.slane %v736, 4
  %v1232 = vsel %vm1022, %v1231, %v1230
  %v1233 = vrot.slane %v737, 3
  %v1234 = vsel %vm1025, %v1233, %v1232
  %v1235 = vrot.slane %v738, 2
  %v1236 = vsel %vm1028, %v1235, %v1234
  %v1237 = vrot.slane %v739, 1
  %v1238 = vsel %vm1031, %v1237, %v1236
  %v1239 = vrot.slane %v741, 7
  %v1240 = vsel %vm1013, %v1239, %v740
  %v1241 = vrot.slane %v742, 6
  %v1242 = vsel %vm1016, %v1241, %v1240
  %v1243 = vrot.slane %v743, 5
  %v1244 = vsel %vm1019, %v1243, %v1242
  %v1245 = vrot.slane %v744, 4
  %v1246 = vsel %vm1022, %v1245, %v1244
  %v1247 = vrot.slane %v745, 3
  %v1248 = vsel %vm1025, %v1247, %v1246
  %v1249 = vrot.slane %v746, 2
  %v1250 = vsel %vm1028, %v1249, %v1248
  %v1251 = vrot.slane %v747, 1
  %v1252 = vsel %vm1031, %v1251, %v1250
  %v1253 = vrot.slane %v749, 7
  %v1254 = vsel %vm1013, %v1253, %v748
  %v1255 = vrot.slane %v750, 6
  %v1256 = vsel %vm1016, %v1255, %v1254
  %v1257 = vrot.slane %v751, 5
  %v1258 = vsel %vm1019, %v1257, %v1256
  %v1259 = vrot.slane %v752, 4
  %v1260 = vsel %vm1022, %v1259, %v1258
  %v1261 = vrot.slane %v753, 3
  %v1262 = vsel %vm1025, %v1261, %v1260
  %v1263 = vrot.slane %v754, 2
  %v1264 = vsel %vm1028, %v1263, %v1262
  %v1265 = vrot.slane %v755, 1
  %v1266 = vsel %vm1031, %v1265, %v1264
  %v1303 = vrot.slane %v949, 7
  %v1304 = vsel %vm1013, %v1303, %v948
  %v1305 = vrot.slane %v950, 6
  %v1306 = vsel %vm1016, %v1305, %v1304
  %v1307 = vrot.slane %v951, 5
  %v1308 = vsel %vm1019, %v1307, %v1306
  %v1309 = vrot.slane %v952, 4
  %v1310 = vsel %vm1022, %v1309, %v1308
  %v1311 = vrot.slane %v953, 3
  %v1312 = vsel %vm1025, %v1311, %v1310
  %v1313 = vrot.slane %v954, 2
  %v1314 = vsel %vm1028, %v1313, %v1312
  %v1315 = vrot.slane %v955, 1
  %v1316 = vsel %vm1031, %v1315, %v1314
  %v1317 = vrot.slane %v957, 7
  %v1318 = vsel %vm1013, %v1317, %v956
  %v1319 = vrot.slane %v958, 6
  %v1320 = vsel %vm1016, %v1319, %v1318
  %v1321 = vrot.slane %v959, 5
  %v1322 = vsel %vm1019, %v1321, %v1320
  %v1323 = vrot.slane %v960, 4
  %v1324 = vsel %vm1022, %v1323, %v1322
  %v1325 = vrot.slane %v961, 3
  %v1326 = vsel %vm1025, %v1325, %v1324
  %v1327 = vrot.slane %v962, 2
  %v1328 = vsel %vm1028, %v1327, %v1326
  %v1329 = vrot.slane %v963, 1
  %v1330 = vsel %vm1031, %v1329, %v1328
  %v1331 = vrot.slane %v965, 7
  %v1332 = vsel %vm1013, %v1331, %v964
  %v1333 = vrot.slane %v966, 6
  %v1334 = vsel %vm1016, %v1333, %v1332
  %v1335 = vrot.slane %v967, 5
  %v1336 = vsel %vm1019, %v1335, %v1334
  %v1337 = vrot.slane %v968, 4
  %v1338 = vsel %vm1022, %v1337, %v1336
  %v1339 = vrot.slane %v969, 3
  %v1340 = vsel %vm1025, %v1339, %v1338
  %v1341 = vrot.slane %v970, 2
  %v1342 = vsel %vm1028, %v1341, %v1340
  %v1343 = vrot.slane %v971, 1
  %v1344 = vsel %vm1031, %v1343, %v1342
  %v1345 = vrot.slane %v973, 7
  %v1346 = vsel %vm1013, %v1345, %v972
  %v1347 = vrot.slane %v974, 6
  %v1348 = vsel %vm1016, %v1347, %v1346
  %v1349 = vrot.slane %v975, 5
  %v1350 = vsel %vm1019, %v1349, %v1348
  %v1351 = vrot.slane %v976, 4
  %v1352 = vsel %vm1022, %v1351, %v1350
  %v1353 = vrot.slane %v977, 3
  %v1354 = vsel %vm1025, %v1353, %v1352
  %v1355 = vrot.slane %v978, 2
  %v1356 = vsel %vm1028, %v1355, %v1354
  %v1357 = vrot.slane %v979, 1
  %v1358 = vsel %vm1031, %v1357, %v1356
  %1359 = vrot.lane.b32.xlu0 %v1316, 64
  %v1360 = vpop.permute.xlu0 %1359
  %1361 = vrot.lane.b32.xlu0 %v1330, 64
  %v1362 = vpop.permute.xlu0 %1361
  %1363 = vrot.lane.b32.xlu0 %v1344, 64
  %v1364 = vpop.permute.xlu0 %1363
  %1365 = vrot.lane.b32.xlu0 %v1358, 64
  %v1366 = vpop.permute.xlu0 %1365
  %vm1371 = vcmask 523264
  %v1372 = vsel %vm1371, %v1032, %v1168
  %v1373 = vsel %vm1371, %v1046, %v1170
  %v1374 = vsel %vm1371, %v1060, %v1172
  %v1375 = vsel %vm1371, %v1074, %v1174
  %v1376 = vsel %vm1371, %v1224, %v1360
  %v1377 = vsel %vm1371, %v1238, %v1362
  %v1378 = vsel %vm1371, %v1252, %v1364
  %v1379 = vsel %vm1371, %v1266, %v1366
  %v1381 = vlaneseq
  %v1382 = vshrl.u32 %v1381, 7
  %v1383 = vsub.s32 0, %v1382
  %v1384 = vrot.slane %v67, %v1383
  %1386 = vmatprep.subr.mxu0 0.0
  %1387 = vmatpush1.msra.mxu0 %v50
  %1388 = vmatprep.subr.mxu0 0.0
  %1389 = vmatpush1.msra.mxu0 %v49
  %1390 = vmatprep.subr.mxu0 0.0
  %1391 = vmatpush1.msra.mxu0 %v48
  %1392 = vmatprep.subr.mxu0 0.0
  %1393 = vmatpush1.msra.mxu0 %v47
  %1394 = vmatprep.subr.mxu0 0.0
  %1395 = vmatpush1.msra.mxu0 %v46
  %1396 = vmatprep.subr.mxu0 0.0
  %1397 = vmatpush1.msra.mxu0 %v45
  %1398 = vmatprep.subr.mxu0 0.0
  %1399 = vmatpush1.msra.mxu0 %v44
  %1400 = vmatprep.subr.mxu0 0.0
  %1401 = vmatpush1.msra.mxu0 %v43
  %1402 = vmatprep.subr.mxu0 0.0
  %1403 = vmatpush1.msra.mxu0 %v42
  %1404 = vmatprep.subr.mxu0 0.0
  %1405 = vmatpush1.msra.mxu0 %v41
  %1406 = vmatprep.subr.mxu0 0.0
  %1407 = vmatpush1.msra.mxu0 %v40
  %1408 = vmatprep.subr.mxu0 0.0
  %1409 = vmatpush1.msra.mxu0 %v39
  %1410 = vmatprep.subr.mxu0 0.0
  %1411 = vmatpush1.msra.mxu0 %v38
  %1412 = vmatprep.subr.mxu0 0.0
  %1413 = vmatpush1.msra.mxu0 %v37
  %1414 = vmatprep.subr.mxu0 0.0
  %1415 = vmatpush1.msra.mxu0 %v36
  %1416 = vmatprep.subr.mxu0 0.0
  %1417 = vmatpush1.msra.mxu0 %v35
  %1418 = vmatprep.subr.mxu0 0.0
  %1419 = vmatpush2.msra.mxu0 %v66
  %1420 = vmatprep.subr.mxu0 0.0
  %1421 = vmatpush2.msra.mxu0 %v65
  %1422 = vmatprep.subr.mxu0 0.0
  %1423 = vmatpush2.msra.mxu0 %v64
  %1424 = vmatprep.subr.mxu0 0.0
  %1425 = vmatpush2.msra.mxu0 %v63
  %1426 = vmatprep.subr.mxu0 0.0
  %1427 = vmatpush2.msra.mxu0 %v62
  %1428 = vmatprep.subr.mxu0 0.0
  %1429 = vmatpush2.msra.mxu0 %v61
  %1430 = vmatprep.subr.mxu0 0.0
  %1431 = vmatpush2.msra.mxu0 %v60
  %1432 = vmatprep.subr.mxu0 0.0
  %1433 = vmatpush2.msra.mxu0 %v59
  %1434 = vmatprep.subr.mxu0 0.0
  %1435 = vmatpush2.msra.mxu0 %v58
  %1436 = vmatprep.subr.mxu0 0.0
  %1437 = vmatpush2.msra.mxu0 %v57
  %1438 = vmatprep.subr.mxu0 0.0
  %1439 = vmatpush2.msra.mxu0 %v56
  %1440 = vmatprep.subr.mxu0 0.0
  %1441 = vmatpush2.msra.mxu0 %v55
  %1442 = vmatprep.subr.mxu0 0.0
  %1443 = vmatpush2.msra.mxu0 %v54
  %1444 = vmatprep.subr.mxu0 0.0
  %1445 = vmatpush2.msra.mxu0 %v53
  %1446 = vmatprep.subr.mxu0 0.0
  %1447 = vmatpush2.msra.mxu0 %v52
  %1448 = vmatprep.subr.mxu0 0.0
  %1449 = vmatpush2.msra.mxu0 %v51
  %1450 = vmatprep.mubr.f32.mxu0 %v1376
  %1451 = vmatmul.mubr.f32.gmra.mxu0 %v1372
  %v1452 = vpop.f32.mrf.mxu0
  %v1453 = vadd.f32 %v1384, %v1452
  %v1454 = vpop.f32.mrf.mxu0
  %1455 = vmatprep.mubr.f32.mxu0 %v1377
  %1456 = vmatmul.mubr.f32.gmra.mxu0 %v1373
  %v1457 = vpop.f32.mrf.mxu0
  %v1458 = vadd.f32 %v1384, %v1457
  %v1459 = vpop.f32.mrf.mxu0
  %1460 = vmatprep.mubr.f32.mxu0 %v1378
  %1461 = vmatmul.mubr.f32.gmra.mxu0 %v1374
  %v1462 = vpop.f32.mrf.mxu0
  %v1463 = vadd.f32 %v1384, %v1462
  %v1464 = vpop.f32.mrf.mxu0
  %1465 = vmatprep.mubr.f32.mxu0 %v1379
  %1466 = vmatmul.mubr.f32.gmra.mxu0 %v1375
  %v1467 = vpop.f32.mrf.mxu0
  %v1468 = vadd.f32 %v1384, %v1467
  %v1469 = vpop.f32.mrf.mxu0
  %1470 = vdwg.mxu0
  %vm1471 = vcmp.gt.f32.partialorder %v1453, 0.0
  %vm1472 = vcmp.gt.f32.partialorder %v1458, 0.0
  %vm1473 = vcmp.gt.f32.partialorder %v1463, 0.0
  %vm1474 = vcmp.gt.f32.partialorder %v1468, 0.0
  %v1475 = vmul.f32 %v1453, 0.2
  %v1476 = vmul.f32 %v1458, 0.2
  %v1477 = vmul.f32 %v1463, 0.2
  %v1478 = vmul.f32 %v1468, 0.2
  %v1479 = vsel %vm1471, %v1453, %v1475
  %v1480 = vsel %vm1472, %v1458, %v1476
  %v1481 = vsel %vm1473, %v1463, %v1477
  %v1482 = vsel %vm1474, %v1468, %v1478
  %v1483 = vld [vmem:[%s0 + $0x1] sm:$0x1]
  %v1484 = vld [vmem:[%s0 + $0x5] sm:$0x1]
  %v1485 = vld [vmem:[%s0 + $0x9] sm:$0x1]
  %v1486 = vld [vmem:[%s0 + $0xd] sm:$0x1]
  %v1487 = vld [vmem:[%s0 + $0x11] sm:$0x1]
  %v1488 = vld [vmem:[%s0 + $0x15] sm:$0x1]
  %v1489 = vld [vmem:[%s0 + $0x19] sm:$0x1]
  %v1490 = vld [vmem:[%s0 + $0x1d] sm:$0x1]
  %v1491 = vld [vmem:[%s0 + $0x21] sm:$0x1]
  %v1492 = vld [vmem:[%s0 + $0x25] sm:$0x1]
  %v1493 = vld [vmem:[%s0 + $0x29] sm:$0x1]
  %v1494 = vld [vmem:[%s0 + $0x2d] sm:$0x1]
  %v1495 = vld [vmem:[%s0 + $0x31] sm:$0x1]
  %v1496 = vld [vmem:[%s0 + $0x35] sm:$0x1]
  %v1497 = vld [vmem:[%s0 + $0x39] sm:$0x1]
  %v1498 = vld [vmem:[%s0 + $0x3d] sm:$0x1]
  %v1499 = vld [vmem:[%s0 + $0x41] sm:$0x1]
  %v1500 = vld [vmem:[%s0 + $0x45] sm:$0x1]
  %v1501 = vld [vmem:[%s0 + $0x49] sm:$0x1]
  %v1502 = vld [vmem:[%s0 + $0x4d] sm:$0x1]
  %v1503 = vld [vmem:[%s0 + $0x51] sm:$0x1]
  %v1504 = vld [vmem:[%s0 + $0x55] sm:$0x1]
  %v1505 = vld [vmem:[%s0 + $0x59] sm:$0x1]
  %v1506 = vld [vmem:[%s0 + $0x5d] sm:$0x1]
  %v1507 = vld [vmem:[%s0 + $0x61] sm:$0x1]
  %v1508 = vld [vmem:[%s0 + $0x65] sm:$0x1]
  %v1509 = vld [vmem:[%s0 + $0x69] sm:$0x1]
  %v1510 = vld [vmem:[%s0 + $0x6d] sm:$0x1]
  %v1511 = vld [vmem:[%s0 + $0x71] sm:$0x1]
  %v1512 = vld [vmem:[%s0 + $0x75] sm:$0x1]
  %v1513 = vld [vmem:[%s0 + $0x79] sm:$0x1]
  %v1514 = vld [vmem:[%s0 + $0x7d] sm:$0x1]
  %v1515 = vadd.f32 %v1483, %v68
  %v1516 = vadd.f32 %v1484, %v120
  %v1517 = vadd.f32 %v1485, %v121
  %v1518 = vadd.f32 %v1486, %v122
  %v1519 = vadd.f32 %v1487, %v123
  %v1520 = vadd.f32 %v1488, %v124
  %v1521 = vadd.f32 %v1489, %v125
  %v1522 = vadd.f32 %v1490, %v126
  %v1523 = vadd.f32 %v1491, %v69
  %v1524 = vadd.f32 %v1492, %v127
  %v1525 = vadd.f32 %v1493, %v128
  %v1526 = vadd.f32 %v1494, %v129
  %v1527 = vadd.f32 %v1495, %v130
  %v1528 = vadd.f32 %v1496, %v131
  %v1529 = vadd.f32 %v1497, %v132
  %v1530 = vadd.f32 %v1498, %v133
  %v1531 = vadd.f32 %v1499, %v70
  %v1532 = vadd.f32 %v1500, %v134
  %v1533 = vadd.f32 %v1501, %v135
  %v1534 = vadd.f32 %v1502, %v136
  %v1535 = vadd.f32 %v1503, %v137
  %v1536 = vadd.f32 %v1504, %v138
  %v1537 = vadd.f32 %v1505, %v139
  %v1538 = vadd.f32 %v1506, %v140
  %v1539 = vadd.f32 %v1507, %v71
  %v1540 = vadd.f32 %v1508, %v141
  %v1541 = vadd.f32 %v1509, %v142
  %v1542 = vadd.f32 %v1510, %v143
  %v1543 = vadd.f32 %v1511, %v144
  %v1544 = vadd.f32 %v1512, %v145
  %v1545 = vadd.f32 %v1513, %v146
  %v1546 = vadd.f32 %v1514, %v147
  %vm1547 = vcmp.gt.f32.partialorder %v1515, 0.0
  %vm1548 = vcmp.gt.f32.partialorder %v1516, 0.0
  %vm1549 = vcmp.gt.f32.partialorder %v1517, 0.0
  %vm1550 = vcmp.gt.f32.partialorder %v1518, 0.0
  %vm1551 = vcmp.gt.f32.partialorder %v1519, 0.0
  %vm1552 = vcmp.gt.f32.partialorder %v1520, 0.0
  %vm1553 = vcmp.gt.f32.partialorder %v1521, 0.0
  %vm1554 = vcmp.gt.f32.partialorder %v1522, 0.0
  %vm1555 = vcmp.gt.f32.partialorder %v1523, 0.0
  %vm1556 = vcmp.gt.f32.partialorder %v1524, 0.0
  %vm1557 = vcmp.gt.f32.partialorder %v1525, 0.0
  %vm1558 = vcmp.gt.f32.partialorder %v1526, 0.0
  %vm1559 = vcmp.gt.f32.partialorder %v1527, 0.0
  %vm1560 = vcmp.gt.f32.partialorder %v1528, 0.0
  %vm1561 = vcmp.gt.f32.partialorder %v1529, 0.0
  %vm1562 = vcmp.gt.f32.partialorder %v1530, 0.0
  %vm1563 = vcmp.gt.f32.partialorder %v1531, 0.0
  %vm1564 = vcmp.gt.f32.partialorder %v1532, 0.0
  %vm1565 = vcmp.gt.f32.partialorder %v1533, 0.0
  %vm1566 = vcmp.gt.f32.partialorder %v1534, 0.0
  %vm1567 = vcmp.gt.f32.partialorder %v1535, 0.0
  %vm1568 = vcmp.gt.f32.partialorder %v1536, 0.0
  %vm1569 = vcmp.gt.f32.partialorder %v1537, 0.0
  %vm1570 = vcmp.gt.f32.partialorder %v1538, 0.0
  %vm1571 = vcmp.gt.f32.partialorder %v1539, 0.0
  %vm1572 = vcmp.gt.f32.partialorder %v1540, 0.0
  %vm1573 = vcmp.gt.f32.partialorder %v1541, 0.0
  %vm1574 = vcmp.gt.f32.partialorder %v1542, 0.0
  %vm1575 = vcmp.gt.f32.partialorder %v1543, 0.0
  %vm1576 = vcmp.gt.f32.partialorder %v1544, 0.0
  %vm1577 = vcmp.gt.f32.partialorder %v1545, 0.0
  %vm1578 = vcmp.gt.f32.partialorder %v1546, 0.0
  %v1579 = vmul.f32 %v1515, 0.2
  %v1580 = vmul.f32 %v1516, 0.2
  %v1581 = vmul.f32 %v1517, 0.2
  %v1582 = vmul.f32 %v1518, 0.2
  %v1583 = vmul.f32 %v1519, 0.2
  %v1584 = vmul.f32 %v1520, 0.2
  %v1585 = vmul.f32 %v1521, 0.2
  %v1586 = vmul.f32 %v1522, 0.2
  %v1587 = vmul.f32 %v1523, 0.2
  %v1588 = vmul.f32 %v1524, 0.2
  %v1589 = vmul.f32 %v1525, 0.2
  %v1590 = vmul.f32 %v1526, 0.2
  %v1591 = vmul.f32 %v1527, 0.2
  %v1592 = vmul.f32 %v1528, 0.2
  %v1593 = vmul.f32 %v1529, 0.2
  %v1594 = vmul.f32 %v1530, 0.2
  %v1595 = vmul.f32 %v1531, 0.2
  %v1596 = vmul.f32 %v1532, 0.2
  %v1597 = vmul.f32 %v1533, 0.2
  %v1598 = vmul.f32 %v1534, 0.2
  %v1599 = vmul.f32 %v1535, 0.2
  %v1600 = vmul.f32 %v1536, 0.2
  %v1601 = vmul.f32 %v1537, 0.2
  %v1602 = vmul.f32 %v1538, 0.2
  %v1603 = vmul.f32 %v1539, 0.2
  %v1604 = vmul.f32 %v1540, 0.2
  %v1605 = vmul.f32 %v1541, 0.2
  %v1606 = vmul.f32 %v1542, 0.2
  %v1607 = vmul.f32 %v1543, 0.2
  %v1608 = vmul.f32 %v1544, 0.2
  %v1609 = vmul.f32 %v1545, 0.2
  %v1610 = vmul.f32 %v1546, 0.2
  %v1611 = vsel %vm1547, %v1515, %v1579
  %v1612 = vsel %vm1548, %v1516, %v1580
  %v1613 = vsel %vm1549, %v1517, %v1581
  %v1614 = vsel %vm1550, %v1518, %v1582
  %v1615 = vsel %vm1551, %v1519, %v1583
  %v1616 = vsel %vm1552, %v1520, %v1584
  %v1617 = vsel %vm1553, %v1521, %v1585
  %v1618 = vsel %vm1554, %v1522, %v1586
  %v1619 = vsel %vm1555, %v1523, %v1587
  %v1620 = vsel %vm1556, %v1524, %v1588
  %v1621 = vsel %vm1557, %v1525, %v1589
  %v1622 = vsel %vm1558, %v1526, %v1590
  %v1623 = vsel %vm1559, %v1527, %v1591
  %v1624 = vsel %vm1560, %v1528, %v1592
  %v1625 = vsel %vm1561, %v1529, %v1593
  %v1626 = vsel %vm1562, %v1530, %v1594
  %v1627 = vsel %vm1563, %v1531, %v1595
  %v1628 = vsel %vm1564, %v1532, %v1596
  %v1629 = vsel %vm1565, %v1533, %v1597
  %v1630 = vsel %vm1566, %v1534, %v1598
  %v1631 = vsel %vm1567, %v1535, %v1599
  %v1632 = vsel %vm1568, %v1536, %v1600
  %v1633 = vsel %vm1569, %v1537, %v1601
  %v1634 = vsel %vm1570, %v1538, %v1602
  %v1635 = vsel %vm1571, %v1539, %v1603
  %v1636 = vsel %vm1572, %v1540, %v1604
  %v1637 = vsel %vm1573, %v1541, %v1605
  %v1638 = vsel %vm1574, %v1542, %v1606
  %v1639 = vsel %vm1575, %v1543, %v1607
  %v1640 = vsel %vm1576, %v1544, %v1608
  %v1641 = vsel %vm1577, %v1545, %v1609
  %v1642 = vsel %vm1578, %v1546, %v1610
  %v1643 = vld [vmem:[%s1 + $0x1] sm:$0x1]
  %v1644 = vld [vmem:[%s1 + $0x5] sm:$0x1]
  %v1645 = vld [vmem:[%s1 + $0x9] sm:$0x1]
  %v1646 = vld [vmem:[%s1 + $0xd] sm:$0x1]
  %v1647 = vld [vmem:[%s1 + $0x11] sm:$0x1]
  %v1648 = vld [vmem:[%s1 + $0x15] sm:$0x1]
  %v1649 = vld [vmem:[%s1 + $0x19] sm:$0x1]
  %v1650 = vld [vmem:[%s1 + $0x1d] sm:$0x1]
  %v1651 = vld [vmem:[%s1 + $0x21] sm:$0x1]
  %v1652 = vld [vmem:[%s1 + $0x25] sm:$0x1]
  %v1653 = vld [vmem:[%s1 + $0x29] sm:$0x1]
  %v1654 = vld [vmem:[%s1 + $0x2d] sm:$0x1]
  %v1655 = vld [vmem:[%s1 + $0x31] sm:$0x1]
  %v1656 = vld [vmem:[%s1 + $0x35] sm:$0x1]
  %v1657 = vld [vmem:[%s1 + $0x39] sm:$0x1]
  %v1658 = vld [vmem:[%s1 + $0x3d] sm:$0x1]
  %v1659 = vld [vmem:[%s1 + $0x41] sm:$0x1]
  %v1660 = vld [vmem:[%s1 + $0x45] sm:$0x1]
  %v1661 = vld [vmem:[%s1 + $0x49] sm:$0x1]
  %v1662 = vld [vmem:[%s1 + $0x4d] sm:$0x1]
  %v1663 = vld [vmem:[%s1 + $0x51] sm:$0x1]
  %v1664 = vld [vmem:[%s1 + $0x55] sm:$0x1]
  %v1665 = vld [vmem:[%s1 + $0x59] sm:$0x1]
  %v1666 = vld [vmem:[%s1 + $0x5d] sm:$0x1]
  %v1667 = vld [vmem:[%s1 + $0x61] sm:$0x1]
  %v1668 = vld [vmem:[%s1 + $0x65] sm:$0x1]
  %v1669 = vld [vmem:[%s1 + $0x69] sm:$0x1]
  %v1670 = vld [vmem:[%s1 + $0x6d] sm:$0x1]
  %v1671 = vld [vmem:[%s1 + $0x71] sm:$0x1]
  %v1672 = vld [vmem:[%s1 + $0x75] sm:$0x1]
  %v1673 = vld [vmem:[%s1 + $0x79] sm:$0x1]
  %v1674 = vld [vmem:[%s1 + $0x7d] sm:$0x1]
  %v1675 = vadd.f32 %v1643, %v72
  %v1676 = vadd.f32 %v1644, %v344
  %v1677 = vadd.f32 %v1645, %v345
  %v1678 = vadd.f32 %v1646, %v346
  %v1679 = vadd.f32 %v1647, %v347
  %v1680 = vadd.f32 %v1648, %v348
  %v1681 = vadd.f32 %v1649, %v349
  %v1682 = vadd.f32 %v1650, %v350
  %v1683 = vadd.f32 %v1651, %v73
  %v1684 = vadd.f32 %v1652, %v351
  %v1685 = vadd.f32 %v1653, %v352
  %v1686 = vadd.f32 %v1654, %v353
  %v1687 = vadd.f32 %v1655, %v354
  %v1688 = vadd.f32 %v1656, %v355
  %v1689 = vadd.f32 %v1657, %v356
  %v1690 = vadd.f32 %v1658, %v357
  %v1691 = vadd.f32 %v1659, %v74
  %v1692 = vadd.f32 %v1660, %v358
  %v1693 = vadd.f32 %v1661, %v359
  %v1694 = vadd.f32 %v1662, %v360
  %v1695 = vadd.f32 %v1663, %v361
  %v1696 = vadd.f32 %v1664, %v362
  %v1697 = vadd.f32 %v1665, %v363
  %v1698 = vadd.f32 %v1666, %v364
  %v1699 = vadd.f32 %v1667, %v75
  %v1700 = vadd.f32 %v1668, %v365
  %v1701 = vadd.f32 %v1669, %v366
  %v1702 = vadd.f32 %v1670, %v367
  %v1703 = vadd.f32 %v1671, %v368
  %v1704 = vadd.f32 %v1672, %v369
  %v1705 = vadd.f32 %v1673, %v370
  %v1706 = vadd.f32 %v1674, %v371
  %vm1707 = vcmp.gt.f32.partialorder %v1675, 0.0
  %vm1708 = vcmp.gt.f32.partialorder %v1676, 0.0
  %vm1709 = vcmp.gt.f32.partialorder %v1677, 0.0
  %vm1710 = vcmp.gt.f32.partialorder %v1678, 0.0
  %vm1711 = vcmp.gt.f32.partialorder %v1679, 0.0
  %vm1712 = vcmp.gt.f32.partialorder %v1680, 0.0
  %vm1713 = vcmp.gt.f32.partialorder %v1681, 0.0
  %vm1714 = vcmp.gt.f32.partialorder %v1682, 0.0
  %vm1715 = vcmp.gt.f32.partialorder %v1683, 0.0
  %vm1716 = vcmp.gt.f32.partialorder %v1684, 0.0
  %vm1717 = vcmp.gt.f32.partialorder %v1685, 0.0
  %vm1718 = vcmp.gt.f32.partialorder %v1686, 0.0
  %vm1719 = vcmp.gt.f32.partialorder %v1687, 0.0
  %vm1720 = vcmp.gt.f32.partialorder %v1688, 0.0
  %vm1721 = vcmp.gt.f32.partialorder %v1689, 0.0
  %vm1722 = vcmp.gt.f32.partialorder %v1690, 0.0
  %vm1723 = vcmp.gt.f32.partialorder %v1691, 0.0
  %vm1724 = vcmp.gt.f32.partialorder %v1692, 0.0
  %vm1725 = vcmp.gt.f32.partialorder %v1693, 0.0
  %vm1726 = vcmp.gt.f32.partialorder %v1694, 0.0
  %vm1727 = vcmp.gt.f32.partialorder %v1695, 0.0
  %vm1728 = vcmp.gt.f32.partialorder %v1696, 0.0
  %vm1729 = vcmp.gt.f32.partialorder %v1697, 0.0
  %vm1730 = vcmp.gt.f32.partialorder %v1698, 0.0
  %vm1731 = vcmp.gt.f32.partialorder %v1699, 0.0
  %vm1732 = vcmp.gt.f32.partialorder %v1700, 0.0
  %vm1733 = vcmp.gt.f32.partialorder %v1701, 0.0
  %vm1734 = vcmp.gt.f32.partialorder %v1702, 0.0
  %vm1735 = vcmp.gt.f32.partialorder %v1703, 0.0
  %vm1736 = vcmp.gt.f32.partialorder %v1704, 0.0
  %vm1737 = vcmp.gt.f32.partialorder %v1705, 0.0
  %vm1738 = vcmp.gt.f32.partialorder %v1706, 0.0
  %v1739 = vmul.f32 %v1675, 0.2
  %v1740 = vmul.f32 %v1676, 0.2
  %v1741 = vmul.f32 %v1677, 0.2
  %v1742 = vmul.f32 %v1678, 0.2
  %v1743 = vmul.f32 %v1679, 0.2
  %v1744 = vmul.f32 %v1680, 0.2
  %v1745 = vmul.f32 %v1681, 0.2
  %v1746 = vmul.f32 %v1682, 0.2
  %v1747 = vmul.f32 %v1683, 0.2
  %v1748 = vmul.f32 %v1684, 0.2
  %v1749 = vmul.f32 %v1685, 0.2
  %v1750 = vmul.f32 %v1686, 0.2
  %v1751 = vmul.f32 %v1687, 0.2
  %v1752 = vmul.f32 %v1688, 0.2
  %v1753 = vmul.f32 %v1689, 0.2
  %v1754 = vmul.f32 %v1690, 0.2
  %v1755 = vmul.f32 %v1691, 0.2
  %v1756 = vmul.f32 %v1692, 0.2
  %v1757 = vmul.f32 %v1693, 0.2
  %v1758 = vmul.f32 %v1694, 0.2
  %v1759 = vmul.f32 %v1695, 0.2
  %v1760 = vmul.f32 %v1696, 0.2
  %v1761 = vmul.f32 %v1697, 0.2
  %v1762 = vmul.f32 %v1698, 0.2
  %v1763 = vmul.f32 %v1699, 0.2
  %v1764 = vmul.f32 %v1700, 0.2
  %v1765 = vmul.f32 %v1701, 0.2
  %v1766 = vmul.f32 %v1702, 0.2
  %v1767 = vmul.f32 %v1703, 0.2
  %v1768 = vmul.f32 %v1704, 0.2
  %v1769 = vmul.f32 %v1705, 0.2
  %v1770 = vmul.f32 %v1706, 0.2
  %v1771 = vsel %vm1707, %v1675, %v1739
  %v1772 = vsel %vm1708, %v1676, %v1740
  %v1773 = vsel %vm1709, %v1677, %v1741
  %v1774 = vsel %vm1710, %v1678, %v1742
  %v1775 = vsel %vm1711, %v1679, %v1743
  %v1776 = vsel %vm1712, %v1680, %v1744
  %v1777 = vsel %vm1713, %v1681, %v1745
  %v1778 = vsel %vm1714, %v1682, %v1746
  %v1779 = vsel %vm1715, %v1683, %v1747
  %v1780 = vsel %vm1716, %v1684, %v1748
  %v1781 = vsel %vm1717, %v1685, %v1749
  %v1782 = vsel %vm1718, %v1686, %v1750
  %v1783 = vsel %vm1719, %v1687, %v1751
  %v1784 = vsel %vm1720, %v1688, %v1752
  %v1785 = vsel %vm1721, %v1689, %v1753
  %v1786 = vsel %vm1722, %v1690, %v1754
  %v1787 = vsel %vm1723, %v1691, %v1755
  %v1788 = vsel %vm1724, %v1692, %v1756
  %v1789 = vsel %vm1725, %v1693, %v1757
  %v1790 = vsel %vm1726, %v1694, %v1758
  %v1791 = vsel %vm1727, %v1695, %v1759
  %v1792 = vsel %vm1728, %v1696, %v1760
  %v1793 = vsel %vm1729, %v1697, %v1761
  %v1794 = vsel %vm1730, %v1698, %v1762
  %v1795 = vsel %vm1731, %v1699, %v1763
  %v1796 = vsel %vm1732, %v1700, %v1764
  %v1797 = vsel %vm1733, %v1701, %v1765
  %v1798 = vsel %vm1734, %v1702, %v1766
  %v1799 = vsel %vm1735, %v1703, %v1767
  %v1800 = vsel %vm1736, %v1704, %v1768
  %v1801 = vsel %vm1737, %v1705, %v1769
  %v1802 = vsel %vm1738, %v1706, %v1770
  %v1803 = vld [vmem:[%s2 + $0x1] sm:$0x1]
  %v1804 = vld [vmem:[%s2 + $0x5] sm:$0x1]
  %v1805 = vld [vmem:[%s2 + $0x9] sm:$0x1]
  %v1806 = vld [vmem:[%s2 + $0xd] sm:$0x1]
  %v1807 = vld [vmem:[%s2 + $0x11] sm:$0x1]
  %v1808 = vld [vmem:[%s2 + $0x15] sm:$0x1]
  %v1809 = vld [vmem:[%s2 + $0x19] sm:$0x1]
  %v1810 = vld [vmem:[%s2 + $0x1d] sm:$0x1]
  %v1811 = vld [vmem:[%s2 + $0x21] sm:$0x1]
  %v1812 = vld [vmem:[%s2 + $0x25] sm:$0x1]
  %v1813 = vld [vmem:[%s2 + $0x29] sm:$0x1]
  %v1814 = vld [vmem:[%s2 + $0x2d] sm:$0x1]
  %v1815 = vld [vmem:[%s2 + $0x31] sm:$0x1]
  %v1816 = vld [vmem:[%s2 + $0x35] sm:$0x1]
  %v1817 = vld [vmem:[%s2 + $0x39] sm:$0x1]
  %v1818 = vld [vmem:[%s2 + $0x3d] sm:$0x1]
  %v1819 = vld [vmem:[%s2 + $0x41] sm:$0x1]
  %v1820 = vld [vmem:[%s2 + $0x45] sm:$0x1]
  %v1821 = vld [vmem:[%s2 + $0x49] sm:$0x1]
  %v1822 = vld [vmem:[%s2 + $0x4d] sm:$0x1]
  %v1823 = vld [vmem:[%s2 + $0x51] sm:$0x1]
  %v1824 = vld [vmem:[%s2 + $0x55] sm:$0x1]
  %v1825 = vld [vmem:[%s2 + $0x59] sm:$0x1]
  %v1826 = vld [vmem:[%s2 + $0x5d] sm:$0x1]
  %v1827 = vld [vmem:[%s2 + $0x61] sm:$0x1]
  %v1828 = vld [vmem:[%s2 + $0x65] sm:$0x1]
  %v1829 = vld [vmem:[%s2 + $0x69] sm:$0x1]
  %v1830 = vld [vmem:[%s2 + $0x6d] sm:$0x1]
  %v1831 = vld [vmem:[%s2 + $0x71] sm:$0x1]
  %v1832 = vld [vmem:[%s2 + $0x75] sm:$0x1]
  %v1833 = vld [vmem:[%s2 + $0x79] sm:$0x1]
  %v1834 = vld [vmem:[%s2 + $0x7d] sm:$0x1]
  %v1835 = vadd.f32 %v1803, %v76
  %v1836 = vadd.f32 %v1804, %v568
  %v1837 = vadd.f32 %v1805, %v569
  %v1838 = vadd.f32 %v1806, %v570
  %v1839 = vadd.f32 %v1807, %v571
  %v1840 = vadd.f32 %v1808, %v572
  %v1841 = vadd.f32 %v1809, %v573
  %v1842 = vadd.f32 %v1810, %v574
  %v1843 = vadd.f32 %v1811, %v77
  %v1844 = vadd.f32 %v1812, %v575
  %v1845 = vadd.f32 %v1813, %v576
  %v1846 = vadd.f32 %v1814, %v577
  %v1847 = vadd.f32 %v1815, %v578
  %v1848 = vadd.f32 %v1816, %v579
  %v1849 = vadd.f32 %v1817, %v580
  %v1850 = vadd.f32 %v1818, %v581
  %v1851 = vadd.f32 %v1819, %v78
  %v1852 = vadd.f32 %v1820, %v582
  %v1853 = vadd.f32 %v1821, %v583
  %v1854 = vadd.f32 %v1822, %v584
  %v1855 = vadd.f32 %v1823, %v585
  %v1856 = vadd.f32 %v1824, %v586
  %v1857 = vadd.f32 %v1825, %v587
  %v1858 = vadd.f32 %v1826, %v588
  %v1859 = vadd.f32 %v1827, %v79
  %v1860 = vadd.f32 %v1828, %v589
  %v1861 = vadd.f32 %v1829, %v590
  %v1862 = vadd.f32 %v1830, %v591
  %v1863 = vadd.f32 %v1831, %v592
  %v1864 = vadd.f32 %v1832, %v593
  %v1865 = vadd.f32 %v1833, %v594
  %v1866 = vadd.f32 %v1834, %v595
  %vm1867 = vcmp.gt.f32.partialorder %v1835, 0.0
  %vm1868 = vcmp.gt.f32.partialorder %v1836, 0.0
  %vm1869 = vcmp.gt.f32.partialorder %v1837, 0.0
  %vm1870 = vcmp.gt.f32.partialorder %v1838, 0.0
  %vm1871 = vcmp.gt.f32.partialorder %v1839, 0.0
  %vm1872 = vcmp.gt.f32.partialorder %v1840, 0.0
  %vm1873 = vcmp.gt.f32.partialorder %v1841, 0.0
  %vm1874 = vcmp.gt.f32.partialorder %v1842, 0.0
  %vm1875 = vcmp.gt.f32.partialorder %v1843, 0.0
  %vm1876 = vcmp.gt.f32.partialorder %v1844, 0.0
  %vm1877 = vcmp.gt.f32.partialorder %v1845, 0.0
  %vm1878 = vcmp.gt.f32.partialorder %v1846, 0.0
  %vm1879 = vcmp.gt.f32.partialorder %v1847, 0.0
  %vm1880 = vcmp.gt.f32.partialorder %v1848, 0.0
  %vm1881 = vcmp.gt.f32.partialorder %v1849, 0.0
  %vm1882 = vcmp.gt.f32.partialorder %v1850, 0.0
  %vm1883 = vcmp.gt.f32.partialorder %v1851, 0.0
  %vm1884 = vcmp.gt.f32.partialorder %v1852, 0.0
  %vm1885 = vcmp.gt.f32.partialorder %v1853, 0.0
  %vm1886 = vcmp.gt.f32.partialorder %v1854, 0.0
  %vm1887 = vcmp.gt.f32.partialorder %v1855, 0.0
  %vm1888 = vcmp.gt.f32.partialorder %v1856, 0.0
  %vm1889 = vcmp.gt.f32.partialorder %v1857, 0.0
  %vm1890 = vcmp.gt.f32.partialorder %v1858, 0.0
  %vm1891 = vcmp.gt.f32.partialorder %v1859, 0.0
  %vm1892 = vcmp.gt.f32.partialorder %v1860, 0.0
  %vm1893 = vcmp.gt.f32.partialorder %v1861, 0.0
  %vm1894 = vcmp.gt.f32.partialorder %v1862, 0.0
  %vm1895 = vcmp.gt.f32.partialorder %v1863, 0.0
  %vm1896 = vcmp.gt.f32.partialorder %v1864, 0.0
  %vm1897 = vcmp.gt.f32.partialorder %v1865, 0.0
  %vm1898 = vcmp.gt.f32.partialorder %v1866, 0.0
  %v1899 = vmul.f32 %v1835, 0.2
  %v1900 = vmul.f32 %v1836, 0.2
  %v1901 = vmul.f32 %v1837, 0.2
  %v1902 = vmul.f32 %v1838, 0.2
  %v1903 = vmul.f32 %v1839, 0.2
  %v1904 = vmul.f32 %v1840, 0.2
  %v1905 = vmul.f32 %v1841, 0.2
  %v1906 = vmul.f32 %v1842, 0.2
  %v1907 = vmul.f32 %v1843, 0.2
  %v1908 = vmul.f32 %v1844, 0.2
  %v1909 = vmul.f32 %v1845, 0.2
  %v1910 = vmul.f32 %v1846, 0.2
  %v1911 = vmul.f32 %v1847, 0.2
  %v1912 = vmul.f32 %v1848, 0.2
  %v1913 = vmul.f32 %v1849, 0.2
  %v1914 = vmul.f32 %v1850, 0.2
  %v1915 = vmul.f32 %v1851, 0.2
  %v1916 = vmul.f32 %v1852, 0.2
  %v1917 = vmul.f32 %v1853, 0.2
  %v1918 = vmul.f32 %v1854, 0.2
  %v1919 = vmul.f32 %v1855, 0.2
  %v1920 = vmul.f32 %v1856, 0.2
  %v1921 = vmul.f32 %v1857, 0.2
  %v1922 = vmul.f32 %v1858, 0.2
  %v1923 = vmul.f32 %v1859, 0.2
  %v1924 = vmul.f32 %v1860, 0.2
  %v1925 = vmul.f32 %v1861, 0.2
  %v1926 = vmul.f32 %v1862, 0.2
  %v1927 = vmul.f32 %v1863, 0.2
  %v1928 = vmul.f32 %v1864, 0.2
  %v1929 = vmul.f32 %v1865, 0.2
  %v1930 = vmul.f32 %v1866, 0.2
  %v1931 = vsel %vm1867, %v1835, %v1899
  %v1932 = vsel %vm1868, %v1836, %v1900
  %v1933 = vsel %vm1869, %v1837, %v1901
  %v1934 = vsel %vm1870, %v1838, %v1902
  %v1935 = vsel %vm1871, %v1839, %v1903
  %v1936 = vsel %vm1872, %v1840, %v1904
  %v1937 = vsel %vm1873, %v1841, %v1905
  %v1938 = vsel %vm1874, %v1842, %v1906
  %v1939 = vsel %vm1875, %v1843, %v1907
  %v1940 = vsel %vm1876, %v1844, %v1908
  %v1941 = vsel %vm1877, %v1845, %v1909
  %v1942 = vsel %vm1878, %v1846, %v1910
  %v1943 = vsel %vm1879, %v1847, %v1911
  %v1944 = vsel %vm1880, %v1848, %v1912
  %v1945 = vsel %vm1881, %v1849, %v1913
  %v1946 = vsel %vm1882, %v1850, %v1914
  %v1947 = vsel %vm1883, %v1851, %v1915
  %v1948 = vsel %vm1884, %v1852, %v1916
  %v1949 = vsel %vm1885, %v1853, %v1917
  %v1950 = vsel %vm1886, %v1854, %v1918
  %v1951 = vsel %vm1887, %v1855, %v1919
  %v1952 = vsel %vm1888, %v1856, %v1920
  %v1953 = vsel %vm1889, %v1857, %v1921
  %v1954 = vsel %vm1890, %v1858, %v1922
  %v1955 = vsel %vm1891, %v1859, %v1923
  %v1956 = vsel %vm1892, %v1860, %v1924
  %v1957 = vsel %vm1893, %v1861, %v1925
  %v1958 = vsel %vm1894, %v1862, %v1926
  %v1959 = vsel %vm1895, %v1863, %v1927
  %v1960 = vsel %vm1896, %v1864, %v1928
  %v1961 = vsel %vm1897, %v1865, %v1929
  %v1962 = vsel %vm1898, %v1866, %v1930
  %v1963 = vld [vmem:[%s3 + $0x1] sm:$0x1]
  %v1964 = vld [vmem:[%s3 + $0x5] sm:$0x1]
  %v1965 = vld [vmem:[%s3 + $0x9] sm:$0x1]
  %v1966 = vld [vmem:[%s3 + $0xd] sm:$0x1]
  %v1967 = vld [vmem:[%s3 + $0x11] sm:$0x1]
  %v1968 = vld [vmem:[%s3 + $0x15] sm:$0x1]
  %v1969 = vld [vmem:[%s3 + $0x19] sm:$0x1]
  %v1970 = vld [vmem:[%s3 + $0x1d] sm:$0x1]
  %v1971 = vld [vmem:[%s3 + $0x21] sm:$0x1]
  %v1972 = vld [vmem:[%s3 + $0x25] sm:$0x1]
  %v1973 = vld [vmem:[%s3 + $0x29] sm:$0x1]
  %v1974 = vld [vmem:[%s3 + $0x2d] sm:$0x1]
  %v1975 = vld [vmem:[%s3 + $0x31] sm:$0x1]
  %v1976 = vld [vmem:[%s3 + $0x35] sm:$0x1]
  %v1977 = vld [vmem:[%s3 + $0x39] sm:$0x1]
  %v1978 = vld [vmem:[%s3 + $0x3d] sm:$0x1]
  %v1979 = vld [vmem:[%s3 + $0x41] sm:$0x1]
  %v1980 = vld [vmem:[%s3 + $0x45] sm:$0x1]
  %v1981 = vld [vmem:[%s3 + $0x49] sm:$0x1]
  %v1982 = vld [vmem:[%s3 + $0x4d] sm:$0x1]
  %v1983 = vld [vmem:[%s3 + $0x51] sm:$0x1]
  %v1984 = vld [vmem:[%s3 + $0x55] sm:$0x1]
  %v1985 = vld [vmem:[%s3 + $0x59] sm:$0x1]
  %v1986 = vld [vmem:[%s3 + $0x5d] sm:$0x1]
  %v1987 = vld [vmem:[%s3 + $0x61] sm:$0x1]
  %v1988 = vld [vmem:[%s3 + $0x65] sm:$0x1]
  %v1989 = vld [vmem:[%s3 + $0x69] sm:$0x1]
  %v1990 = vld [vmem:[%s3 + $0x6d] sm:$0x1]
  %v1991 = vld [vmem:[%s3 + $0x71] sm:$0x1]
  %v1992 = vld [vmem:[%s3 + $0x75] sm:$0x1]
  %v1993 = vld [vmem:[%s3 + $0x79] sm:$0x1]
  %v1994 = vld [vmem:[%s3 + $0x7d] sm:$0x1]
  %v1995 = vadd.f32 %v1963, %v80
  %v1996 = vadd.f32 %v1964, %v792
  %v1997 = vadd.f32 %v1965, %v793
  %v1998 = vadd.f32 %v1966, %v794
  %v1999 = vadd.f32 %v1967, %v795
  %v2000 = vadd.f32 %v1968, %v796
  %v2001 = vadd.f32 %v1969, %v797
  %v2002 = vadd.f32 %v1970, %v798
  %v2003 = vadd.f32 %v1971, %v81
  %v2004 = vadd.f32 %v1972, %v799
  %v2005 = vadd.f32 %v1973, %v800
  %v2006 = vadd.f32 %v1974, %v801
  %v2007 = vadd.f32 %v1975, %v802
  %v2008 = vadd.f32 %v1976, %v803
  %v2009 = vadd.f32 %v1977, %v804
  %v2010 = vadd.f32 %v1978, %v805
  %v2011 = vadd.f32 %v1979, %v82
  %v2012 = vadd.f32 %v1980, %v806
  %v2013 = vadd.f32 %v1981, %v807
  %v2014 = vadd.f32 %v1982, %v808
  %v2015 = vadd.f32 %v1983, %v809
  %v2016 = vadd.f32 %v1984, %v810
  %v2017 = vadd.f32 %v1985, %v811
  %v2018 = vadd.f32 %v1986, %v812
  %v2019 = vadd.f32 %v1987, %v83
  %v2020 = vadd.f32 %v1988, %v813
  %v2021 = vadd.f32 %v1989, %v814
  %v2022 = vadd.f32 %v1990, %v815
  %v2023 = vadd.f32 %v1991, %v816
  %v2024 = vadd.f32 %v1992, %v817
  %v2025 = vadd.f32 %v1993, %v818
  %v2026 = vadd.f32 %v1994, %v819
  %vm2027 = vcmp.gt.f32.partialorder %v1995, 0.0
  %vm2028 = vcmp.gt.f32.partialorder %v1996, 0.0
  %vm2029 = vcmp.gt.f32.partialorder %v1997, 0.0
  %vm2030 = vcmp.gt.f32.partialorder %v1998, 0.0
  %vm2031 = vcmp.gt.f32.partialorder %v1999, 0.0
  %vm2032 = vcmp.gt.f32.partialorder %v2000, 0.0
  %vm2033 = vcmp.gt.f32.partialorder %v2001, 0.0
  %vm2034 = vcmp.gt.f32.partialorder %v2002, 0.0
  %vm2035 = vcmp.gt.f32.partialorder %v2003, 0.0
  %vm2036 = vcmp.gt.f32.partialorder %v2004, 0.0
  %vm2037 = vcmp.gt.f32.partialorder %v2005, 0.0
  %vm2038 = vcmp.gt.f32.partialorder %v2006, 0.0
  %vm2039 = vcmp.gt.f32.partialorder %v2007, 0.0
  %vm2040 = vcmp.gt.f32.partialorder %v2008, 0.0
  %vm2041 = vcmp.gt.f32.partialorder %v2009, 0.0
  %vm2042 = vcmp.gt.f32.partialorder %v2010, 0.0
  %vm2043 = vcmp.gt.f32.partialorder %v2011, 0.0
  %vm2044 = vcmp.gt.f32.partialorder %v2012, 0.0
  %vm2045 = vcmp.gt.f32.partialorder %v2013, 0.0
  %vm2046 = vcmp.gt.f32.partialorder %v2014, 0.0
  %vm2047 = vcmp.gt.f32.partialorder %v2015, 0.0
  %vm2048 = vcmp.gt.f32.partialorder %v2016, 0.0
  %vm2049 = vcmp.gt.f32.partialorder %v2017, 0.0
  %vm2050 = vcmp.gt.f32.partialorder %v2018, 0.0
  %vm2051 = vcmp.gt.f32.partialorder %v2019, 0.0
  %vm2052 = vcmp.gt.f32.partialorder %v2020, 0.0
  %vm2053 = vcmp.gt.f32.partialorder %v2021, 0.0
  %vm2054 = vcmp.gt.f32.partialorder %v2022, 0.0
  %vm2055 = vcmp.gt.f32.partialorder %v2023, 0.0
  %vm2056 = vcmp.gt.f32.partialorder %v2024, 0.0
  %vm2057 = vcmp.gt.f32.partialorder %v2025, 0.0
  %vm2058 = vcmp.gt.f32.partialorder %v2026, 0.0
  %v2059 = vmul.f32 %v1995, 0.2
  %v2060 = vmul.f32 %v1996, 0.2
  %v2061 = vmul.f32 %v1997, 0.2
  %v2062 = vmul.f32 %v1998, 0.2
  %v2063 = vmul.f32 %v1999, 0.2
  %v2064 = vmul.f32 %v2000, 0.2
  %v2065 = vmul.f32 %v2001, 0.2
  %v2066 = vmul.f32 %v2002, 0.2
  %v2067 = vmul.f32 %v2003, 0.2
  %v2068 = vmul.f32 %v2004, 0.2
  %v2069 = vmul.f32 %v2005, 0.2
  %v2070 = vmul.f32 %v2006, 0.2
  %v2071 = vmul.f32 %v2007, 0.2
  %v2072 = vmul.f32 %v2008, 0.2
  %v2073 = vmul.f32 %v2009, 0.2
  %v2074 = vmul.f32 %v2010, 0.2
  %v2075 = vmul.f32 %v2011, 0.2
  %v2076 = vmul.f32 %v2012, 0.2
  %v2077 = vmul.f32 %v2013, 0.2
  %v2078 = vmul.f32 %v2014, 0.2
  %v2079 = vmul.f32 %v2015, 0.2
  %v2080 = vmul.f32 %v2016, 0.2
  %v2081 = vmul.f32 %v2017, 0.2
  %v2082 = vmul.f32 %v2018, 0.2
  %v2083 = vmul.f32 %v2019, 0.2
  %v2084 = vmul.f32 %v2020, 0.2
  %v2085 = vmul.f32 %v2021, 0.2
  %v2086 = vmul.f32 %v2022, 0.2
  %v2087 = vmul.f32 %v2023, 0.2
  %v2088 = vmul.f32 %v2024, 0.2
  %v2089 = vmul.f32 %v2025, 0.2
  %v2090 = vmul.f32 %v2026, 0.2
  %v2091 = vsel %vm2027, %v1995, %v2059
  %v2092 = vsel %vm2028, %v1996, %v2060
  %v2093 = vsel %vm2029, %v1997, %v2061
  %v2094 = vsel %vm2030, %v1998, %v2062
  %v2095 = vsel %vm2031, %v1999, %v2063
  %v2096 = vsel %vm2032, %v2000, %v2064
  %v2097 = vsel %vm2033, %v2001, %v2065
  %v2098 = vsel %vm2034, %v2002, %v2066
  %v2099 = vsel %vm2035, %v2003, %v2067
  %v2100 = vsel %vm2036, %v2004, %v2068
  %v2101 = vsel %vm2037, %v2005, %v2069
  %v2102 = vsel %vm2038, %v2006, %v2070
  %v2103 = vsel %vm2039, %v2007, %v2071
  %v2104 = vsel %vm2040, %v2008, %v2072
  %v2105 = vsel %vm2041, %v2009, %v2073
  %v2106 = vsel %vm2042, %v2010, %v2074
  %v2107 = vsel %vm2043, %v2011, %v2075
  %v2108 = vsel %vm2044, %v2012, %v2076
  %v2109 = vsel %vm2045, %v2013, %v2077
  %v2110 = vsel %vm2046, %v2014, %v2078
  %v2111 = vsel %vm2047, %v2015, %v2079
  %v2112 = vsel %vm2048, %v2016, %v2080
  %v2113 = vsel %vm2049, %v2017, %v2081
  %v2114 = vsel %vm2050, %v2018, %v2082
  %v2115 = vsel %vm2051, %v2019, %v2083
  %v2116 = vsel %vm2052, %v2020, %v2084
  %v2117 = vsel %vm2053, %v2021, %v2085
  %v2118 = vsel %vm2054, %v2022, %v2086
  %v2119 = vsel %vm2055, %v2023, %v2087
  %v2120 = vsel %vm2056, %v2024, %v2088
  %v2121 = vsel %vm2057, %v2025, %v2089
  %v2122 = vsel %vm2058, %v2026, %v2090
  %v2155 = vrot.slane %v1612, 7
  %v2156 = vsel %vm1013, %v2155, %v1611
  %v2157 = vrot.slane %v1613, 6
  %v2158 = vsel %vm1016, %v2157, %v2156
  %v2159 = vrot.slane %v1614, 5
  %v2160 = vsel %vm1019, %v2159, %v2158
  %v2161 = vrot.slane %v1615, 4
  %v2162 = vsel %vm1022, %v2161, %v2160
  %v2163 = vrot.slane %v1616, 3
  %v2164 = vsel %vm1025, %v2163, %v2162
  %v2165 = vrot.slane %v1617, 2
  %v2166 = vsel %vm1028, %v2165, %v2164
  %v2167 = vrot.slane %v1618, 1
  %v2168 = vsel %vm1031, %v2167, %v2166
  %v2169 = vrot.slane %v1620, 7
  %v2170 = vsel %vm1013, %v2169, %v1619
  %v2171 = vrot.slane %v1621, 6
  %v2172 = vsel %vm1016, %v2171, %v2170
  %v2173 = vrot.slane %v1622, 5
  %v2174 = vsel %vm1019, %v2173, %v2172
  %v2175 = vrot.slane %v1623, 4
  %v2176 = vsel %vm1022, %v2175, %v2174
  %v2177 = vrot.slane %v1624, 3
  %v2178 = vsel %vm1025, %v2177, %v2176
  %v2179 = vrot.slane %v1625, 2
  %v2180 = vsel %vm1028, %v2179, %v2178
  %v2181 = vrot.slane %v1626, 1
  %v2182 = vsel %vm1031, %v2181, %v2180
  %v2183 = vrot.slane %v1628, 7
  %v2184 = vsel %vm1013, %v2183, %v1627
  %v2185 = vrot.slane %v1629, 6
  %v2186 = vsel %vm1016, %v2185, %v2184
  %v2187 = vrot.slane %v1630, 5
  %v2188 = vsel %vm1019, %v2187, %v2186
  %v2189 = vrot.slane %v1631, 4
  %v2190 = vsel %vm1022, %v2189, %v2188
  %v2191 = vrot.slane %v1632, 3
  %v2192 = vsel %vm1025, %v2191, %v2190
  %v2193 = vrot.slane %v1633, 2
  %v2194 = vsel %vm1028, %v2193, %v2192
  %v2195 = vrot.slane %v1634, 1
  %v2196 = vsel %vm1031, %v2195, %v2194
  %v2197 = vrot.slane %v1636, 7
  %v2198 = vsel %vm1013, %v2197, %v1635
  %v2199 = vrot.slane %v1637, 6
  %v2200 = vsel %vm1016, %v2199, %v2198
  %v2201 = vrot.slane %v1638, 5
  %v2202 = vsel %vm1019, %v2201, %v2200
  %v2203 = vrot.slane %v1639, 4
  %v2204 = vsel %vm1022, %v2203, %v2202
  %v2205 = vrot.slane %v1640, 3
  %v2206 = vsel %vm1025, %v2205, %v2204
  %v2207 = vrot.slane %v1641, 2
  %v2208 = vsel %vm1028, %v2207, %v2206
  %v2209 = vrot.slane %v1642, 1
  %v2210 = vsel %vm1031, %v2209, %v2208
  %v2247 = vrot.slane %v1772, 7
  %v2248 = vsel %vm1013, %v2247, %v1771
  %v2249 = vrot.slane %v1773, 6
  %v2250 = vsel %vm1016, %v2249, %v2248
  %v2251 = vrot.slane %v1774, 5
  %v2252 = vsel %vm1019, %v2251, %v2250
  %v2253 = vrot.slane %v1775, 4
  %v2254 = vsel %vm1022, %v2253, %v2252
  %v2255 = vrot.slane %v1776, 3
  %v2256 = vsel %vm1025, %v2255, %v2254
  %v2257 = vrot.slane %v1777, 2
  %v2258 = vsel %vm1028, %v2257, %v2256
  %v2259 = vrot.slane %v1778, 1
  %v2260 = vsel %vm1031, %v2259, %v2258
  %v2261 = vrot.slane %v1780, 7
  %v2262 = vsel %vm1013, %v2261, %v1779
  %v2263 = vrot.slane %v1781, 6
  %v2264 = vsel %vm1016, %v2263, %v2262
  %v2265 = vrot.slane %v1782, 5
  %v2266 = vsel %vm1019, %v2265, %v2264
  %v2267 = vrot.slane %v1783, 4
  %v2268 = vsel %vm1022, %v2267, %v2266
  %v2269 = vrot.slane %v1784, 3
  %v2270 = vsel %vm1025, %v2269, %v2268
  %v2271 = vrot.slane %v1785, 2
  %v2272 = vsel %vm1028, %v2271, %v2270
  %v2273 = vrot.slane %v1786, 1
  %v2274 = vsel %vm1031, %v2273, %v2272
  %v2275 = vrot.slane %v1788, 7
  %v2276 = vsel %vm1013, %v2275, %v1787
  %v2277 = vrot.slane %v1789, 6
  %v2278 = vsel %vm1016, %v2277, %v2276
  %v2279 = vrot.slane %v1790, 5
  %v2280 = vsel %vm1019, %v2279, %v2278
  %v2281 = vrot.slane %v1791, 4
  %v2282 = vsel %vm1022, %v2281, %v2280
  %v2283 = vrot.slane %v1792, 3
  %v2284 = vsel %vm1025, %v2283, %v2282
  %v2285 = vrot.slane %v1793, 2
  %v2286 = vsel %vm1028, %v2285, %v2284
  %v2287 = vrot.slane %v1794, 1
  %v2288 = vsel %vm1031, %v2287, %v2286
  %v2289 = vrot.slane %v1796, 7
  %v2290 = vsel %vm1013, %v2289, %v1795
  %v2291 = vrot.slane %v1797, 6
  %v2292 = vsel %vm1016, %v2291, %v2290
  %v2293 = vrot.slane %v1798, 5
  %v2294 = vsel %vm1019, %v2293, %v2292
  %v2295 = vrot.slane %v1799, 4
  %v2296 = vsel %vm1022, %v2295, %v2294
  %v2297 = vrot.slane %v1800, 3
  %v2298 = vsel %vm1025, %v2297, %v2296
  %v2299 = vrot.slane %v1801, 2
  %v2300 = vsel %vm1028, %v2299, %v2298
  %v2301 = vrot.slane %v1802, 1
  %v2302 = vsel %vm1031, %v2301, %v2300
  %2303 = vrot.lane.b32.xlu0 %v2260, 64
  %v2304 = vpop.permute.xlu0 %2303
  %2305 = vrot.lane.b32.xlu0 %v2274, 64
  %v2306 = vpop.permute.xlu0 %2305
  %2307 = vrot.lane.b32.xlu0 %v2288, 64
  %v2308 = vpop.permute.xlu0 %2307
  %2309 = vrot.lane.b32.xlu0 %v2302, 64
  %v2310 = vpop.permute.xlu0 %2309
  %v2347 = vrot.slane %v1932, 7
  %v2348 = vsel %vm1013, %v2347, %v1931
  %v2349 = vrot.slane %v1933, 6
  %v2350 = vsel %vm1016, %v2349, %v2348
  %v2351 = vrot.slane %v1934, 5
  %v2352 = vsel %vm1019, %v2351, %v2350
  %v2353 = vrot.slane %v1935, 4
  %v2354 = vsel %vm1022, %v2353, %v2352
  %v2355 = vrot.slane %v1936, 3
  %v2356 = vsel %vm1025, %v2355, %v2354
  %v2357 = vrot.slane %v1937, 2
  %v2358 = vsel %vm1028, %v2357, %v2356
  %v2359 = vrot.slane %v1938, 1
  %v2360 = vsel %vm1031, %v2359, %v2358
  %v2361 = vrot.slane %v1940, 7
  %v2362 = vsel %vm1013, %v2361, %v1939
  %v2363 = vrot.slane %v1941, 6
  %v2364 = vsel %vm1016, %v2363, %v2362
  %v2365 = vrot.slane %v1942, 5
  %v2366 = vsel %vm1019, %v2365, %v2364
  %v2367 = vrot.slane %v1943, 4
  %v2368 = vsel %vm1022, %v2367, %v2366
  %v2369 = vrot.slane %v1944, 3
  %v2370 = vsel %vm1025, %v2369, %v2368
  %v2371 = vrot.slane %v1945, 2
  %v2372 = vsel %vm1028, %v2371, %v2370
  %v2373 = vrot.slane %v1946, 1
  %v2374 = vsel %vm1031, %v2373, %v2372
  %v2375 = vrot.slane %v1948, 7
  %v2376 = vsel %vm1013, %v2375, %v1947
  %v2377 = vrot.slane %v1949, 6
  %v2378 = vsel %vm1016, %v2377, %v2376
  %v2379 = vrot.slane %v1950, 5
  %v2380 = vsel %vm1019, %v2379, %v2378
  %v2381 = vrot.slane %v1951, 4
  %v2382 = vsel %vm1022, %v2381, %v2380
  %v2383 = vrot.slane %v1952, 3
  %v2384 = vsel %vm1025, %v2383, %v2382
  %v2385 = vrot.slane %v1953, 2
  %v2386 = vsel %vm1028, %v2385, %v2384
  %v2387 = vrot.slane %v1954, 1
  %v2388 = vsel %vm1031, %v2387, %v2386
  %v2389 = vrot.slane %v1956, 7
  %v2390 = vsel %vm1013, %v2389, %v1955
  %v2391 = vrot.slane %v1957, 6
  %v2392 = vsel %vm1016, %v2391, %v2390
  %v2393 = vrot.slane %v1958, 5
  %v2394 = vsel %vm1019, %v2393, %v2392
  %v2395 = vrot.slane %v1959, 4
  %v2396 = vsel %vm1022, %v2395, %v2394
  %v2397 = vrot.slane %v1960, 3
  %v2398 = vsel %vm1025, %v2397, %v2396
  %v2399 = vrot.slane %v1961, 2
  %v2400 = vsel %vm1028, %v2399, %v2398
  %v2401 = vrot.slane %v1962, 1
  %v2402 = vsel %vm1031, %v2401, %v2400
  %v2439 = vrot.slane %v2092, 7
  %v2440 = vsel %vm1013, %v2439, %v2091
  %v2441 = vrot.slane %v2093, 6
  %v2442 = vsel %vm1016, %v2441, %v2440
  %v2443 = vrot.slane %v2094, 5
  %v2444 = vsel %vm1019, %v2443, %v2442
  %v2445 = vrot.slane %v2095, 4
  %v2446 = vsel %vm1022, %v2445, %v2444
  %v2447 = vrot.slane %v2096, 3
  %v2448 = vsel %vm1025, %v2447, %v2446
  %v2449 = vrot.slane %v2097, 2
  %v2450 = vsel %vm1028, %v2449, %v2448
  %v2451 = vrot.slane %v2098, 1
  %v2452 = vsel %vm1031, %v2451, %v2450
  %v2453 = vrot.slane %v2100, 7
  %v2454 = vsel %vm1013, %v2453, %v2099
  %v2455 = vrot.slane %v2101, 6
  %v2456 = vsel %vm1016, %v2455, %v2454
  %v2457 = vrot.slane %v2102, 5
  %v2458 = vsel %vm1019, %v2457, %v2456
  %v2459 = vrot.slane %v2103, 4
  %v2460 = vsel %vm1022, %v2459, %v2458
  %v2461 = vrot.slane %v2104, 3
  %v2462 = vsel %vm1025, %v2461, %v2460
  %v2463 = vrot.slane %v2105, 2
  %v2464 = vsel %vm1028, %v2463, %v2462
  %v2465 = vrot.slane %v2106, 1
  %v2466 = vsel %vm1031, %v2465, %v2464
  %v2467 = vrot.slane %v2108, 7
  %v2468 = vsel %vm1013, %v2467, %v2107
  %v2469 = vrot.slane %v2109, 6
  %v2470 = vsel %vm1016, %v2469, %v2468
  %v2471 = vrot.slane %v2110, 5
  %v2472 = vsel %vm1019, %v2471, %v2470
  %v2473 = vrot.slane %v2111, 4
  %v2474 = vsel %vm1022, %v2473, %v2472
  %v2475 = vrot.slane %v2112, 3
  %v2476 = vsel %vm1025, %v2475, %v2474
  %v2477 = vrot.slane %v2113, 2
  %v2478 = vsel %vm1028, %v2477, %v2476
  %v2479 = vrot.slane %v2114, 1
  %v2480 = vsel %vm1031, %v2479, %v2478
  %v2481 = vrot.slane %v2116, 7
  %v2482 = vsel %vm1013, %v2481, %v2115
  %v2483 = vrot.slane %v2117, 6
  %v2484 = vsel %vm1016, %v2483, %v2482
  %v2485 = vrot.slane %v2118, 5
  %v2486 = vsel %vm1019, %v2485, %v2484
  %v2487 = vrot.slane %v2119, 4
  %v2488 = vsel %vm1022, %v2487, %v2486
  %v2489 = vrot.slane %v2120, 3
  %v2490 = vsel %vm1025, %v2489, %v2488
  %v2491 = vrot.slane %v2121, 2
  %v2492 = vsel %vm1028, %v2491, %v2490
  %v2493 = vrot.slane %v2122, 1
  %v2494 = vsel %vm1031, %v2493, %v2492
  %2495 = vrot.lane.b32.xlu0 %v2452, 64
  %v2496 = vpop.permute.xlu0 %2495
  %2497 = vrot.lane.b32.xlu0 %v2466, 64
  %v2498 = vpop.permute.xlu0 %2497
  %2499 = vrot.lane.b32.xlu0 %v2480, 64
  %v2500 = vpop.permute.xlu0 %2499
  %2501 = vrot.lane.b32.xlu0 %v2494, 64
  %v2502 = vpop.permute.xlu0 %2501
  %v2507 = vsel %vm1371, %v2168, %v2304
  %v2508 = vsel %vm1371, %v2182, %v2306
  %v2509 = vsel %vm1371, %v2196, %v2308
  %v2510 = vsel %vm1371, %v2210, %v2310
  %v2511 = vsel %vm1371, %v2360, %v2496
  %v2512 = vsel %vm1371, %v2374, %v2498
  %v2513 = vsel %vm1371, %v2388, %v2500
  %v2514 = vsel %vm1371, %v2402, %v2502
  %2515 = vmatprep.subr.mxu0 0.0
  %2516 = vmatpush1.msra.mxu0 %v50
  %2517 = vmatprep.subr.mxu0 0.0
  %2518 = vmatpush1.msra.mxu0 %v49
  %2519 = vmatprep.subr.mxu0 0.0
  %2520 = vmatpush1.msra.mxu0 %v48
  %2521 = vmatprep.subr.mxu0 0.0
  %2522 = vmatpush1.msra.mxu0 %v47
  %2523 = vmatprep.subr.mxu0 0.0
  %2524 = vmatpush1.msra.mxu0 %v46
  %2525 = vmatprep.subr.mxu0 0.0
  %2526 = vmatpush1.msra.mxu0 %v45
  %2527 = vmatprep.subr.mxu0 0.0
  %2528 = vmatpush1.msra.mxu0 %v44
  %2529 = vmatprep.subr.mxu0 0.0
  %2530 = vmatpush1.msra.mxu0 %v43
  %2531 = vmatprep.subr.mxu0 0.0
  %2532 = vmatpush1.msra.mxu0 %v42
  %2533 = vmatprep.subr.mxu0 0.0
  %2534 = vmatpush1.msra.mxu0 %v41
  %2535 = vmatprep.subr.mxu0 0.0
  %2536 = vmatpush1.msra.mxu0 %v40
  %2537 = vmatprep.subr.mxu0 0.0
  %2538 = vmatpush1.msra.mxu0 %v39
  %2539 = vmatprep.subr.mxu0 0.0
  %2540 = vmatpush1.msra.mxu0 %v38
  %2541 = vmatprep.subr.mxu0 0.0
  %2542 = vmatpush1.msra.mxu0 %v37
  %2543 = vmatprep.subr.mxu0 0.0
  %2544 = vmatpush1.msra.mxu0 %v36
  %2545 = vmatprep.subr.mxu0 0.0
  %2546 = vmatpush1.msra.mxu0 %v35
  %2547 = vmatprep.subr.mxu0 0.0
  %2548 = vmatpush2.msra.mxu0 %v66
  %2549 = vmatprep.subr.mxu0 0.0
  %2550 = vmatpush2.msra.mxu0 %v65
  %2551 = vmatprep.subr.mxu0 0.0
  %2552 = vmatpush2.msra.mxu0 %v64
  %2553 = vmatprep.subr.mxu0 0.0
  %2554 = vmatpush2.msra.mxu0 %v63
  %2555 = vmatprep.subr.mxu0 0.0
  %2556 = vmatpush2.msra.mxu0 %v62
  %2557 = vmatprep.subr.mxu0 0.0
  %2558 = vmatpush2.msra.mxu0 %v61
  %2559 = vmatprep.subr.mxu0 0.0
  %2560 = vmatpush2.msra.mxu0 %v60
  %2561 = vmatprep.subr.mxu0 0.0
  %2562 = vmatpush2.msra.mxu0 %v59
  %2563 = vmatprep.subr.mxu0 0.0
  %2564 = vmatpush2.msra.mxu0 %v58
  %2565 = vmatprep.subr.mxu0 0.0
  %2566 = vmatpush2.msra.mxu0 %v57
  %2567 = vmatprep.subr.mxu0 0.0
  %2568 = vmatpush2.msra.mxu0 %v56
  %2569 = vmatprep.subr.mxu0 0.0
  %2570 = vmatpush2.msra.mxu0 %v55
  %2571 = vmatprep.subr.mxu0 0.0
  %2572 = vmatpush2.msra.mxu0 %v54
  %2573 = vmatprep.subr.mxu0 0.0
  %2574 = vmatpush2.msra.mxu0 %v53
  %2575 = vmatprep.subr.mxu0 0.0
  %2576 = vmatpush2.msra.mxu0 %v52
  %2577 = vmatprep.subr.mxu0 0.0
  %2578 = vmatpush2.msra.mxu0 %v51
  %2579 = vmatprep.mubr.f32.mxu0 %v2511
  %2580 = vmatmul.mubr.f32.gmra.mxu0 %v2507
  %v2581 = vpop.f32.mrf.mxu0
  %v2582 = vadd.f32 %v1384, %v2581
  %v2583 = vpop.f32.mrf.mxu0
  %2584 = vmatprep.mubr.f32.mxu0 %v2512
  %2585 = vmatmul.mubr.f32.gmra.mxu0 %v2508
  %v2586 = vpop.f32.mrf.mxu0
  %v2587 = vadd.f32 %v1384, %v2586
  %v2588 = vpop.f32.mrf.mxu0
  %2589 = vmatprep.mubr.f32.mxu0 %v2513
  %2590 = vmatmul.mubr.f32.gmra.mxu0 %v2509
  %v2591 = vpop.f32.mrf.mxu0
  %v2592 = vadd.f32 %v1384, %v2591
  %v2593 = vpop.f32.mrf.mxu0
  %2594 = vmatprep.mubr.f32.mxu0 %v2514
  %2595 = vmatmul.mubr.f32.gmra.mxu0 %v2510
  %v2596 = vpop.f32.mrf.mxu0
  %v2597 = vadd.f32 %v1384, %v2596
  %v2598 = vpop.f32.mrf.mxu0
  %2599 = vdwg.mxu0
  %vm2600 = vcmp.gt.f32.partialorder %v2582, 0.0
  %vm2601 = vcmp.gt.f32.partialorder %v2587, 0.0
  %vm2602 = vcmp.gt.f32.partialorder %v2592, 0.0
  %vm2603 = vcmp.gt.f32.partialorder %v2597, 0.0
  %v2604 = vmul.f32 %v2582, 0.2
  %v2605 = vmul.f32 %v2587, 0.2
  %v2606 = vmul.f32 %v2592, 0.2
  %v2607 = vmul.f32 %v2597, 0.2
  %v2608 = vsel %vm2600, %v2582, %v2604
  %v2609 = vsel %vm2601, %v2587, %v2605
  %v2610 = vsel %vm2602, %v2592, %v2606
  %v2611 = vsel %vm2603, %v2597, %v2607
  %v2612 = vmax.f32 %v1479, %v2608
  %v2613 = vmax.f32 %v1480, %v2609
  %v2614 = vmax.f32 %v1481, %v2610
  %v2615 = vmax.f32 %v1482, %v2611
  %v2616 = vld [vmem:[%s0 + $0x2] sm:$0x1]
  %v2617 = vld [vmem:[%s0 + $0x6] sm:$0x1]
  %v2618 = vld [vmem:[%s0 + $0xa] sm:$0x1]
  %v2619 = vld [vmem:[%s0 + $0xe] sm:$0x1]
  %v2620 = vld [vmem:[%s0 + $0x12] sm:$0x1]
  %v2621 = vld [vmem:[%s0 + $0x16] sm:$0x1]
  %v2622 = vld [vmem:[%s0 + $0x1a] sm:$0x1]
  %v2623 = vld [vmem:[%s0 + $0x1e] sm:$0x1]
  %v2624 = vld [vmem:[%s0 + $0x22] sm:$0x1]
  %v2625 = vld [vmem:[%s0 + $0x26] sm:$0x1]
  %v2626 = vld [vmem:[%s0 + $0x2a] sm:$0x1]
  %v2627 = vld [vmem:[%s0 + $0x2e] sm:$0x1]
  %v2628 = vld [vmem:[%s0 + $0x32] sm:$0x1]
  %v2629 = vld [vmem:[%s0 + $0x36] sm:$0x1]
  %v2630 = vld [vmem:[%s0 + $0x3a] sm:$0x1]
  %v2631 = vld [vmem:[%s0 + $0x3e] sm:$0x1]
  %v2632 = vld [vmem:[%s0 + $0x42] sm:$0x1]
  %v2633 = vld [vmem:[%s0 + $0x46] sm:$0x1]
  %v2634 = vld [vmem:[%s0 + $0x4a] sm:$0x1]
  %v2635 = vld [vmem:[%s0 + $0x4e] sm:$0x1]
  %v2636 = vld [vmem:[%s0 + $0x52] sm:$0x1]
  %v2637 = vld [vmem:[%s0 + $0x56] sm:$0x1]
  %v2638 = vld [vmem:[%s0 + $0x5a] sm:$0x1]
  %v2639 = vld [vmem:[%s0 + $0x5e] sm:$0x1]
  %v2640 = vld [vmem:[%s0 + $0x62] sm:$0x1]
  %v2641 = vld [vmem:[%s0 + $0x66] sm:$0x1]
  %v2642 = vld [vmem:[%s0 + $0x6a] sm:$0x1]
  %v2643 = vld [vmem:[%s0 + $0x6e] sm:$0x1]
  %v2644 = vld [vmem:[%s0 + $0x72] sm:$0x1]
  %v2645 = vld [vmem:[%s0 + $0x76] sm:$0x1]
  %v2646 = vld [vmem:[%s0 + $0x7a] sm:$0x1]
  %v2647 = vld [vmem:[%s0 + $0x7e] sm:$0x1]
  %v2648 = vadd.f32 %v2616, %v68
  %v2649 = vadd.f32 %v2617, %v120
  %v2650 = vadd.f32 %v2618, %v121
  %v2651 = vadd.f32 %v2619, %v122
  %v2652 = vadd.f32 %v2620, %v123
  %v2653 = vadd.f32 %v2621, %v124
  %v2654 = vadd.f32 %v2622, %v125
  %v2655 = vadd.f32 %v2623, %v126
  %v2656 = vadd.f32 %v2624, %v69
  %v2657 = vadd.f32 %v2625, %v127
  %v2658 = vadd.f32 %v2626, %v128
  %v2659 = vadd.f32 %v2627, %v129
  %v2660 = vadd.f32 %v2628, %v130
  %v2661 = vadd.f32 %v2629, %v131
  %v2662 = vadd.f32 %v2630, %v132
  %v2663 = vadd.f32 %v2631, %v133
  %v2664 = vadd.f32 %v2632, %v70
  %v2665 = vadd.f32 %v2633, %v134
  %v2666 = vadd.f32 %v2634, %v135
  %v2667 = vadd.f32 %v2635, %v136
  %v2668 = vadd.f32 %v2636, %v137
  %v2669 = vadd.f32 %v2637, %v138
  %v2670 = vadd.f32 %v2638, %v139
  %v2671 = vadd.f32 %v2639, %v140
  %v2672 = vadd.f32 %v2640, %v71
  %v2673 = vadd.f32 %v2641, %v141
  %v2674 = vadd.f32 %v2642, %v142
  %v2675 = vadd.f32 %v2643, %v143
  %v2676 = vadd.f32 %v2644, %v144
  %v2677 = vadd.f32 %v2645, %v145
  %v2678 = vadd.f32 %v2646, %v146
  %v2679 = vadd.f32 %v2647, %v147
  %vm2680 = vcmp.gt.f32.partialorder %v2648, 0.0
  %vm2681 = vcmp.gt.f32.partialorder %v2649, 0.0
  %vm2682 = vcmp.gt.f32.partialorder %v2650, 0.0
  %vm2683 = vcmp.gt.f32.partialorder %v2651, 0.0
  %vm2684 = vcmp.gt.f32.partialorder %v2652, 0.0
  %vm2685 = vcmp.gt.f32.partialorder %v2653, 0.0
  %vm2686 = vcmp.gt.f32.partialorder %v2654, 0.0
  %vm2687 = vcmp.gt.f32.partialorder %v2655, 0.0
  %vm2688 = vcmp.gt.f32.partialorder %v2656, 0.0
  %vm2689 = vcmp.gt.f32.partialorder %v2657, 0.0
  %vm2690 = vcmp.gt.f32.partialorder %v2658, 0.0
  %vm2691 = vcmp.gt.f32.partialorder %v2659, 0.0
  %vm2692 = vcmp.gt.f32.partialorder %v2660, 0.0
  %vm2693 = vcmp.gt.f32.partialorder %v2661, 0.0
  %vm2694 = vcmp.gt.f32.partialorder %v2662, 0.0
  %vm2695 = vcmp.gt.f32.partialorder %v2663, 0.0
  %vm2696 = vcmp.gt.f32.partialorder %v2664, 0.0
  %vm2697 = vcmp.gt.f32.partialorder %v2665, 0.0
  %vm2698 = vcmp.gt.f32.partialorder %v2666, 0.0
  %vm2699 = vcmp.gt.f32.partialorder %v2667, 0.0
  %vm2700 = vcmp.gt.f32.partialorder %v2668, 0.0
  %vm2701 = vcmp.gt.f32.partialorder %v2669, 0.0
  %vm2702 = vcmp.gt.f32.partialorder %v2670, 0.0
  %vm2703 = vcmp.gt.f32.partialorder %v2671, 0.0
  %vm2704 = vcmp.gt.f32.partialorder %v2672, 0.0
  %vm2705 = vcmp.gt.f32.partialorder %v2673, 0.0
  %vm2706 = vcmp.gt.f32.partialorder %v2674, 0.0
  %vm2707 = vcmp.gt.f32.partialorder %v2675, 0.0
  %vm2708 = vcmp.gt.f32.partialorder %v2676, 0.0
  %vm2709 = vcmp.gt.f32.partialorder %v2677, 0.0
  %vm2710 = vcmp.gt.f32.partialorder %v2678, 0.0
  %vm2711 = vcmp.gt.f32.partialorder %v2679, 0.0
  %v2712 = vmul.f32 %v2648, 0.2
  %v2713 = vmul.f32 %v2649, 0.2
  %v2714 = vmul.f32 %v2650, 0.2
  %v2715 = vmul.f32 %v2651, 0.2
  %v2716 = vmul.f32 %v2652, 0.2
  %v2717 = vmul.f32 %v2653, 0.2
  %v2718 = vmul.f32 %v2654, 0.2
  %v2719 = vmul.f32 %v2655, 0.2
  %v2720 = vmul.f32 %v2656, 0.2
  %v2721 = vmul.f32 %v2657, 0.2
  %v2722 = vmul.f32 %v2658, 0.2
  %v2723 = vmul.f32 %v2659, 0.2
  %v2724 = vmul.f32 %v2660, 0.2
  %v2725 = vmul.f32 %v2661, 0.2
  %v2726 = vmul.f32 %v2662, 0.2
  %v2727 = vmul.f32 %v2663, 0.2
  %v2728 = vmul.f32 %v2664, 0.2
  %v2729 = vmul.f32 %v2665, 0.2
  %v2730 = vmul.f32 %v2666, 0.2
  %v2731 = vmul.f32 %v2667, 0.2
  %v2732 = vmul.f32 %v2668, 0.2
  %v2733 = vmul.f32 %v2669, 0.2
  %v2734 = vmul.f32 %v2670, 0.2
  %v2735 = vmul.f32 %v2671, 0.2
  %v2736 = vmul.f32 %v2672, 0.2
  %v2737 = vmul.f32 %v2673, 0.2
  %v2738 = vmul.f32 %v2674, 0.2
  %v2739 = vmul.f32 %v2675, 0.2
  %v2740 = vmul.f32 %v2676, 0.2
  %v2741 = vmul.f32 %v2677, 0.2
  %v2742 = vmul.f32 %v2678, 0.2
  %v2743 = vmul.f32 %v2679, 0.2
  %v2744 = vsel %vm2680, %v2648, %v2712
  %v2745 = vsel %vm2681, %v2649, %v2713
  %v2746 = vsel %vm2682, %v2650, %v2714
  %v2747 = vsel %vm2683, %v2651, %v2715
  %v2748 = vsel %vm2684, %v2652, %v2716
  %v2749 = vsel %vm2685, %v2653, %v2717
  %v2750 = vsel %vm2686, %v2654, %v2718
  %v2751 = vsel %vm2687, %v2655, %v2719
  %v2752 = vsel %vm2688, %v2656, %v2720
  %v2753 = vsel %vm2689, %v2657, %v2721
  %v2754 = vsel %vm2690, %v2658, %v2722
  %v2755 = vsel %vm2691, %v2659, %v2723
  %v2756 = vsel %vm2692, %v2660, %v2724
  %v2757 = vsel %vm2693, %v2661, %v2725
  %v2758 = vsel %vm2694, %v2662, %v2726
  %v2759 = vsel %vm2695, %v2663, %v2727
  %v2760 = vsel %vm2696, %v2664, %v2728
  %v2761 = vsel %vm2697, %v2665, %v2729
  %v2762 = vsel %vm2698, %v2666, %v2730
  %v2763 = vsel %vm2699, %v2667, %v2731
  %v2764 = vsel %vm2700, %v2668, %v2732
  %v2765 = vsel %vm2701, %v2669, %v2733
  %v2766 = vsel %vm2702, %v2670, %v2734
  %v2767 = vsel %vm2703, %v2671, %v2735
  %v2768 = vsel %vm2704, %v2672, %v2736
  %v2769 = vsel %vm2705, %v2673, %v2737
  %v2770 = vsel %vm2706, %v2674, %v2738
  %v2771 = vsel %vm2707, %v2675, %v2739
  %v2772 = vsel %vm2708, %v2676, %v2740
  %v2773 = vsel %vm2709, %v2677, %v2741
  %v2774 = vsel %vm2710, %v2678, %v2742
  %v2775 = vsel %vm2711, %v2679, %v2743
  %v2776 = vld [vmem:[%s1 + $0x2] sm:$0x1]
  %v2777 = vld [vmem:[%s1 + $0x6] sm:$0x1]
  %v2778 = vld [vmem:[%s1 + $0xa] sm:$0x1]
  %v2779 = vld [vmem:[%s1 + $0xe] sm:$0x1]
  %v2780 = vld [vmem:[%s1 + $0x12] sm:$0x1]
  %v2781 = vld [vmem:[%s1 + $0x16] sm:$0x1]
  %v2782 = vld [vmem:[%s1 + $0x1a] sm:$0x1]
  %v2783 = vld [vmem:[%s1 + $0x1e] sm:$0x1]
  %v2784 = vld [vmem:[%s1 + $0x22] sm:$0x1]
  %v2785 = vld [vmem:[%s1 + $0x26] sm:$0x1]
  %v2786 = vld [vmem:[%s1 + $0x2a] sm:$0x1]
  %v2787 = vld [vmem:[%s1 + $0x2e] sm:$0x1]
  %v2788 = vld [vmem:[%s1 + $0x32] sm:$0x1]
  %v2789 = vld [vmem:[%s1 + $0x36] sm:$0x1]
  %v2790 = vld [vmem:[%s1 + $0x3a] sm:$0x1]
  %v2791 = vld [vmem:[%s1 + $0x3e] sm:$0x1]
  %v2792 = vld [vmem:[%s1 + $0x42] sm:$0x1]
  %v2793 = vld [vmem:[%s1 + $0x46] sm:$0x1]
  %v2794 = vld [vmem:[%s1 + $0x4a] sm:$0x1]
  %v2795 = vld [vmem:[%s1 + $0x4e] sm:$0x1]
  %v2796 = vld [vmem:[%s1 + $0x52] sm:$0x1]
  %v2797 = vld [vmem:[%s1 + $0x56] sm:$0x1]
  %v2798 = vld [vmem:[%s1 + $0x5a] sm:$0x1]
  %v2799 = vld [vmem:[%s1 + $0x5e] sm:$0x1]
  %v2800 = vld [vmem:[%s1 + $0x62] sm:$0x1]
  %v2801 = vld [vmem:[%s1 + $0x66] sm:$0x1]
  %v2802 = vld [vmem:[%s1 + $0x6a] sm:$0x1]
  %v2803 = vld [vmem:[%s1 + $0x6e] sm:$0x1]
  %v2804 = vld [vmem:[%s1 + $0x72] sm:$0x1]
  %v2805 = vld [vmem:[%s1 + $0x76] sm:$0x1]
  %v2806 = vld [vmem:[%s1 + $0x7a] sm:$0x1]
  %v2807 = vld [vmem:[%s1 + $0x7e] sm:$0x1]
  %v2808 = vadd.f32 %v2776, %v72
  %v2809 = vadd.f32 %v2777, %v344
  %v2810 = vadd.f32 %v2778, %v345
  %v2811 = vadd.f32 %v2779, %v346
  %v2812 = vadd.f32 %v2780, %v347
  %v2813 = vadd.f32 %v2781, %v348
  %v2814 = vadd.f32 %v2782, %v349
  %v2815 = vadd.f32 %v2783, %v350
  %v2816 = vadd.f32 %v2784, %v73
  %v2817 = vadd.f32 %v2785, %v351
  %v2818 = vadd.f32 %v2786, %v352
  %v2819 = vadd.f32 %v2787, %v353
  %v2820 = vadd.f32 %v2788, %v354
  %v2821 = vadd.f32 %v2789, %v355
  %v2822 = vadd.f32 %v2790, %v356
  %v2823 = vadd.f32 %v2791, %v357
  %v2824 = vadd.f32 %v2792, %v74
  %v2825 = vadd.f32 %v2793, %v358
  %v2826 = vadd.f32 %v2794, %v359
  %v2827 = vadd.f32 %v2795, %v360
  %v2828 = vadd.f32 %v2796, %v361
  %v2829 = vadd.f32 %v2797, %v362
  %v2830 = vadd.f32 %v2798, %v363
  %v2831 = vadd.f32 %v2799, %v364
  %v2832 = vadd.f32 %v2800, %v75
  %v2833 = vadd.f32 %v2801, %v365
  %v2834 = vadd.f32 %v2802, %v366
  %v2835 = vadd.f32 %v2803, %v367
  %v2836 = vadd.f32 %v2804, %v368
  %v2837 = vadd.f32 %v2805, %v369
  %v2838 = vadd.f32 %v2806, %v370
  %v2839 = vadd.f32 %v2807, %v371
  %vm2840 = vcmp.gt.f32.partialorder %v2808, 0.0
  %vm2841 = vcmp.gt.f32.partialorder %v2809, 0.0
  %vm2842 = vcmp.gt.f32.partialorder %v2810, 0.0
  %vm2843 = vcmp.gt.f32.partialorder %v2811, 0.0
  %vm2844 = vcmp.gt.f32.partialorder %v2812, 0.0
  %vm2845 = vcmp.gt.f32.partialorder %v2813, 0.0
  %vm2846 = vcmp.gt.f32.partialorder %v2814, 0.0
  %vm2847 = vcmp.gt.f32.partialorder %v2815, 0.0
  %vm2848 = vcmp.gt.f32.partialorder %v2816, 0.0
  %vm2849 = vcmp.gt.f32.partialorder %v2817, 0.0
  %vm2850 = vcmp.gt.f32.partialorder %v2818, 0.0
  %vm2851 = vcmp.gt.f32.partialorder %v2819, 0.0
  %vm2852 = vcmp.gt.f32.partialorder %v2820, 0.0
  %vm2853 = vcmp.gt.f32.partialorder %v2821, 0.0
  %vm2854 = vcmp.gt.f32.partialorder %v2822, 0.0
  %vm2855 = vcmp.gt.f32.partialorder %v2823, 0.0
  %vm2856 = vcmp.gt.f32.partialorder %v2824, 0.0
  %vm2857 = vcmp.gt.f32.partialorder %v2825, 0.0
  %vm2858 = vcmp.gt.f32.partialorder %v2826, 0.0
  %vm2859 = vcmp.gt.f32.partialorder %v2827, 0.0
  %vm2860 = vcmp.gt.f32.partialorder %v2828, 0.0
  %vm2861 = vcmp.gt.f32.partialorder %v2829, 0.0
  %vm2862 = vcmp.gt.f32.partialorder %v2830, 0.0
  %vm2863 = vcmp.gt.f32.partialorder %v2831, 0.0
  %vm2864 = vcmp.gt.f32.partialorder %v2832, 0.0
  %vm2865 = vcmp.gt.f32.partialorder %v2833, 0.0
  %vm2866 = vcmp.gt.f32.partialorder %v2834, 0.0
  %vm2867 = vcmp.gt.f32.partialorder %v2835, 0.0
  %vm2868 = vcmp.gt.f32.partialorder %v2836, 0.0
  %vm2869 = vcmp.gt.f32.partialorder %v2837, 0.0
  %vm2870 = vcmp.gt.f32.partialorder %v2838, 0.0
  %vm2871 = vcmp.gt.f32.partialorder %v2839, 0.0
  %v2872 = vmul.f32 %v2808, 0.2
  %v2873 = vmul.f32 %v2809, 0.2
  %v2874 = vmul.f32 %v2810, 0.2
  %v2875 = vmul.f32 %v2811, 0.2
  %v2876 = vmul.f32 %v2812, 0.2
  %v2877 = vmul.f32 %v2813, 0.2
  %v2878 = vmul.f32 %v2814, 0.2
  %v2879 = vmul.f32 %v2815, 0.2
  %v2880 = vmul.f32 %v2816, 0.2
  %v2881 = vmul.f32 %v2817, 0.2
  %v2882 = vmul.f32 %v2818, 0.2
  %v2883 = vmul.f32 %v2819, 0.2
  %v2884 = vmul.f32 %v2820, 0.2
  %v2885 = vmul.f32 %v2821, 0.2
  %v2886 = vmul.f32 %v2822, 0.2
  %v2887 = vmul.f32 %v2823, 0.2
  %v2888 = vmul.f32 %v2824, 0.2
  %v2889 = vmul.f32 %v2825, 0.2
  %v2890 = vmul.f32 %v2826, 0.2
  %v2891 = vmul.f32 %v2827, 0.2
  %v2892 = vmul.f32 %v2828, 0.2
  %v2893 = vmul.f32 %v2829, 0.2
  %v2894 = vmul.f32 %v2830, 0.2
  %v2895 = vmul.f32 %v2831, 0.2
  %v2896 = vmul.f32 %v2832, 0.2
  %v2897 = vmul.f32 %v2833, 0.2
  %v2898 = vmul.f32 %v2834, 0.2
  %v2899 = vmul.f32 %v2835, 0.2
  %v2900 = vmul.f32 %v2836, 0.2
  %v2901 = vmul.f32 %v2837, 0.2
  %v2902 = vmul.f32 %v2838, 0.2
  %v2903 = vmul.f32 %v2839, 0.2
  %v2904 = vsel %vm2840, %v2808, %v2872
  %v2905 = vsel %vm2841, %v2809, %v2873
  %v2906 = vsel %vm2842, %v2810, %v2874
  %v2907 = vsel %vm2843, %v2811, %v2875
  %v2908 = vsel %vm2844, %v2812, %v2876
  %v2909 = vsel %vm2845, %v2813, %v2877
  %v2910 = vsel %vm2846, %v2814, %v2878
  %v2911 = vsel %vm2847, %v2815, %v2879
  %v2912 = vsel %vm2848, %v2816, %v2880
  %v2913 = vsel %vm2849, %v2817, %v2881
  %v2914 = vsel %vm2850, %v2818, %v2882
  %v2915 = vsel %vm2851, %v2819, %v2883
  %v2916 = vsel %vm2852, %v2820, %v2884
  %v2917 = vsel %vm2853, %v2821, %v2885
  %v2918 = vsel %vm2854, %v2822, %v2886
  %v2919 = vsel %vm2855, %v2823, %v2887
  %v2920 = vsel %vm2856, %v2824, %v2888
  %v2921 = vsel %vm2857, %v2825, %v2889
  %v2922 = vsel %vm2858, %v2826, %v2890
  %v2923 = vsel %vm2859, %v2827, %v2891
  %v2924 = vsel %vm2860, %v2828, %v2892
  %v2925 = vsel %vm2861, %v2829, %v2893
  %v2926 = vsel %vm2862, %v2830, %v2894
  %v2927 = vsel %vm2863, %v2831, %v2895
  %v2928 = vsel %vm2864, %v2832, %v2896
  %v2929 = vsel %vm2865, %v2833, %v2897
  %v2930 = vsel %vm2866, %v2834, %v2898
  %v2931 = vsel %vm2867, %v2835, %v2899
  %v2932 = vsel %vm2868, %v2836, %v2900
  %v2933 = vsel %vm2869, %v2837, %v2901
  %v2934 = vsel %vm2870, %v2838, %v2902
  %v2935 = vsel %vm2871, %v2839, %v2903
  %v2936 = vld [vmem:[%s2 + $0x2] sm:$0x1]
  %v2937 = vld [vmem:[%s2 + $0x6] sm:$0x1]
  %v2938 = vld [vmem:[%s2 + $0xa] sm:$0x1]
  %v2939 = vld [vmem:[%s2 + $0xe] sm:$0x1]
  %v2940 = vld [vmem:[%s2 + $0x12] sm:$0x1]
  %v2941 = vld [vmem:[%s2 + $0x16] sm:$0x1]
  %v2942 = vld [vmem:[%s2 + $0x1a] sm:$0x1]
  %v2943 = vld [vmem:[%s2 + $0x1e] sm:$0x1]
  %v2944 = vld [vmem:[%s2 + $0x22] sm:$0x1]
  %v2945 = vld [vmem:[%s2 + $0x26] sm:$0x1]
  %v2946 = vld [vmem:[%s2 + $0x2a] sm:$0x1]
  %v2947 = vld [vmem:[%s2 + $0x2e] sm:$0x1]
  %v2948 = vld [vmem:[%s2 + $0x32] sm:$0x1]
  %v2949 = vld [vmem:[%s2 + $0x36] sm:$0x1]
  %v2950 = vld [vmem:[%s2 + $0x3a] sm:$0x1]
  %v2951 = vld [vmem:[%s2 + $0x3e] sm:$0x1]
  %v2952 = vld [vmem:[%s2 + $0x42] sm:$0x1]
  %v2953 = vld [vmem:[%s2 + $0x46] sm:$0x1]
  %v2954 = vld [vmem:[%s2 + $0x4a] sm:$0x1]
  %v2955 = vld [vmem:[%s2 + $0x4e] sm:$0x1]
  %v2956 = vld [vmem:[%s2 + $0x52] sm:$0x1]
  %v2957 = vld [vmem:[%s2 + $0x56] sm:$0x1]
  %v2958 = vld [vmem:[%s2 + $0x5a] sm:$0x1]
  %v2959 = vld [vmem:[%s2 + $0x5e] sm:$0x1]
  %v2960 = vld [vmem:[%s2 + $0x62] sm:$0x1]
  %v2961 = vld [vmem:[%s2 + $0x66] sm:$0x1]
  %v2962 = vld [vmem:[%s2 + $0x6a] sm:$0x1]
  %v2963 = vld [vmem:[%s2 + $0x6e] sm:$0x1]
  %v2964 = vld [vmem:[%s2 + $0x72] sm:$0x1]
  %v2965 = vld [vmem:[%s2 + $0x76] sm:$0x1]
  %v2966 = vld [vmem:[%s2 + $0x7a] sm:$0x1]
  %v2967 = vld [vmem:[%s2 + $0x7e] sm:$0x1]
  %v2968 = vadd.f32 %v2936, %v76
  %v2969 = vadd.f32 %v2937, %v568
  %v2970 = vadd.f32 %v2938, %v569
  %v2971 = vadd.f32 %v2939, %v570
  %v2972 = vadd.f32 %v2940, %v571
  %v2973 = vadd.f32 %v2941, %v572
  %v2974 = vadd.f32 %v2942, %v573
  %v2975 = vadd.f32 %v2943, %v574
  %v2976 = vadd.f32 %v2944, %v77
  %v2977 = vadd.f32 %v2945, %v575
  %v2978 = vadd.f32 %v2946, %v576
  %v2979 = vadd.f32 %v2947, %v577
  %v2980 = vadd.f32 %v2948, %v578
  %v2981 = vadd.f32 %v2949, %v579
  %v2982 = vadd.f32 %v2950, %v580
  %v2983 = vadd.f32 %v2951, %v581
  %v2984 = vadd.f32 %v2952, %v78
  %v2985 = vadd.f32 %v2953, %v582
  %v2986 = vadd.f32 %v2954, %v583
  %v2987 = vadd.f32 %v2955, %v584
  %v2988 = vadd.f32 %v2956, %v585
  %v2989 = vadd.f32 %v2957, %v586
  %v2990 = vadd.f32 %v2958, %v587
  %v2991 = vadd.f32 %v2959, %v588
  %v2992 = vadd.f32 %v2960, %v79
  %v2993 = vadd.f32 %v2961, %v589
  %v2994 = vadd.f32 %v2962, %v590
  %v2995 = vadd.f32 %v2963, %v591
  %v2996 = vadd.f32 %v2964, %v592
  %v2997 = vadd.f32 %v2965, %v593
  %v2998 = vadd.f32 %v2966, %v594
  %v2999 = vadd.f32 %v2967, %v595
  %vm3000 = vcmp.gt.f32.partialorder %v2968, 0.0
  %vm3001 = vcmp.gt.f32.partialorder %v2969, 0.0
  %vm3002 = vcmp.gt.f32.partialorder %v2970, 0.0
  %vm3003 = vcmp.gt.f32.partialorder %v2971, 0.0
  %vm3004 = vcmp.gt.f32.partialorder %v2972, 0.0
  %vm3005 = vcmp.gt.f32.partialorder %v2973, 0.0
  %vm3006 = vcmp.gt.f32.partialorder %v2974, 0.0
  %vm3007 = vcmp.gt.f32.partialorder %v2975, 0.0
  %vm3008 = vcmp.gt.f32.partialorder %v2976, 0.0
  %vm3009 = vcmp.gt.f32.partialorder %v2977, 0.0
  %vm3010 = vcmp.gt.f32.partialorder %v2978, 0.0
  %vm3011 = vcmp.gt.f32.partialorder %v2979, 0.0
  %vm3012 = vcmp.gt.f32.partialorder %v2980, 0.0
  %vm3013 = vcmp.gt.f32.partialorder %v2981, 0.0
  %vm3014 = vcmp.gt.f32.partialorder %v2982, 0.0
  %vm3015 = vcmp.gt.f32.partialorder %v2983, 0.0
  %vm3016 = vcmp.gt.f32.partialorder %v2984, 0.0
  %vm3017 = vcmp.gt.f32.partialorder %v2985, 0.0
  %vm3018 = vcmp.gt.f32.partialorder %v2986, 0.0
  %vm3019 = vcmp.gt.f32.partialorder %v2987, 0.0
  %vm3020 = vcmp.gt.f32.partialorder %v2988, 0.0
  %vm3021 = vcmp.gt.f32.partialorder %v2989, 0.0
  %vm3022 = vcmp.gt.f32.partialorder %v2990, 0.0
  %vm3023 = vcmp.gt.f32.partialorder %v2991, 0.0
  %vm3024 = vcmp.gt.f32.partialorder %v2992, 0.0
  %vm3025 = vcmp.gt.f32.partialorder %v2993, 0.0
  %vm3026 = vcmp.gt.f32.partialorder %v2994, 0.0
  %vm3027 = vcmp.gt.f32.partialorder %v2995, 0.0
  %vm3028 = vcmp.gt.f32.partialorder %v2996, 0.0
  %vm3029 = vcmp.gt.f32.partialorder %v2997, 0.0
  %vm3030 = vcmp.gt.f32.partialorder %v2998, 0.0
  %vm3031 = vcmp.gt.f32.partialorder %v2999, 0.0
  %v3032 = vmul.f32 %v2968, 0.2
  %v3033 = vmul.f32 %v2969, 0.2
  %v3034 = vmul.f32 %v2970, 0.2
  %v3035 = vmul.f32 %v2971, 0.2
  %v3036 = vmul.f32 %v2972, 0.2
  %v3037 = vmul.f32 %v2973, 0.2
  %v3038 = vmul.f32 %v2974, 0.2
  %v3039 = vmul.f32 %v2975, 0.2
  %v3040 = vmul.f32 %v2976, 0.2
  %v3041 = vmul.f32 %v2977, 0.2
  %v3042 = vmul.f32 %v2978, 0.2
  %v3043 = vmul.f32 %v2979, 0.2
  %v3044 = vmul.f32 %v2980, 0.2
  %v3045 = vmul.f32 %v2981, 0.2
  %v3046 = vmul.f32 %v2982, 0.2
  %v3047 = vmul.f32 %v2983, 0.2
  %v3048 = vmul.f32 %v2984, 0.2
  %v3049 = vmul.f32 %v2985, 0.2
  %v3050 = vmul.f32 %v2986, 0.2
  %v3051 = vmul.f32 %v2987, 0.2
  %v3052 = vmul.f32 %v2988, 0.2
  %v3053 = vmul.f32 %v2989, 0.2
  %v3054 = vmul.f32 %v2990, 0.2
  %v3055 = vmul.f32 %v2991, 0.2
  %v3056 = vmul.f32 %v2992, 0.2
  %v3057 = vmul.f32 %v2993, 0.2
  %v3058 = vmul.f32 %v2994, 0.2
  %v3059 = vmul.f32 %v2995, 0.2
  %v3060 = vmul.f32 %v2996, 0.2
  %v3061 = vmul.f32 %v2997, 0.2
  %v3062 = vmul.f32 %v2998, 0.2
  %v3063 = vmul.f32 %v2999, 0.2
  %v3064 = vsel %vm3000, %v2968, %v3032
  %v3065 = vsel %vm3001, %v2969, %v3033
  %v3066 = vsel %vm3002, %v2970, %v3034
  %v3067 = vsel %vm3003, %v2971, %v3035
  %v3068 = vsel %vm3004, %v2972, %v3036
  %v3069 = vsel %vm3005, %v2973, %v3037
  %v3070 = vsel %vm3006, %v2974, %v3038
  %v3071 = vsel %vm3007, %v2975, %v3039
  %v3072 = vsel %vm3008, %v2976, %v3040
  %v3073 = vsel %vm3009, %v2977, %v3041
  %v3074 = vsel %vm3010, %v2978, %v3042
  %v3075 = vsel %vm3011, %v2979, %v3043
  %v3076 = vsel %vm3012, %v2980, %v3044
  %v3077 = vsel %vm3013, %v2981, %v3045
  %v3078 = vsel %vm3014, %v2982, %v3046
  %v3079 = vsel %vm3015, %v2983, %v3047
  %v3080 = vsel %vm3016, %v2984, %v3048
  %v3081 = vsel %vm3017, %v2985, %v3049
  %v3082 = vsel %vm3018, %v2986, %v3050
  %v3083 = vsel %vm3019, %v2987, %v3051
  %v3084 = vsel %vm3020, %v2988, %v3052
  %v3085 = vsel %vm3021, %v2989, %v3053
  %v3086 = vsel %vm3022, %v2990, %v3054
  %v3087 = vsel %vm3023, %v2991, %v3055
  %v3088 = vsel %vm3024, %v2992, %v3056
  %v3089 = vsel %vm3025, %v2993, %v3057
  %v3090 = vsel %vm3026, %v2994, %v3058
  %v3091 = vsel %vm3027, %v2995, %v3059
  %v3092 = vsel %vm3028, %v2996, %v3060
  %v3093 = vsel %vm3029, %v2997, %v3061
  %v3094 = vsel %vm3030, %v2998, %v3062
  %v3095 = vsel %vm3031, %v2999, %v3063
  %v3096 = vld [vmem:[%s3 + $0x2] sm:$0x1]
  %v3097 = vld [vmem:[%s3 + $0x6] sm:$0x1]
  %v3098 = vld [vmem:[%s3 + $0xa] sm:$0x1]
  %v3099 = vld [vmem:[%s3 + $0xe] sm:$0x1]
  %v3100 = vld [vmem:[%s3 + $0x12] sm:$0x1]
  %v3101 = vld [vmem:[%s3 + $0x16] sm:$0x1]
  %v3102 = vld [vmem:[%s3 + $0x1a] sm:$0x1]
  %v3103 = vld [vmem:[%s3 + $0x1e] sm:$0x1]
  %v3104 = vld [vmem:[%s3 + $0x22] sm:$0x1]
  %v3105 = vld [vmem:[%s3 + $0x26] sm:$0x1]
  %v3106 = vld [vmem:[%s3 + $0x2a] sm:$0x1]
  %v3107 = vld [vmem:[%s3 + $0x2e] sm:$0x1]
  %v3108 = vld [vmem:[%s3 + $0x32] sm:$0x1]
  %v3109 = vld [vmem:[%s3 + $0x36] sm:$0x1]
  %v3110 = vld [vmem:[%s3 + $0x3a] sm:$0x1]
  %v3111 = vld [vmem:[%s3 + $0x3e] sm:$0x1]
  %v3112 = vld [vmem:[%s3 + $0x42] sm:$0x1]
  %v3113 = vld [vmem:[%s3 + $0x46] sm:$0x1]
  %v3114 = vld [vmem:[%s3 + $0x4a] sm:$0x1]
  %v3115 = vld [vmem:[%s3 + $0x4e] sm:$0x1]
  %v3116 = vld [vmem:[%s3 + $0x52] sm:$0x1]
  %v3117 = vld [vmem:[%s3 + $0x56] sm:$0x1]
  %v3118 = vld [vmem:[%s3 + $0x5a] sm:$0x1]
  %v3119 = vld [vmem:[%s3 + $0x5e] sm:$0x1]
  %v3120 = vld [vmem:[%s3 + $0x62] sm:$0x1]
  %v3121 = vld [vmem:[%s3 + $0x66] sm:$0x1]
  %v3122 = vld [vmem:[%s3 + $0x6a] sm:$0x1]
  %v3123 = vld [vmem:[%s3 + $0x6e] sm:$0x1]
  %v3124 = vld [vmem:[%s3 + $0x72] sm:$0x1]
  %v3125 = vld [vmem:[%s3 + $0x76] sm:$0x1]
  %v3126 = vld [vmem:[%s3 + $0x7a] sm:$0x1]
  %v3127 = vld [vmem:[%s3 + $0x7e] sm:$0x1]
  %v3128 = vadd.f32 %v3096, %v80
  %v3129 = vadd.f32 %v3097, %v792
  %v3130 = vadd.f32 %v3098, %v793
  %v3131 = vadd.f32 %v3099, %v794
  %v3132 = vadd.f32 %v3100, %v795
  %v3133 = vadd.f32 %v3101, %v796
  %v3134 = vadd.f32 %v3102, %v797
  %v3135 = vadd.f32 %v3103, %v798
  %v3136 = vadd.f32 %v3104, %v81
  %v3137 = vadd.f32 %v3105, %v799
  %v3138 = vadd.f32 %v3106, %v800
  %v3139 = vadd.f32 %v3107, %v801
  %v3140 = vadd.f32 %v3108, %v802
  %v3141 = vadd.f32 %v3109, %v803
  %v3142 = vadd.f32 %v3110, %v804
  %v3143 = vadd.f32 %v3111, %v805
  %v3144 = vadd.f32 %v3112, %v82
  %v3145 = vadd.f32 %v3113, %v806
  %v3146 = vadd.f32 %v3114, %v807
  %v3147 = vadd.f32 %v3115, %v808
  %v3148 = vadd.f32 %v3116, %v809
  %v3149 = vadd.f32 %v3117, %v810
  %v3150 = vadd.f32 %v3118, %v811
  %v3151 = vadd.f32 %v3119, %v812
  %v3152 = vadd.f32 %v3120, %v83
  %v3153 = vadd.f32 %v3121, %v813
  %v3154 = vadd.f32 %v3122, %v814
  %v3155 = vadd.f32 %v3123, %v815
  %v3156 = vadd.f32 %v3124, %v816
  %v3157 = vadd.f32 %v3125, %v817
  %v3158 = vadd.f32 %v3126, %v818
  %v3159 = vadd.f32 %v3127, %v819
  %vm3160 = vcmp.gt.f32.partialorder %v3128, 0.0
  %vm3161 = vcmp.gt.f32.partialorder %v3129, 0.0
  %vm3162 = vcmp.gt.f32.partialorder %v3130, 0.0
  %vm3163 = vcmp.gt.f32.partialorder %v3131, 0.0
  %vm3164 = vcmp.gt.f32.partialorder %v3132, 0.0
  %vm3165 = vcmp.gt.f32.partialorder %v3133, 0.0
  %vm3166 = vcmp.gt.f32.partialorder %v3134, 0.0
  %vm3167 = vcmp.gt.f32.partialorder %v3135, 0.0
  %vm3168 = vcmp.gt.f32.partialorder %v3136, 0.0
  %vm3169 = vcmp.gt.f32.partialorder %v3137, 0.0
  %vm3170 = vcmp.gt.f32.partialorder %v3138, 0.0
  %vm3171 = vcmp.gt.f32.partialorder %v3139, 0.0
  %vm3172 = vcmp.gt.f32.partialorder %v3140, 0.0
  %vm3173 = vcmp.gt.f32.partialorder %v3141, 0.0
  %vm3174 = vcmp.gt.f32.partialorder %v3142, 0.0
  %vm3175 = vcmp.gt.f32.partialorder %v3143, 0.0
  %vm3176 = vcmp.gt.f32.partialorder %v3144, 0.0
  %vm3177 = vcmp.gt.f32.partialorder %v3145, 0.0
  %vm3178 = vcmp.gt.f32.partialorder %v3146, 0.0
  %vm3179 = vcmp.gt.f32.partialorder %v3147, 0.0
  %vm3180 = vcmp.gt.f32.partialorder %v3148, 0.0
  %vm3181 = vcmp.gt.f32.partialorder %v3149, 0.0
  %vm3182 = vcmp.gt.f32.partialorder %v3150, 0.0
  %vm3183 = vcmp.gt.f32.partialorder %v3151, 0.0
  %vm3184 = vcmp.gt.f32.partialorder %v3152, 0.0
  %vm3185 = vcmp.gt.f32.partialorder %v3153, 0.0
  %vm3186 = vcmp.gt.f32.partialorder %v3154, 0.0
  %vm3187 = vcmp.gt.f32.partialorder %v3155, 0.0
  %vm3188 = vcmp.gt.f32.partialorder %v3156, 0.0
  %vm3189 = vcmp.gt.f32.partialorder %v3157, 0.0
  %vm3190 = vcmp.gt.f32.partialorder %v3158, 0.0
  %vm3191 = vcmp.gt.f32.partialorder %v3159, 0.0
  %v3192 = vmul.f32 %v3128, 0.2
  %v3193 = vmul.f32 %v3129, 0.2
  %v3194 = vmul.f32 %v3130, 0.2
  %v3195 = vmul.f32 %v3131, 0.2
  %v3196 = vmul.f32 %v3132, 0.2
  %v3197 = vmul.f32 %v3133, 0.2
  %v3198 = vmul.f32 %v3134, 0.2
  %v3199 = vmul.f32 %v3135, 0.2
  %v3200 = vmul.f32 %v3136, 0.2
  %v3201 = vmul.f32 %v3137, 0.2
  %v3202 = vmul.f32 %v3138, 0.2
  %v3203 = vmul.f32 %v3139, 0.2
  %v3204 = vmul.f32 %v3140, 0.2
  %v3205 = vmul.f32 %v3141, 0.2
  %v3206 = vmul.f32 %v3142, 0.2
  %v3207 = vmul.f32 %v3143, 0.2
  %v3208 = vmul.f32 %v3144, 0.2
  %v3209 = vmul.f32 %v3145, 0.2
  %v3210 = vmul.f32 %v3146, 0.2
  %v3211 = vmul.f32 %v3147, 0.2
  %v3212 = vmul.f32 %v3148, 0.2
  %v3213 = vmul.f32 %v3149, 0.2
  %v3214 = vmul.f32 %v3150, 0.2
  %v3215 = vmul.f32 %v3151, 0.2
  %v3216 = vmul.f32 %v3152, 0.2
  %v3217 = vmul.f32 %v3153, 0.2
  %v3218 = vmul.f32 %v3154, 0.2
  %v3219 = vmul.f32 %v3155, 0.2
  %v3220 = vmul.f32 %v3156, 0.2
  %v3221 = vmul.f32 %v3157, 0.2
  %v3222 = vmul.f32 %v3158, 0.2
  %v3223 = vmul.f32 %v3159, 0.2
  %v3224 = vsel %vm3160, %v3128, %v3192
  %v3225 = vsel %vm3161, %v3129, %v3193
  %v3226 = vsel %vm3162, %v3130, %v3194
  %v3227 = vsel %vm3163, %v3131, %v3195
  %v3228 = vsel %vm3164, %v3132, %v3196
  %v3229 = vsel %vm3165, %v3133, %v3197
  %v3230 = vsel %vm3166, %v3134, %v3198
  %v3231 = vsel %vm3167, %v3135, %v3199
  %v3232 = vsel %vm3168, %v3136, %v3200
  %v3233 = vsel %vm3169, %v3137, %v3201
  %v3234 = vsel %vm3170, %v3138, %v3202
  %v3235 = vsel %vm3171, %v3139, %v3203
  %v3236 = vsel %vm3172, %v3140, %v3204
  %v3237 = vsel %vm3173, %v3141, %v3205
  %v3238 = vsel %vm3174, %v3142, %v3206
  %v3239 = vsel %vm3175, %v3143, %v3207
  %v3240 = vsel %vm3176, %v3144, %v3208
  %v3241 = vsel %vm3177, %v3145, %v3209
  %v3242 = vsel %vm3178, %v3146, %v3210
  %v3243 = vsel %vm3179, %v3147, %v3211
  %v3244 = vsel %vm3180, %v3148, %v3212
  %v3245 = vsel %vm3181, %v3149, %v3213
  %v3246 = vsel %vm3182, %v3150, %v3214
  %v3247 = vsel %vm3183, %v3151, %v3215
  %v3248 = vsel %vm3184, %v3152, %v3216
  %v3249 = vsel %vm3185, %v3153, %v3217
  %v3250 = vsel %vm3186, %v3154, %v3218
  %v3251 = vsel %vm3187, %v3155, %v3219
  %v3252 = vsel %vm3188, %v3156, %v3220
  %v3253 = vsel %vm3189, %v3157, %v3221
  %v3254 = vsel %vm3190, %v3158, %v3222
  %v3255 = vsel %vm3191, %v3159, %v3223
  %v3288 = vrot.slane %v2745, 7
  %v3289 = vsel %vm1013, %v3288, %v2744
  %v3290 = vrot.slane %v2746, 6
  %v3291 = vsel %vm1016, %v3290, %v3289
  %v3292 = vrot.slane %v2747, 5
  %v3293 = vsel %vm1019, %v3292, %v3291
  %v3294 = vrot.slane %v2748, 4
  %v3295 = vsel %vm1022, %v3294, %v3293
  %v3296 = vrot.slane %v2749, 3
  %v3297 = vsel %vm1025, %v3296, %v3295
  %v3298 = vrot.slane %v2750, 2
  %v3299 = vsel %vm1028, %v3298, %v3297
  %v3300 = vrot.slane %v2751, 1
  %v3301 = vsel %vm1031, %v3300, %v3299
  %v3302 = vrot.slane %v2753, 7
  %v3303 = vsel %vm1013, %v3302, %v2752
  %v3304 = vrot.slane %v2754, 6
  %v3305 = vsel %vm1016, %v3304, %v3303
  %v3306 = vrot.slane %v2755, 5
  %v3307 = vsel %vm1019, %v3306, %v3305
  %v3308 = vrot.slane %v2756, 4
  %v3309 = vsel %vm1022, %v3308, %v3307
  %v3310 = vrot.slane %v2757, 3
  %v3311 = vsel %vm1025, %v3310, %v3309
  %v3312 = vrot.slane %v2758, 2
  %v3313 = vsel %vm1028, %v3312, %v3311
  %v3314 = vrot.slane %v2759, 1
  %v3315 = vsel %vm1031, %v3314, %v3313
  %v3316 = vrot.slane %v2761, 7
  %v3317 = vsel %vm1013, %v3316, %v2760
  %v3318 = vrot.slane %v2762, 6
  %v3319 = vsel %vm1016, %v3318, %v3317
  %v3320 = vrot.slane %v2763, 5
  %v3321 = vsel %vm1019, %v3320, %v3319
  %v3322 = vrot.slane %v2764, 4
  %v3323 = vsel %vm1022, %v3322, %v3321
  %v3324 = vrot.slane %v2765, 3
  %v3325 = vsel %vm1025, %v3324, %v3323
  %v3326 = vrot.slane %v2766, 2
  %v3327 = vsel %vm1028, %v3326, %v3325
  %v3328 = vrot.slane %v2767, 1
  %v3329 = vsel %vm1031, %v3328, %v3327
  %v3330 = vrot.slane %v2769, 7
  %v3331 = vsel %vm1013, %v3330, %v2768
  %v3332 = vrot.slane %v2770, 6
  %v3333 = vsel %vm1016, %v3332, %v3331
  %v3334 = vrot.slane %v2771, 5
  %v3335 = vsel %vm1019, %v3334, %v3333
  %v3336 = vrot.slane %v2772, 4
  %v3337 = vsel %vm1022, %v3336, %v3335
  %v3338 = vrot.slane %v2773, 3
  %v3339 = vsel %vm1025, %v3338, %v3337
  %v3340 = vrot.slane %v2774, 2
  %v3341 = vsel %vm1028, %v3340, %v3339
  %v3342 = vrot.slane %v2775, 1
  %v3343 = vsel %vm1031, %v3342, %v3341
  %v3380 = vrot.slane %v2905, 7
  %v3381 = vsel %vm1013, %v3380, %v2904
  %v3382 = vrot.slane %v2906, 6
  %v3383 = vsel %vm1016, %v3382, %v3381
  %v3384 = vrot.slane %v2907, 5
  %v3385 = vsel %vm1019, %v3384, %v3383
  %v3386 = vrot.slane %v2908, 4
  %v3387 = vsel %vm1022, %v3386, %v3385
  %v3388 = vrot.slane %v2909, 3
  %v3389 = vsel %vm1025, %v3388, %v3387
  %v3390 = vrot.slane %v2910, 2
  %v3391 = vsel %vm1028, %v3390, %v3389
  %v3392 = vrot.slane %v2911, 1
  %v3393 = vsel %vm1031, %v3392, %v3391
  %v3394 = vrot.slane %v2913, 7
  %v3395 = vsel %vm1013, %v3394, %v2912
  %v3396 = vrot.slane %v2914, 6
  %v3397 = vsel %vm1016, %v3396, %v3395
  %v3398 = vrot.slane %v2915, 5
  %v3399 = vsel %vm1019, %v3398, %v3397
  %v3400 = vrot.slane %v2916, 4
  %v3401 = vsel %vm1022, %v3400, %v3399
  %v3402 = vrot.slane %v2917, 3
  %v3403 = vsel %vm1025, %v3402, %v3401
  %v3404 = vrot.slane %v2918, 2
  %v3405 = vsel %vm1028, %v3404, %v3403
  %v3406 = vrot.slane %v2919, 1
  %v3407 = vsel %vm1031, %v3406, %v3405
  %v3408 = vrot.slane %v2921, 7
  %v3409 = vsel %vm1013, %v3408, %v2920
  %v3410 = vrot.slane %v2922, 6
  %v3411 = vsel %vm1016, %v3410, %v3409
  %v3412 = vrot.slane %v2923, 5
  %v3413 = vsel %vm1019, %v3412, %v3411
  %v3414 = vrot.slane %v2924, 4
  %v3415 = vsel %vm1022, %v3414, %v3413
  %v3416 = vrot.slane %v2925, 3
  %v3417 = vsel %vm1025, %v3416, %v3415
  %v3418 = vrot.slane %v2926, 2
  %v3419 = vsel %vm1028, %v3418, %v3417
  %v3420 = vrot.slane %v2927, 1
  %v3421 = vsel %vm1031, %v3420, %v3419
  %v3422 = vrot.slane %v2929, 7
  %v3423 = vsel %vm1013, %v3422, %v2928
  %v3424 = vrot.slane %v2930, 6
  %v3425 = vsel %vm1016, %v3424, %v3423
  %v3426 = vrot.slane %v2931, 5
  %v3427 = vsel %vm1019, %v3426, %v3425
  %v3428 = vrot.slane %v2932, 4
  %v3429 = vsel %vm1022, %v3428, %v3427
  %v3430 = vrot.slane %v2933, 3
  %v3431 = vsel %vm1025, %v3430, %v3429
  %v3432 = vrot.slane %v2934, 2
  %v3433 = vsel %vm1028, %v3432, %v3431
  %v3434 = vrot.slane %v2935, 1
  %v3435 = vsel %vm1031, %v3434, %v3433
  %3436 = vrot.lane.b32.xlu0 %v3393, 64
  %v3437 = vpop.permute.xlu0 %3436
  %3438 = vrot.lane.b32.xlu0 %v3407, 64
  %v3439 = vpop.permute.xlu0 %3438
  %3440 = vrot.lane.b32.xlu0 %v3421, 64
  %v3441 = vpop.permute.xlu0 %3440
  %3442 = vrot.lane.b32.xlu0 %v3435, 64
  %v3443 = vpop.permute.xlu0 %3442
  %v3480 = vrot.slane %v3065, 7
  %v3481 = vsel %vm1013, %v3480, %v3064
  %v3482 = vrot.slane %v3066, 6
  %v3483 = vsel %vm1016, %v3482, %v3481
  %v3484 = vrot.slane %v3067, 5
  %v3485 = vsel %vm1019, %v3484, %v3483
  %v3486 = vrot.slane %v3068, 4
  %v3487 = vsel %vm1022, %v3486, %v3485
  %v3488 = vrot.slane %v3069, 3
  %v3489 = vsel %vm1025, %v3488, %v3487
  %v3490 = vrot.slane %v3070, 2
  %v3491 = vsel %vm1028, %v3490, %v3489
  %v3492 = vrot.slane %v3071, 1
  %v3493 = vsel %vm1031, %v3492, %v3491
  %v3494 = vrot.slane %v3073, 7
  %v3495 = vsel %vm1013, %v3494, %v3072
  %v3496 = vrot.slane %v3074, 6
  %v3497 = vsel %vm1016, %v3496, %v3495
  %v3498 = vrot.slane %v3075, 5
  %v3499 = vsel %vm1019, %v3498, %v3497
  %v3500 = vrot.slane %v3076, 4
  %v3501 = vsel %vm1022, %v3500, %v3499
  %v3502 = vrot.slane %v3077, 3
  %v3503 = vsel %vm1025, %v3502, %v3501
  %v3504 = vrot.slane %v3078, 2
  %v3505 = vsel %vm1028, %v3504, %v3503
  %v3506 = vrot.slane %v3079, 1
  %v3507 = vsel %vm1031, %v3506, %v3505
  %v3508 = vrot.slane %v3081, 7
  %v3509 = vsel %vm1013, %v3508, %v3080
  %v3510 = vrot.slane %v3082, 6
  %v3511 = vsel %vm1016, %v3510, %v3509
  %v3512 = vrot.slane %v3083, 5
  %v3513 = vsel %vm1019, %v3512, %v3511
  %v3514 = vrot.slane %v3084, 4
  %v3515 = vsel %vm1022, %v3514, %v3513
  %v3516 = vrot.slane %v3085, 3
  %v3517 = vsel %vm1025, %v3516, %v3515
  %v3518 = vrot.slane %v3086, 2
  %v3519 = vsel %vm1028, %v3518, %v3517
  %v3520 = vrot.slane %v3087, 1
  %v3521 = vsel %vm1031, %v3520, %v3519
  %v3522 = vrot.slane %v3089, 7
  %v3523 = vsel %vm1013, %v3522, %v3088
  %v3524 = vrot.slane %v3090, 6
  %v3525 = vsel %vm1016, %v3524, %v3523
  %v3526 = vrot.slane %v3091, 5
  %v3527 = vsel %vm1019, %v3526, %v3525
  %v3528 = vrot.slane %v3092, 4
  %v3529 = vsel %vm1022, %v3528, %v3527
  %v3530 = vrot.slane %v3093, 3
  %v3531 = vsel %vm1025, %v3530, %v3529
  %v3532 = vrot.slane %v3094, 2
  %v3533 = vsel %vm1028, %v3532, %v3531
  %v3534 = vrot.slane %v3095, 1
  %v3535 = vsel %vm1031, %v3534, %v3533
  %v3572 = vrot.slane %v3225, 7
  %v3573 = vsel %vm1013, %v3572, %v3224
  %v3574 = vrot.slane %v3226, 6
  %v3575 = vsel %vm1016, %v3574, %v3573
  %v3576 = vrot.slane %v3227, 5
  %v3577 = vsel %vm1019, %v3576, %v3575
  %v3578 = vrot.slane %v3228, 4
  %v3579 = vsel %vm1022, %v3578, %v3577
  %v3580 = vrot.slane %v3229, 3
  %v3581 = vsel %vm1025, %v3580, %v3579
  %v3582 = vrot.slane %v3230, 2
  %v3583 = vsel %vm1028, %v3582, %v3581
  %v3584 = vrot.slane %v3231, 1
  %v3585 = vsel %vm1031, %v3584, %v3583
  %v3586 = vrot.slane %v3233, 7
  %v3587 = vsel %vm1013, %v3586, %v3232
  %v3588 = vrot.slane %v3234, 6
  %v3589 = vsel %vm1016, %v3588, %v3587
  %v3590 = vrot.slane %v3235, 5
  %v3591 = vsel %vm1019, %v3590, %v3589
  %v3592 = vrot.slane %v3236, 4
  %v3593 = vsel %vm1022, %v3592, %v3591
  %v3594 = vrot.slane %v3237, 3
  %v3595 = vsel %vm1025, %v3594, %v3593
  %v3596 = vrot.slane %v3238, 2
  %v3597 = vsel %vm1028, %v3596, %v3595
  %v3598 = vrot.slane %v3239, 1
  %v3599 = vsel %vm1031, %v3598, %v3597
  %v3600 = vrot.slane %v3241, 7
  %v3601 = vsel %vm1013, %v3600, %v3240
  %v3602 = vrot.slane %v3242, 6
  %v3603 = vsel %vm1016, %v3602, %v3601
  %v3604 = vrot.slane %v3243, 5
  %v3605 = vsel %vm1019, %v3604, %v3603
  %v3606 = vrot.slane %v3244, 4
  %v3607 = vsel %vm1022, %v3606, %v3605
  %v3608 = vrot.slane %v3245, 3
  %v3609 = vsel %vm1025, %v3608, %v3607
  %v3610 = vrot.slane %v3246, 2
  %v3611 = vsel %vm1028, %v3610, %v3609
  %v3612 = vrot.slane %v3247, 1
  %v3613 = vsel %vm1031, %v3612, %v3611
  %v3614 = vrot.slane %v3249, 7
  %v3615 = vsel %vm1013, %v3614, %v3248
  %v3616 = vrot.slane %v3250, 6
  %v3617 = vsel %vm1016, %v3616, %v3615
  %v3618 = vrot.slane %v3251, 5
  %v3619 = vsel %vm1019, %v3618, %v3617
  %v3620 = vrot.slane %v3252, 4
  %v3621 = vsel %vm1022, %v3620, %v3619
  %v3622 = vrot.slane %v3253, 3
  %v3623 = vsel %vm1025, %v3622, %v3621
  %v3624 = vrot.slane %v3254, 2
  %v3625 = vsel %vm1028, %v3624, %v3623
  %v3626 = vrot.slane %v3255, 1
  %v3627 = vsel %vm1031, %v3626, %v3625
  %3628 = vrot.lane.b32.xlu0 %v3585, 64
  %v3629 = vpop.permute.xlu0 %3628
  %3630 = vrot.lane.b32.xlu0 %v3599, 64
  %v3631 = vpop.permute.xlu0 %3630
  %3632 = vrot.lane.b32.xlu0 %v3613, 64
  %v3633 = vpop.permute.xlu0 %3632
  %3634 = vrot.lane.b32.xlu0 %v3627, 64
  %v3635 = vpop.permute.xlu0 %3634
  %v3640 = vsel %vm1371, %v3301, %v3437
  %v3641 = vsel %vm1371, %v3315, %v3439
  %v3642 = vsel %vm1371, %v3329, %v3441
  %v3643 = vsel %vm1371, %v3343, %v3443
  %v3644 = vsel %vm1371, %v3493, %v3629
  %v3645 = vsel %vm1371, %v3507, %v3631
  %v3646 = vsel %vm1371, %v3521, %v3633
  %v3647 = vsel %vm1371, %v3535, %v3635
  %3648 = vmatprep.subr.mxu0 0.0
  %3649 = vmatpush1.msra.mxu0 %v50
  %3650 = vmatprep.subr.mxu0 0.0
  %3651 = vmatpush1.msra.mxu0 %v49
  %3652 = vmatprep.subr.mxu0 0.0
  %3653 = vmatpush1.msra.mxu0 %v48
  %3654 = vmatprep.subr.mxu0 0.0
  %3655 = vmatpush1.msra.mxu0 %v47
  %3656 = vmatprep.subr.mxu0 0.0
  %3657 = vmatpush1.msra.mxu0 %v46
  %3658 = vmatprep.subr.mxu0 0.0
  %3659 = vmatpush1.msra.mxu0 %v45
  %3660 = vmatprep.subr.mxu0 0.0
  %3661 = vmatpush1.msra.mxu0 %v44
  %3662 = vmatprep.subr.mxu0 0.0
  %3663 = vmatpush1.msra.mxu0 %v43
  %3664 = vmatprep.subr.mxu0 0.0
  %3665 = vmatpush1.msra.mxu0 %v42
  %3666 = vmatprep.subr.mxu0 0.0
  %3667 = vmatpush1.msra.mxu0 %v41
  %3668 = vmatprep.subr.mxu0 0.0
  %3669 = vmatpush1.msra.mxu0 %v40
  %3670 = vmatprep.subr.mxu0 0.0
  %3671 = vmatpush1.msra.mxu0 %v39
  %3672 = vmatprep.subr.mxu0 0.0
  %3673 = vmatpush1.msra.mxu0 %v38
  %3674 = vmatprep.subr.mxu0 0.0
  %3675 = vmatpush1.msra.mxu0 %v37
  %3676 = vmatprep.subr.mxu0 0.0
  %3677 = vmatpush1.msra.mxu0 %v36
  %3678 = vmatprep.subr.mxu0 0.0
  %3679 = vmatpush1.msra.mxu0 %v35
  %3680 = vmatprep.subr.mxu0 0.0
  %3681 = vmatpush2.msra.mxu0 %v66
  %3682 = vmatprep.subr.mxu0 0.0
  %3683 = vmatpush2.msra.mxu0 %v65
  %3684 = vmatprep.subr.mxu0 0.0
  %3685 = vmatpush2.msra.mxu0 %v64
  %3686 = vmatprep.subr.mxu0 0.0
  %3687 = vmatpush2.msra.mxu0 %v63
  %3688 = vmatprep.subr.mxu0 0.0
  %3689 = vmatpush2.msra.mxu0 %v62
  %3690 = vmatprep.subr.mxu0 0.0
  %3691 = vmatpush2.msra.mxu0 %v61
  %3692 = vmatprep.subr.mxu0 0.0
  %3693 = vmatpush2.msra.mxu0 %v60
  %3694 = vmatprep.subr.mxu0 0.0
  %3695 = vmatpush2.msra.mxu0 %v59
  %3696 = vmatprep.subr.mxu0 0.0
  %3697 = vmatpush2.msra.mxu0 %v58
  %3698 = vmatprep.subr.mxu0 0.0
  %3699 = vmatpush2.msra.mxu0 %v57
  %3700 = vmatprep.subr.mxu0 0.0
  %3701 = vmatpush2.msra.mxu0 %v56
  %3702 = vmatprep.subr.mxu0 0.0
  %3703 = vmatpush2.msra.mxu0 %v55
  %3704 = vmatprep.subr.mxu0 0.0
  %3705 = vmatpush2.msra.mxu0 %v54
  %3706 = vmatprep.subr.mxu0 0.0
  %3707 = vmatpush2.msra.mxu0 %v53
  %3708 = vmatprep.subr.mxu0 0.0
  %3709 = vmatpush2.msra.mxu0 %v52
  %3710 = vmatprep.subr.mxu0 0.0
  %3711 = vmatpush2.msra.mxu0 %v51
  %3712 = vmatprep.mubr.f32.mxu0 %v3644
  %3713 = vmatmul.mubr.f32.gmra.mxu0 %v3640
  %v3714 = vpop.f32.mrf.mxu0
  %v3715 = vadd.f32 %v1384, %v3714
  %v3716 = vpop.f32.mrf.mxu0
  %3717 = vmatprep.mubr.f32.mxu0 %v3645
  %3718 = vmatmul.mubr.f32.gmra.mxu0 %v3641
  %v3719 = vpop.f32.mrf.mxu0
  %v3720 = vadd.f32 %v1384, %v3719
  %v3721 = vpop.f32.mrf.mxu0
  %3722 = vmatprep.mubr.f32.mxu0 %v3646
  %3723 = vmatmul.mubr.f32.gmra.mxu0 %v3642
  %v3724 = vpop.f32.mrf.mxu0
  %v3725 = vadd.f32 %v1384, %v3724
  %v3726 = vpop.f32.mrf.mxu0
  %3727 = vmatprep.mubr.f32.mxu0 %v3647
  %3728 = vmatmul.mubr.f32.gmra.mxu0 %v3643
  %v3729 = vpop.f32.mrf.mxu0
  %v3730 = vadd.f32 %v1384, %v3729
  %v3731 = vpop.f32.mrf.mxu0
  %3732 = vdwg.mxu0
  %vm3733 = vcmp.gt.f32.partialorder %v3715, 0.0
  %vm3734 = vcmp.gt.f32.partialorder %v3720, 0.0
  %vm3735 = vcmp.gt.f32.partialorder %v3725, 0.0
  %vm3736 = vcmp.gt.f32.partialorder %v3730, 0.0
  %v3737 = vmul.f32 %v3715, 0.2
  %v3738 = vmul.f32 %v3720, 0.2
  %v3739 = vmul.f32 %v3725, 0.2
  %v3740 = vmul.f32 %v3730, 0.2
  %v3741 = vsel %vm3733, %v3715, %v3737
  %v3742 = vsel %vm3734, %v3720, %v3738
  %v3743 = vsel %vm3735, %v3725, %v3739
  %v3744 = vsel %vm3736, %v3730, %v3740
  %v3745 = vmax.f32 %v2612, %v3741
  %v3746 = vmax.f32 %v2613, %v3742
  %v3747 = vmax.f32 %v2614, %v3743
  %v3748 = vmax.f32 %v2615, %v3744
  %v3749 = vld [vmem:[%s0 + $0x3] sm:$0x1]
  %v3750 = vld [vmem:[%s0 + $0x7] sm:$0x1]
  %v3751 = vld [vmem:[%s0 + $0xb] sm:$0x1]
  %v3752 = vld [vmem:[%s0 + $0xf] sm:$0x1]
  %v3753 = vld [vmem:[%s0 + $0x13] sm:$0x1]
  %v3754 = vld [vmem:[%s0 + $0x17] sm:$0x1]
  %v3755 = vld [vmem:[%s0 + $0x1b] sm:$0x1]
  %v3756 = vld [vmem:[%s0 + $0x1f] sm:$0x1]
  %v3757 = vld [vmem:[%s0 + $0x23] sm:$0x1]
  %v3758 = vld [vmem:[%s0 + $0x27] sm:$0x1]
  %v3759 = vld [vmem:[%s0 + $0x2b] sm:$0x1]
  %v3760 = vld [vmem:[%s0 + $0x2f] sm:$0x1]
  %v3761 = vld [vmem:[%s0 + $0x33] sm:$0x1]
  %v3762 = vld [vmem:[%s0 + $0x37] sm:$0x1]
  %v3763 = vld [vmem:[%s0 + $0x3b] sm:$0x1]
  %v3764 = vld [vmem:[%s0 + $0x3f] sm:$0x1]
  %v3765 = vld [vmem:[%s0 + $0x43] sm:$0x1]
  %v3766 = vld [vmem:[%s0 + $0x47] sm:$0x1]
  %v3767 = vld [vmem:[%s0 + $0x4b] sm:$0x1]
  %v3768 = vld [vmem:[%s0 + $0x4f] sm:$0x1]
  %v3769 = vld [vmem:[%s0 + $0x53] sm:$0x1]
  %v3770 = vld [vmem:[%s0 + $0x57] sm:$0x1]
  %v3771 = vld [vmem:[%s0 + $0x5b] sm:$0x1]
  %v3772 = vld [vmem:[%s0 + $0x5f] sm:$0x1]
  %v3773 = vld [vmem:[%s0 + $0x63] sm:$0x1]
  %v3774 = vld [vmem:[%s0 + $0x67] sm:$0x1]
  %v3775 = vld [vmem:[%s0 + $0x6b] sm:$0x1]
  %v3776 = vld [vmem:[%s0 + $0x6f] sm:$0x1]
  %v3777 = vld [vmem:[%s0 + $0x73] sm:$0x1]
  %v3778 = vld [vmem:[%s0 + $0x77] sm:$0x1]
  %v3779 = vld [vmem:[%s0 + $0x7b] sm:$0x1]
  %v3780 = vld [vmem:[%s0 + $0x7f] sm:$0x1]
  %v3781 = vadd.f32 %v3749, %v68
  %v3782 = vadd.f32 %v3750, %v120
  %v3783 = vadd.f32 %v3751, %v121
  %v3784 = vadd.f32 %v3752, %v122
  %v3785 = vadd.f32 %v3753, %v123
  %v3786 = vadd.f32 %v3754, %v124
  %v3787 = vadd.f32 %v3755, %v125
  %v3788 = vadd.f32 %v3756, %v126
  %v3789 = vadd.f32 %v3757, %v69
  %v3790 = vadd.f32 %v3758, %v127
  %v3791 = vadd.f32 %v3759, %v128
  %v3792 = vadd.f32 %v3760, %v129
  %v3793 = vadd.f32 %v3761, %v130
  %v3794 = vadd.f32 %v3762, %v131
  %v3795 = vadd.f32 %v3763, %v132
  %v3796 = vadd.f32 %v3764, %v133
  %v3797 = vadd.f32 %v3765, %v70
  %v3798 = vadd.f32 %v3766, %v134
  %v3799 = vadd.f32 %v3767, %v135
  %v3800 = vadd.f32 %v3768, %v136
  %v3801 = vadd.f32 %v3769, %v137
  %v3802 = vadd.f32 %v3770, %v138
  %v3803 = vadd.f32 %v3771, %v139
  %v3804 = vadd.f32 %v3772, %v140
  %v3805 = vadd.f32 %v3773, %v71
  %v3806 = vadd.f32 %v3774, %v141
  %v3807 = vadd.f32 %v3775, %v142
  %v3808 = vadd.f32 %v3776, %v143
  %v3809 = vadd.f32 %v3777, %v144
  %v3810 = vadd.f32 %v3778, %v145
  %v3811 = vadd.f32 %v3779, %v146
  %v3812 = vadd.f32 %v3780, %v147
  %vm3813 = vcmp.gt.f32.partialorder %v3781, 0.0
  %vm3814 = vcmp.gt.f32.partialorder %v3782, 0.0
  %vm3815 = vcmp.gt.f32.partialorder %v3783, 0.0
  %vm3816 = vcmp.gt.f32.partialorder %v3784, 0.0
  %vm3817 = vcmp.gt.f32.partialorder %v3785, 0.0
  %vm3818 = vcmp.gt.f32.partialorder %v3786, 0.0
  %vm3819 = vcmp.gt.f32.partialorder %v3787, 0.0
  %vm3820 = vcmp.gt.f32.partialorder %v3788, 0.0
  %vm3821 = vcmp.gt.f32.partialorder %v3789, 0.0
  %vm3822 = vcmp.gt.f32.partialorder %v3790, 0.0
  %vm3823 = vcmp.gt.f32.partialorder %v3791, 0.0
  %vm3824 = vcmp.gt.f32.partialorder %v3792, 0.0
  %vm3825 = vcmp.gt.f32.partialorder %v3793, 0.0
  %vm3826 = vcmp.gt.f32.partialorder %v3794, 0.0
  %vm3827 = vcmp.gt.f32.partialorder %v3795, 0.0
  %vm3828 = vcmp.gt.f32.partialorder %v3796, 0.0
  %vm3829 = vcmp.gt.f32.partialorder %v3797, 0.0
  %vm3830 = vcmp.gt.f32.partialorder %v3798, 0.0
  %vm3831 = vcmp.gt.f32.partialorder %v3799, 0.0
  %vm3832 = vcmp.gt.f32.partialorder %v3800, 0.0
  %vm3833 = vcmp.gt.f32.partialorder %v3801, 0.0
  %vm3834 = vcmp.gt.f32.partialorder %v3802, 0.0
  %vm3835 = vcmp.gt.f32.partialorder %v3803, 0.0
  %vm3836 = vcmp.gt.f32.partialorder %v3804, 0.0
  %vm3837 = vcmp.gt.f32.partialorder %v3805, 0.0
  %vm3838 = vcmp.gt.f32.partialorder %v3806, 0.0
  %vm3839 = vcmp.gt.f32.partialorder %v3807, 0.0
  %vm3840 = vcmp.gt.f32.partialorder %v3808, 0.0
  %vm3841 = vcmp.gt.f32.partialorder %v3809, 0.0
  %vm3842 = vcmp.gt.f32.partialorder %v3810, 0.0
  %vm3843 = vcmp.gt.f32.partialorder %v3811, 0.0
  %vm3844 = vcmp.gt.f32.partialorder %v3812, 0.0
  %v3845 = vmul.f32 %v3781, 0.2
  %v3846 = vmul.f32 %v3782, 0.2
  %v3847 = vmul.f32 %v3783, 0.2
  %v3848 = vmul.f32 %v3784, 0.2
  %v3849 = vmul.f32 %v3785, 0.2
  %v3850 = vmul.f32 %v3786, 0.2
  %v3851 = vmul.f32 %v3787, 0.2
  %v3852 = vmul.f32 %v3788, 0.2
  %v3853 = vmul.f32 %v3789, 0.2
  %v3854 = vmul.f32 %v3790, 0.2
  %v3855 = vmul.f32 %v3791, 0.2
  %v3856 = vmul.f32 %v3792, 0.2
  %v3857 = vmul.f32 %v3793, 0.2
  %v3858 = vmul.f32 %v3794, 0.2
  %v3859 = vmul.f32 %v3795, 0.2
  %v3860 = vmul.f32 %v3796, 0.2
  %v3861 = vmul.f32 %v3797, 0.2
  %v3862 = vmul.f32 %v3798, 0.2
  %v3863 = vmul.f32 %v3799, 0.2
  %v3864 = vmul.f32 %v3800, 0.2
  %v3865 = vmul.f32 %v3801, 0.2
  %v3866 = vmul.f32 %v3802, 0.2
  %v3867 = vmul.f32 %v3803, 0.2
  %v3868 = vmul.f32 %v3804, 0.2
  %v3869 = vmul.f32 %v3805, 0.2
  %v3870 = vmul.f32 %v3806, 0.2
  %v3871 = vmul.f32 %v3807, 0.2
  %v3872 = vmul.f32 %v3808, 0.2
  %v3873 = vmul.f32 %v3809, 0.2
  %v3874 = vmul.f32 %v3810, 0.2
  %v3875 = vmul.f32 %v3811, 0.2
  %v3876 = vmul.f32 %v3812, 0.2
  %v3877 = vsel %vm3813, %v3781, %v3845
  %v3878 = vsel %vm3814, %v3782, %v3846
  %v3879 = vsel %vm3815, %v3783, %v3847
  %v3880 = vsel %vm3816, %v3784, %v3848
  %v3881 = vsel %vm3817, %v3785, %v3849
  %v3882 = vsel %vm3818, %v3786, %v3850
  %v3883 = vsel %vm3819, %v3787, %v3851
  %v3884 = vsel %vm3820, %v3788, %v3852
  %v3885 = vsel %vm3821, %v3789, %v3853
  %v3886 = vsel %vm3822, %v3790, %v3854
  %v3887 = vsel %vm3823, %v3791, %v3855
  %v3888 = vsel %vm3824, %v3792, %v3856
  %v3889 = vsel %vm3825, %v3793, %v3857
  %v3890 = vsel %vm3826, %v3794, %v3858
  %v3891 = vsel %vm3827, %v3795, %v3859
  %v3892 = vsel %vm3828, %v3796, %v3860
  %v3893 = vsel %vm3829, %v3797, %v3861
  %v3894 = vsel %vm3830, %v3798, %v3862
  %v3895 = vsel %vm3831, %v3799, %v3863
  %v3896 = vsel %vm3832, %v3800, %v3864
  %v3897 = vsel %vm3833, %v3801, %v3865
  %v3898 = vsel %vm3834, %v3802, %v3866
  %v3899 = vsel %vm3835, %v3803, %v3867
  %v3900 = vsel %vm3836, %v3804, %v3868
  %v3901 = vsel %vm3837, %v3805, %v3869
  %v3902 = vsel %vm3838, %v3806, %v3870
  %v3903 = vsel %vm3839, %v3807, %v3871
  %v3904 = vsel %vm3840, %v3808, %v3872
  %v3905 = vsel %vm3841, %v3809, %v3873
  %v3906 = vsel %vm3842, %v3810, %v3874
  %v3907 = vsel %vm3843, %v3811, %v3875
  %v3908 = vsel %vm3844, %v3812, %v3876
  %v3909 = vld [vmem:[%s1 + $0x3] sm:$0x1]
  %v3910 = vld [vmem:[%s1 + $0x7] sm:$0x1]
  %v3911 = vld [vmem:[%s1 + $0xb] sm:$0x1]
  %v3912 = vld [vmem:[%s1 + $0xf] sm:$0x1]
  %v3913 = vld [vmem:[%s1 + $0x13] sm:$0x1]
  %v3914 = vld [vmem:[%s1 + $0x17] sm:$0x1]
  %v3915 = vld [vmem:[%s1 + $0x1b] sm:$0x1]
  %v3916 = vld [vmem:[%s1 + $0x1f] sm:$0x1]
  %v3917 = vld [vmem:[%s1 + $0x23] sm:$0x1]
  %v3918 = vld [vmem:[%s1 + $0x27] sm:$0x1]
  %v3919 = vld [vmem:[%s1 + $0x2b] sm:$0x1]
  %v3920 = vld [vmem:[%s1 + $0x2f] sm:$0x1]
  %v3921 = vld [vmem:[%s1 + $0x33] sm:$0x1]
  %v3922 = vld [vmem:[%s1 + $0x37] sm:$0x1]
  %v3923 = vld [vmem:[%s1 + $0x3b] sm:$0x1]
  %v3924 = vld [vmem:[%s1 + $0x3f] sm:$0x1]
  %v3925 = vld [vmem:[%s1 + $0x43] sm:$0x1]
  %v3926 = vld [vmem:[%s1 + $0x47] sm:$0x1]
  %v3927 = vld [vmem:[%s1 + $0x4b] sm:$0x1]
  %v3928 = vld [vmem:[%s1 + $0x4f] sm:$0x1]
  %v3929 = vld [vmem:[%s1 + $0x53] sm:$0x1]
  %v3930 = vld [vmem:[%s1 + $0x57] sm:$0x1]
  %v3931 = vld [vmem:[%s1 + $0x5b] sm:$0x1]
  %v3932 = vld [vmem:[%s1 + $0x5f] sm:$0x1]
  %v3933 = vld [vmem:[%s1 + $0x63] sm:$0x1]
  %v3934 = vld [vmem:[%s1 + $0x67] sm:$0x1]
  %v3935 = vld [vmem:[%s1 + $0x6b] sm:$0x1]
  %v3936 = vld [vmem:[%s1 + $0x6f] sm:$0x1]
  %v3937 = vld [vmem:[%s1 + $0x73] sm:$0x1]
  %v3938 = vld [vmem:[%s1 + $0x77] sm:$0x1]
  %v3939 = vld [vmem:[%s1 + $0x7b] sm:$0x1]
  %v3940 = vld [vmem:[%s1 + $0x7f] sm:$0x1]
  %v3941 = vadd.f32 %v3909, %v72
  %v3942 = vadd.f32 %v3910, %v344
  %v3943 = vadd.f32 %v3911, %v345
  %v3944 = vadd.f32 %v3912, %v346
  %v3945 = vadd.f32 %v3913, %v347
  %v3946 = vadd.f32 %v3914, %v348
  %v3947 = vadd.f32 %v3915, %v349
  %v3948 = vadd.f32 %v3916, %v350
  %v3949 = vadd.f32 %v3917, %v73
  %v3950 = vadd.f32 %v3918, %v351
  %v3951 = vadd.f32 %v3919, %v352
  %v3952 = vadd.f32 %v3920, %v353
  %v3953 = vadd.f32 %v3921, %v354
  %v3954 = vadd.f32 %v3922, %v355
  %v3955 = vadd.f32 %v3923, %v356
  %v3956 = vadd.f32 %v3924, %v357
  %v3957 = vadd.f32 %v3925, %v74
  %v3958 = vadd.f32 %v3926, %v358
  %v3959 = vadd.f32 %v3927, %v359
  %v3960 = vadd.f32 %v3928, %v360
  %v3961 = vadd.f32 %v3929, %v361
  %v3962 = vadd.f32 %v3930, %v362
  %v3963 = vadd.f32 %v3931, %v363
  %v3964 = vadd.f32 %v3932, %v364
  %v3965 = vadd.f32 %v3933, %v75
  %v3966 = vadd.f32 %v3934, %v365
  %v3967 = vadd.f32 %v3935, %v366
  %v3968 = vadd.f32 %v3936, %v367
  %v3969 = vadd.f32 %v3937, %v368
  %v3970 = vadd.f32 %v3938, %v369
  %v3971 = vadd.f32 %v3939, %v370
  %v3972 = vadd.f32 %v3940, %v371
  %vm3973 = vcmp.gt.f32.partialorder %v3941, 0.0
  %vm3974 = vcmp.gt.f32.partialorder %v3942, 0.0
  %vm3975 = vcmp.gt.f32.partialorder %v3943, 0.0
  %vm3976 = vcmp.gt.f32.partialorder %v3944, 0.0
  %vm3977 = vcmp.gt.f32.partialorder %v3945, 0.0
  %vm3978 = vcmp.gt.f32.partialorder %v3946, 0.0
  %vm3979 = vcmp.gt.f32.partialorder %v3947, 0.0
  %vm3980 = vcmp.gt.f32.partialorder %v3948, 0.0
  %vm3981 = vcmp.gt.f32.partialorder %v3949, 0.0
  %vm3982 = vcmp.gt.f32.partialorder %v3950, 0.0
  %vm3983 = vcmp.gt.f32.partialorder %v3951, 0.0
  %vm3984 = vcmp.gt.f32.partialorder %v3952, 0.0
  %vm3985 = vcmp.gt.f32.partialorder %v3953, 0.0
  %vm3986 = vcmp.gt.f32.partialorder %v3954, 0.0
  %vm3987 = vcmp.gt.f32.partialorder %v3955, 0.0
  %vm3988 = vcmp.gt.f32.partialorder %v3956, 0.0
  %vm3989 = vcmp.gt.f32.partialorder %v3957, 0.0
  %vm3990 = vcmp.gt.f32.partialorder %v3958, 0.0
  %vm3991 = vcmp.gt.f32.partialorder %v3959, 0.0
  %vm3992 = vcmp.gt.f32.partialorder %v3960, 0.0
  %vm3993 = vcmp.gt.f32.partialorder %v3961, 0.0
  %vm3994 = vcmp.gt.f32.partialorder %v3962, 0.0
  %vm3995 = vcmp.gt.f32.partialorder %v3963, 0.0
  %vm3996 = vcmp.gt.f32.partialorder %v3964, 0.0
  %vm3997 = vcmp.gt.f32.partialorder %v3965, 0.0
  %vm3998 = vcmp.gt.f32.partialorder %v3966, 0.0
  %vm3999 = vcmp.gt.f32.partialorder %v3967, 0.0
  %vm4000 = vcmp.gt.f32.partialorder %v3968, 0.0
  %vm4001 = vcmp.gt.f32.partialorder %v3969, 0.0
  %vm4002 = vcmp.gt.f32.partialorder %v3970, 0.0
  %vm4003 = vcmp.gt.f32.partialorder %v3971, 0.0
  %vm4004 = vcmp.gt.f32.partialorder %v3972, 0.0
  %v4005 = vmul.f32 %v3941, 0.2
  %v4006 = vmul.f32 %v3942, 0.2
  %v4007 = vmul.f32 %v3943, 0.2
  %v4008 = vmul.f32 %v3944, 0.2
  %v4009 = vmul.f32 %v3945, 0.2
  %v4010 = vmul.f32 %v3946, 0.2
  %v4011 = vmul.f32 %v3947, 0.2
  %v4012 = vmul.f32 %v3948, 0.2
  %v4013 = vmul.f32 %v3949, 0.2
  %v4014 = vmul.f32 %v3950, 0.2
  %v4015 = vmul.f32 %v3951, 0.2
  %v4016 = vmul.f32 %v3952, 0.2
  %v4017 = vmul.f32 %v3953, 0.2
  %v4018 = vmul.f32 %v3954, 0.2
  %v4019 = vmul.f32 %v3955, 0.2
  %v4020 = vmul.f32 %v3956, 0.2
  %v4021 = vmul.f32 %v3957, 0.2
  %v4022 = vmul.f32 %v3958, 0.2
  %v4023 = vmul.f32 %v3959, 0.2
  %v4024 = vmul.f32 %v3960, 0.2
  %v4025 = vmul.f32 %v3961, 0.2
  %v4026 = vmul.f32 %v3962, 0.2
  %v4027 = vmul.f32 %v3963, 0.2
  %v4028 = vmul.f32 %v3964, 0.2
  %v4029 = vmul.f32 %v3965, 0.2
  %v4030 = vmul.f32 %v3966, 0.2
  %v4031 = vmul.f32 %v3967, 0.2
  %v4032 = vmul.f32 %v3968, 0.2
  %v4033 = vmul.f32 %v3969, 0.2
  %v4034 = vmul.f32 %v3970, 0.2
  %v4035 = vmul.f32 %v3971, 0.2
  %v4036 = vmul.f32 %v3972, 0.2
  %v4037 = vsel %vm3973, %v3941, %v4005
  %v4038 = vsel %vm3974, %v3942, %v4006
  %v4039 = vsel %vm3975, %v3943, %v4007
  %v4040 = vsel %vm3976, %v3944, %v4008
  %v4041 = vsel %vm3977, %v3945, %v4009
  %v4042 = vsel %vm3978, %v3946, %v4010
  %v4043 = vsel %vm3979, %v3947, %v4011
  %v4044 = vsel %vm3980, %v3948, %v4012
  %v4045 = vsel %vm3981, %v3949, %v4013
  %v4046 = vsel %vm3982, %v3950, %v4014
  %v4047 = vsel %vm3983, %v3951, %v4015
  %v4048 = vsel %vm3984, %v3952, %v4016
  %v4049 = vsel %vm3985, %v3953, %v4017
  %v4050 = vsel %vm3986, %v3954, %v4018
  %v4051 = vsel %vm3987, %v3955, %v4019
  %v4052 = vsel %vm3988, %v3956, %v4020
  %v4053 = vsel %vm3989, %v3957, %v4021
  %v4054 = vsel %vm3990, %v3958, %v4022
  %v4055 = vsel %vm3991, %v3959, %v4023
  %v4056 = vsel %vm3992, %v3960, %v4024
  %v4057 = vsel %vm3993, %v3961, %v4025
  %v4058 = vsel %vm3994, %v3962, %v4026
  %v4059 = vsel %vm3995, %v3963, %v4027
  %v4060 = vsel %vm3996, %v3964, %v4028
  %v4061 = vsel %vm3997, %v3965, %v4029
  %v4062 = vsel %vm3998, %v3966, %v4030
  %v4063 = vsel %vm3999, %v3967, %v4031
  %v4064 = vsel %vm4000, %v3968, %v4032
  %v4065 = vsel %vm4001, %v3969, %v4033
  %v4066 = vsel %vm4002, %v3970, %v4034
  %v4067 = vsel %vm4003, %v3971, %v4035
  %v4068 = vsel %vm4004, %v3972, %v4036
  %v4069 = vld [vmem:[%s2 + $0x3] sm:$0x1]
  %v4070 = vld [vmem:[%s2 + $0x7] sm:$0x1]
  %v4071 = vld [vmem:[%s2 + $0xb] sm:$0x1]
  %v4072 = vld [vmem:[%s2 + $0xf] sm:$0x1]
  %v4073 = vld [vmem:[%s2 + $0x13] sm:$0x1]
  %v4074 = vld [vmem:[%s2 + $0x17] sm:$0x1]
  %v4075 = vld [vmem:[%s2 + $0x1b] sm:$0x1]
  %v4076 = vld [vmem:[%s2 + $0x1f] sm:$0x1]
  %v4077 = vld [vmem:[%s2 + $0x23] sm:$0x1]
  %v4078 = vld [vmem:[%s2 + $0x27] sm:$0x1]
  %v4079 = vld [vmem:[%s2 + $0x2b] sm:$0x1]
  %v4080 = vld [vmem:[%s2 + $0x2f] sm:$0x1]
  %v4081 = vld [vmem:[%s2 + $0x33] sm:$0x1]
  %v4082 = vld [vmem:[%s2 + $0x37] sm:$0x1]
  %v4083 = vld [vmem:[%s2 + $0x3b] sm:$0x1]
  %v4084 = vld [vmem:[%s2 + $0x3f] sm:$0x1]
  %v4085 = vld [vmem:[%s2 + $0x43] sm:$0x1]
  %v4086 = vld [vmem:[%s2 + $0x47] sm:$0x1]
  %v4087 = vld [vmem:[%s2 + $0x4b] sm:$0x1]
  %v4088 = vld [vmem:[%s2 + $0x4f] sm:$0x1]
  %v4089 = vld [vmem:[%s2 + $0x53] sm:$0x1]
  %v4090 = vld [vmem:[%s2 + $0x57] sm:$0x1]
  %v4091 = vld [vmem:[%s2 + $0x5b] sm:$0x1]
  %v4092 = vld [vmem:[%s2 + $0x5f] sm:$0x1]
  %v4093 = vld [vmem:[%s2 + $0x63] sm:$0x1]
  %v4094 = vld [vmem:[%s2 + $0x67] sm:$0x1]
  %v4095 = vld [vmem:[%s2 + $0x6b] sm:$0x1]
  %v4096 = vld [vmem:[%s2 + $0x6f] sm:$0x1]
  %v4097 = vld [vmem:[%s2 + $0x73] sm:$0x1]
  %v4098 = vld [vmem:[%s2 + $0x77] sm:$0x1]
  %v4099 = vld [vmem:[%s2 + $0x7b] sm:$0x1]
  %v4100 = vld [vmem:[%s2 + $0x7f] sm:$0x1]
  %v4101 = vadd.f32 %v4069, %v76
  %v4102 = vadd.f32 %v4070, %v568
  %v4103 = vadd.f32 %v4071, %v569
  %v4104 = vadd.f32 %v4072, %v570
  %v4105 = vadd.f32 %v4073, %v571
  %v4106 = vadd.f32 %v4074, %v572
  %v4107 = vadd.f32 %v4075, %v573
  %v4108 = vadd.f32 %v4076, %v574
  %v4109 = vadd.f32 %v4077, %v77
  %v4110 = vadd.f32 %v4078, %v575
  %v4111 = vadd.f32 %v4079, %v576
  %v4112 = vadd.f32 %v4080, %v577
  %v4113 = vadd.f32 %v4081, %v578
  %v4114 = vadd.f32 %v4082, %v579
  %v4115 = vadd.f32 %v4083, %v580
  %v4116 = vadd.f32 %v4084, %v581
  %v4117 = vadd.f32 %v4085, %v78
  %v4118 = vadd.f32 %v4086, %v582
  %v4119 = vadd.f32 %v4087, %v583
  %v4120 = vadd.f32 %v4088, %v584
  %v4121 = vadd.f32 %v4089, %v585
  %v4122 = vadd.f32 %v4090, %v586
  %v4123 = vadd.f32 %v4091, %v587
  %v4124 = vadd.f32 %v4092, %v588
  %v4125 = vadd.f32 %v4093, %v79
  %v4126 = vadd.f32 %v4094, %v589
  %v4127 = vadd.f32 %v4095, %v590
  %v4128 = vadd.f32 %v4096, %v591
  %v4129 = vadd.f32 %v4097, %v592
  %v4130 = vadd.f32 %v4098, %v593
  %v4131 = vadd.f32 %v4099, %v594
  %v4132 = vadd.f32 %v4100, %v595
  %vm4133 = vcmp.gt.f32.partialorder %v4101, 0.0
  %vm4134 = vcmp.gt.f32.partialorder %v4102, 0.0
  %vm4135 = vcmp.gt.f32.partialorder %v4103, 0.0
  %vm4136 = vcmp.gt.f32.partialorder %v4104, 0.0
  %vm4137 = vcmp.gt.f32.partialorder %v4105, 0.0
  %vm4138 = vcmp.gt.f32.partialorder %v4106, 0.0
  %vm4139 = vcmp.gt.f32.partialorder %v4107, 0.0
  %vm4140 = vcmp.gt.f32.partialorder %v4108, 0.0
  %vm4141 = vcmp.gt.f32.partialorder %v4109, 0.0
  %vm4142 = vcmp.gt.f32.partialorder %v4110, 0.0
  %vm4143 = vcmp.gt.f32.partialorder %v4111, 0.0
  %vm4144 = vcmp.gt.f32.partialorder %v4112, 0.0
  %vm4145 = vcmp.gt.f32.partialorder %v4113, 0.0
  %vm4146 = vcmp.gt.f32.partialorder %v4114, 0.0
  %vm4147 = vcmp.gt.f32.partialorder %v4115, 0.0
  %vm4148 = vcmp.gt.f32.partialorder %v4116, 0.0
  %vm4149 = vcmp.gt.f32.partialorder %v4117, 0.0
  %vm4150 = vcmp.gt.f32.partialorder %v4118, 0.0
  %vm4151 = vcmp.gt.f32.partialorder %v4119, 0.0
  %vm4152 = vcmp.gt.f32.partialorder %v4120, 0.0
  %vm4153 = vcmp.gt.f32.partialorder %v4121, 0.0
  %vm4154 = vcmp.gt.f32.partialorder %v4122, 0.0
  %vm4155 = vcmp.gt.f32.partialorder %v4123, 0.0
  %vm4156 = vcmp.gt.f32.partialorder %v4124, 0.0
  %vm4157 = vcmp.gt.f32.partialorder %v4125, 0.0
  %vm4158 = vcmp.gt.f32.partialorder %v4126, 0.0
  %vm4159 = vcmp.gt.f32.partialorder %v4127, 0.0
  %vm4160 = vcmp.gt.f32.partialorder %v4128, 0.0
  %vm4161 = vcmp.gt.f32.partialorder %v4129, 0.0
  %vm4162 = vcmp.gt.f32.partialorder %v4130, 0.0
  %vm4163 = vcmp.gt.f32.partialorder %v4131, 0.0
  %vm4164 = vcmp.gt.f32.partialorder %v4132, 0.0
  %v4165 = vmul.f32 %v4101, 0.2
  %v4166 = vmul.f32 %v4102, 0.2
  %v4167 = vmul.f32 %v4103, 0.2
  %v4168 = vmul.f32 %v4104, 0.2
  %v4169 = vmul.f32 %v4105, 0.2
  %v4170 = vmul.f32 %v4106, 0.2
  %v4171 = vmul.f32 %v4107, 0.2
  %v4172 = vmul.f32 %v4108, 0.2
  %v4173 = vmul.f32 %v4109, 0.2
  %v4174 = vmul.f32 %v4110, 0.2
  %v4175 = vmul.f32 %v4111, 0.2
  %v4176 = vmul.f32 %v4112, 0.2
  %v4177 = vmul.f32 %v4113, 0.2
  %v4178 = vmul.f32 %v4114, 0.2
  %v4179 = vmul.f32 %v4115, 0.2
  %v4180 = vmul.f32 %v4116, 0.2
  %v4181 = vmul.f32 %v4117, 0.2
  %v4182 = vmul.f32 %v4118, 0.2
  %v4183 = vmul.f32 %v4119, 0.2
  %v4184 = vmul.f32 %v4120, 0.2
  %v4185 = vmul.f32 %v4121, 0.2
  %v4186 = vmul.f32 %v4122, 0.2
  %v4187 = vmul.f32 %v4123, 0.2
  %v4188 = vmul.f32 %v4124, 0.2
  %v4189 = vmul.f32 %v4125, 0.2
  %v4190 = vmul.f32 %v4126, 0.2
  %v4191 = vmul.f32 %v4127, 0.2
  %v4192 = vmul.f32 %v4128, 0.2
  %v4193 = vmul.f32 %v4129, 0.2
  %v4194 = vmul.f32 %v4130, 0.2
  %v4195 = vmul.f32 %v4131, 0.2
  %v4196 = vmul.f32 %v4132, 0.2
  %v4197 = vsel %vm4133, %v4101, %v4165
  %v4198 = vsel %vm4134, %v4102, %v4166
  %v4199 = vsel %vm4135, %v4103, %v4167
  %v4200 = vsel %vm4136, %v4104, %v4168
  %v4201 = vsel %vm4137, %v4105, %v4169
  %v4202 = vsel %vm4138, %v4106, %v4170
  %v4203 = vsel %vm4139, %v4107, %v4171
  %v4204 = vsel %vm4140, %v4108, %v4172
  %v4205 = vsel %vm4141, %v4109, %v4173
  %v4206 = vsel %vm4142, %v4110, %v4174
  %v4207 = vsel %vm4143, %v4111, %v4175
  %v4208 = vsel %vm4144, %v4112, %v4176
  %v4209 = vsel %vm4145, %v4113, %v4177
  %v4210 = vsel %vm4146, %v4114, %v4178
  %v4211 = vsel %vm4147, %v4115, %v4179
  %v4212 = vsel %vm4148, %v4116, %v4180
  %v4213 = vsel %vm4149, %v4117, %v4181
  %v4214 = vsel %vm4150, %v4118, %v4182
  %v4215 = vsel %vm4151, %v4119, %v4183
  %v4216 = vsel %vm4152, %v4120, %v4184
  %v4217 = vsel %vm4153, %v4121, %v4185
  %v4218 = vsel %vm4154, %v4122, %v4186
  %v4219 = vsel %vm4155, %v4123, %v4187
  %v4220 = vsel %vm4156, %v4124, %v4188
  %v4221 = vsel %vm4157, %v4125, %v4189
  %v4222 = vsel %vm4158, %v4126, %v4190
  %v4223 = vsel %vm4159, %v4127, %v4191
  %v4224 = vsel %vm4160, %v4128, %v4192
  %v4225 = vsel %vm4161, %v4129, %v4193
  %v4226 = vsel %vm4162, %v4130, %v4194
  %v4227 = vsel %vm4163, %v4131, %v4195
  %v4228 = vsel %vm4164, %v4132, %v4196
  %v4229 = vld [vmem:[%s3 + $0x3] sm:$0x1]
  %v4230 = vld [vmem:[%s3 + $0x7] sm:$0x1]
  %v4231 = vld [vmem:[%s3 + $0xb] sm:$0x1]
  %v4232 = vld [vmem:[%s3 + $0xf] sm:$0x1]
  %v4233 = vld [vmem:[%s3 + $0x13] sm:$0x1]
  %v4234 = vld [vmem:[%s3 + $0x17] sm:$0x1]
  %v4235 = vld [vmem:[%s3 + $0x1b] sm:$0x1]
  %v4236 = vld [vmem:[%s3 + $0x1f] sm:$0x1]
  %v4237 = vld [vmem:[%s3 + $0x23] sm:$0x1]
  %v4238 = vld [vmem:[%s3 + $0x27] sm:$0x1]
  %v4239 = vld [vmem:[%s3 + $0x2b] sm:$0x1]
  %v4240 = vld [vmem:[%s3 + $0x2f] sm:$0x1]
  %v4241 = vld [vmem:[%s3 + $0x33] sm:$0x1]
  %v4242 = vld [vmem:[%s3 + $0x37] sm:$0x1]
  %v4243 = vld [vmem:[%s3 + $0x3b] sm:$0x1]
  %v4244 = vld [vmem:[%s3 + $0x3f] sm:$0x1]
  %v4245 = vld [vmem:[%s3 + $0x43] sm:$0x1]
  %v4246 = vld [vmem:[%s3 + $0x47] sm:$0x1]
  %v4247 = vld [vmem:[%s3 + $0x4b] sm:$0x1]
  %v4248 = vld [vmem:[%s3 + $0x4f] sm:$0x1]
  %v4249 = vld [vmem:[%s3 + $0x53] sm:$0x1]
  %v4250 = vld [vmem:[%s3 + $0x57] sm:$0x1]
  %v4251 = vld [vmem:[%s3 + $0x5b] sm:$0x1]
  %v4252 = vld [vmem:[%s3 + $0x5f] sm:$0x1]
  %v4253 = vld [vmem:[%s3 + $0x63] sm:$0x1]
  %v4254 = vld [vmem:[%s3 + $0x67] sm:$0x1]
  %v4255 = vld [vmem:[%s3 + $0x6b] sm:$0x1]
  %v4256 = vld [vmem:[%s3 + $0x6f] sm:$0x1]
  %v4257 = vld [vmem:[%s3 + $0x73] sm:$0x1]
  %v4258 = vld [vmem:[%s3 + $0x77] sm:$0x1]
  %v4259 = vld [vmem:[%s3 + $0x7b] sm:$0x1]
  %v4260 = vld [vmem:[%s3 + $0x7f] sm:$0x1]
  %v4261 = vadd.f32 %v4229, %v80
  %v4262 = vadd.f32 %v4230, %v792
  %v4263 = vadd.f32 %v4231, %v793
  %v4264 = vadd.f32 %v4232, %v794
  %v4265 = vadd.f32 %v4233, %v795
  %v4266 = vadd.f32 %v4234, %v796
  %v4267 = vadd.f32 %v4235, %v797
  %v4268 = vadd.f32 %v4236, %v798
  %v4269 = vadd.f32 %v4237, %v81
  %v4270 = vadd.f32 %v4238, %v799
  %v4271 = vadd.f32 %v4239, %v800
  %v4272 = vadd.f32 %v4240, %v801
  %v4273 = vadd.f32 %v4241, %v802
  %v4274 = vadd.f32 %v4242, %v803
  %v4275 = vadd.f32 %v4243, %v804
  %v4276 = vadd.f32 %v4244, %v805
  %v4277 = vadd.f32 %v4245, %v82
  %v4278 = vadd.f32 %v4246, %v806
  %v4279 = vadd.f32 %v4247, %v807
  %v4280 = vadd.f32 %v4248, %v808
  %v4281 = vadd.f32 %v4249, %v809
  %v4282 = vadd.f32 %v4250, %v810
  %v4283 = vadd.f32 %v4251, %v811
  %v4284 = vadd.f32 %v4252, %v812
  %v4285 = vadd.f32 %v4253, %v83
  %v4286 = vadd.f32 %v4254, %v813
  %v4287 = vadd.f32 %v4255, %v814
  %v4288 = vadd.f32 %v4256, %v815
  %v4289 = vadd.f32 %v4257, %v816
  %v4290 = vadd.f32 %v4258, %v817
  %v4291 = vadd.f32 %v4259, %v818
  %v4292 = vadd.f32 %v4260, %v819
  %vm4293 = vcmp.gt.f32.partialorder %v4261, 0.0
  %vm4294 = vcmp.gt.f32.partialorder %v4262, 0.0
  %vm4295 = vcmp.gt.f32.partialorder %v4263, 0.0
  %vm4296 = vcmp.gt.f32.partialorder %v4264, 0.0
  %vm4297 = vcmp.gt.f32.partialorder %v4265, 0.0
  %vm4298 = vcmp.gt.f32.partialorder %v4266, 0.0
  %vm4299 = vcmp.gt.f32.partialorder %v4267, 0.0
  %vm4300 = vcmp.gt.f32.partialorder %v4268, 0.0
  %vm4301 = vcmp.gt.f32.partialorder %v4269, 0.0
  %vm4302 = vcmp.gt.f32.partialorder %v4270, 0.0
  %vm4303 = vcmp.gt.f32.partialorder %v4271, 0.0
  %vm4304 = vcmp.gt.f32.partialorder %v4272, 0.0
  %vm4305 = vcmp.gt.f32.partialorder %v4273, 0.0
  %vm4306 = vcmp.gt.f32.partialorder %v4274, 0.0
  %vm4307 = vcmp.gt.f32.partialorder %v4275, 0.0
  %vm4308 = vcmp.gt.f32.partialorder %v4276, 0.0
  %vm4309 = vcmp.gt.f32.partialorder %v4277, 0.0
  %vm4310 = vcmp.gt.f32.partialorder %v4278, 0.0
  %vm4311 = vcmp.gt.f32.partialorder %v4279, 0.0
  %vm4312 = vcmp.gt.f32.partialorder %v4280, 0.0
  %vm4313 = vcmp.gt.f32.partialorder %v4281, 0.0
  %vm4314 = vcmp.gt.f32.partialorder %v4282, 0.0
  %vm4315 = vcmp.gt.f32.partialorder %v4283, 0.0
  %vm4316 = vcmp.gt.f32.partialorder %v4284, 0.0
  %vm4317 = vcmp.gt.f32.partialorder %v4285, 0.0
  %vm4318 = vcmp.gt.f32.partialorder %v4286, 0.0
  %vm4319 = vcmp.gt.f32.partialorder %v4287, 0.0
  %vm4320 = vcmp.gt.f32.partialorder %v4288, 0.0
  %vm4321 = vcmp.gt.f32.partialorder %v4289, 0.0
  %vm4322 = vcmp.gt.f32.partialorder %v4290, 0.0
  %vm4323 = vcmp.gt.f32.partialorder %v4291, 0.0
  %vm4324 = vcmp.gt.f32.partialorder %v4292, 0.0
  %v4325 = vmul.f32 %v4261, 0.2
  %v4326 = vmul.f32 %v4262, 0.2
  %v4327 = vmul.f32 %v4263, 0.2
  %v4328 = vmul.f32 %v4264, 0.2
  %v4329 = vmul.f32 %v4265, 0.2
  %v4330 = vmul.f32 %v4266, 0.2
  %v4331 = vmul.f32 %v4267, 0.2
  %v4332 = vmul.f32 %v4268, 0.2
  %v4333 = vmul.f32 %v4269, 0.2
  %v4334 = vmul.f32 %v4270, 0.2
  %v4335 = vmul.f32 %v4271, 0.2
  %v4336 = vmul.f32 %v4272, 0.2
  %v4337 = vmul.f32 %v4273, 0.2
  %v4338 = vmul.f32 %v4274, 0.2
  %v4339 = vmul.f32 %v4275, 0.2
  %v4340 = vmul.f32 %v4276, 0.2
  %v4341 = vmul.f32 %v4277, 0.2
  %v4342 = vmul.f32 %v4278, 0.2
  %v4343 = vmul.f32 %v4279, 0.2
  %v4344 = vmul.f32 %v4280, 0.2
  %v4345 = vmul.f32 %v4281, 0.2
  %v4346 = vmul.f32 %v4282, 0.2
  %v4347 = vmul.f32 %v4283, 0.2
  %v4348 = vmul.f32 %v4284, 0.2
  %v4349 = vmul.f32 %v4285, 0.2
  %v4350 = vmul.f32 %v4286, 0.2
  %v4351 = vmul.f32 %v4287, 0.2
  %v4352 = vmul.f32 %v4288, 0.2
  %v4353 = vmul.f32 %v4289, 0.2
  %v4354 = vmul.f32 %v4290, 0.2
  %v4355 = vmul.f32 %v4291, 0.2
  %v4356 = vmul.f32 %v4292, 0.2
  %v4357 = vsel %vm4293, %v4261, %v4325
  %v4358 = vsel %vm4294, %v4262, %v4326
  %v4359 = vsel %vm4295, %v4263, %v4327
  %v4360 = vsel %vm4296, %v4264, %v4328
  %v4361 = vsel %vm4297, %v4265, %v4329
  %v4362 = vsel %vm4298, %v4266, %v4330
  %v4363 = vsel %vm4299, %v4267, %v4331
  %v4364 = vsel %vm4300, %v4268, %v4332
  %v4365 = vsel %vm4301, %v4269, %v4333
  %v4366 = vsel %vm4302, %v4270, %v4334
  %v4367 = vsel %vm4303, %v4271, %v4335
  %v4368 = vsel %vm4304, %v4272, %v4336
  %v4369 = vsel %vm4305, %v4273, %v4337
  %v4370 = vsel %vm4306, %v4274, %v4338
  %v4371 = vsel %vm4307, %v4275, %v4339
  %v4372 = vsel %vm4308, %v4276, %v4340
  %v4373 = vsel %vm4309, %v4277, %v4341
  %v4374 = vsel %vm4310, %v4278, %v4342
  %v4375 = vsel %vm4311, %v4279, %v4343
  %v4376 = vsel %vm4312, %v4280, %v4344
  %v4377 = vsel %vm4313, %v4281, %v4345
  %v4378 = vsel %vm4314, %v4282, %v4346
  %v4379 = vsel %vm4315, %v4283, %v4347
  %v4380 = vsel %vm4316, %v4284, %v4348
  %v4381 = vsel %vm4317, %v4285, %v4349
  %v4382 = vsel %vm4318, %v4286, %v4350
  %v4383 = vsel %vm4319, %v4287, %v4351
  %v4384 = vsel %vm4320, %v4288, %v4352
  %v4385 = vsel %vm4321, %v4289, %v4353
  %v4386 = vsel %vm4322, %v4290, %v4354
  %v4387 = vsel %vm4323, %v4291, %v4355
  %v4388 = vsel %vm4324, %v4292, %v4356
  %v4421 = vrot.slane %v3878, 7
  %v4422 = vsel %vm1013, %v4421, %v3877
  %v4423 = vrot.slane %v3879, 6
  %v4424 = vsel %vm1016, %v4423, %v4422
  %v4425 = vrot.slane %v3880, 5
  %v4426 = vsel %vm1019, %v4425, %v4424
  %v4427 = vrot.slane %v3881, 4
  %v4428 = vsel %vm1022, %v4427, %v4426
  %v4429 = vrot.slane %v3882, 3
  %v4430 = vsel %vm1025, %v4429, %v4428
  %v4431 = vrot.slane %v3883, 2
  %v4432 = vsel %vm1028, %v4431, %v4430
  %v4433 = vrot.slane %v3884, 1
  %v4434 = vsel %vm1031, %v4433, %v4432
  %v4435 = vrot.slane %v3886, 7
  %v4436 = vsel %vm1013, %v4435, %v3885
  %v4437 = vrot.slane %v3887, 6
  %v4438 = vsel %vm1016, %v4437, %v4436
  %v4439 = vrot.slane %v3888, 5
  %v4440 = vsel %vm1019, %v4439, %v4438
  %v4441 = vrot.slane %v3889, 4
  %v4442 = vsel %vm1022, %v4441, %v4440
  %v4443 = vrot.slane %v3890, 3
  %v4444 = vsel %vm1025, %v4443, %v4442
  %v4445 = vrot.slane %v3891, 2
  %v4446 = vsel %vm1028, %v4445, %v4444
  %v4447 = vrot.slane %v3892, 1
  %v4448 = vsel %vm1031, %v4447, %v4446
  %v4449 = vrot.slane %v3894, 7
  %v4450 = vsel %vm1013, %v4449, %v3893
  %v4451 = vrot.slane %v3895, 6
  %v4452 = vsel %vm1016, %v4451, %v4450
  %v4453 = vrot.slane %v3896, 5
  %v4454 = vsel %vm1019, %v4453, %v4452
  %v4455 = vrot.slane %v3897, 4
  %v4456 = vsel %vm1022, %v4455, %v4454
  %v4457 = vrot.slane %v3898, 3
  %v4458 = vsel %vm1025, %v4457, %v4456
  %v4459 = vrot.slane %v3899, 2
  %v4460 = vsel %vm1028, %v4459, %v4458
  %v4461 = vrot.slane %v3900, 1
  %v4462 = vsel %vm1031, %v4461, %v4460
  %v4463 = vrot.slane %v3902, 7
  %v4464 = vsel %vm1013, %v4463, %v3901
  %v4465 = vrot.slane %v3903, 6
  %v4466 = vsel %vm1016, %v4465, %v4464
  %v4467 = vrot.slane %v3904, 5
  %v4468 = vsel %vm1019, %v4467, %v4466
  %v4469 = vrot.slane %v3905, 4
  %v4470 = vsel %vm1022, %v4469, %v4468
  %v4471 = vrot.slane %v3906, 3
  %v4472 = vsel %vm1025, %v4471, %v4470
  %v4473 = vrot.slane %v3907, 2
  %v4474 = vsel %vm1028, %v4473, %v4472
  %v4475 = vrot.slane %v3908, 1
  %v4476 = vsel %vm1031, %v4475, %v4474
  %v4513 = vrot.slane %v4038, 7
  %v4514 = vsel %vm1013, %v4513, %v4037
  %v4515 = vrot.slane %v4039, 6
  %v4516 = vsel %vm1016, %v4515, %v4514
  %v4517 = vrot.slane %v4040, 5
  %v4518 = vsel %vm1019, %v4517, %v4516
  %v4519 = vrot.slane %v4041, 4
  %v4520 = vsel %vm1022, %v4519, %v4518
  %v4521 = vrot.slane %v4042, 3
  %v4522 = vsel %vm1025, %v4521, %v4520
  %v4523 = vrot.slane %v4043, 2
  %v4524 = vsel %vm1028, %v4523, %v4522
  %v4525 = vrot.slane %v4044, 1
  %v4526 = vsel %vm1031, %v4525, %v4524
  %v4527 = vrot.slane %v4046, 7
  %v4528 = vsel %vm1013, %v4527, %v4045
  %v4529 = vrot.slane %v4047, 6
  %v4530 = vsel %vm1016, %v4529, %v4528
  %v4531 = vrot.slane %v4048, 5
  %v4532 = vsel %vm1019, %v4531, %v4530
  %v4533 = vrot.slane %v4049, 4
  %v4534 = vsel %vm1022, %v4533, %v4532
  %v4535 = vrot.slane %v4050, 3
  %v4536 = vsel %vm1025, %v4535, %v4534
  %v4537 = vrot.slane %v4051, 2
  %v4538 = vsel %vm1028, %v4537, %v4536
  %v4539 = vrot.slane %v4052, 1
  %v4540 = vsel %vm1031, %v4539, %v4538
  %v4541 = vrot.slane %v4054, 7
  %v4542 = vsel %vm1013, %v4541, %v4053
  %v4543 = vrot.slane %v4055, 6
  %v4544 = vsel %vm1016, %v4543, %v4542
  %v4545 = vrot.slane %v4056, 5
  %v4546 = vsel %vm1019, %v4545, %v4544
  %v4547 = vrot.slane %v4057, 4
  %v4548 = vsel %vm1022, %v4547, %v4546
  %v4549 = vrot.slane %v4058, 3
  %v4550 = vsel %vm1025, %v4549, %v4548
  %v4551 = vrot.slane %v4059, 2
  %v4552 = vsel %vm1028, %v4551, %v4550
  %v4553 = vrot.slane %v4060, 1
  %v4554 = vsel %vm1031, %v4553, %v4552
  %v4555 = vrot.slane %v4062, 7
  %v4556 = vsel %vm1013, %v4555, %v4061
  %v4557 = vrot.slane %v4063, 6
  %v4558 = vsel %vm1016, %v4557, %v4556
  %v4559 = vrot.slane %v4064, 5
  %v4560 = vsel %vm1019, %v4559, %v4558
  %v4561 = vrot.slane %v4065, 4
  %v4562 = vsel %vm1022, %v4561, %v4560
  %v4563 = vrot.slane %v4066, 3
  %v4564 = vsel %vm1025, %v4563, %v4562
  %v4565 = vrot.slane %v4067, 2
  %v4566 = vsel %vm1028, %v4565, %v4564
  %v4567 = vrot.slane %v4068, 1
  %v4568 = vsel %vm1031, %v4567, %v4566
  %4569 = vrot.lane.b32.xlu0 %v4526, 64
  %v4570 = vpop.permute.xlu0 %4569
  %4571 = vrot.lane.b32.xlu0 %v4540, 64
  %v4572 = vpop.permute.xlu0 %4571
  %4573 = vrot.lane.b32.xlu0 %v4554, 64
  %v4574 = vpop.permute.xlu0 %4573
  %4575 = vrot.lane.b32.xlu0 %v4568, 64
  %v4576 = vpop.permute.xlu0 %4575
  %v4613 = vrot.slane %v4198, 7
  %v4614 = vsel %vm1013, %v4613, %v4197
  %v4615 = vrot.slane %v4199, 6
  %v4616 = vsel %vm1016, %v4615, %v4614
  %v4617 = vrot.slane %v4200, 5
  %v4618 = vsel %vm1019, %v4617, %v4616
  %v4619 = vrot.slane %v4201, 4
  %v4620 = vsel %vm1022, %v4619, %v4618
  %v4621 = vrot.slane %v4202, 3
  %v4622 = vsel %vm1025, %v4621, %v4620
  %v4623 = vrot.slane %v4203, 2
  %v4624 = vsel %vm1028, %v4623, %v4622
  %v4625 = vrot.slane %v4204, 1
  %v4626 = vsel %vm1031, %v4625, %v4624
  %v4627 = vrot.slane %v4206, 7
  %v4628 = vsel %vm1013, %v4627, %v4205
  %v4629 = vrot.slane %v4207, 6
  %v4630 = vsel %vm1016, %v4629, %v4628
  %v4631 = vrot.slane %v4208, 5
  %v4632 = vsel %vm1019, %v4631, %v4630
  %v4633 = vrot.slane %v4209, 4
  %v4634 = vsel %vm1022, %v4633, %v4632
  %v4635 = vrot.slane %v4210, 3
  %v4636 = vsel %vm1025, %v4635, %v4634
  %v4637 = vrot.slane %v4211, 2
  %v4638 = vsel %vm1028, %v4637, %v4636
  %v4639 = vrot.slane %v4212, 1
  %v4640 = vsel %vm1031, %v4639, %v4638
  %v4641 = vrot.slane %v4214, 7
  %v4642 = vsel %vm1013, %v4641, %v4213
  %v4643 = vrot.slane %v4215, 6
  %v4644 = vsel %vm1016, %v4643, %v4642
  %v4645 = vrot.slane %v4216, 5
  %v4646 = vsel %vm1019, %v4645, %v4644
  %v4647 = vrot.slane %v4217, 4
  %v4648 = vsel %vm1022, %v4647, %v4646
  %v4649 = vrot.slane %v4218, 3
  %v4650 = vsel %vm1025, %v4649, %v4648
  %v4651 = vrot.slane %v4219, 2
  %v4652 = vsel %vm1028, %v4651, %v4650
  %v4653 = vrot.slane %v4220, 1
  %v4654 = vsel %vm1031, %v4653, %v4652
  %v4655 = vrot.slane %v4222, 7
  %v4656 = vsel %vm1013, %v4655, %v4221
  %v4657 = vrot.slane %v4223, 6
  %v4658 = vsel %vm1016, %v4657, %v4656
  %v4659 = vrot.slane %v4224, 5
  %v4660 = vsel %vm1019, %v4659, %v4658
  %v4661 = vrot.slane %v4225, 4
  %v4662 = vsel %vm1022, %v4661, %v4660
  %v4663 = vrot.slane %v4226, 3
  %v4664 = vsel %vm1025, %v4663, %v4662
  %v4665 = vrot.slane %v4227, 2
  %v4666 = vsel %vm1028, %v4665, %v4664
  %v4667 = vrot.slane %v4228, 1
  %v4668 = vsel %vm1031, %v4667, %v4666
  %v4705 = vrot.slane %v4358, 7
  %v4706 = vsel %vm1013, %v4705, %v4357
  %v4707 = vrot.slane %v4359, 6
  %v4708 = vsel %vm1016, %v4707, %v4706
  %v4709 = vrot.slane %v4360, 5
  %v4710 = vsel %vm1019, %v4709, %v4708
  %v4711 = vrot.slane %v4361, 4
  %v4712 = vsel %vm1022, %v4711, %v4710
  %v4713 = vrot.slane %v4362, 3
  %v4714 = vsel %vm1025, %v4713, %v4712
  %v4715 = vrot.slane %v4363, 2
  %v4716 = vsel %vm1028, %v4715, %v4714
  %v4717 = vrot.slane %v4364, 1
  %v4718 = vsel %vm1031, %v4717, %v4716
  %v4719 = vrot.slane %v4366, 7
  %v4720 = vsel %vm1013, %v4719, %v4365
  %v4721 = vrot.slane %v4367, 6
  %v4722 = vsel %vm1016, %v4721, %v4720
  %v4723 = vrot.slane %v4368, 5
  %v4724 = vsel %vm1019, %v4723, %v4722
  %v4725 = vrot.slane %v4369, 4
  %v4726 = vsel %vm1022, %v4725, %v4724
  %v4727 = vrot.slane %v4370, 3
  %v4728 = vsel %vm1025, %v4727, %v4726
  %v4729 = vrot.slane %v4371, 2
  %v4730 = vsel %vm1028, %v4729, %v4728
  %v4731 = vrot.slane %v4372, 1
  %v4732 = vsel %vm1031, %v4731, %v4730
  %v4733 = vrot.slane %v4374, 7
  %v4734 = vsel %vm1013, %v4733, %v4373
  %v4735 = vrot.slane %v4375, 6
  %v4736 = vsel %vm1016, %v4735, %v4734
  %v4737 = vrot.slane %v4376, 5
  %v4738 = vsel %vm1019, %v4737, %v4736
  %v4739 = vrot.slane %v4377, 4
  %v4740 = vsel %vm1022, %v4739, %v4738
  %v4741 = vrot.slane %v4378, 3
  %v4742 = vsel %vm1025, %v4741, %v4740
  %v4743 = vrot.slane %v4379, 2
  %v4744 = vsel %vm1028, %v4743, %v4742
  %v4745 = vrot.slane %v4380, 1
  %v4746 = vsel %vm1031, %v4745, %v4744
  %v4747 = vrot.slane %v4382, 7
  %v4748 = vsel %vm1013, %v4747, %v4381
  %v4749 = vrot.slane %v4383, 6
  %v4750 = vsel %vm1016, %v4749, %v4748
  %v4751 = vrot.slane %v4384, 5
  %v4752 = vsel %vm1019, %v4751, %v4750
  %v4753 = vrot.slane %v4385, 4
  %v4754 = vsel %vm1022, %v4753, %v4752
  %v4755 = vrot.slane %v4386, 3
  %v4756 = vsel %vm1025, %v4755, %v4754
  %v4757 = vrot.slane %v4387, 2
  %v4758 = vsel %vm1028, %v4757, %v4756
  %v4759 = vrot.slane %v4388, 1
  %v4760 = vsel %vm1031, %v4759, %v4758
  %4761 = vrot.lane.b32.xlu0 %v4718, 64
  %v4762 = vpop.permute.xlu0 %4761
  %4763 = vrot.lane.b32.xlu0 %v4732, 64
  %v4764 = vpop.permute.xlu0 %4763
  %4765 = vrot.lane.b32.xlu0 %v4746, 64
  %v4766 = vpop.permute.xlu0 %4765
  %4767 = vrot.lane.b32.xlu0 %v4760, 64
  %v4768 = vpop.permute.xlu0 %4767
  %v4773 = vsel %vm1371, %v4434, %v4570
  %v4774 = vsel %vm1371, %v4448, %v4572
  %v4775 = vsel %vm1371, %v4462, %v4574
  %v4776 = vsel %vm1371, %v4476, %v4576
  %v4777 = vsel %vm1371, %v4626, %v4762
  %v4778 = vsel %vm1371, %v4640, %v4764
  %v4779 = vsel %vm1371, %v4654, %v4766
  %v4780 = vsel %vm1371, %v4668, %v4768
  %4781 = vmatprep.subr.mxu0 0.0
  %4782 = vmatpush1.msra.mxu0 %v50
  %4783 = vmatprep.subr.mxu0 0.0
  %4784 = vmatpush1.msra.mxu0 %v49
  %4785 = vmatprep.subr.mxu0 0.0
  %4786 = vmatpush1.msra.mxu0 %v48
  %4787 = vmatprep.subr.mxu0 0.0
  %4788 = vmatpush1.msra.mxu0 %v47
  %4789 = vmatprep.subr.mxu0 0.0
  %4790 = vmatpush1.msra.mxu0 %v46
  %4791 = vmatprep.subr.mxu0 0.0
  %4792 = vmatpush1.msra.mxu0 %v45
  %4793 = vmatprep.subr.mxu0 0.0
  %4794 = vmatpush1.msra.mxu0 %v44
  %4795 = vmatprep.subr.mxu0 0.0
  %4796 = vmatpush1.msra.mxu0 %v43
  %4797 = vmatprep.subr.mxu0 0.0
  %4798 = vmatpush1.msra.mxu0 %v42
  %4799 = vmatprep.subr.mxu0 0.0
  %4800 = vmatpush1.msra.mxu0 %v41
  %4801 = vmatprep.subr.mxu0 0.0
  %4802 = vmatpush1.msra.mxu0 %v40
  %4803 = vmatprep.subr.mxu0 0.0
  %4804 = vmatpush1.msra.mxu0 %v39
  %4805 = vmatprep.subr.mxu0 0.0
  %4806 = vmatpush1.msra.mxu0 %v38
  %4807 = vmatprep.subr.mxu0 0.0
  %4808 = vmatpush1.msra.mxu0 %v37
  %4809 = vmatprep.subr.mxu0 0.0
  %4810 = vmatpush1.msra.mxu0 %v36
  %4811 = vmatprep.subr.mxu0 0.0
  %4812 = vmatpush1.msra.mxu0 %v35
  %4813 = vmatprep.subr.mxu0 0.0
  %4814 = vmatpush2.msra.mxu0 %v66
  %4815 = vmatprep.subr.mxu0 0.0
  %4816 = vmatpush2.msra.mxu0 %v65
  %4817 = vmatprep.subr.mxu0 0.0
  %4818 = vmatpush2.msra.mxu0 %v64
  %4819 = vmatprep.subr.mxu0 0.0
  %4820 = vmatpush2.msra.mxu0 %v63
  %4821 = vmatprep.subr.mxu0 0.0
  %4822 = vmatpush2.msra.mxu0 %v62
  %4823 = vmatprep.subr.mxu0 0.0
  %4824 = vmatpush2.msra.mxu0 %v61
  %4825 = vmatprep.subr.mxu0 0.0
  %4826 = vmatpush2.msra.mxu0 %v60
  %4827 = vmatprep.subr.mxu0 0.0
  %4828 = vmatpush2.msra.mxu0 %v59
  %4829 = vmatprep.subr.mxu0 0.0
  %4830 = vmatpush2.msra.mxu0 %v58
  %4831 = vmatprep.subr.mxu0 0.0
  %4832 = vmatpush2.msra.mxu0 %v57
  %4833 = vmatprep.subr.mxu0 0.0
  %4834 = vmatpush2.msra.mxu0 %v56
  %4835 = vmatprep.subr.mxu0 0.0
  %4836 = vmatpush2.msra.mxu0 %v55
  %4837 = vmatprep.subr.mxu0 0.0
  %4838 = vmatpush2.msra.mxu0 %v54
  %4839 = vmatprep.subr.mxu0 0.0
  %4840 = vmatpush2.msra.mxu0 %v53
  %4841 = vmatprep.subr.mxu0 0.0
  %4842 = vmatpush2.msra.mxu0 %v52
  %4843 = vmatprep.subr.mxu0 0.0
  %4844 = vmatpush2.msra.mxu0 %v51
  %4845 = vmatprep.mubr.f32.mxu0 %v4777
  %4846 = vmatmul.mubr.f32.gmra.mxu0 %v4773
  %v4847 = vpop.f32.mrf.mxu0
  %v4848 = vadd.f32 %v1384, %v4847
  %v4849 = vpop.f32.mrf.mxu0
  %4850 = vmatprep.mubr.f32.mxu0 %v4778
  %4851 = vmatmul.mubr.f32.gmra.mxu0 %v4774
  %v4852 = vpop.f32.mrf.mxu0
  %v4853 = vadd.f32 %v1384, %v4852
  %v4854 = vpop.f32.mrf.mxu0
  %4855 = vmatprep.mubr.f32.mxu0 %v4779
  %4856 = vmatmul.mubr.f32.gmra.mxu0 %v4775
  %v4857 = vpop.f32.mrf.mxu0
  %v4858 = vadd.f32 %v1384, %v4857
  %v4859 = vpop.f32.mrf.mxu0
  %4860 = vmatprep.mubr.f32.mxu0 %v4780
  %4861 = vmatmul.mubr.f32.gmra.mxu0 %v4776
  %v4862 = vpop.f32.mrf.mxu0
  %v4863 = vadd.f32 %v1384, %v4862
  %v4864 = vpop.f32.mrf.mxu0
  %4865 = vdwg.mxu0
  %vm4866 = vcmp.gt.f32.partialorder %v4848, 0.0
  %vm4867 = vcmp.gt.f32.partialorder %v4853, 0.0
  %vm4868 = vcmp.gt.f32.partialorder %v4858, 0.0
  %vm4869 = vcmp.gt.f32.partialorder %v4863, 0.0
  %v4870 = vmul.f32 %v4848, 0.2
  %v4871 = vmul.f32 %v4853, 0.2
  %v4872 = vmul.f32 %v4858, 0.2
  %v4873 = vmul.f32 %v4863, 0.2
  %v4874 = vsel %vm4866, %v4848, %v4870
  %v4875 = vsel %vm4867, %v4853, %v4871
  %v4876 = vsel %vm4868, %v4858, %v4872
  %v4877 = vsel %vm4869, %v4863, %v4873
  %v4878 = vmax.f32 %v3745, %v4874
  %v4879 = vmax.f32 %v3746, %v4875
  %v4880 = vmax.f32 %v3747, %v4876
  %v4881 = vmax.f32 %v3748, %v4877
  %4882 = vst.msk [vmem:[%s10] sm:$0xff] %vm1371, %v4878
  %4883 = vst.msk [vmem:[%s10 + $0x8] sm:$0xff] %vm1371, %v4879
  %4884 = vst.msk [vmem:[%s10 + $0x10] sm:$0xff] %vm1371, %v4880
  %4885 = vst.msk [vmem:[%s10 + $0x18] sm:$0xff] %vm1371, %v4881
  // Predicated region
  $region42: #{dgcnn_forward.25} parent=0 // pred_check
    _
  $region43: #{dgcnn_forward.25} parent=0 // pred_check_branch
    %4887 = sbr.rel (0) target = $region45
  $region44: #{dgcnn_forward.25} parent=0 // pred_region
    _
  $region45: #{dgcnn_forward.25} parent=0 // pred_fallthru
    _
  // Predicated region
  $region46: #{dgcnn_forward.25} parent=0 // pred_check
    _
  $region47: #{dgcnn_forward.25} parent=0 // pred_check_branch
    %4889 = sbr.rel (0) target = $region49
  $region48: #{dgcnn_forward.25} parent=0 // pred_region
    _
  $region49: #{dgcnn_forward.25} parent=0 // pred_fallthru
    _

</llo_original>
